<compile_context>
chip_gen: v6e
topology: v6e:2x2x1
jax: 0.10.0
libtpu: 0.0.40
codegen_flags: <defaults>
</compile_context>

<pallas_src>
import jax
import jax.numpy as jnp
from jax import lax
from jax.experimental import pallas as pl
from jax.experimental.pallas import tpu as pltpu

E = 128          # projection_dim
H = 4            # num_heads
DH = E // H      # head dim = 32
FF = 2 * E       # transformer_units[0] = 256
NUM_LAYERS = 6
EPS = 1e-6       # layer_norm_eps
INV_SQRT2 = 0.7071067811865476


def _layernorm(x, w, b):
    mu = jnp.mean(x, axis=-1, keepdims=True)
    var = jnp.mean((x - mu) ** 2, axis=-1, keepdims=True)   # biased var (PyTorch LN)
    return (x - mu) * lax.rsqrt(var + EPS) * w + b


def _gelu(x):
    # exact (erf-based) GELU, matching nn.GELU() default
    return 0.5 * x * (1.0 + lax.erf(x * INV_SQRT2))


def encoder_kernel(
    x_ref,
    ln1w_ref, ln1b_ref, wqkv_ref, bqkv_ref, wo_ref, bo_ref,
    ln2w_ref, ln2b_ref, w1_ref, b1_ref, w2_ref, b2_ref,
    o_ref, cat_ref,
):
    """One grid step == one sequence; all NUM_LAYERS encoder blocks fused."""
    x = x_ref[...]                                   # (S, E) f32 activation carry

    for l in range(NUM_LAYERS):                      # static unroll over layers
        # ---- norm1 ----
        x1 = _layernorm(x, ln1w_ref[l], ln1b_ref[l])

        # ---- multi-head self-attention (Q-scale pre-folded into wqkv/bqkv) ----
        qkv = jnp.dot(x1.astype(jnp.bfloat16), wqkv_ref[l],
                      preferred_element_type=jnp.float32) + bqkv_ref[l]   # (S, 3E) f32
        qkvb = qkv.astype(jnp.bfloat16)              # single bf16 cast for all heads

        for h in range(H):                           # static unroll over 4 heads
            qh = qkvb[:, h * DH:(h + 1) * DH]
            kh = qkvb[:, E + h * DH:E + (h + 1) * DH]
            vh = qkvb[:, 2 * E + h * DH:2 * E + (h + 1) * DH]

            # scores: contract the head dim of both operands (no explicit kh.T)
            s = lax.dot_general(qh, kh, (((1,), (1,)), ((), ())),
                                preferred_element_type=jnp.float32)       # (S, S)
            s = s - jnp.max(s, axis=-1, keepdims=True)
            p = jnp.exp(s)
            p = p * pl.reciprocal(jnp.sum(p, axis=-1, keepdims=True), approx=True)

            oh = jnp.dot(p.astype(jnp.bfloat16), vh,
                         preferred_element_type=jnp.float32)              # (S, DH)
            # deposit per-head output at a static 32-lane offset
            cat_ref[:, h * DH:(h + 1) * DH] = oh

        # single output projection per layer (replaces 4 per-head Wo matmuls)
        attn = jnp.dot(cat_ref[...].astype(jnp.bfloat16), wo_ref[l],
                       preferred_element_type=jnp.float32) + bo_ref[l]

        # ---- residual 1 ----
        x2 = x + attn

        # ---- norm2 + feed-forward (GELU after BOTH linears, per the module) ----
        x3 = _layernorm(x2, ln2w_ref[l], ln2b_ref[l])
        h1 = _gelu(jnp.dot(x3.astype(jnp.bfloat16), w1_ref[l],
                           preferred_element_type=jnp.float32) + b1_ref[l])
        h2 = _gelu(jnp.dot(h1.astype(jnp.bfloat16), w2_ref[l],
                           preferred_element_type=jnp.float32) + b2_ref[l])

        # ---- residual 2 -> carry to next layer ----
        x = x2 + h2

    o_ref[...] = x


def encoder_forward(x, stacked_params):
    """x: (B, S, E) f32.  stacked_params: 12 arrays, each with leading L axis."""
    B, S, _ = x.shape
    x2d = x.reshape(B * S, E)

    def full_spec(arr):
        # whole stacked weight resident in VMEM; constant block index -> no
        # re-fetch across grid steps.
        nd = arr.ndim
        return pl.BlockSpec(arr.shape, lambda b, _nd=nd: (0,) * _nd)

    out2d = pl.pallas_call(
        encoder_kernel,
        out_shape=jax.ShapeDtypeStruct((B * S, E), jnp.float32),
        grid=(B,),
        in_specs=[pl.BlockSpec((S, E), lambda b: (b, 0))]      # one sequence / step
                 + [full_spec(p) for p in stacked_params],
        out_specs=pl.BlockSpec((S, E), lambda b: (b, 0)),
        scratch_shapes=[pltpu.VMEM((S, E), jnp.float32)],       # head-concat scratch
        compiler_params=pltpu.CompilerParams(
            dimension_semantics=("parallel",)),                 # batch axis -> both TCs on v7x
    )(x2d, *stacked_params)

    return out2d.reshape(B, S, E)


def init_stacked_params(key, num_layers=NUM_LAYERS):
    """Deterministic synthetic parameters, stacked over layers.

    Weight matrices are stored pre-transposed to (in, out) in bf16 (MXU inputs);
    LN params / biases stay f32 (added to f32 accumulations) and are stored as
    (L, 1, N) slabs.  The 1/sqrt(head_dim) attention scale is folded into the
    Q columns of wqkv and bqkv at init time.
    """
    s = 0.02
    scale = 1.0 / (DH ** 0.5)
    qscale = jnp.concatenate(
        [jnp.full((E,), scale, jnp.float32), jnp.ones((2 * E,), jnp.float32)])
    layer_keys = jax.random.split(key, num_layers)

    def one(k):
        ks = jax.random.split(k, 8)
        ln1w = jnp.ones((1, E), jnp.float32)
        ln1b = jnp.zeros((1, E), jnp.float32)
        wqkv_f = jax.random.normal(ks[0], (E, 3 * E), jnp.float32) * s
        bqkv_f = jax.random.normal(ks[1], (1, 3 * E), jnp.float32) * s
        wqkv = (wqkv_f * qscale[None, :]).astype(jnp.bfloat16)     # scale folded into Q
        bqkv = bqkv_f * qscale[None, :]
        wo = (jax.random.normal(ks[2], (E, E), jnp.float32) * s).astype(jnp.bfloat16)
        bo = jax.random.normal(ks[3], (1, E), jnp.float32) * s
        ln2w = jnp.ones((1, E), jnp.float32)
        ln2b = jnp.zeros((1, E), jnp.float32)
        w1 = (jax.random.normal(ks[4], (E, FF), jnp.float32) * s).astype(jnp.bfloat16)
        b1 = jax.random.normal(ks[5], (1, FF), jnp.float32) * s
        w2 = (jax.random.normal(ks[6], (FF, E), jnp.float32) * s).astype(jnp.bfloat16)
        b2 = jax.random.normal(ks[7], (1, E), jnp.float32) * s
        return [ln1w, ln1b, wqkv, bqkv, wo, bo, ln2w, ln2b, w1, b1, w2, b2]

    per_layer = [one(k) for k in layer_keys]
    return [jnp.stack([lp[i] for lp in per_layer], axis=0) for i in range(12)]


if __name__ == "__main__":
    B, S = 2, 8
    key = jax.random.PRNGKey(0)
    kx, kp = jax.random.split(key)
    x = jax.random.normal(kx, (B, S, E), jnp.float32)
    params = init_stacked_params(kp)

    y = encoder_forward(x, params)
    jax.block_until_ready(y)
    assert y.shape == (B, S, E) and y.dtype == jnp.float32
    print("KERNEL_OK")
</pallas_src>

<mosaic_0001>
module attributes {stable_mosaic.version = 11 : i64} {
  func.func @encoder_kernel(%arg0: i32, %arg1: memref<8x128xf32, #tpu.memory_space<vmem>>, %arg2: memref<6x1x128xf32, #tpu.memory_space<vmem>>, %arg3: memref<6x1x128xf32, #tpu.memory_space<vmem>>, %arg4: memref<6x128x384xbf16, #tpu.memory_space<vmem>>, %arg5: memref<6x1x384xf32, #tpu.memory_space<vmem>>, %arg6: memref<6x128x128xbf16, #tpu.memory_space<vmem>>, %arg7: memref<6x1x128xf32, #tpu.memory_space<vmem>>, %arg8: memref<6x1x128xf32, #tpu.memory_space<vmem>>, %arg9: memref<6x1x128xf32, #tpu.memory_space<vmem>>, %arg10: memref<6x128x256xbf16, #tpu.memory_space<vmem>>, %arg11: memref<6x1x256xf32, #tpu.memory_space<vmem>>, %arg12: memref<6x256x128xbf16, #tpu.memory_space<vmem>>, %arg13: memref<6x1x128xf32, #tpu.memory_space<vmem>>, %arg14: memref<8x128xf32, #tpu.memory_space<vmem>>, %arg15: memref<8x128xf32, #tpu.memory_space<vmem>>) attributes {dimension_semantics = [#tpu.dimension_semantics<parallel>], iteration_bounds = array<i64: 2>, scalar_prefetch = 0 : i64, scratch_operands = 1 : i64, tpu.core_type = #tpu.core_type<tc>, window_params = [{transform_indices = @transform_0, window_bounds = array<i64: 8, 128>}, {pipeline_mode = #tpu.pipeline_mode<synchronous>, transform_indices = @transform_1, window_bounds = array<i64: 6, 1, 128>}, {pipeline_mode = #tpu.pipeline_mode<synchronous>, transform_indices = @transform_2, window_bounds = array<i64: 6, 1, 128>}, {pipeline_mode = #tpu.pipeline_mode<synchronous>, transform_indices = @transform_3, window_bounds = array<i64: 6, 128, 384>}, {pipeline_mode = #tpu.pipeline_mode<synchronous>, transform_indices = @transform_4, window_bounds = array<i64: 6, 1, 384>}, {pipeline_mode = #tpu.pipeline_mode<synchronous>, transform_indices = @transform_5, window_bounds = array<i64: 6, 128, 128>}, {pipeline_mode = #tpu.pipeline_mode<synchronous>, transform_indices = @transform_6, window_bounds = array<i64: 6, 1, 128>}, {pipeline_mode = #tpu.pipeline_mode<synchronous>, transform_indices = @transform_7, window_bounds = array<i64: 6, 1, 128>}, {pipeline_mode = #tpu.pipeline_mode<synchronous>, transform_indices = @transform_8, window_bounds = array<i64: 6, 1, 128>}, {pipeline_mode = #tpu.pipeline_mode<synchronous>, transform_indices = @transform_9, window_bounds = array<i64: 6, 128, 256>}, {pipeline_mode = #tpu.pipeline_mode<synchronous>, transform_indices = @transform_10, window_bounds = array<i64: 6, 1, 256>}, {pipeline_mode = #tpu.pipeline_mode<synchronous>, transform_indices = @transform_11, window_bounds = array<i64: 6, 256, 128>}, {pipeline_mode = #tpu.pipeline_mode<synchronous>, transform_indices = @transform_12, window_bounds = array<i64: 6, 1, 128>}, {transform_indices = @transform_13, window_bounds = array<i64: 8, 128>}]} {
    %c0 = arith.constant 0 : index
    %c0_0 = arith.constant 0 : index
    %0 = vector.load %arg1[%c0, %c0_0] : memref<8x128xf32, #tpu.memory_space<vmem>>, vector<8x128xf32>
    %c0_1 = arith.constant 0 : index
    %c0_2 = arith.constant 0 : index
    %c0_3 = arith.constant 0 : index
    %1 = vector.load %arg2[%c0_1, %c0_2, %c0_3] : memref<6x1x128xf32, #tpu.memory_space<vmem>>, vector<1x1x128xf32>
    %2 = vector.shape_cast %1 : vector<1x1x128xf32> to vector<1x128xf32>
    %c0_4 = arith.constant 0 : index
    %c0_5 = arith.constant 0 : index
    %c0_6 = arith.constant 0 : index
    %3 = vector.load %arg3[%c0_4, %c0_5, %c0_6] : memref<6x1x128xf32, #tpu.memory_space<vmem>>, vector<1x1x128xf32>
    %4 = vector.shape_cast %3 : vector<1x1x128xf32> to vector<1x128xf32>
    %cst = arith.constant dense<0.000000e+00> : vector<8xf32>
    %5 = vector.multi_reduction <add>, %0, %cst [1] : vector<8x128xf32> to vector<8xf32>
    %6 = vector.shape_cast %5 : vector<8xf32> to vector<8x1xf32>
    %cst_7 = arith.constant 1.280000e+02 : f32
    %7 = vector.broadcast %cst_7 : f32 to vector<8x1xf32>
    %8 = arith.divf %6, %7 : vector<8x1xf32>
    %9 = vector.broadcast %8 : vector<8x1xf32> to vector<8x128xf32>
    %10 = arith.subf %0, %9 : vector<8x128xf32>
    %11 = arith.mulf %10, %10 : vector<8x128xf32>
    %cst_8 = arith.constant dense<0.000000e+00> : vector<8xf32>
    %12 = vector.multi_reduction <add>, %11, %cst_8 [1] : vector<8x128xf32> to vector<8xf32>
    %13 = vector.shape_cast %12 : vector<8xf32> to vector<8x1xf32>
    %cst_9 = arith.constant 1.280000e+02 : f32
    %14 = vector.broadcast %cst_9 : f32 to vector<8x1xf32>
    %15 = arith.divf %13, %14 : vector<8x1xf32>
    %16 = vector.broadcast %8 : vector<8x1xf32> to vector<8x128xf32>
    %17 = arith.subf %0, %16 : vector<8x128xf32>
    %cst_10 = arith.constant 9.99999997E-7 : f32
    %18 = vector.broadcast %cst_10 : f32 to vector<8x1xf32>
    %19 = arith.addf %15, %18 : vector<8x1xf32>
    %20 = math.rsqrt %19 : vector<8x1xf32>
    %21 = vector.broadcast %20 : vector<8x1xf32> to vector<8x128xf32>
    %22 = arith.mulf %17, %21 : vector<8x128xf32>
    %23 = vector.broadcast %2 : vector<1x128xf32> to vector<8x128xf32>
    %24 = arith.mulf %22, %23 : vector<8x128xf32>
    %25 = vector.broadcast %4 : vector<1x128xf32> to vector<8x128xf32>
    %26 = arith.addf %24, %25 : vector<8x128xf32>
    %27 = arith.truncf %26 : vector<8x128xf32> to vector<8x128xbf16>
    %c0_11 = arith.constant 0 : index
    %c0_12 = arith.constant 0 : index
    %c0_13 = arith.constant 0 : index
    %28 = vector.load %arg4[%c0_11, %c0_12, %c0_13] : memref<6x128x384xbf16, #tpu.memory_space<vmem>>, vector<1x128x384xbf16>
    %29 = vector.shape_cast %28 : vector<1x128x384xbf16> to vector<128x384xbf16>
    %cst_14 = arith.constant dense<0.000000e+00> : vector<8x384xf32>
    %30 = tpu.matmul %27, %29, %cst_14 {dimension_numbers = #tpu.dot_dimension_numbers<[1], [0], [0], [1], [0, 0, 1, 1], [], []>} : vector<8x128xbf16>, vector<128x384xbf16>, vector<8x384xf32> -> vector<8x384xf32>
    %c0_15 = arith.constant 0 : index
    %c0_16 = arith.constant 0 : index
    %c0_17 = arith.constant 0 : index
    %31 = vector.load %arg5[%c0_15, %c0_16, %c0_17] : memref<6x1x384xf32, #tpu.memory_space<vmem>>, vector<1x1x384xf32>
    %32 = vector.shape_cast %31 : vector<1x1x384xf32> to vector<1x384xf32>
    %33 = vector.broadcast %32 : vector<1x384xf32> to vector<8x384xf32>
    %34 = arith.addf %30, %33 : vector<8x384xf32>
    %35 = arith.truncf %34 : vector<8x384xf32> to vector<8x384xbf16>
    %36 = vector.extract_strided_slice %35 {offsets = [0, 0], sizes = [8, 32], strides = [1, 1]} : vector<8x384xbf16> to vector<8x32xbf16>
    %37 = vector.extract_strided_slice %35 {offsets = [0, 128], sizes = [8, 32], strides = [1, 1]} : vector<8x384xbf16> to vector<8x32xbf16>
    %38 = vector.extract_strided_slice %35 {offsets = [0, 256], sizes = [8, 32], strides = [1, 1]} : vector<8x384xbf16> to vector<8x32xbf16>
    %cst_18 = arith.constant dense<0.000000e+00> : vector<8x8xf32>
    %39 = tpu.matmul %36, %37, %cst_18 {dimension_numbers = #tpu.dot_dimension_numbers<[1], [1], [0], [0], [0, 0, 1, 0], [], []>} : vector<8x32xbf16>, vector<8x32xbf16>, vector<8x8xf32> -> vector<8x8xf32>
    %cst_19 = arith.constant dense<0xFF800000> : vector<8xf32>
    %40 = vector.multi_reduction <maximumf>, %39, %cst_19 [1] : vector<8x8xf32> to vector<8xf32>
    %41 = vector.shape_cast %40 : vector<8xf32> to vector<8x1xf32>
    %42 = vector.broadcast %41 : vector<8x1xf32> to vector<8x8xf32>
    %43 = arith.subf %39, %42 : vector<8x8xf32>
    %44 = math.exp %43 : vector<8x8xf32>
    %cst_20 = arith.constant dense<0.000000e+00> : vector<8xf32>
    %45 = vector.multi_reduction <add>, %44, %cst_20 [1] : vector<8x8xf32> to vector<8xf32>
    %46 = vector.shape_cast %45 : vector<8xf32> to vector<8x1xf32>
    %47 = tpu.reciprocal %46 {approx = true} : vector<8x1xf32> -> vector<8x1xf32>
    %48 = vector.broadcast %47 : vector<8x1xf32> to vector<8x8xf32>
    %49 = arith.mulf %44, %48 : vector<8x8xf32>
    %50 = arith.truncf %49 : vector<8x8xf32> to vector<8x8xbf16>
    %cst_21 = arith.constant dense<0.000000e+00> : vector<8x32xf32>
    %51 = tpu.matmul %50, %38, %cst_21 {dimension_numbers = #tpu.dot_dimension_numbers<[1], [0], [0], [1], [0, 0, 1, 1], [], []>} : vector<8x8xbf16>, vector<8x32xbf16>, vector<8x32xf32> -> vector<8x32xf32>
    %c0_22 = arith.constant 0 : index
    %c0_23 = arith.constant 0 : index
    %52 = vector.load %arg15[%c0_22, %c0_23] : memref<8x128xf32, #tpu.memory_space<vmem>>, vector<8x32xf32>
    tpu.vector_store %arg15[%c0_22, %c0_23], %51 {strides = array<i32>} : memref<8x128xf32, #tpu.memory_space<vmem>>, vector<8x32xf32>,
    %53 = vector.extract_strided_slice %35 {offsets = [0, 32], sizes = [8, 32], strides = [1, 1]} : vector<8x384xbf16> to vector<8x32xbf16>
    %54 = vector.extract_strided_slice %35 {offsets = [0, 160], sizes = [8, 32], strides = [1, 1]} : vector<8x384xbf16> to vector<8x32xbf16>
    %55 = vector.extract_strided_slice %35 {offsets = [0, 288], sizes = [8, 32], strides = [1, 1]} : vector<8x384xbf16> to vector<8x32xbf16>
    %cst_24 = arith.constant dense<0.000000e+00> : vector<8x8xf32>
    %56 = tpu.matmul %53, %54, %cst_24 {dimension_numbers = #tpu.dot_dimension_numbers<[1], [1], [0], [0], [0, 0, 1, 0], [], []>} : vector<8x32xbf16>, vector<8x32xbf16>, vector<8x8xf32> -> vector<8x8xf32>
    %cst_25 = arith.constant dense<0xFF800000> : vector<8xf32>
    %57 = vector.multi_reduction <maximumf>, %56, %cst_25 [1] : vector<8x8xf32> to vector<8xf32>
    %58 = vector.shape_cast %57 : vector<8xf32> to vector<8x1xf32>
    %59 = vector.broadcast %58 : vector<8x1xf32> to vector<8x8xf32>
    %60 = arith.subf %56, %59 : vector<8x8xf32>
    %61 = math.exp %60 : vector<8x8xf32>
    %cst_26 = arith.constant dense<0.000000e+00> : vector<8xf32>
    %62 = vector.multi_reduction <add>, %61, %cst_26 [1] : vector<8x8xf32> to vector<8xf32>
    %63 = vector.shape_cast %62 : vector<8xf32> to vector<8x1xf32>
    %64 = tpu.reciprocal %63 {approx = true} : vector<8x1xf32> -> vector<8x1xf32>
    %65 = vector.broadcast %64 : vector<8x1xf32> to vector<8x8xf32>
    %66 = arith.mulf %61, %65 : vector<8x8xf32>
    %67 = arith.truncf %66 : vector<8x8xf32> to vector<8x8xbf16>
    %cst_27 = arith.constant dense<0.000000e+00> : vector<8x32xf32>
    %68 = tpu.matmul %67, %55, %cst_27 {dimension_numbers = #tpu.dot_dimension_numbers<[1], [0], [0], [1], [0, 0, 1, 1], [], []>} : vector<8x8xbf16>, vector<8x32xbf16>, vector<8x32xf32> -> vector<8x32xf32>
    %c0_28 = arith.constant 0 : index
    %c32 = arith.constant 32 : index
    %69 = vector.load %arg15[%c0_28, %c32] : memref<8x128xf32, #tpu.memory_space<vmem>>, vector<8x32xf32>
    tpu.vector_store %arg15[%c0_28, %c32], %68 {strides = array<i32>} : memref<8x128xf32, #tpu.memory_space<vmem>>, vector<8x32xf32>,
    %70 = vector.extract_strided_slice %35 {offsets = [0, 64], sizes = [8, 32], strides = [1, 1]} : vector<8x384xbf16> to vector<8x32xbf16>
    %71 = vector.extract_strided_slice %35 {offsets = [0, 192], sizes = [8, 32], strides = [1, 1]} : vector<8x384xbf16> to vector<8x32xbf16>
    %72 = vector.extract_strided_slice %35 {offsets = [0, 320], sizes = [8, 32], strides = [1, 1]} : vector<8x384xbf16> to vector<8x32xbf16>
    %cst_29 = arith.constant dense<0.000000e+00> : vector<8x8xf32>
    %73 = tpu.matmul %70, %71, %cst_29 {dimension_numbers = #tpu.dot_dimension_numbers<[1], [1], [0], [0], [0, 0, 1, 0], [], []>} : vector<8x32xbf16>, vector<8x32xbf16>, vector<8x8xf32> -> vector<8x8xf32>
    %cst_30 = arith.constant dense<0xFF800000> : vector<8xf32>
    %74 = vector.multi_reduction <maximumf>, %73, %cst_30 [1] : vector<8x8xf32> to vector<8xf32>
    %75 = vector.shape_cast %74 : vector<8xf32> to vector<8x1xf32>
    %76 = vector.broadcast %75 : vector<8x1xf32> to vector<8x8xf32>
    %77 = arith.subf %73, %76 : vector<8x8xf32>
    %78 = math.exp %77 : vector<8x8xf32>
    %cst_31 = arith.constant dense<0.000000e+00> : vector<8xf32>
    %79 = vector.multi_reduction <add>, %78, %cst_31 [1] : vector<8x8xf32> to vector<8xf32>
    %80 = vector.shape_cast %79 : vector<8xf32> to vector<8x1xf32>
    %81 = tpu.reciprocal %80 {approx = true} : vector<8x1xf32> -> vector<8x1xf32>
    %82 = vector.broadcast %81 : vector<8x1xf32> to vector<8x8xf32>
    %83 = arith.mulf %78, %82 : vector<8x8xf32>
    %84 = arith.truncf %83 : vector<8x8xf32> to vector<8x8xbf16>
    %cst_32 = arith.constant dense<0.000000e+00> : vector<8x32xf32>
    %85 = tpu.matmul %84, %72, %cst_32 {dimension_numbers = #tpu.dot_dimension_numbers<[1], [0], [0], [1], [0, 0, 1, 1], [], []>} : vector<8x8xbf16>, vector<8x32xbf16>, vector<8x32xf32> -> vector<8x32xf32>
    %c0_33 = arith.constant 0 : index
    %c64 = arith.constant 64 : index
    %86 = vector.load %arg15[%c0_33, %c64] : memref<8x128xf32, #tpu.memory_space<vmem>>, vector<8x32xf32>
    tpu.vector_store %arg15[%c0_33, %c64], %85 {strides = array<i32>} : memref<8x128xf32, #tpu.memory_space<vmem>>, vector<8x32xf32>,
    %87 = vector.extract_strided_slice %35 {offsets = [0, 96], sizes = [8, 32], strides = [1, 1]} : vector<8x384xbf16> to vector<8x32xbf16>
    %88 = vector.extract_strided_slice %35 {offsets = [0, 224], sizes = [8, 32], strides = [1, 1]} : vector<8x384xbf16> to vector<8x32xbf16>
    %89 = vector.extract_strided_slice %35 {offsets = [0, 352], sizes = [8, 32], strides = [1, 1]} : vector<8x384xbf16> to vector<8x32xbf16>
    %cst_34 = arith.constant dense<0.000000e+00> : vector<8x8xf32>
    %90 = tpu.matmul %87, %88, %cst_34 {dimension_numbers = #tpu.dot_dimension_numbers<[1], [1], [0], [0], [0, 0, 1, 0], [], []>} : vector<8x32xbf16>, vector<8x32xbf16>, vector<8x8xf32> -> vector<8x8xf32>
    %cst_35 = arith.constant dense<0xFF800000> : vector<8xf32>
    %91 = vector.multi_reduction <maximumf>, %90, %cst_35 [1] : vector<8x8xf32> to vector<8xf32>
    %92 = vector.shape_cast %91 : vector<8xf32> to vector<8x1xf32>
    %93 = vector.broadcast %92 : vector<8x1xf32> to vector<8x8xf32>
    %94 = arith.subf %90, %93 : vector<8x8xf32>
    %95 = math.exp %94 : vector<8x8xf32>
    %cst_36 = arith.constant dense<0.000000e+00> : vector<8xf32>
    %96 = vector.multi_reduction <add>, %95, %cst_36 [1] : vector<8x8xf32> to vector<8xf32>
    %97 = vector.shape_cast %96 : vector<8xf32> to vector<8x1xf32>
    %98 = tpu.reciprocal %97 {approx = true} : vector<8x1xf32> -> vector<8x1xf32>
    %99 = vector.broadcast %98 : vector<8x1xf32> to vector<8x8xf32>
    %100 = arith.mulf %95, %99 : vector<8x8xf32>
    %101 = arith.truncf %100 : vector<8x8xf32> to vector<8x8xbf16>
    %cst_37 = arith.constant dense<0.000000e+00> : vector<8x32xf32>
    %102 = tpu.matmul %101, %89, %cst_37 {dimension_numbers = #tpu.dot_dimension_numbers<[1], [0], [0], [1], [0, 0, 1, 1], [], []>} : vector<8x8xbf16>, vector<8x32xbf16>, vector<8x32xf32> -> vector<8x32xf32>
    %c0_38 = arith.constant 0 : index
    %c96 = arith.constant 96 : index
    %103 = vector.load %arg15[%c0_38, %c96] : memref<8x128xf32, #tpu.memory_space<vmem>>, vector<8x32xf32>
    tpu.vector_store %arg15[%c0_38, %c96], %102 {strides = array<i32>} : memref<8x128xf32, #tpu.memory_space<vmem>>, vector<8x32xf32>,
    %c0_39 = arith.constant 0 : index
    %c0_40 = arith.constant 0 : index
    %104 = vector.load %arg15[%c0_39, %c0_40] : memref<8x128xf32, #tpu.memory_space<vmem>>, vector<8x128xf32>
    %105 = arith.truncf %104 : vector<8x128xf32> to vector<8x128xbf16>
    %c0_41 = arith.constant 0 : index
    %c0_42 = arith.constant 0 : index
    %c0_43 = arith.constant 0 : index
    %106 = vector.load %arg6[%c0_41, %c0_42, %c0_43] : memref<6x128x128xbf16, #tpu.memory_space<vmem>>, vector<1x128x128xbf16>
    %107 = vector.shape_cast %106 : vector<1x128x128xbf16> to vector<128x128xbf16>
    %cst_44 = arith.constant dense<0.000000e+00> : vector<8x128xf32>
    %108 = tpu.matmul %105, %107, %cst_44 {dimension_numbers = #tpu.dot_dimension_numbers<[1], [0], [0], [1], [0, 0, 1, 1], [], []>} : vector<8x128xbf16>, vector<128x128xbf16>, vector<8x128xf32> -> vector<8x128xf32>
    %c0_45 = arith.constant 0 : index
    %c0_46 = arith.constant 0 : index
    %c0_47 = arith.constant 0 : index
    %109 = vector.load %arg7[%c0_45, %c0_46, %c0_47] : memref<6x1x128xf32, #tpu.memory_space<vmem>>, vector<1x1x128xf32>
    %110 = vector.shape_cast %109 : vector<1x1x128xf32> to vector<1x128xf32>
    %111 = vector.broadcast %110 : vector<1x128xf32> to vector<8x128xf32>
    %112 = arith.addf %108, %111 : vector<8x128xf32>
    %113 = arith.addf %0, %112 : vector<8x128xf32>
    %c0_48 = arith.constant 0 : index
    %c0_49 = arith.constant 0 : index
    %c0_50 = arith.constant 0 : index
    %114 = vector.load %arg8[%c0_48, %c0_49, %c0_50] : memref<6x1x128xf32, #tpu.memory_space<vmem>>, vector<1x1x128xf32>
    %115 = vector.shape_cast %114 : vector<1x1x128xf32> to vector<1x128xf32>
    %c0_51 = arith.constant 0 : index
    %c0_52 = arith.constant 0 : index
    %c0_53 = arith.constant 0 : index
    %116 = vector.load %arg9[%c0_51, %c0_52, %c0_53] : memref<6x1x128xf32, #tpu.memory_space<vmem>>, vector<1x1x128xf32>
    %117 = vector.shape_cast %116 : vector<1x1x128xf32> to vector<1x128xf32>
    %cst_54 = arith.constant dense<0.000000e+00> : vector<8xf32>
    %118 = vector.multi_reduction <add>, %113, %cst_54 [1] : vector<8x128xf32> to vector<8xf32>
    %119 = vector.shape_cast %118 : vector<8xf32> to vector<8x1xf32>
    %cst_55 = arith.constant 1.280000e+02 : f32
    %120 = vector.broadcast %cst_55 : f32 to vector<8x1xf32>
    %121 = arith.divf %119, %120 : vector<8x1xf32>
    %122 = vector.broadcast %121 : vector<8x1xf32> to vector<8x128xf32>
    %123 = arith.subf %113, %122 : vector<8x128xf32>
    %124 = arith.mulf %123, %123 : vector<8x128xf32>
    %cst_56 = arith.constant dense<0.000000e+00> : vector<8xf32>
    %125 = vector.multi_reduction <add>, %124, %cst_56 [1] : vector<8x128xf32> to vector<8xf32>
    %126 = vector.shape_cast %125 : vector<8xf32> to vector<8x1xf32>
    %cst_57 = arith.constant 1.280000e+02 : f32
    %127 = vector.broadcast %cst_57 : f32 to vector<8x1xf32>
    %128 = arith.divf %126, %127 : vector<8x1xf32>
    %129 = vector.broadcast %121 : vector<8x1xf32> to vector<8x128xf32>
    %130 = arith.subf %113, %129 : vector<8x128xf32>
    %cst_58 = arith.constant 9.99999997E-7 : f32
    %131 = vector.broadcast %cst_58 : f32 to vector<8x1xf32>
    %132 = arith.addf %128, %131 : vector<8x1xf32>
    %133 = math.rsqrt %132 : vector<8x1xf32>
    %134 = vector.broadcast %133 : vector<8x1xf32> to vector<8x128xf32>
    %135 = arith.mulf %130, %134 : vector<8x128xf32>
    %136 = vector.broadcast %115 : vector<1x128xf32> to vector<8x128xf32>
    %137 = arith.mulf %135, %136 : vector<8x128xf32>
    %138 = vector.broadcast %117 : vector<1x128xf32> to vector<8x128xf32>
    %139 = arith.addf %137, %138 : vector<8x128xf32>
    %140 = arith.truncf %139 : vector<8x128xf32> to vector<8x128xbf16>
    %c0_59 = arith.constant 0 : index
    %c0_60 = arith.constant 0 : index
    %c0_61 = arith.constant 0 : index
    %141 = vector.load %arg10[%c0_59, %c0_60, %c0_61] : memref<6x128x256xbf16, #tpu.memory_space<vmem>>, vector<1x128x256xbf16>
    %142 = vector.shape_cast %141 : vector<1x128x256xbf16> to vector<128x256xbf16>
    %cst_62 = arith.constant dense<0.000000e+00> : vector<8x256xf32>
    %143 = tpu.matmul %140, %142, %cst_62 {dimension_numbers = #tpu.dot_dimension_numbers<[1], [0], [0], [1], [0, 0, 1, 1], [], []>} : vector<8x128xbf16>, vector<128x256xbf16>, vector<8x256xf32> -> vector<8x256xf32>
    %c0_63 = arith.constant 0 : index
    %c0_64 = arith.constant 0 : index
    %c0_65 = arith.constant 0 : index
    %144 = vector.load %arg11[%c0_63, %c0_64, %c0_65] : memref<6x1x256xf32, #tpu.memory_space<vmem>>, vector<1x1x256xf32>
    %145 = vector.shape_cast %144 : vector<1x1x256xf32> to vector<1x256xf32>
    %146 = vector.broadcast %145 : vector<1x256xf32> to vector<8x256xf32>
    %147 = arith.addf %143, %146 : vector<8x256xf32>
    %cst_66 = arith.constant 5.000000e-01 : f32
    %148 = vector.broadcast %cst_66 : f32 to vector<8x256xf32>
    %149 = arith.mulf %148, %147 : vector<8x256xf32>
    %cst_67 = arith.constant 0.707106769 : f32
    %150 = vector.broadcast %cst_67 : f32 to vector<8x256xf32>
    %151 = arith.mulf %147, %150 : vector<8x256xf32>
    %152 = math.erf %151 : vector<8x256xf32>
    %cst_68 = arith.constant 1.000000e+00 : f32
    %153 = vector.broadcast %cst_68 : f32 to vector<8x256xf32>
    %154 = arith.addf %153, %152 : vector<8x256xf32>
    %155 = arith.mulf %149, %154 : vector<8x256xf32>
    %156 = arith.truncf %155 : vector<8x256xf32> to vector<8x256xbf16>
    %c0_69 = arith.constant 0 : index
    %c0_70 = arith.constant 0 : index
    %c0_71 = arith.constant 0 : index
    %157 = vector.load %arg12[%c0_69, %c0_70, %c0_71] : memref<6x256x128xbf16, #tpu.memory_space<vmem>>, vector<1x256x128xbf16>
    %158 = vector.shape_cast %157 : vector<1x256x128xbf16> to vector<256x128xbf16>
    %cst_72 = arith.constant dense<0.000000e+00> : vector<8x128xf32>
    %159 = tpu.matmul %156, %158, %cst_72 {dimension_numbers = #tpu.dot_dimension_numbers<[1], [0], [0], [1], [0, 0, 1, 1], [], []>} : vector<8x256xbf16>, vector<256x128xbf16>, vector<8x128xf32> -> vector<8x128xf32>
    %c0_73 = arith.constant 0 : index
    %c0_74 = arith.constant 0 : index
    %c0_75 = arith.constant 0 : index
    %160 = vector.load %arg13[%c0_73, %c0_74, %c0_75] : memref<6x1x128xf32, #tpu.memory_space<vmem>>, vector<1x1x128xf32>
    %161 = vector.shape_cast %160 : vector<1x1x128xf32> to vector<1x128xf32>
    %162 = vector.broadcast %161 : vector<1x128xf32> to vector<8x128xf32>
    %163 = arith.addf %159, %162 : vector<8x128xf32>
    %cst_76 = arith.constant 5.000000e-01 : f32
    %164 = vector.broadcast %cst_76 : f32 to vector<8x128xf32>
    %165 = arith.mulf %164, %163 : vector<8x128xf32>
    %cst_77 = arith.constant 0.707106769 : f32
    %166 = vector.broadcast %cst_77 : f32 to vector<8x128xf32>
    %167 = arith.mulf %163, %166 : vector<8x128xf32>
    %168 = math.erf %167 : vector<8x128xf32>
    %cst_78 = arith.constant 1.000000e+00 : f32
    %169 = vector.broadcast %cst_78 : f32 to vector<8x128xf32>
    %170 = arith.addf %169, %168 : vector<8x128xf32>
    %171 = arith.mulf %165, %170 : vector<8x128xf32>
    %172 = arith.addf %113, %171 : vector<8x128xf32>
    %c1 = arith.constant 1 : index
    %c0_79 = arith.constant 0 : index
    %c0_80 = arith.constant 0 : index
    %173 = vector.load %arg2[%c1, %c0_79, %c0_80] : memref<6x1x128xf32, #tpu.memory_space<vmem>>, vector<1x1x128xf32>
    %174 = vector.shape_cast %173 : vector<1x1x128xf32> to vector<1x128xf32>
    %c1_81 = arith.constant 1 : index
    %c0_82 = arith.constant 0 : index
    %c0_83 = arith.constant 0 : index
    %175 = vector.load %arg3[%c1_81, %c0_82, %c0_83] : memref<6x1x128xf32, #tpu.memory_space<vmem>>, vector<1x1x128xf32>
    %176 = vector.shape_cast %175 : vector<1x1x128xf32> to vector<1x128xf32>
    %cst_84 = arith.constant dense<0.000000e+00> : vector<8xf32>
    %177 = vector.multi_reduction <add>, %172, %cst_84 [1] : vector<8x128xf32> to vector<8xf32>
    %178 = vector.shape_cast %177 : vector<8xf32> to vector<8x1xf32>
    %cst_85 = arith.constant 1.280000e+02 : f32
    %179 = vector.broadcast %cst_85 : f32 to vector<8x1xf32>
    %180 = arith.divf %178, %179 : vector<8x1xf32>
    %181 = vector.broadcast %180 : vector<8x1xf32> to vector<8x128xf32>
    %182 = arith.subf %172, %181 : vector<8x128xf32>
    %183 = arith.mulf %182, %182 : vector<8x128xf32>
    %cst_86 = arith.constant dense<0.000000e+00> : vector<8xf32>
    %184 = vector.multi_reduction <add>, %183, %cst_86 [1] : vector<8x128xf32> to vector<8xf32>
    %185 = vector.shape_cast %184 : vector<8xf32> to vector<8x1xf32>
    %cst_87 = arith.constant 1.280000e+02 : f32
    %186 = vector.broadcast %cst_87 : f32 to vector<8x1xf32>
    %187 = arith.divf %185, %186 : vector<8x1xf32>
    %188 = vector.broadcast %180 : vector<8x1xf32> to vector<8x128xf32>
    %189 = arith.subf %172, %188 : vector<8x128xf32>
    %cst_88 = arith.constant 9.99999997E-7 : f32
    %190 = vector.broadcast %cst_88 : f32 to vector<8x1xf32>
    %191 = arith.addf %187, %190 : vector<8x1xf32>
    %192 = math.rsqrt %191 : vector<8x1xf32>
    %193 = vector.broadcast %192 : vector<8x1xf32> to vector<8x128xf32>
    %194 = arith.mulf %189, %193 : vector<8x128xf32>
    %195 = vector.broadcast %174 : vector<1x128xf32> to vector<8x128xf32>
    %196 = arith.mulf %194, %195 : vector<8x128xf32>
    %197 = vector.broadcast %176 : vector<1x128xf32> to vector<8x128xf32>
    %198 = arith.addf %196, %197 : vector<8x128xf32>
    %199 = arith.truncf %198 : vector<8x128xf32> to vector<8x128xbf16>
    %c1_89 = arith.constant 1 : index
    %c0_90 = arith.constant 0 : index
    %c0_91 = arith.constant 0 : index
    %200 = vector.load %arg4[%c1_89, %c0_90, %c0_91] : memref<6x128x384xbf16, #tpu.memory_space<vmem>>, vector<1x128x384xbf16>
    %201 = vector.shape_cast %200 : vector<1x128x384xbf16> to vector<128x384xbf16>
    %cst_92 = arith.constant dense<0.000000e+00> : vector<8x384xf32>
    %202 = tpu.matmul %199, %201, %cst_92 {dimension_numbers = #tpu.dot_dimension_numbers<[1], [0], [0], [1], [0, 0, 1, 1], [], []>} : vector<8x128xbf16>, vector<128x384xbf16>, vector<8x384xf32> -> vector<8x384xf32>
    %c1_93 = arith.constant 1 : index
    %c0_94 = arith.constant 0 : index
    %c0_95 = arith.constant 0 : index
    %203 = vector.load %arg5[%c1_93, %c0_94, %c0_95] : memref<6x1x384xf32, #tpu.memory_space<vmem>>, vector<1x1x384xf32>
    %204 = vector.shape_cast %203 : vector<1x1x384xf32> to vector<1x384xf32>
    %205 = vector.broadcast %204 : vector<1x384xf32> to vector<8x384xf32>
    %206 = arith.addf %202, %205 : vector<8x384xf32>
    %207 = arith.truncf %206 : vector<8x384xf32> to vector<8x384xbf16>
    %208 = vector.extract_strided_slice %207 {offsets = [0, 0], sizes = [8, 32], strides = [1, 1]} : vector<8x384xbf16> to vector<8x32xbf16>
    %209 = vector.extract_strided_slice %207 {offsets = [0, 128], sizes = [8, 32], strides = [1, 1]} : vector<8x384xbf16> to vector<8x32xbf16>
    %210 = vector.extract_strided_slice %207 {offsets = [0, 256], sizes = [8, 32], strides = [1, 1]} : vector<8x384xbf16> to vector<8x32xbf16>
    %cst_96 = arith.constant dense<0.000000e+00> : vector<8x8xf32>
    %211 = tpu.matmul %208, %209, %cst_96 {dimension_numbers = #tpu.dot_dimension_numbers<[1], [1], [0], [0], [0, 0, 1, 0], [], []>} : vector<8x32xbf16>, vector<8x32xbf16>, vector<8x8xf32> -> vector<8x8xf32>
    %cst_97 = arith.constant dense<0xFF800000> : vector<8xf32>
    %212 = vector.multi_reduction <maximumf>, %211, %cst_97 [1] : vector<8x8xf32> to vector<8xf32>
    %213 = vector.shape_cast %212 : vector<8xf32> to vector<8x1xf32>
    %214 = vector.broadcast %213 : vector<8x1xf32> to vector<8x8xf32>
    %215 = arith.subf %211, %214 : vector<8x8xf32>
    %216 = math.exp %215 : vector<8x8xf32>
    %cst_98 = arith.constant dense<0.000000e+00> : vector<8xf32>
    %217 = vector.multi_reduction <add>, %216, %cst_98 [1] : vector<8x8xf32> to vector<8xf32>
    %218 = vector.shape_cast %217 : vector<8xf32> to vector<8x1xf32>
    %219 = tpu.reciprocal %218 {approx = true} : vector<8x1xf32> -> vector<8x1xf32>
    %220 = vector.broadcast %219 : vector<8x1xf32> to vector<8x8xf32>
    %221 = arith.mulf %216, %220 : vector<8x8xf32>
    %222 = arith.truncf %221 : vector<8x8xf32> to vector<8x8xbf16>
    %cst_99 = arith.constant dense<0.000000e+00> : vector<8x32xf32>
    %223 = tpu.matmul %222, %210, %cst_99 {dimension_numbers = #tpu.dot_dimension_numbers<[1], [0], [0], [1], [0, 0, 1, 1], [], []>} : vector<8x8xbf16>, vector<8x32xbf16>, vector<8x32xf32> -> vector<8x32xf32>
    %c0_100 = arith.constant 0 : index
    %c0_101 = arith.constant 0 : index
    %224 = vector.load %arg15[%c0_100, %c0_101] : memref<8x128xf32, #tpu.memory_space<vmem>>, vector<8x32xf32>
    tpu.vector_store %arg15[%c0_100, %c0_101], %223 {strides = array<i32>} : memref<8x128xf32, #tpu.memory_space<vmem>>, vector<8x32xf32>,
    %225 = vector.extract_strided_slice %207 {offsets = [0, 32], sizes = [8, 32], strides = [1, 1]} : vector<8x384xbf16> to vector<8x32xbf16>
    %226 = vector.extract_strided_slice %207 {offsets = [0, 160], sizes = [8, 32], strides = [1, 1]} : vector<8x384xbf16> to vector<8x32xbf16>
    %227 = vector.extract_strided_slice %207 {offsets = [0, 288], sizes = [8, 32], strides = [1, 1]} : vector<8x384xbf16> to vector<8x32xbf16>
    %cst_102 = arith.constant dense<0.000000e+00> : vector<8x8xf32>
    %228 = tpu.matmul %225, %226, %cst_102 {dimension_numbers = #tpu.dot_dimension_numbers<[1], [1], [0], [0], [0, 0, 1, 0], [], []>} : vector<8x32xbf16>, vector<8x32xbf16>, vector<8x8xf32> -> vector<8x8xf32>
    %cst_103 = arith.constant dense<0xFF800000> : vector<8xf32>
    %229 = vector.multi_reduction <maximumf>, %228, %cst_103 [1] : vector<8x8xf32> to vector<8xf32>
    %230 = vector.shape_cast %229 : vector<8xf32> to vector<8x1xf32>
    %231 = vector.broadcast %230 : vector<8x1xf32> to vector<8x8xf32>
    %232 = arith.subf %228, %231 : vector<8x8xf32>
    %233 = math.exp %232 : vector<8x8xf32>
    %cst_104 = arith.constant dense<0.000000e+00> : vector<8xf32>
    %234 = vector.multi_reduction <add>, %233, %cst_104 [1] : vector<8x8xf32> to vector<8xf32>
    %235 = vector.shape_cast %234 : vector<8xf32> to vector<8x1xf32>
    %236 = tpu.reciprocal %235 {approx = true} : vector<8x1xf32> -> vector<8x1xf32>
    %237 = vector.broadcast %236 : vector<8x1xf32> to vector<8x8xf32>
    %238 = arith.mulf %233, %237 : vector<8x8xf32>
    %239 = arith.truncf %238 : vector<8x8xf32> to vector<8x8xbf16>
    %cst_105 = arith.constant dense<0.000000e+00> : vector<8x32xf32>
    %240 = tpu.matmul %239, %227, %cst_105 {dimension_numbers = #tpu.dot_dimension_numbers<[1], [0], [0], [1], [0, 0, 1, 1], [], []>} : vector<8x8xbf16>, vector<8x32xbf16>, vector<8x32xf32> -> vector<8x32xf32>
    %c0_106 = arith.constant 0 : index
    %c32_107 = arith.constant 32 : index
    %241 = vector.load %arg15[%c0_106, %c32_107] : memref<8x128xf32, #tpu.memory_space<vmem>>, vector<8x32xf32>
    tpu.vector_store %arg15[%c0_106, %c32_107], %240 {strides = array<i32>} : memref<8x128xf32, #tpu.memory_space<vmem>>, vector<8x32xf32>,
    %242 = vector.extract_strided_slice %207 {offsets = [0, 64], sizes = [8, 32], strides = [1, 1]} : vector<8x384xbf16> to vector<8x32xbf16>
    %243 = vector.extract_strided_slice %207 {offsets = [0, 192], sizes = [8, 32], strides = [1, 1]} : vector<8x384xbf16> to vector<8x32xbf16>
    %244 = vector.extract_strided_slice %207 {offsets = [0, 320], sizes = [8, 32], strides = [1, 1]} : vector<8x384xbf16> to vector<8x32xbf16>
    %cst_108 = arith.constant dense<0.000000e+00> : vector<8x8xf32>
    %245 = tpu.matmul %242, %243, %cst_108 {dimension_numbers = #tpu.dot_dimension_numbers<[1], [1], [0], [0], [0, 0, 1, 0], [], []>} : vector<8x32xbf16>, vector<8x32xbf16>, vector<8x8xf32> -> vector<8x8xf32>
    %cst_109 = arith.constant dense<0xFF800000> : vector<8xf32>
    %246 = vector.multi_reduction <maximumf>, %245, %cst_109 [1] : vector<8x8xf32> to vector<8xf32>
    %247 = vector.shape_cast %246 : vector<8xf32> to vector<8x1xf32>
    %248 = vector.broadcast %247 : vector<8x1xf32> to vector<8x8xf32>
    %249 = arith.subf %245, %248 : vector<8x8xf32>
    %250 = math.exp %249 : vector<8x8xf32>
    %cst_110 = arith.constant dense<0.000000e+00> : vector<8xf32>
    %251 = vector.multi_reduction <add>, %250, %cst_110 [1] : vector<8x8xf32> to vector<8xf32>
    %252 = vector.shape_cast %251 : vector<8xf32> to vector<8x1xf32>
    %253 = tpu.reciprocal %252 {approx = true} : vector<8x1xf32> -> vector<8x1xf32>
    %254 = vector.broadcast %253 : vector<8x1xf32> to vector<8x8xf32>
    %255 = arith.mulf %250, %254 : vector<8x8xf32>
    %256 = arith.truncf %255 : vector<8x8xf32> to vector<8x8xbf16>
    %cst_111 = arith.constant dense<0.000000e+00> : vector<8x32xf32>
    %257 = tpu.matmul %256, %244, %cst_111 {dimension_numbers = #tpu.dot_dimension_numbers<[1], [0], [0], [1], [0, 0, 1, 1], [], []>} : vector<8x8xbf16>, vector<8x32xbf16>, vector<8x32xf32> -> vector<8x32xf32>
    %c0_112 = arith.constant 0 : index
    %c64_113 = arith.constant 64 : index
    %258 = vector.load %arg15[%c0_112, %c64_113] : memref<8x128xf32, #tpu.memory_space<vmem>>, vector<8x32xf32>
    tpu.vector_store %arg15[%c0_112, %c64_113], %257 {strides = array<i32>} : memref<8x128xf32, #tpu.memory_space<vmem>>, vector<8x32xf32>,
    %259 = vector.extract_strided_slice %207 {offsets = [0, 96], sizes = [8, 32], strides = [1, 1]} : vector<8x384xbf16> to vector<8x32xbf16>
    %260 = vector.extract_strided_slice %207 {offsets = [0, 224], sizes = [8, 32], strides = [1, 1]} : vector<8x384xbf16> to vector<8x32xbf16>
    %261 = vector.extract_strided_slice %207 {offsets = [0, 352], sizes = [8, 32], strides = [1, 1]} : vector<8x384xbf16> to vector<8x32xbf16>
    %cst_114 = arith.constant dense<0.000000e+00> : vector<8x8xf32>
    %262 = tpu.matmul %259, %260, %cst_114 {dimension_numbers = #tpu.dot_dimension_numbers<[1], [1], [0], [0], [0, 0, 1, 0], [], []>} : vector<8x32xbf16>, vector<8x32xbf16>, vector<8x8xf32> -> vector<8x8xf32>
    %cst_115 = arith.constant dense<0xFF800000> : vector<8xf32>
    %263 = vector.multi_reduction <maximumf>, %262, %cst_115 [1] : vector<8x8xf32> to vector<8xf32>
    %264 = vector.shape_cast %263 : vector<8xf32> to vector<8x1xf32>
    %265 = vector.broadcast %264 : vector<8x1xf32> to vector<8x8xf32>
    %266 = arith.subf %262, %265 : vector<8x8xf32>
    %267 = math.exp %266 : vector<8x8xf32>
    %cst_116 = arith.constant dense<0.000000e+00> : vector<8xf32>
    %268 = vector.multi_reduction <add>, %267, %cst_116 [1] : vector<8x8xf32> to vector<8xf32>
    %269 = vector.shape_cast %268 : vector<8xf32> to vector<8x1xf32>
    %270 = tpu.reciprocal %269 {approx = true} : vector<8x1xf32> -> vector<8x1xf32>
    %271 = vector.broadcast %270 : vector<8x1xf32> to vector<8x8xf32>
    %272 = arith.mulf %267, %271 : vector<8x8xf32>
    %273 = arith.truncf %272 : vector<8x8xf32> to vector<8x8xbf16>
    %cst_117 = arith.constant dense<0.000000e+00> : vector<8x32xf32>
    %274 = tpu.matmul %273, %261, %cst_117 {dimension_numbers = #tpu.dot_dimension_numbers<[1], [0], [0], [1], [0, 0, 1, 1], [], []>} : vector<8x8xbf16>, vector<8x32xbf16>, vector<8x32xf32> -> vector<8x32xf32>
    %c0_118 = arith.constant 0 : index
    %c96_119 = arith.constant 96 : index
    %275 = vector.load %arg15[%c0_118, %c96_119] : memref<8x128xf32, #tpu.memory_space<vmem>>, vector<8x32xf32>
    tpu.vector_store %arg15[%c0_118, %c96_119], %274 {strides = array<i32>} : memref<8x128xf32, #tpu.memory_space<vmem>>, vector<8x32xf32>,
    %c0_120 = arith.constant 0 : index
    %c0_121 = arith.constant 0 : index
    %276 = vector.load %arg15[%c0_120, %c0_121] : memref<8x128xf32, #tpu.memory_space<vmem>>, vector<8x128xf32>
    %277 = arith.truncf %276 : vector<8x128xf32> to vector<8x128xbf16>
    %c1_122 = arith.constant 1 : index
    %c0_123 = arith.constant 0 : index
    %c0_124 = arith.constant 0 : index
    %278 = vector.load %arg6[%c1_122, %c0_123, %c0_124] : memref<6x128x128xbf16, #tpu.memory_space<vmem>>, vector<1x128x128xbf16>
    %279 = vector.shape_cast %278 : vector<1x128x128xbf16> to vector<128x128xbf16>
    %cst_125 = arith.constant dense<0.000000e+00> : vector<8x128xf32>
    %280 = tpu.matmul %277, %279, %cst_125 {dimension_numbers = #tpu.dot_dimension_numbers<[1], [0], [0], [1], [0, 0, 1, 1], [], []>} : vector<8x128xbf16>, vector<128x128xbf16>, vector<8x128xf32> -> vector<8x128xf32>
    %c1_126 = arith.constant 1 : index
    %c0_127 = arith.constant 0 : index
    %c0_128 = arith.constant 0 : index
    %281 = vector.load %arg7[%c1_126, %c0_127, %c0_128] : memref<6x1x128xf32, #tpu.memory_space<vmem>>, vector<1x1x128xf32>
    %282 = vector.shape_cast %281 : vector<1x1x128xf32> to vector<1x128xf32>
    %283 = vector.broadcast %282 : vector<1x128xf32> to vector<8x128xf32>
    %284 = arith.addf %280, %283 : vector<8x128xf32>
    %285 = arith.addf %172, %284 : vector<8x128xf32>
    %c1_129 = arith.constant 1 : index
    %c0_130 = arith.constant 0 : index
    %c0_131 = arith.constant 0 : index
    %286 = vector.load %arg8[%c1_129, %c0_130, %c0_131] : memref<6x1x128xf32, #tpu.memory_space<vmem>>, vector<1x1x128xf32>
    %287 = vector.shape_cast %286 : vector<1x1x128xf32> to vector<1x128xf32>
    %c1_132 = arith.constant 1 : index
    %c0_133 = arith.constant 0 : index
    %c0_134 = arith.constant 0 : index
    %288 = vector.load %arg9[%c1_132, %c0_133, %c0_134] : memref<6x1x128xf32, #tpu.memory_space<vmem>>, vector<1x1x128xf32>
    %289 = vector.shape_cast %288 : vector<1x1x128xf32> to vector<1x128xf32>
    %cst_135 = arith.constant dense<0.000000e+00> : vector<8xf32>
    %290 = vector.multi_reduction <add>, %285, %cst_135 [1] : vector<8x128xf32> to vector<8xf32>
    %291 = vector.shape_cast %290 : vector<8xf32> to vector<8x1xf32>
    %cst_136 = arith.constant 1.280000e+02 : f32
    %292 = vector.broadcast %cst_136 : f32 to vector<8x1xf32>
    %293 = arith.divf %291, %292 : vector<8x1xf32>
    %294 = vector.broadcast %293 : vector<8x1xf32> to vector<8x128xf32>
    %295 = arith.subf %285, %294 : vector<8x128xf32>
    %296 = arith.mulf %295, %295 : vector<8x128xf32>
    %cst_137 = arith.constant dense<0.000000e+00> : vector<8xf32>
    %297 = vector.multi_reduction <add>, %296, %cst_137 [1] : vector<8x128xf32> to vector<8xf32>
    %298 = vector.shape_cast %297 : vector<8xf32> to vector<8x1xf32>
    %cst_138 = arith.constant 1.280000e+02 : f32
    %299 = vector.broadcast %cst_138 : f32 to vector<8x1xf32>
    %300 = arith.divf %298, %299 : vector<8x1xf32>
    %301 = vector.broadcast %293 : vector<8x1xf32> to vector<8x128xf32>
    %302 = arith.subf %285, %301 : vector<8x128xf32>
    %cst_139 = arith.constant 9.99999997E-7 : f32
    %303 = vector.broadcast %cst_139 : f32 to vector<8x1xf32>
    %304 = arith.addf %300, %303 : vector<8x1xf32>
    %305 = math.rsqrt %304 : vector<8x1xf32>
    %306 = vector.broadcast %305 : vector<8x1xf32> to vector<8x128xf32>
    %307 = arith.mulf %302, %306 : vector<8x128xf32>
    %308 = vector.broadcast %287 : vector<1x128xf32> to vector<8x128xf32>
    %309 = arith.mulf %307, %308 : vector<8x128xf32>
    %310 = vector.broadcast %289 : vector<1x128xf32> to vector<8x128xf32>
    %311 = arith.addf %309, %310 : vector<8x128xf32>
    %312 = arith.truncf %311 : vector<8x128xf32> to vector<8x128xbf16>
    %c1_140 = arith.constant 1 : index
    %c0_141 = arith.constant 0 : index
    %c0_142 = arith.constant 0 : index
    %313 = vector.load %arg10[%c1_140, %c0_141, %c0_142] : memref<6x128x256xbf16, #tpu.memory_space<vmem>>, vector<1x128x256xbf16>
    %314 = vector.shape_cast %313 : vector<1x128x256xbf16> to vector<128x256xbf16>
    %cst_143 = arith.constant dense<0.000000e+00> : vector<8x256xf32>
    %315 = tpu.matmul %312, %314, %cst_143 {dimension_numbers = #tpu.dot_dimension_numbers<[1], [0], [0], [1], [0, 0, 1, 1], [], []>} : vector<8x128xbf16>, vector<128x256xbf16>, vector<8x256xf32> -> vector<8x256xf32>
    %c1_144 = arith.constant 1 : index
    %c0_145 = arith.constant 0 : index
    %c0_146 = arith.constant 0 : index
    %316 = vector.load %arg11[%c1_144, %c0_145, %c0_146] : memref<6x1x256xf32, #tpu.memory_space<vmem>>, vector<1x1x256xf32>
    %317 = vector.shape_cast %316 : vector<1x1x256xf32> to vector<1x256xf32>
    %318 = vector.broadcast %317 : vector<1x256xf32> to vector<8x256xf32>
    %319 = arith.addf %315, %318 : vector<8x256xf32>
    %cst_147 = arith.constant 5.000000e-01 : f32
    %320 = vector.broadcast %cst_147 : f32 to vector<8x256xf32>
    %321 = arith.mulf %320, %319 : vector<8x256xf32>
    %cst_148 = arith.constant 0.707106769 : f32
    %322 = vector.broadcast %cst_148 : f32 to vector<8x256xf32>
    %323 = arith.mulf %319, %322 : vector<8x256xf32>
    %324 = math.erf %323 : vector<8x256xf32>
    %cst_149 = arith.constant 1.000000e+00 : f32
    %325 = vector.broadcast %cst_149 : f32 to vector<8x256xf32>
    %326 = arith.addf %325, %324 : vector<8x256xf32>
    %327 = arith.mulf %321, %326 : vector<8x256xf32>
    %328 = arith.truncf %327 : vector<8x256xf32> to vector<8x256xbf16>
    %c1_150 = arith.constant 1 : index
    %c0_151 = arith.constant 0 : index
    %c0_152 = arith.constant 0 : index
    %329 = vector.load %arg12[%c1_150, %c0_151, %c0_152] : memref<6x256x128xbf16, #tpu.memory_space<vmem>>, vector<1x256x128xbf16>
    %330 = vector.shape_cast %329 : vector<1x256x128xbf16> to vector<256x128xbf16>
    %cst_153 = arith.constant dense<0.000000e+00> : vector<8x128xf32>
    %331 = tpu.matmul %328, %330, %cst_153 {dimension_numbers = #tpu.dot_dimension_numbers<[1], [0], [0], [1], [0, 0, 1, 1], [], []>} : vector<8x256xbf16>, vector<256x128xbf16>, vector<8x128xf32> -> vector<8x128xf32>
    %c1_154 = arith.constant 1 : index
    %c0_155 = arith.constant 0 : index
    %c0_156 = arith.constant 0 : index
    %332 = vector.load %arg13[%c1_154, %c0_155, %c0_156] : memref<6x1x128xf32, #tpu.memory_space<vmem>>, vector<1x1x128xf32>
    %333 = vector.shape_cast %332 : vector<1x1x128xf32> to vector<1x128xf32>
    %334 = vector.broadcast %333 : vector<1x128xf32> to vector<8x128xf32>
    %335 = arith.addf %331, %334 : vector<8x128xf32>
    %cst_157 = arith.constant 5.000000e-01 : f32
    %336 = vector.broadcast %cst_157 : f32 to vector<8x128xf32>
    %337 = arith.mulf %336, %335 : vector<8x128xf32>
    %cst_158 = arith.constant 0.707106769 : f32
    %338 = vector.broadcast %cst_158 : f32 to vector<8x128xf32>
    %339 = arith.mulf %335, %338 : vector<8x128xf32>
    %340 = math.erf %339 : vector<8x128xf32>
    %cst_159 = arith.constant 1.000000e+00 : f32
    %341 = vector.broadcast %cst_159 : f32 to vector<8x128xf32>
    %342 = arith.addf %341, %340 : vector<8x128xf32>
    %343 = arith.mulf %337, %342 : vector<8x128xf32>
    %344 = arith.addf %285, %343 : vector<8x128xf32>
    %c2 = arith.constant 2 : index
    %c0_160 = arith.constant 0 : index
    %c0_161 = arith.constant 0 : index
    %345 = vector.load %arg2[%c2, %c0_160, %c0_161] : memref<6x1x128xf32, #tpu.memory_space<vmem>>, vector<1x1x128xf32>
    %346 = vector.shape_cast %345 : vector<1x1x128xf32> to vector<1x128xf32>
    %c2_162 = arith.constant 2 : index
    %c0_163 = arith.constant 0 : index
    %c0_164 = arith.constant 0 : index
    %347 = vector.load %arg3[%c2_162, %c0_163, %c0_164] : memref<6x1x128xf32, #tpu.memory_space<vmem>>, vector<1x1x128xf32>
    %348 = vector.shape_cast %347 : vector<1x1x128xf32> to vector<1x128xf32>
    %cst_165 = arith.constant dense<0.000000e+00> : vector<8xf32>
    %349 = vector.multi_reduction <add>, %344, %cst_165 [1] : vector<8x128xf32> to vector<8xf32>
    %350 = vector.shape_cast %349 : vector<8xf32> to vector<8x1xf32>
    %cst_166 = arith.constant 1.280000e+02 : f32
    %351 = vector.broadcast %cst_166 : f32 to vector<8x1xf32>
    %352 = arith.divf %350, %351 : vector<8x1xf32>
    %353 = vector.broadcast %352 : vector<8x1xf32> to vector<8x128xf32>
    %354 = arith.subf %344, %353 : vector<8x128xf32>
    %355 = arith.mulf %354, %354 : vector<8x128xf32>
    %cst_167 = arith.constant dense<0.000000e+00> : vector<8xf32>
    %356 = vector.multi_reduction <add>, %355, %cst_167 [1] : vector<8x128xf32> to vector<8xf32>
    %357 = vector.shape_cast %356 : vector<8xf32> to vector<8x1xf32>
    %cst_168 = arith.constant 1.280000e+02 : f32
    %358 = vector.broadcast %cst_168 : f32 to vector<8x1xf32>
    %359 = arith.divf %357, %358 : vector<8x1xf32>
    %360 = vector.broadcast %352 : vector<8x1xf32> to vector<8x128xf32>
    %361 = arith.subf %344, %360 : vector<8x128xf32>
    %cst_169 = arith.constant 9.99999997E-7 : f32
    %362 = vector.broadcast %cst_169 : f32 to vector<8x1xf32>
    %363 = arith.addf %359, %362 : vector<8x1xf32>
    %364 = math.rsqrt %363 : vector<8x1xf32>
    %365 = vector.broadcast %364 : vector<8x1xf32> to vector<8x128xf32>
    %366 = arith.mulf %361, %365 : vector<8x128xf32>
    %367 = vector.broadcast %346 : vector<1x128xf32> to vector<8x128xf32>
    %368 = arith.mulf %366, %367 : vector<8x128xf32>
    %369 = vector.broadcast %348 : vector<1x128xf32> to vector<8x128xf32>
    %370 = arith.addf %368, %369 : vector<8x128xf32>
    %371 = arith.truncf %370 : vector<8x128xf32> to vector<8x128xbf16>
    %c2_170 = arith.constant 2 : index
    %c0_171 = arith.constant 0 : index
    %c0_172 = arith.constant 0 : index
    %372 = vector.load %arg4[%c2_170, %c0_171, %c0_172] : memref<6x128x384xbf16, #tpu.memory_space<vmem>>, vector<1x128x384xbf16>
    %373 = vector.shape_cast %372 : vector<1x128x384xbf16> to vector<128x384xbf16>
    %cst_173 = arith.constant dense<0.000000e+00> : vector<8x384xf32>
    %374 = tpu.matmul %371, %373, %cst_173 {dimension_numbers = #tpu.dot_dimension_numbers<[1], [0], [0], [1], [0, 0, 1, 1], [], []>} : vector<8x128xbf16>, vector<128x384xbf16>, vector<8x384xf32> -> vector<8x384xf32>
    %c2_174 = arith.constant 2 : index
    %c0_175 = arith.constant 0 : index
    %c0_176 = arith.constant 0 : index
    %375 = vector.load %arg5[%c2_174, %c0_175, %c0_176] : memref<6x1x384xf32, #tpu.memory_space<vmem>>, vector<1x1x384xf32>
    %376 = vector.shape_cast %375 : vector<1x1x384xf32> to vector<1x384xf32>
    %377 = vector.broadcast %376 : vector<1x384xf32> to vector<8x384xf32>
    %378 = arith.addf %374, %377 : vector<8x384xf32>
    %379 = arith.truncf %378 : vector<8x384xf32> to vector<8x384xbf16>
    %380 = vector.extract_strided_slice %379 {offsets = [0, 0], sizes = [8, 32], strides = [1, 1]} : vector<8x384xbf16> to vector<8x32xbf16>
    %381 = vector.extract_strided_slice %379 {offsets = [0, 128], sizes = [8, 32], strides = [1, 1]} : vector<8x384xbf16> to vector<8x32xbf16>
    %382 = vector.extract_strided_slice %379 {offsets = [0, 256], sizes = [8, 32], strides = [1, 1]} : vector<8x384xbf16> to vector<8x32xbf16>
    %cst_177 = arith.constant dense<0.000000e+00> : vector<8x8xf32>
    %383 = tpu.matmul %380, %381, %cst_177 {dimension_numbers = #tpu.dot_dimension_numbers<[1], [1], [0], [0], [0, 0, 1, 0], [], []>} : vector<8x32xbf16>, vector<8x32xbf16>, vector<8x8xf32> -> vector<8x8xf32>
    %cst_178 = arith.constant dense<0xFF800000> : vector<8xf32>
    %384 = vector.multi_reduction <maximumf>, %383, %cst_178 [1] : vector<8x8xf32> to vector<8xf32>
    %385 = vector.shape_cast %384 : vector<8xf32> to vector<8x1xf32>
    %386 = vector.broadcast %385 : vector<8x1xf32> to vector<8x8xf32>
    %387 = arith.subf %383, %386 : vector<8x8xf32>
    %388 = math.exp %387 : vector<8x8xf32>
    %cst_179 = arith.constant dense<0.000000e+00> : vector<8xf32>
    %389 = vector.multi_reduction <add>, %388, %cst_179 [1] : vector<8x8xf32> to vector<8xf32>
    %390 = vector.shape_cast %389 : vector<8xf32> to vector<8x1xf32>
    %391 = tpu.reciprocal %390 {approx = true} : vector<8x1xf32> -> vector<8x1xf32>
    %392 = vector.broadcast %391 : vector<8x1xf32> to vector<8x8xf32>
    %393 = arith.mulf %388, %392 : vector<8x8xf32>
    %394 = arith.truncf %393 : vector<8x8xf32> to vector<8x8xbf16>
    %cst_180 = arith.constant dense<0.000000e+00> : vector<8x32xf32>
    %395 = tpu.matmul %394, %382, %cst_180 {dimension_numbers = #tpu.dot_dimension_numbers<[1], [0], [0], [1], [0, 0, 1, 1], [], []>} : vector<8x8xbf16>, vector<8x32xbf16>, vector<8x32xf32> -> vector<8x32xf32>
    %c0_181 = arith.constant 0 : index
    %c0_182 = arith.constant 0 : index
    %396 = vector.load %arg15[%c0_181, %c0_182] : memref<8x128xf32, #tpu.memory_space<vmem>>, vector<8x32xf32>
    tpu.vector_store %arg15[%c0_181, %c0_182], %395 {strides = array<i32>} : memref<8x128xf32, #tpu.memory_space<vmem>>, vector<8x32xf32>,
    %397 = vector.extract_strided_slice %379 {offsets = [0, 32], sizes = [8, 32], strides = [1, 1]} : vector<8x384xbf16> to vector<8x32xbf16>
    %398 = vector.extract_strided_slice %379 {offsets = [0, 160], sizes = [8, 32], strides = [1, 1]} : vector<8x384xbf16> to vector<8x32xbf16>
    %399 = vector.extract_strided_slice %379 {offsets = [0, 288], sizes = [8, 32], strides = [1, 1]} : vector<8x384xbf16> to vector<8x32xbf16>
    %cst_183 = arith.constant dense<0.000000e+00> : vector<8x8xf32>
    %400 = tpu.matmul %397, %398, %cst_183 {dimension_numbers = #tpu.dot_dimension_numbers<[1], [1], [0], [0], [0, 0, 1, 0], [], []>} : vector<8x32xbf16>, vector<8x32xbf16>, vector<8x8xf32> -> vector<8x8xf32>
    %cst_184 = arith.constant dense<0xFF800000> : vector<8xf32>
    %401 = vector.multi_reduction <maximumf>, %400, %cst_184 [1] : vector<8x8xf32> to vector<8xf32>
    %402 = vector.shape_cast %401 : vector<8xf32> to vector<8x1xf32>
    %403 = vector.broadcast %402 : vector<8x1xf32> to vector<8x8xf32>
    %404 = arith.subf %400, %403 : vector<8x8xf32>
    %405 = math.exp %404 : vector<8x8xf32>
    %cst_185 = arith.constant dense<0.000000e+00> : vector<8xf32>
    %406 = vector.multi_reduction <add>, %405, %cst_185 [1] : vector<8x8xf32> to vector<8xf32>
    %407 = vector.shape_cast %406 : vector<8xf32> to vector<8x1xf32>
    %408 = tpu.reciprocal %407 {approx = true} : vector<8x1xf32> -> vector<8x1xf32>
    %409 = vector.broadcast %408 : vector<8x1xf32> to vector<8x8xf32>
    %410 = arith.mulf %405, %409 : vector<8x8xf32>
    %411 = arith.truncf %410 : vector<8x8xf32> to vector<8x8xbf16>
    %cst_186 = arith.constant dense<0.000000e+00> : vector<8x32xf32>
    %412 = tpu.matmul %411, %399, %cst_186 {dimension_numbers = #tpu.dot_dimension_numbers<[1], [0], [0], [1], [0, 0, 1, 1], [], []>} : vector<8x8xbf16>, vector<8x32xbf16>, vector<8x32xf32> -> vector<8x32xf32>
    %c0_187 = arith.constant 0 : index
    %c32_188 = arith.constant 32 : index
    %413 = vector.load %arg15[%c0_187, %c32_188] : memref<8x128xf32, #tpu.memory_space<vmem>>, vector<8x32xf32>
    tpu.vector_store %arg15[%c0_187, %c32_188], %412 {strides = array<i32>} : memref<8x128xf32, #tpu.memory_space<vmem>>, vector<8x32xf32>,
    %414 = vector.extract_strided_slice %379 {offsets = [0, 64], sizes = [8, 32], strides = [1, 1]} : vector<8x384xbf16> to vector<8x32xbf16>
    %415 = vector.extract_strided_slice %379 {offsets = [0, 192], sizes = [8, 32], strides = [1, 1]} : vector<8x384xbf16> to vector<8x32xbf16>
    %416 = vector.extract_strided_slice %379 {offsets = [0, 320], sizes = [8, 32], strides = [1, 1]} : vector<8x384xbf16> to vector<8x32xbf16>
    %cst_189 = arith.constant dense<0.000000e+00> : vector<8x8xf32>
    %417 = tpu.matmul %414, %415, %cst_189 {dimension_numbers = #tpu.dot_dimension_numbers<[1], [1], [0], [0], [0, 0, 1, 0], [], []>} : vector<8x32xbf16>, vector<8x32xbf16>, vector<8x8xf32> -> vector<8x8xf32>
    %cst_190 = arith.constant dense<0xFF800000> : vector<8xf32>
    %418 = vector.multi_reduction <maximumf>, %417, %cst_190 [1] : vector<8x8xf32> to vector<8xf32>
    %419 = vector.shape_cast %418 : vector<8xf32> to vector<8x1xf32>
    %420 = vector.broadcast %419 : vector<8x1xf32> to vector<8x8xf32>
    %421 = arith.subf %417, %420 : vector<8x8xf32>
    %422 = math.exp %421 : vector<8x8xf32>
    %cst_191 = arith.constant dense<0.000000e+00> : vector<8xf32>
    %423 = vector.multi_reduction <add>, %422, %cst_191 [1] : vector<8x8xf32> to vector<8xf32>
    %424 = vector.shape_cast %423 : vector<8xf32> to vector<8x1xf32>
    %425 = tpu.reciprocal %424 {approx = true} : vector<8x1xf32> -> vector<8x1xf32>
    %426 = vector.broadcast %425 : vector<8x1xf32> to vector<8x8xf32>
    %427 = arith.mulf %422, %426 : vector<8x8xf32>
    %428 = arith.truncf %427 : vector<8x8xf32> to vector<8x8xbf16>
    %cst_192 = arith.constant dense<0.000000e+00> : vector<8x32xf32>
    %429 = tpu.matmul %428, %416, %cst_192 {dimension_numbers = #tpu.dot_dimension_numbers<[1], [0], [0], [1], [0, 0, 1, 1], [], []>} : vector<8x8xbf16>, vector<8x32xbf16>, vector<8x32xf32> -> vector<8x32xf32>
    %c0_193 = arith.constant 0 : index
    %c64_194 = arith.constant 64 : index
    %430 = vector.load %arg15[%c0_193, %c64_194] : memref<8x128xf32, #tpu.memory_space<vmem>>, vector<8x32xf32>
    tpu.vector_store %arg15[%c0_193, %c64_194], %429 {strides = array<i32>} : memref<8x128xf32, #tpu.memory_space<vmem>>, vector<8x32xf32>,
    %431 = vector.extract_strided_slice %379 {offsets = [0, 96], sizes = [8, 32], strides = [1, 1]} : vector<8x384xbf16> to vector<8x32xbf16>
    %432 = vector.extract_strided_slice %379 {offsets = [0, 224], sizes = [8, 32], strides = [1, 1]} : vector<8x384xbf16> to vector<8x32xbf16>
    %433 = vector.extract_strided_slice %379 {offsets = [0, 352], sizes = [8, 32], strides = [1, 1]} : vector<8x384xbf16> to vector<8x32xbf16>
    %cst_195 = arith.constant dense<0.000000e+00> : vector<8x8xf32>
    %434 = tpu.matmul %431, %432, %cst_195 {dimension_numbers = #tpu.dot_dimension_numbers<[1], [1], [0], [0], [0, 0, 1, 0], [], []>} : vector<8x32xbf16>, vector<8x32xbf16>, vector<8x8xf32> -> vector<8x8xf32>
    %cst_196 = arith.constant dense<0xFF800000> : vector<8xf32>
    %435 = vector.multi_reduction <maximumf>, %434, %cst_196 [1] : vector<8x8xf32> to vector<8xf32>
    %436 = vector.shape_cast %435 : vector<8xf32> to vector<8x1xf32>
    %437 = vector.broadcast %436 : vector<8x1xf32> to vector<8x8xf32>
    %438 = arith.subf %434, %437 : vector<8x8xf32>
    %439 = math.exp %438 : vector<8x8xf32>
    %cst_197 = arith.constant dense<0.000000e+00> : vector<8xf32>
    %440 = vector.multi_reduction <add>, %439, %cst_197 [1] : vector<8x8xf32> to vector<8xf32>
    %441 = vector.shape_cast %440 : vector<8xf32> to vector<8x1xf32>
    %442 = tpu.reciprocal %441 {approx = true} : vector<8x1xf32> -> vector<8x1xf32>
    %443 = vector.broadcast %442 : vector<8x1xf32> to vector<8x8xf32>
    %444 = arith.mulf %439, %443 : vector<8x8xf32>
    %445 = arith.truncf %444 : vector<8x8xf32> to vector<8x8xbf16>
    %cst_198 = arith.constant dense<0.000000e+00> : vector<8x32xf32>
    %446 = tpu.matmul %445, %433, %cst_198 {dimension_numbers = #tpu.dot_dimension_numbers<[1], [0], [0], [1], [0, 0, 1, 1], [], []>} : vector<8x8xbf16>, vector<8x32xbf16>, vector<8x32xf32> -> vector<8x32xf32>
    %c0_199 = arith.constant 0 : index
    %c96_200 = arith.constant 96 : index
    %447 = vector.load %arg15[%c0_199, %c96_200] : memref<8x128xf32, #tpu.memory_space<vmem>>, vector<8x32xf32>
    tpu.vector_store %arg15[%c0_199, %c96_200], %446 {strides = array<i32>} : memref<8x128xf32, #tpu.memory_space<vmem>>, vector<8x32xf32>,
    %c0_201 = arith.constant 0 : index
    %c0_202 = arith.constant 0 : index
    %448 = vector.load %arg15[%c0_201, %c0_202] : memref<8x128xf32, #tpu.memory_space<vmem>>, vector<8x128xf32>
    %449 = arith.truncf %448 : vector<8x128xf32> to vector<8x128xbf16>
    %c2_203 = arith.constant 2 : index
    %c0_204 = arith.constant 0 : index
    %c0_205 = arith.constant 0 : index
    %450 = vector.load %arg6[%c2_203, %c0_204, %c0_205] : memref<6x128x128xbf16, #tpu.memory_space<vmem>>, vector<1x128x128xbf16>
    %451 = vector.shape_cast %450 : vector<1x128x128xbf16> to vector<128x128xbf16>
    %cst_206 = arith.constant dense<0.000000e+00> : vector<8x128xf32>
    %452 = tpu.matmul %449, %451, %cst_206 {dimension_numbers = #tpu.dot_dimension_numbers<[1], [0], [0], [1], [0, 0, 1, 1], [], []>} : vector<8x128xbf16>, vector<128x128xbf16>, vector<8x128xf32> -> vector<8x128xf32>
    %c2_207 = arith.constant 2 : index
    %c0_208 = arith.constant 0 : index
    %c0_209 = arith.constant 0 : index
    %453 = vector.load %arg7[%c2_207, %c0_208, %c0_209] : memref<6x1x128xf32, #tpu.memory_space<vmem>>, vector<1x1x128xf32>
    %454 = vector.shape_cast %453 : vector<1x1x128xf32> to vector<1x128xf32>
    %455 = vector.broadcast %454 : vector<1x128xf32> to vector<8x128xf32>
    %456 = arith.addf %452, %455 : vector<8x128xf32>
    %457 = arith.addf %344, %456 : vector<8x128xf32>
    %c2_210 = arith.constant 2 : index
    %c0_211 = arith.constant 0 : index
    %c0_212 = arith.constant 0 : index
    %458 = vector.load %arg8[%c2_210, %c0_211, %c0_212] : memref<6x1x128xf32, #tpu.memory_space<vmem>>, vector<1x1x128xf32>
    %459 = vector.shape_cast %458 : vector<1x1x128xf32> to vector<1x128xf32>
    %c2_213 = arith.constant 2 : index
    %c0_214 = arith.constant 0 : index
    %c0_215 = arith.constant 0 : index
    %460 = vector.load %arg9[%c2_213, %c0_214, %c0_215] : memref<6x1x128xf32, #tpu.memory_space<vmem>>, vector<1x1x128xf32>
    %461 = vector.shape_cast %460 : vector<1x1x128xf32> to vector<1x128xf32>
    %cst_216 = arith.constant dense<0.000000e+00> : vector<8xf32>
    %462 = vector.multi_reduction <add>, %457, %cst_216 [1] : vector<8x128xf32> to vector<8xf32>
    %463 = vector.shape_cast %462 : vector<8xf32> to vector<8x1xf32>
    %cst_217 = arith.constant 1.280000e+02 : f32
    %464 = vector.broadcast %cst_217 : f32 to vector<8x1xf32>
    %465 = arith.divf %463, %464 : vector<8x1xf32>
    %466 = vector.broadcast %465 : vector<8x1xf32> to vector<8x128xf32>
    %467 = arith.subf %457, %466 : vector<8x128xf32>
    %468 = arith.mulf %467, %467 : vector<8x128xf32>
    %cst_218 = arith.constant dense<0.000000e+00> : vector<8xf32>
    %469 = vector.multi_reduction <add>, %468, %cst_218 [1] : vector<8x128xf32> to vector<8xf32>
    %470 = vector.shape_cast %469 : vector<8xf32> to vector<8x1xf32>
    %cst_219 = arith.constant 1.280000e+02 : f32
    %471 = vector.broadcast %cst_219 : f32 to vector<8x1xf32>
    %472 = arith.divf %470, %471 : vector<8x1xf32>
    %473 = vector.broadcast %465 : vector<8x1xf32> to vector<8x128xf32>
    %474 = arith.subf %457, %473 : vector<8x128xf32>
    %cst_220 = arith.constant 9.99999997E-7 : f32
    %475 = vector.broadcast %cst_220 : f32 to vector<8x1xf32>
    %476 = arith.addf %472, %475 : vector<8x1xf32>
    %477 = math.rsqrt %476 : vector<8x1xf32>
    %478 = vector.broadcast %477 : vector<8x1xf32> to vector<8x128xf32>
    %479 = arith.mulf %474, %478 : vector<8x128xf32>
    %480 = vector.broadcast %459 : vector<1x128xf32> to vector<8x128xf32>
    %481 = arith.mulf %479, %480 : vector<8x128xf32>
    %482 = vector.broadcast %461 : vector<1x128xf32> to vector<8x128xf32>
    %483 = arith.addf %481, %482 : vector<8x128xf32>
    %484 = arith.truncf %483 : vector<8x128xf32> to vector<8x128xbf16>
    %c2_221 = arith.constant 2 : index
    %c0_222 = arith.constant 0 : index
    %c0_223 = arith.constant 0 : index
    %485 = vector.load %arg10[%c2_221, %c0_222, %c0_223] : memref<6x128x256xbf16, #tpu.memory_space<vmem>>, vector<1x128x256xbf16>
    %486 = vector.shape_cast %485 : vector<1x128x256xbf16> to vector<128x256xbf16>
    %cst_224 = arith.constant dense<0.000000e+00> : vector<8x256xf32>
    %487 = tpu.matmul %484, %486, %cst_224 {dimension_numbers = #tpu.dot_dimension_numbers<[1], [0], [0], [1], [0, 0, 1, 1], [], []>} : vector<8x128xbf16>, vector<128x256xbf16>, vector<8x256xf32> -> vector<8x256xf32>
    %c2_225 = arith.constant 2 : index
    %c0_226 = arith.constant 0 : index
    %c0_227 = arith.constant 0 : index
    %488 = vector.load %arg11[%c2_225, %c0_226, %c0_227] : memref<6x1x256xf32, #tpu.memory_space<vmem>>, vector<1x1x256xf32>
    %489 = vector.shape_cast %488 : vector<1x1x256xf32> to vector<1x256xf32>
    %490 = vector.broadcast %489 : vector<1x256xf32> to vector<8x256xf32>
    %491 = arith.addf %487, %490 : vector<8x256xf32>
    %cst_228 = arith.constant 5.000000e-01 : f32
    %492 = vector.broadcast %cst_228 : f32 to vector<8x256xf32>
    %493 = arith.mulf %492, %491 : vector<8x256xf32>
    %cst_229 = arith.constant 0.707106769 : f32
    %494 = vector.broadcast %cst_229 : f32 to vector<8x256xf32>
    %495 = arith.mulf %491, %494 : vector<8x256xf32>
    %496 = math.erf %495 : vector<8x256xf32>
    %cst_230 = arith.constant 1.000000e+00 : f32
    %497 = vector.broadcast %cst_230 : f32 to vector<8x256xf32>
    %498 = arith.addf %497, %496 : vector<8x256xf32>
    %499 = arith.mulf %493, %498 : vector<8x256xf32>
    %500 = arith.truncf %499 : vector<8x256xf32> to vector<8x256xbf16>
    %c2_231 = arith.constant 2 : index
    %c0_232 = arith.constant 0 : index
    %c0_233 = arith.constant 0 : index
    %501 = vector.load %arg12[%c2_231, %c0_232, %c0_233] : memref<6x256x128xbf16, #tpu.memory_space<vmem>>, vector<1x256x128xbf16>
    %502 = vector.shape_cast %501 : vector<1x256x128xbf16> to vector<256x128xbf16>
    %cst_234 = arith.constant dense<0.000000e+00> : vector<8x128xf32>
    %503 = tpu.matmul %500, %502, %cst_234 {dimension_numbers = #tpu.dot_dimension_numbers<[1], [0], [0], [1], [0, 0, 1, 1], [], []>} : vector<8x256xbf16>, vector<256x128xbf16>, vector<8x128xf32> -> vector<8x128xf32>
    %c2_235 = arith.constant 2 : index
    %c0_236 = arith.constant 0 : index
    %c0_237 = arith.constant 0 : index
    %504 = vector.load %arg13[%c2_235, %c0_236, %c0_237] : memref<6x1x128xf32, #tpu.memory_space<vmem>>, vector<1x1x128xf32>
    %505 = vector.shape_cast %504 : vector<1x1x128xf32> to vector<1x128xf32>
    %506 = vector.broadcast %505 : vector<1x128xf32> to vector<8x128xf32>
    %507 = arith.addf %503, %506 : vector<8x128xf32>
    %cst_238 = arith.constant 5.000000e-01 : f32
    %508 = vector.broadcast %cst_238 : f32 to vector<8x128xf32>
    %509 = arith.mulf %508, %507 : vector<8x128xf32>
    %cst_239 = arith.constant 0.707106769 : f32
    %510 = vector.broadcast %cst_239 : f32 to vector<8x128xf32>
    %511 = arith.mulf %507, %510 : vector<8x128xf32>
    %512 = math.erf %511 : vector<8x128xf32>
    %cst_240 = arith.constant 1.000000e+00 : f32
    %513 = vector.broadcast %cst_240 : f32 to vector<8x128xf32>
    %514 = arith.addf %513, %512 : vector<8x128xf32>
    %515 = arith.mulf %509, %514 : vector<8x128xf32>
    %516 = arith.addf %457, %515 : vector<8x128xf32>
    %c3 = arith.constant 3 : index
    %c0_241 = arith.constant 0 : index
    %c0_242 = arith.constant 0 : index
    %517 = vector.load %arg2[%c3, %c0_241, %c0_242] : memref<6x1x128xf32, #tpu.memory_space<vmem>>, vector<1x1x128xf32>
    %518 = vector.shape_cast %517 : vector<1x1x128xf32> to vector<1x128xf32>
    %c3_243 = arith.constant 3 : index
    %c0_244 = arith.constant 0 : index
    %c0_245 = arith.constant 0 : index
    %519 = vector.load %arg3[%c3_243, %c0_244, %c0_245] : memref<6x1x128xf32, #tpu.memory_space<vmem>>, vector<1x1x128xf32>
    %520 = vector.shape_cast %519 : vector<1x1x128xf32> to vector<1x128xf32>
    %cst_246 = arith.constant dense<0.000000e+00> : vector<8xf32>
    %521 = vector.multi_reduction <add>, %516, %cst_246 [1] : vector<8x128xf32> to vector<8xf32>
    %522 = vector.shape_cast %521 : vector<8xf32> to vector<8x1xf32>
    %cst_247 = arith.constant 1.280000e+02 : f32
    %523 = vector.broadcast %cst_247 : f32 to vector<8x1xf32>
    %524 = arith.divf %522, %523 : vector<8x1xf32>
    %525 = vector.broadcast %524 : vector<8x1xf32> to vector<8x128xf32>
    %526 = arith.subf %516, %525 : vector<8x128xf32>
    %527 = arith.mulf %526, %526 : vector<8x128xf32>
    %cst_248 = arith.constant dense<0.000000e+00> : vector<8xf32>
    %528 = vector.multi_reduction <add>, %527, %cst_248 [1] : vector<8x128xf32> to vector<8xf32>
    %529 = vector.shape_cast %528 : vector<8xf32> to vector<8x1xf32>
    %cst_249 = arith.constant 1.280000e+02 : f32
    %530 = vector.broadcast %cst_249 : f32 to vector<8x1xf32>
    %531 = arith.divf %529, %530 : vector<8x1xf32>
    %532 = vector.broadcast %524 : vector<8x1xf32> to vector<8x128xf32>
    %533 = arith.subf %516, %532 : vector<8x128xf32>
    %cst_250 = arith.constant 9.99999997E-7 : f32
    %534 = vector.broadcast %cst_250 : f32 to vector<8x1xf32>
    %535 = arith.addf %531, %534 : vector<8x1xf32>
    %536 = math.rsqrt %535 : vector<8x1xf32>
    %537 = vector.broadcast %536 : vector<8x1xf32> to vector<8x128xf32>
    %538 = arith.mulf %533, %537 : vector<8x128xf32>
    %539 = vector.broadcast %518 : vector<1x128xf32> to vector<8x128xf32>
    %540 = arith.mulf %538, %539 : vector<8x128xf32>
    %541 = vector.broadcast %520 : vector<1x128xf32> to vector<8x128xf32>
    %542 = arith.addf %540, %541 : vector<8x128xf32>
    %543 = arith.truncf %542 : vector<8x128xf32> to vector<8x128xbf16>
    %c3_251 = arith.constant 3 : index
    %c0_252 = arith.constant 0 : index
    %c0_253 = arith.constant 0 : index
    %544 = vector.load %arg4[%c3_251, %c0_252, %c0_253] : memref<6x128x384xbf16, #tpu.memory_space<vmem>>, vector<1x128x384xbf16>
    %545 = vector.shape_cast %544 : vector<1x128x384xbf16> to vector<128x384xbf16>
    %cst_254 = arith.constant dense<0.000000e+00> : vector<8x384xf32>
    %546 = tpu.matmul %543, %545, %cst_254 {dimension_numbers = #tpu.dot_dimension_numbers<[1], [0], [0], [1], [0, 0, 1, 1], [], []>} : vector<8x128xbf16>, vector<128x384xbf16>, vector<8x384xf32> -> vector<8x384xf32>
    %c3_255 = arith.constant 3 : index
    %c0_256 = arith.constant 0 : index
    %c0_257 = arith.constant 0 : index
    %547 = vector.load %arg5[%c3_255, %c0_256, %c0_257] : memref<6x1x384xf32, #tpu.memory_space<vmem>>, vector<1x1x384xf32>
    %548 = vector.shape_cast %547 : vector<1x1x384xf32> to vector<1x384xf32>
    %549 = vector.broadcast %548 : vector<1x384xf32> to vector<8x384xf32>
    %550 = arith.addf %546, %549 : vector<8x384xf32>
    %551 = arith.truncf %550 : vector<8x384xf32> to vector<8x384xbf16>
    %552 = vector.extract_strided_slice %551 {offsets = [0, 0], sizes = [8, 32], strides = [1, 1]} : vector<8x384xbf16> to vector<8x32xbf16>
    %553 = vector.extract_strided_slice %551 {offsets = [0, 128], sizes = [8, 32], strides = [1, 1]} : vector<8x384xbf16> to vector<8x32xbf16>
    %554 = vector.extract_strided_slice %551 {offsets = [0, 256], sizes = [8, 32], strides = [1, 1]} : vector<8x384xbf16> to vector<8x32xbf16>
    %cst_258 = arith.constant dense<0.000000e+00> : vector<8x8xf32>
    %555 = tpu.matmul %552, %553, %cst_258 {dimension_numbers = #tpu.dot_dimension_numbers<[1], [1], [0], [0], [0, 0, 1, 0], [], []>} : vector<8x32xbf16>, vector<8x32xbf16>, vector<8x8xf32> -> vector<8x8xf32>
    %cst_259 = arith.constant dense<0xFF800000> : vector<8xf32>
    %556 = vector.multi_reduction <maximumf>, %555, %cst_259 [1] : vector<8x8xf32> to vector<8xf32>
    %557 = vector.shape_cast %556 : vector<8xf32> to vector<8x1xf32>
    %558 = vector.broadcast %557 : vector<8x1xf32> to vector<8x8xf32>
    %559 = arith.subf %555, %558 : vector<8x8xf32>
    %560 = math.exp %559 : vector<8x8xf32>
    %cst_260 = arith.constant dense<0.000000e+00> : vector<8xf32>
    %561 = vector.multi_reduction <add>, %560, %cst_260 [1] : vector<8x8xf32> to vector<8xf32>
    %562 = vector.shape_cast %561 : vector<8xf32> to vector<8x1xf32>
    %563 = tpu.reciprocal %562 {approx = true} : vector<8x1xf32> -> vector<8x1xf32>
    %564 = vector.broadcast %563 : vector<8x1xf32> to vector<8x8xf32>
    %565 = arith.mulf %560, %564 : vector<8x8xf32>
    %566 = arith.truncf %565 : vector<8x8xf32> to vector<8x8xbf16>
    %cst_261 = arith.constant dense<0.000000e+00> : vector<8x32xf32>
    %567 = tpu.matmul %566, %554, %cst_261 {dimension_numbers = #tpu.dot_dimension_numbers<[1], [0], [0], [1], [0, 0, 1, 1], [], []>} : vector<8x8xbf16>, vector<8x32xbf16>, vector<8x32xf32> -> vector<8x32xf32>
    %c0_262 = arith.constant 0 : index
    %c0_263 = arith.constant 0 : index
    %568 = vector.load %arg15[%c0_262, %c0_263] : memref<8x128xf32, #tpu.memory_space<vmem>>, vector<8x32xf32>
    tpu.vector_store %arg15[%c0_262, %c0_263], %567 {strides = array<i32>} : memref<8x128xf32, #tpu.memory_space<vmem>>, vector<8x32xf32>,
    %569 = vector.extract_strided_slice %551 {offsets = [0, 32], sizes = [8, 32], strides = [1, 1]} : vector<8x384xbf16> to vector<8x32xbf16>
    %570 = vector.extract_strided_slice %551 {offsets = [0, 160], sizes = [8, 32], strides = [1, 1]} : vector<8x384xbf16> to vector<8x32xbf16>
    %571 = vector.extract_strided_slice %551 {offsets = [0, 288], sizes = [8, 32], strides = [1, 1]} : vector<8x384xbf16> to vector<8x32xbf16>
    %cst_264 = arith.constant dense<0.000000e+00> : vector<8x8xf32>
    %572 = tpu.matmul %569, %570, %cst_264 {dimension_numbers = #tpu.dot_dimension_numbers<[1], [1], [0], [0], [0, 0, 1, 0], [], []>} : vector<8x32xbf16>, vector<8x32xbf16>, vector<8x8xf32> -> vector<8x8xf32>
    %cst_265 = arith.constant dense<0xFF800000> : vector<8xf32>
    %573 = vector.multi_reduction <maximumf>, %572, %cst_265 [1] : vector<8x8xf32> to vector<8xf32>
    %574 = vector.shape_cast %573 : vector<8xf32> to vector<8x1xf32>
    %575 = vector.broadcast %574 : vector<8x1xf32> to vector<8x8xf32>
    %576 = arith.subf %572, %575 : vector<8x8xf32>
    %577 = math.exp %576 : vector<8x8xf32>
    %cst_266 = arith.constant dense<0.000000e+00> : vector<8xf32>
    %578 = vector.multi_reduction <add>, %577, %cst_266 [1] : vector<8x8xf32> to vector<8xf32>
    %579 = vector.shape_cast %578 : vector<8xf32> to vector<8x1xf32>
    %580 = tpu.reciprocal %579 {approx = true} : vector<8x1xf32> -> vector<8x1xf32>
    %581 = vector.broadcast %580 : vector<8x1xf32> to vector<8x8xf32>
    %582 = arith.mulf %577, %581 : vector<8x8xf32>
    %583 = arith.truncf %582 : vector<8x8xf32> to vector<8x8xbf16>
    %cst_267 = arith.constant dense<0.000000e+00> : vector<8x32xf32>
    %584 = tpu.matmul %583, %571, %cst_267 {dimension_numbers = #tpu.dot_dimension_numbers<[1], [0], [0], [1], [0, 0, 1, 1], [], []>} : vector<8x8xbf16>, vector<8x32xbf16>, vector<8x32xf32> -> vector<8x32xf32>
    %c0_268 = arith.constant 0 : index
    %c32_269 = arith.constant 32 : index
    %585 = vector.load %arg15[%c0_268, %c32_269] : memref<8x128xf32, #tpu.memory_space<vmem>>, vector<8x32xf32>
    tpu.vector_store %arg15[%c0_268, %c32_269], %584 {strides = array<i32>} : memref<8x128xf32, #tpu.memory_space<vmem>>, vector<8x32xf32>,
    %586 = vector.extract_strided_slice %551 {offsets = [0, 64], sizes = [8, 32], strides = [1, 1]} : vector<8x384xbf16> to vector<8x32xbf16>
    %587 = vector.extract_strided_slice %551 {offsets = [0, 192], sizes = [8, 32], strides = [1, 1]} : vector<8x384xbf16> to vector<8x32xbf16>
    %588 = vector.extract_strided_slice %551 {offsets = [0, 320], sizes = [8, 32], strides = [1, 1]} : vector<8x384xbf16> to vector<8x32xbf16>
    %cst_270 = arith.constant dense<0.000000e+00> : vector<8x8xf32>
    %589 = tpu.matmul %586, %587, %cst_270 {dimension_numbers = #tpu.dot_dimension_numbers<[1], [1], [0], [0], [0, 0, 1, 0], [], []>} : vector<8x32xbf16>, vector<8x32xbf16>, vector<8x8xf32> -> vector<8x8xf32>
    %cst_271 = arith.constant dense<0xFF800000> : vector<8xf32>
    %590 = vector.multi_reduction <maximumf>, %589, %cst_271 [1] : vector<8x8xf32> to vector<8xf32>
    %591 = vector.shape_cast %590 : vector<8xf32> to vector<8x1xf32>
    %592 = vector.broadcast %591 : vector<8x1xf32> to vector<8x8xf32>
    %593 = arith.subf %589, %592 : vector<8x8xf32>
    %594 = math.exp %593 : vector<8x8xf32>
    %cst_272 = arith.constant dense<0.000000e+00> : vector<8xf32>
    %595 = vector.multi_reduction <add>, %594, %cst_272 [1] : vector<8x8xf32> to vector<8xf32>
    %596 = vector.shape_cast %595 : vector<8xf32> to vector<8x1xf32>
    %597 = tpu.reciprocal %596 {approx = true} : vector<8x1xf32> -> vector<8x1xf32>
    %598 = vector.broadcast %597 : vector<8x1xf32> to vector<8x8xf32>
    %599 = arith.mulf %594, %598 : vector<8x8xf32>
    %600 = arith.truncf %599 : vector<8x8xf32> to vector<8x8xbf16>
    %cst_273 = arith.constant dense<0.000000e+00> : vector<8x32xf32>
    %601 = tpu.matmul %600, %588, %cst_273 {dimension_numbers = #tpu.dot_dimension_numbers<[1], [0], [0], [1], [0, 0, 1, 1], [], []>} : vector<8x8xbf16>, vector<8x32xbf16>, vector<8x32xf32> -> vector<8x32xf32>
    %c0_274 = arith.constant 0 : index
    %c64_275 = arith.constant 64 : index
    %602 = vector.load %arg15[%c0_274, %c64_275] : memref<8x128xf32, #tpu.memory_space<vmem>>, vector<8x32xf32>
    tpu.vector_store %arg15[%c0_274, %c64_275], %601 {strides = array<i32>} : memref<8x128xf32, #tpu.memory_space<vmem>>, vector<8x32xf32>,
    %603 = vector.extract_strided_slice %551 {offsets = [0, 96], sizes = [8, 32], strides = [1, 1]} : vector<8x384xbf16> to vector<8x32xbf16>
    %604 = vector.extract_strided_slice %551 {offsets = [0, 224], sizes = [8, 32], strides = [1, 1]} : vector<8x384xbf16> to vector<8x32xbf16>
    %605 = vector.extract_strided_slice %551 {offsets = [0, 352], sizes = [8, 32], strides = [1, 1]} : vector<8x384xbf16> to vector<8x32xbf16>
    %cst_276 = arith.constant dense<0.000000e+00> : vector<8x8xf32>
    %606 = tpu.matmul %603, %604, %cst_276 {dimension_numbers = #tpu.dot_dimension_numbers<[1], [1], [0], [0], [0, 0, 1, 0], [], []>} : vector<8x32xbf16>, vector<8x32xbf16>, vector<8x8xf32> -> vector<8x8xf32>
    %cst_277 = arith.constant dense<0xFF800000> : vector<8xf32>
    %607 = vector.multi_reduction <maximumf>, %606, %cst_277 [1] : vector<8x8xf32> to vector<8xf32>
    %608 = vector.shape_cast %607 : vector<8xf32> to vector<8x1xf32>
    %609 = vector.broadcast %608 : vector<8x1xf32> to vector<8x8xf32>
    %610 = arith.subf %606, %609 : vector<8x8xf32>
    %611 = math.exp %610 : vector<8x8xf32>
    %cst_278 = arith.constant dense<0.000000e+00> : vector<8xf32>
    %612 = vector.multi_reduction <add>, %611, %cst_278 [1] : vector<8x8xf32> to vector<8xf32>
    %613 = vector.shape_cast %612 : vector<8xf32> to vector<8x1xf32>
    %614 = tpu.reciprocal %613 {approx = true} : vector<8x1xf32> -> vector<8x1xf32>
    %615 = vector.broadcast %614 : vector<8x1xf32> to vector<8x8xf32>
    %616 = arith.mulf %611, %615 : vector<8x8xf32>
    %617 = arith.truncf %616 : vector<8x8xf32> to vector<8x8xbf16>
    %cst_279 = arith.constant dense<0.000000e+00> : vector<8x32xf32>
    %618 = tpu.matmul %617, %605, %cst_279 {dimension_numbers = #tpu.dot_dimension_numbers<[1], [0], [0], [1], [0, 0, 1, 1], [], []>} : vector<8x8xbf16>, vector<8x32xbf16>, vector<8x32xf32> -> vector<8x32xf32>
    %c0_280 = arith.constant 0 : index
    %c96_281 = arith.constant 96 : index
    %619 = vector.load %arg15[%c0_280, %c96_281] : memref<8x128xf32, #tpu.memory_space<vmem>>, vector<8x32xf32>
    tpu.vector_store %arg15[%c0_280, %c96_281], %618 {strides = array<i32>} : memref<8x128xf32, #tpu.memory_space<vmem>>, vector<8x32xf32>,
    %c0_282 = arith.constant 0 : index
    %c0_283 = arith.constant 0 : index
    %620 = vector.load %arg15[%c0_282, %c0_283] : memref<8x128xf32, #tpu.memory_space<vmem>>, vector<8x128xf32>
    %621 = arith.truncf %620 : vector<8x128xf32> to vector<8x128xbf16>
    %c3_284 = arith.constant 3 : index
    %c0_285 = arith.constant 0 : index
    %c0_286 = arith.constant 0 : index
    %622 = vector.load %arg6[%c3_284, %c0_285, %c0_286] : memref<6x128x128xbf16, #tpu.memory_space<vmem>>, vector<1x128x128xbf16>
    %623 = vector.shape_cast %622 : vector<1x128x128xbf16> to vector<128x128xbf16>
    %cst_287 = arith.constant dense<0.000000e+00> : vector<8x128xf32>
    %624 = tpu.matmul %621, %623, %cst_287 {dimension_numbers = #tpu.dot_dimension_numbers<[1], [0], [0], [1], [0, 0, 1, 1], [], []>} : vector<8x128xbf16>, vector<128x128xbf16>, vector<8x128xf32> -> vector<8x128xf32>
    %c3_288 = arith.constant 3 : index
    %c0_289 = arith.constant 0 : index
    %c0_290 = arith.constant 0 : index
    %625 = vector.load %arg7[%c3_288, %c0_289, %c0_290] : memref<6x1x128xf32, #tpu.memory_space<vmem>>, vector<1x1x128xf32>
    %626 = vector.shape_cast %625 : vector<1x1x128xf32> to vector<1x128xf32>
    %627 = vector.broadcast %626 : vector<1x128xf32> to vector<8x128xf32>
    %628 = arith.addf %624, %627 : vector<8x128xf32>
    %629 = arith.addf %516, %628 : vector<8x128xf32>
    %c3_291 = arith.constant 3 : index
    %c0_292 = arith.constant 0 : index
    %c0_293 = arith.constant 0 : index
    %630 = vector.load %arg8[%c3_291, %c0_292, %c0_293] : memref<6x1x128xf32, #tpu.memory_space<vmem>>, vector<1x1x128xf32>
    %631 = vector.shape_cast %630 : vector<1x1x128xf32> to vector<1x128xf32>
    %c3_294 = arith.constant 3 : index
    %c0_295 = arith.constant 0 : index
    %c0_296 = arith.constant 0 : index
    %632 = vector.load %arg9[%c3_294, %c0_295, %c0_296] : memref<6x1x128xf32, #tpu.memory_space<vmem>>, vector<1x1x128xf32>
    %633 = vector.shape_cast %632 : vector<1x1x128xf32> to vector<1x128xf32>
    %cst_297 = arith.constant dense<0.000000e+00> : vector<8xf32>
    %634 = vector.multi_reduction <add>, %629, %cst_297 [1] : vector<8x128xf32> to vector<8xf32>
    %635 = vector.shape_cast %634 : vector<8xf32> to vector<8x1xf32>
    %cst_298 = arith.constant 1.280000e+02 : f32
    %636 = vector.broadcast %cst_298 : f32 to vector<8x1xf32>
    %637 = arith.divf %635, %636 : vector<8x1xf32>
    %638 = vector.broadcast %637 : vector<8x1xf32> to vector<8x128xf32>
    %639 = arith.subf %629, %638 : vector<8x128xf32>
    %640 = arith.mulf %639, %639 : vector<8x128xf32>
    %cst_299 = arith.constant dense<0.000000e+00> : vector<8xf32>
    %641 = vector.multi_reduction <add>, %640, %cst_299 [1] : vector<8x128xf32> to vector<8xf32>
    %642 = vector.shape_cast %641 : vector<8xf32> to vector<8x1xf32>
    %cst_300 = arith.constant 1.280000e+02 : f32
    %643 = vector.broadcast %cst_300 : f32 to vector<8x1xf32>
    %644 = arith.divf %642, %643 : vector<8x1xf32>
    %645 = vector.broadcast %637 : vector<8x1xf32> to vector<8x128xf32>
    %646 = arith.subf %629, %645 : vector<8x128xf32>
    %cst_301 = arith.constant 9.99999997E-7 : f32
    %647 = vector.broadcast %cst_301 : f32 to vector<8x1xf32>
    %648 = arith.addf %644, %647 : vector<8x1xf32>
    %649 = math.rsqrt %648 : vector<8x1xf32>
    %650 = vector.broadcast %649 : vector<8x1xf32> to vector<8x128xf32>
    %651 = arith.mulf %646, %650 : vector<8x128xf32>
    %652 = vector.broadcast %631 : vector<1x128xf32> to vector<8x128xf32>
    %653 = arith.mulf %651, %652 : vector<8x128xf32>
    %654 = vector.broadcast %633 : vector<1x128xf32> to vector<8x128xf32>
    %655 = arith.addf %653, %654 : vector<8x128xf32>
    %656 = arith.truncf %655 : vector<8x128xf32> to vector<8x128xbf16>
    %c3_302 = arith.constant 3 : index
    %c0_303 = arith.constant 0 : index
    %c0_304 = arith.constant 0 : index
    %657 = vector.load %arg10[%c3_302, %c0_303, %c0_304] : memref<6x128x256xbf16, #tpu.memory_space<vmem>>, vector<1x128x256xbf16>
    %658 = vector.shape_cast %657 : vector<1x128x256xbf16> to vector<128x256xbf16>
    %cst_305 = arith.constant dense<0.000000e+00> : vector<8x256xf32>
    %659 = tpu.matmul %656, %658, %cst_305 {dimension_numbers = #tpu.dot_dimension_numbers<[1], [0], [0], [1], [0, 0, 1, 1], [], []>} : vector<8x128xbf16>, vector<128x256xbf16>, vector<8x256xf32> -> vector<8x256xf32>
    %c3_306 = arith.constant 3 : index
    %c0_307 = arith.constant 0 : index
    %c0_308 = arith.constant 0 : index
    %660 = vector.load %arg11[%c3_306, %c0_307, %c0_308] : memref<6x1x256xf32, #tpu.memory_space<vmem>>, vector<1x1x256xf32>
    %661 = vector.shape_cast %660 : vector<1x1x256xf32> to vector<1x256xf32>
    %662 = vector.broadcast %661 : vector<1x256xf32> to vector<8x256xf32>
    %663 = arith.addf %659, %662 : vector<8x256xf32>
    %cst_309 = arith.constant 5.000000e-01 : f32
    %664 = vector.broadcast %cst_309 : f32 to vector<8x256xf32>
    %665 = arith.mulf %664, %663 : vector<8x256xf32>
    %cst_310 = arith.constant 0.707106769 : f32
    %666 = vector.broadcast %cst_310 : f32 to vector<8x256xf32>
    %667 = arith.mulf %663, %666 : vector<8x256xf32>
    %668 = math.erf %667 : vector<8x256xf32>
    %cst_311 = arith.constant 1.000000e+00 : f32
    %669 = vector.broadcast %cst_311 : f32 to vector<8x256xf32>
    %670 = arith.addf %669, %668 : vector<8x256xf32>
    %671 = arith.mulf %665, %670 : vector<8x256xf32>
    %672 = arith.truncf %671 : vector<8x256xf32> to vector<8x256xbf16>
    %c3_312 = arith.constant 3 : index
    %c0_313 = arith.constant 0 : index
    %c0_314 = arith.constant 0 : index
    %673 = vector.load %arg12[%c3_312, %c0_313, %c0_314] : memref<6x256x128xbf16, #tpu.memory_space<vmem>>, vector<1x256x128xbf16>
    %674 = vector.shape_cast %673 : vector<1x256x128xbf16> to vector<256x128xbf16>
    %cst_315 = arith.constant dense<0.000000e+00> : vector<8x128xf32>
    %675 = tpu.matmul %672, %674, %cst_315 {dimension_numbers = #tpu.dot_dimension_numbers<[1], [0], [0], [1], [0, 0, 1, 1], [], []>} : vector<8x256xbf16>, vector<256x128xbf16>, vector<8x128xf32> -> vector<8x128xf32>
    %c3_316 = arith.constant 3 : index
    %c0_317 = arith.constant 0 : index
    %c0_318 = arith.constant 0 : index
    %676 = vector.load %arg13[%c3_316, %c0_317, %c0_318] : memref<6x1x128xf32, #tpu.memory_space<vmem>>, vector<1x1x128xf32>
    %677 = vector.shape_cast %676 : vector<1x1x128xf32> to vector<1x128xf32>
    %678 = vector.broadcast %677 : vector<1x128xf32> to vector<8x128xf32>
    %679 = arith.addf %675, %678 : vector<8x128xf32>
    %cst_319 = arith.constant 5.000000e-01 : f32
    %680 = vector.broadcast %cst_319 : f32 to vector<8x128xf32>
    %681 = arith.mulf %680, %679 : vector<8x128xf32>
    %cst_320 = arith.constant 0.707106769 : f32
    %682 = vector.broadcast %cst_320 : f32 to vector<8x128xf32>
    %683 = arith.mulf %679, %682 : vector<8x128xf32>
    %684 = math.erf %683 : vector<8x128xf32>
    %cst_321 = arith.constant 1.000000e+00 : f32
    %685 = vector.broadcast %cst_321 : f32 to vector<8x128xf32>
    %686 = arith.addf %685, %684 : vector<8x128xf32>
    %687 = arith.mulf %681, %686 : vector<8x128xf32>
    %688 = arith.addf %629, %687 : vector<8x128xf32>
    %c4 = arith.constant 4 : index
    %c0_322 = arith.constant 0 : index
    %c0_323 = arith.constant 0 : index
    %689 = vector.load %arg2[%c4, %c0_322, %c0_323] : memref<6x1x128xf32, #tpu.memory_space<vmem>>, vector<1x1x128xf32>
    %690 = vector.shape_cast %689 : vector<1x1x128xf32> to vector<1x128xf32>
    %c4_324 = arith.constant 4 : index
    %c0_325 = arith.constant 0 : index
    %c0_326 = arith.constant 0 : index
    %691 = vector.load %arg3[%c4_324, %c0_325, %c0_326] : memref<6x1x128xf32, #tpu.memory_space<vmem>>, vector<1x1x128xf32>
    %692 = vector.shape_cast %691 : vector<1x1x128xf32> to vector<1x128xf32>
    %cst_327 = arith.constant dense<0.000000e+00> : vector<8xf32>
    %693 = vector.multi_reduction <add>, %688, %cst_327 [1] : vector<8x128xf32> to vector<8xf32>
    %694 = vector.shape_cast %693 : vector<8xf32> to vector<8x1xf32>
    %cst_328 = arith.constant 1.280000e+02 : f32
    %695 = vector.broadcast %cst_328 : f32 to vector<8x1xf32>
    %696 = arith.divf %694, %695 : vector<8x1xf32>
    %697 = vector.broadcast %696 : vector<8x1xf32> to vector<8x128xf32>
    %698 = arith.subf %688, %697 : vector<8x128xf32>
    %699 = arith.mulf %698, %698 : vector<8x128xf32>
    %cst_329 = arith.constant dense<0.000000e+00> : vector<8xf32>
    %700 = vector.multi_reduction <add>, %699, %cst_329 [1] : vector<8x128xf32> to vector<8xf32>
    %701 = vector.shape_cast %700 : vector<8xf32> to vector<8x1xf32>
    %cst_330 = arith.constant 1.280000e+02 : f32
    %702 = vector.broadcast %cst_330 : f32 to vector<8x1xf32>
    %703 = arith.divf %701, %702 : vector<8x1xf32>
    %704 = vector.broadcast %696 : vector<8x1xf32> to vector<8x128xf32>
    %705 = arith.subf %688, %704 : vector<8x128xf32>
    %cst_331 = arith.constant 9.99999997E-7 : f32
    %706 = vector.broadcast %cst_331 : f32 to vector<8x1xf32>
    %707 = arith.addf %703, %706 : vector<8x1xf32>
    %708 = math.rsqrt %707 : vector<8x1xf32>
    %709 = vector.broadcast %708 : vector<8x1xf32> to vector<8x128xf32>
    %710 = arith.mulf %705, %709 : vector<8x128xf32>
    %711 = vector.broadcast %690 : vector<1x128xf32> to vector<8x128xf32>
    %712 = arith.mulf %710, %711 : vector<8x128xf32>
    %713 = vector.broadcast %692 : vector<1x128xf32> to vector<8x128xf32>
    %714 = arith.addf %712, %713 : vector<8x128xf32>
    %715 = arith.truncf %714 : vector<8x128xf32> to vector<8x128xbf16>
    %c4_332 = arith.constant 4 : index
    %c0_333 = arith.constant 0 : index
    %c0_334 = arith.constant 0 : index
    %716 = vector.load %arg4[%c4_332, %c0_333, %c0_334] : memref<6x128x384xbf16, #tpu.memory_space<vmem>>, vector<1x128x384xbf16>
    %717 = vector.shape_cast %716 : vector<1x128x384xbf16> to vector<128x384xbf16>
    %cst_335 = arith.constant dense<0.000000e+00> : vector<8x384xf32>
    %718 = tpu.matmul %715, %717, %cst_335 {dimension_numbers = #tpu.dot_dimension_numbers<[1], [0], [0], [1], [0, 0, 1, 1], [], []>} : vector<8x128xbf16>, vector<128x384xbf16>, vector<8x384xf32> -> vector<8x384xf32>
    %c4_336 = arith.constant 4 : index
    %c0_337 = arith.constant 0 : index
    %c0_338 = arith.constant 0 : index
    %719 = vector.load %arg5[%c4_336, %c0_337, %c0_338] : memref<6x1x384xf32, #tpu.memory_space<vmem>>, vector<1x1x384xf32>
    %720 = vector.shape_cast %719 : vector<1x1x384xf32> to vector<1x384xf32>
    %721 = vector.broadcast %720 : vector<1x384xf32> to vector<8x384xf32>
    %722 = arith.addf %718, %721 : vector<8x384xf32>
    %723 = arith.truncf %722 : vector<8x384xf32> to vector<8x384xbf16>
    %724 = vector.extract_strided_slice %723 {offsets = [0, 0], sizes = [8, 32], strides = [1, 1]} : vector<8x384xbf16> to vector<8x32xbf16>
    %725 = vector.extract_strided_slice %723 {offsets = [0, 128], sizes = [8, 32], strides = [1, 1]} : vector<8x384xbf16> to vector<8x32xbf16>
    %726 = vector.extract_strided_slice %723 {offsets = [0, 256], sizes = [8, 32], strides = [1, 1]} : vector<8x384xbf16> to vector<8x32xbf16>
    %cst_339 = arith.constant dense<0.000000e+00> : vector<8x8xf32>
    %727 = tpu.matmul %724, %725, %cst_339 {dimension_numbers = #tpu.dot_dimension_numbers<[1], [1], [0], [0], [0, 0, 1, 0], [], []>} : vector<8x32xbf16>, vector<8x32xbf16>, vector<8x8xf32> -> vector<8x8xf32>
    %cst_340 = arith.constant dense<0xFF800000> : vector<8xf32>
    %728 = vector.multi_reduction <maximumf>, %727, %cst_340 [1] : vector<8x8xf32> to vector<8xf32>
    %729 = vector.shape_cast %728 : vector<8xf32> to vector<8x1xf32>
    %730 = vector.broadcast %729 : vector<8x1xf32> to vector<8x8xf32>
    %731 = arith.subf %727, %730 : vector<8x8xf32>
    %732 = math.exp %731 : vector<8x8xf32>
    %cst_341 = arith.constant dense<0.000000e+00> : vector<8xf32>
    %733 = vector.multi_reduction <add>, %732, %cst_341 [1] : vector<8x8xf32> to vector<8xf32>
    %734 = vector.shape_cast %733 : vector<8xf32> to vector<8x1xf32>
    %735 = tpu.reciprocal %734 {approx = true} : vector<8x1xf32> -> vector<8x1xf32>
    %736 = vector.broadcast %735 : vector<8x1xf32> to vector<8x8xf32>
    %737 = arith.mulf %732, %736 : vector<8x8xf32>
    %738 = arith.truncf %737 : vector<8x8xf32> to vector<8x8xbf16>
    %cst_342 = arith.constant dense<0.000000e+00> : vector<8x32xf32>
    %739 = tpu.matmul %738, %726, %cst_342 {dimension_numbers = #tpu.dot_dimension_numbers<[1], [0], [0], [1], [0, 0, 1, 1], [], []>} : vector<8x8xbf16>, vector<8x32xbf16>, vector<8x32xf32> -> vector<8x32xf32>
    %c0_343 = arith.constant 0 : index
    %c0_344 = arith.constant 0 : index
    %740 = vector.load %arg15[%c0_343, %c0_344] : memref<8x128xf32, #tpu.memory_space<vmem>>, vector<8x32xf32>
    tpu.vector_store %arg15[%c0_343, %c0_344], %739 {strides = array<i32>} : memref<8x128xf32, #tpu.memory_space<vmem>>, vector<8x32xf32>,
    %741 = vector.extract_strided_slice %723 {offsets = [0, 32], sizes = [8, 32], strides = [1, 1]} : vector<8x384xbf16> to vector<8x32xbf16>
    %742 = vector.extract_strided_slice %723 {offsets = [0, 160], sizes = [8, 32], strides = [1, 1]} : vector<8x384xbf16> to vector<8x32xbf16>
    %743 = vector.extract_strided_slice %723 {offsets = [0, 288], sizes = [8, 32], strides = [1, 1]} : vector<8x384xbf16> to vector<8x32xbf16>
    %cst_345 = arith.constant dense<0.000000e+00> : vector<8x8xf32>
    %744 = tpu.matmul %741, %742, %cst_345 {dimension_numbers = #tpu.dot_dimension_numbers<[1], [1], [0], [0], [0, 0, 1, 0], [], []>} : vector<8x32xbf16>, vector<8x32xbf16>, vector<8x8xf32> -> vector<8x8xf32>
    %cst_346 = arith.constant dense<0xFF800000> : vector<8xf32>
    %745 = vector.multi_reduction <maximumf>, %744, %cst_346 [1] : vector<8x8xf32> to vector<8xf32>
    %746 = vector.shape_cast %745 : vector<8xf32> to vector<8x1xf32>
    %747 = vector.broadcast %746 : vector<8x1xf32> to vector<8x8xf32>
    %748 = arith.subf %744, %747 : vector<8x8xf32>
    %749 = math.exp %748 : vector<8x8xf32>
    %cst_347 = arith.constant dense<0.000000e+00> : vector<8xf32>
    %750 = vector.multi_reduction <add>, %749, %cst_347 [1] : vector<8x8xf32> to vector<8xf32>
    %751 = vector.shape_cast %750 : vector<8xf32> to vector<8x1xf32>
    %752 = tpu.reciprocal %751 {approx = true} : vector<8x1xf32> -> vector<8x1xf32>
    %753 = vector.broadcast %752 : vector<8x1xf32> to vector<8x8xf32>
    %754 = arith.mulf %749, %753 : vector<8x8xf32>
    %755 = arith.truncf %754 : vector<8x8xf32> to vector<8x8xbf16>
    %cst_348 = arith.constant dense<0.000000e+00> : vector<8x32xf32>
    %756 = tpu.matmul %755, %743, %cst_348 {dimension_numbers = #tpu.dot_dimension_numbers<[1], [0], [0], [1], [0, 0, 1, 1], [], []>} : vector<8x8xbf16>, vector<8x32xbf16>, vector<8x32xf32> -> vector<8x32xf32>
    %c0_349 = arith.constant 0 : index
    %c32_350 = arith.constant 32 : index
    %757 = vector.load %arg15[%c0_349, %c32_350] : memref<8x128xf32, #tpu.memory_space<vmem>>, vector<8x32xf32>
    tpu.vector_store %arg15[%c0_349, %c32_350], %756 {strides = array<i32>} : memref<8x128xf32, #tpu.memory_space<vmem>>, vector<8x32xf32>,
    %758 = vector.extract_strided_slice %723 {offsets = [0, 64], sizes = [8, 32], strides = [1, 1]} : vector<8x384xbf16> to vector<8x32xbf16>
    %759 = vector.extract_strided_slice %723 {offsets = [0, 192], sizes = [8, 32], strides = [1, 1]} : vector<8x384xbf16> to vector<8x32xbf16>
    %760 = vector.extract_strided_slice %723 {offsets = [0, 320], sizes = [8, 32], strides = [1, 1]} : vector<8x384xbf16> to vector<8x32xbf16>
    %cst_351 = arith.constant dense<0.000000e+00> : vector<8x8xf32>
    %761 = tpu.matmul %758, %759, %cst_351 {dimension_numbers = #tpu.dot_dimension_numbers<[1], [1], [0], [0], [0, 0, 1, 0], [], []>} : vector<8x32xbf16>, vector<8x32xbf16>, vector<8x8xf32> -> vector<8x8xf32>
    %cst_352 = arith.constant dense<0xFF800000> : vector<8xf32>
    %762 = vector.multi_reduction <maximumf>, %761, %cst_352 [1] : vector<8x8xf32> to vector<8xf32>
    %763 = vector.shape_cast %762 : vector<8xf32> to vector<8x1xf32>
    %764 = vector.broadcast %763 : vector<8x1xf32> to vector<8x8xf32>
    %765 = arith.subf %761, %764 : vector<8x8xf32>
    %766 = math.exp %765 : vector<8x8xf32>
    %cst_353 = arith.constant dense<0.000000e+00> : vector<8xf32>
    %767 = vector.multi_reduction <add>, %766, %cst_353 [1] : vector<8x8xf32> to vector<8xf32>
    %768 = vector.shape_cast %767 : vector<8xf32> to vector<8x1xf32>
    %769 = tpu.reciprocal %768 {approx = true} : vector<8x1xf32> -> vector<8x1xf32>
    %770 = vector.broadcast %769 : vector<8x1xf32> to vector<8x8xf32>
    %771 = arith.mulf %766, %770 : vector<8x8xf32>
    %772 = arith.truncf %771 : vector<8x8xf32> to vector<8x8xbf16>
    %cst_354 = arith.constant dense<0.000000e+00> : vector<8x32xf32>
    %773 = tpu.matmul %772, %760, %cst_354 {dimension_numbers = #tpu.dot_dimension_numbers<[1], [0], [0], [1], [0, 0, 1, 1], [], []>} : vector<8x8xbf16>, vector<8x32xbf16>, vector<8x32xf32> -> vector<8x32xf32>
    %c0_355 = arith.constant 0 : index
    %c64_356 = arith.constant 64 : index
    %774 = vector.load %arg15[%c0_355, %c64_356] : memref<8x128xf32, #tpu.memory_space<vmem>>, vector<8x32xf32>
    tpu.vector_store %arg15[%c0_355, %c64_356], %773 {strides = array<i32>} : memref<8x128xf32, #tpu.memory_space<vmem>>, vector<8x32xf32>,
    %775 = vector.extract_strided_slice %723 {offsets = [0, 96], sizes = [8, 32], strides = [1, 1]} : vector<8x384xbf16> to vector<8x32xbf16>
    %776 = vector.extract_strided_slice %723 {offsets = [0, 224], sizes = [8, 32], strides = [1, 1]} : vector<8x384xbf16> to vector<8x32xbf16>
    %777 = vector.extract_strided_slice %723 {offsets = [0, 352], sizes = [8, 32], strides = [1, 1]} : vector<8x384xbf16> to vector<8x32xbf16>
    %cst_357 = arith.constant dense<0.000000e+00> : vector<8x8xf32>
    %778 = tpu.matmul %775, %776, %cst_357 {dimension_numbers = #tpu.dot_dimension_numbers<[1], [1], [0], [0], [0, 0, 1, 0], [], []>} : vector<8x32xbf16>, vector<8x32xbf16>, vector<8x8xf32> -> vector<8x8xf32>
    %cst_358 = arith.constant dense<0xFF800000> : vector<8xf32>
    %779 = vector.multi_reduction <maximumf>, %778, %cst_358 [1] : vector<8x8xf32> to vector<8xf32>
    %780 = vector.shape_cast %779 : vector<8xf32> to vector<8x1xf32>
    %781 = vector.broadcast %780 : vector<8x1xf32> to vector<8x8xf32>
    %782 = arith.subf %778, %781 : vector<8x8xf32>
    %783 = math.exp %782 : vector<8x8xf32>
    %cst_359 = arith.constant dense<0.000000e+00> : vector<8xf32>
    %784 = vector.multi_reduction <add>, %783, %cst_359 [1] : vector<8x8xf32> to vector<8xf32>
    %785 = vector.shape_cast %784 : vector<8xf32> to vector<8x1xf32>
    %786 = tpu.reciprocal %785 {approx = true} : vector<8x1xf32> -> vector<8x1xf32>
    %787 = vector.broadcast %786 : vector<8x1xf32> to vector<8x8xf32>
    %788 = arith.mulf %783, %787 : vector<8x8xf32>
    %789 = arith.truncf %788 : vector<8x8xf32> to vector<8x8xbf16>
    %cst_360 = arith.constant dense<0.000000e+00> : vector<8x32xf32>
    %790 = tpu.matmul %789, %777, %cst_360 {dimension_numbers = #tpu.dot_dimension_numbers<[1], [0], [0], [1], [0, 0, 1, 1], [], []>} : vector<8x8xbf16>, vector<8x32xbf16>, vector<8x32xf32> -> vector<8x32xf32>
    %c0_361 = arith.constant 0 : index
    %c96_362 = arith.constant 96 : index
    %791 = vector.load %arg15[%c0_361, %c96_362] : memref<8x128xf32, #tpu.memory_space<vmem>>, vector<8x32xf32>
    tpu.vector_store %arg15[%c0_361, %c96_362], %790 {strides = array<i32>} : memref<8x128xf32, #tpu.memory_space<vmem>>, vector<8x32xf32>,
    %c0_363 = arith.constant 0 : index
    %c0_364 = arith.constant 0 : index
    %792 = vector.load %arg15[%c0_363, %c0_364] : memref<8x128xf32, #tpu.memory_space<vmem>>, vector<8x128xf32>
    %793 = arith.truncf %792 : vector<8x128xf32> to vector<8x128xbf16>
    %c4_365 = arith.constant 4 : index
    %c0_366 = arith.constant 0 : index
    %c0_367 = arith.constant 0 : index
    %794 = vector.load %arg6[%c4_365, %c0_366, %c0_367] : memref<6x128x128xbf16, #tpu.memory_space<vmem>>, vector<1x128x128xbf16>
    %795 = vector.shape_cast %794 : vector<1x128x128xbf16> to vector<128x128xbf16>
    %cst_368 = arith.constant dense<0.000000e+00> : vector<8x128xf32>
    %796 = tpu.matmul %793, %795, %cst_368 {dimension_numbers = #tpu.dot_dimension_numbers<[1], [0], [0], [1], [0, 0, 1, 1], [], []>} : vector<8x128xbf16>, vector<128x128xbf16>, vector<8x128xf32> -> vector<8x128xf32>
    %c4_369 = arith.constant 4 : index
    %c0_370 = arith.constant 0 : index
    %c0_371 = arith.constant 0 : index
    %797 = vector.load %arg7[%c4_369, %c0_370, %c0_371] : memref<6x1x128xf32, #tpu.memory_space<vmem>>, vector<1x1x128xf32>
    %798 = vector.shape_cast %797 : vector<1x1x128xf32> to vector<1x128xf32>
    %799 = vector.broadcast %798 : vector<1x128xf32> to vector<8x128xf32>
    %800 = arith.addf %796, %799 : vector<8x128xf32>
    %801 = arith.addf %688, %800 : vector<8x128xf32>
    %c4_372 = arith.constant 4 : index
    %c0_373 = arith.constant 0 : index
    %c0_374 = arith.constant 0 : index
    %802 = vector.load %arg8[%c4_372, %c0_373, %c0_374] : memref<6x1x128xf32, #tpu.memory_space<vmem>>, vector<1x1x128xf32>
    %803 = vector.shape_cast %802 : vector<1x1x128xf32> to vector<1x128xf32>
    %c4_375 = arith.constant 4 : index
    %c0_376 = arith.constant 0 : index
    %c0_377 = arith.constant 0 : index
    %804 = vector.load %arg9[%c4_375, %c0_376, %c0_377] : memref<6x1x128xf32, #tpu.memory_space<vmem>>, vector<1x1x128xf32>
    %805 = vector.shape_cast %804 : vector<1x1x128xf32> to vector<1x128xf32>
    %cst_378 = arith.constant dense<0.000000e+00> : vector<8xf32>
    %806 = vector.multi_reduction <add>, %801, %cst_378 [1] : vector<8x128xf32> to vector<8xf32>
    %807 = vector.shape_cast %806 : vector<8xf32> to vector<8x1xf32>
    %cst_379 = arith.constant 1.280000e+02 : f32
    %808 = vector.broadcast %cst_379 : f32 to vector<8x1xf32>
    %809 = arith.divf %807, %808 : vector<8x1xf32>
    %810 = vector.broadcast %809 : vector<8x1xf32> to vector<8x128xf32>
    %811 = arith.subf %801, %810 : vector<8x128xf32>
    %812 = arith.mulf %811, %811 : vector<8x128xf32>
    %cst_380 = arith.constant dense<0.000000e+00> : vector<8xf32>
    %813 = vector.multi_reduction <add>, %812, %cst_380 [1] : vector<8x128xf32> to vector<8xf32>
    %814 = vector.shape_cast %813 : vector<8xf32> to vector<8x1xf32>
    %cst_381 = arith.constant 1.280000e+02 : f32
    %815 = vector.broadcast %cst_381 : f32 to vector<8x1xf32>
    %816 = arith.divf %814, %815 : vector<8x1xf32>
    %817 = vector.broadcast %809 : vector<8x1xf32> to vector<8x128xf32>
    %818 = arith.subf %801, %817 : vector<8x128xf32>
    %cst_382 = arith.constant 9.99999997E-7 : f32
    %819 = vector.broadcast %cst_382 : f32 to vector<8x1xf32>
    %820 = arith.addf %816, %819 : vector<8x1xf32>
    %821 = math.rsqrt %820 : vector<8x1xf32>
    %822 = vector.broadcast %821 : vector<8x1xf32> to vector<8x128xf32>
    %823 = arith.mulf %818, %822 : vector<8x128xf32>
    %824 = vector.broadcast %803 : vector<1x128xf32> to vector<8x128xf32>
    %825 = arith.mulf %823, %824 : vector<8x128xf32>
    %826 = vector.broadcast %805 : vector<1x128xf32> to vector<8x128xf32>
    %827 = arith.addf %825, %826 : vector<8x128xf32>
    %828 = arith.truncf %827 : vector<8x128xf32> to vector<8x128xbf16>
    %c4_383 = arith.constant 4 : index
    %c0_384 = arith.constant 0 : index
    %c0_385 = arith.constant 0 : index
    %829 = vector.load %arg10[%c4_383, %c0_384, %c0_385] : memref<6x128x256xbf16, #tpu.memory_space<vmem>>, vector<1x128x256xbf16>
    %830 = vector.shape_cast %829 : vector<1x128x256xbf16> to vector<128x256xbf16>
    %cst_386 = arith.constant dense<0.000000e+00> : vector<8x256xf32>
    %831 = tpu.matmul %828, %830, %cst_386 {dimension_numbers = #tpu.dot_dimension_numbers<[1], [0], [0], [1], [0, 0, 1, 1], [], []>} : vector<8x128xbf16>, vector<128x256xbf16>, vector<8x256xf32> -> vector<8x256xf32>
    %c4_387 = arith.constant 4 : index
    %c0_388 = arith.constant 0 : index
    %c0_389 = arith.constant 0 : index
    %832 = vector.load %arg11[%c4_387, %c0_388, %c0_389] : memref<6x1x256xf32, #tpu.memory_space<vmem>>, vector<1x1x256xf32>
    %833 = vector.shape_cast %832 : vector<1x1x256xf32> to vector<1x256xf32>
    %834 = vector.broadcast %833 : vector<1x256xf32> to vector<8x256xf32>
    %835 = arith.addf %831, %834 : vector<8x256xf32>
    %cst_390 = arith.constant 5.000000e-01 : f32
    %836 = vector.broadcast %cst_390 : f32 to vector<8x256xf32>
    %837 = arith.mulf %836, %835 : vector<8x256xf32>
    %cst_391 = arith.constant 0.707106769 : f32
    %838 = vector.broadcast %cst_391 : f32 to vector<8x256xf32>
    %839 = arith.mulf %835, %838 : vector<8x256xf32>
    %840 = math.erf %839 : vector<8x256xf32>
    %cst_392 = arith.constant 1.000000e+00 : f32
    %841 = vector.broadcast %cst_392 : f32 to vector<8x256xf32>
    %842 = arith.addf %841, %840 : vector<8x256xf32>
    %843 = arith.mulf %837, %842 : vector<8x256xf32>
    %844 = arith.truncf %843 : vector<8x256xf32> to vector<8x256xbf16>
    %c4_393 = arith.constant 4 : index
    %c0_394 = arith.constant 0 : index
    %c0_395 = arith.constant 0 : index
    %845 = vector.load %arg12[%c4_393, %c0_394, %c0_395] : memref<6x256x128xbf16, #tpu.memory_space<vmem>>, vector<1x256x128xbf16>
    %846 = vector.shape_cast %845 : vector<1x256x128xbf16> to vector<256x128xbf16>
    %cst_396 = arith.constant dense<0.000000e+00> : vector<8x128xf32>
    %847 = tpu.matmul %844, %846, %cst_396 {dimension_numbers = #tpu.dot_dimension_numbers<[1], [0], [0], [1], [0, 0, 1, 1], [], []>} : vector<8x256xbf16>, vector<256x128xbf16>, vector<8x128xf32> -> vector<8x128xf32>
    %c4_397 = arith.constant 4 : index
    %c0_398 = arith.constant 0 : index
    %c0_399 = arith.constant 0 : index
    %848 = vector.load %arg13[%c4_397, %c0_398, %c0_399] : memref<6x1x128xf32, #tpu.memory_space<vmem>>, vector<1x1x128xf32>
    %849 = vector.shape_cast %848 : vector<1x1x128xf32> to vector<1x128xf32>
    %850 = vector.broadcast %849 : vector<1x128xf32> to vector<8x128xf32>
    %851 = arith.addf %847, %850 : vector<8x128xf32>
    %cst_400 = arith.constant 5.000000e-01 : f32
    %852 = vector.broadcast %cst_400 : f32 to vector<8x128xf32>
    %853 = arith.mulf %852, %851 : vector<8x128xf32>
    %cst_401 = arith.constant 0.707106769 : f32
    %854 = vector.broadcast %cst_401 : f32 to vector<8x128xf32>
    %855 = arith.mulf %851, %854 : vector<8x128xf32>
    %856 = math.erf %855 : vector<8x128xf32>
    %cst_402 = arith.constant 1.000000e+00 : f32
    %857 = vector.broadcast %cst_402 : f32 to vector<8x128xf32>
    %858 = arith.addf %857, %856 : vector<8x128xf32>
    %859 = arith.mulf %853, %858 : vector<8x128xf32>
    %860 = arith.addf %801, %859 : vector<8x128xf32>
    %c5 = arith.constant 5 : index
    %c0_403 = arith.constant 0 : index
    %c0_404 = arith.constant 0 : index
    %861 = vector.load %arg2[%c5, %c0_403, %c0_404] : memref<6x1x128xf32, #tpu.memory_space<vmem>>, vector<1x1x128xf32>
    %862 = vector.shape_cast %861 : vector<1x1x128xf32> to vector<1x128xf32>
    %c5_405 = arith.constant 5 : index
    %c0_406 = arith.constant 0 : index
    %c0_407 = arith.constant 0 : index
    %863 = vector.load %arg3[%c5_405, %c0_406, %c0_407] : memref<6x1x128xf32, #tpu.memory_space<vmem>>, vector<1x1x128xf32>
    %864 = vector.shape_cast %863 : vector<1x1x128xf32> to vector<1x128xf32>
    %cst_408 = arith.constant dense<0.000000e+00> : vector<8xf32>
    %865 = vector.multi_reduction <add>, %860, %cst_408 [1] : vector<8x128xf32> to vector<8xf32>
    %866 = vector.shape_cast %865 : vector<8xf32> to vector<8x1xf32>
    %cst_409 = arith.constant 1.280000e+02 : f32
    %867 = vector.broadcast %cst_409 : f32 to vector<8x1xf32>
    %868 = arith.divf %866, %867 : vector<8x1xf32>
    %869 = vector.broadcast %868 : vector<8x1xf32> to vector<8x128xf32>
    %870 = arith.subf %860, %869 : vector<8x128xf32>
    %871 = arith.mulf %870, %870 : vector<8x128xf32>
    %cst_410 = arith.constant dense<0.000000e+00> : vector<8xf32>
    %872 = vector.multi_reduction <add>, %871, %cst_410 [1] : vector<8x128xf32> to vector<8xf32>
    %873 = vector.shape_cast %872 : vector<8xf32> to vector<8x1xf32>
    %cst_411 = arith.constant 1.280000e+02 : f32
    %874 = vector.broadcast %cst_411 : f32 to vector<8x1xf32>
    %875 = arith.divf %873, %874 : vector<8x1xf32>
    %876 = vector.broadcast %868 : vector<8x1xf32> to vector<8x128xf32>
    %877 = arith.subf %860, %876 : vector<8x128xf32>
    %cst_412 = arith.constant 9.99999997E-7 : f32
    %878 = vector.broadcast %cst_412 : f32 to vector<8x1xf32>
    %879 = arith.addf %875, %878 : vector<8x1xf32>
    %880 = math.rsqrt %879 : vector<8x1xf32>
    %881 = vector.broadcast %880 : vector<8x1xf32> to vector<8x128xf32>
    %882 = arith.mulf %877, %881 : vector<8x128xf32>
    %883 = vector.broadcast %862 : vector<1x128xf32> to vector<8x128xf32>
    %884 = arith.mulf %882, %883 : vector<8x128xf32>
    %885 = vector.broadcast %864 : vector<1x128xf32> to vector<8x128xf32>
    %886 = arith.addf %884, %885 : vector<8x128xf32>
    %887 = arith.truncf %886 : vector<8x128xf32> to vector<8x128xbf16>
    %c5_413 = arith.constant 5 : index
    %c0_414 = arith.constant 0 : index
    %c0_415 = arith.constant 0 : index
    %888 = vector.load %arg4[%c5_413, %c0_414, %c0_415] : memref<6x128x384xbf16, #tpu.memory_space<vmem>>, vector<1x128x384xbf16>
    %889 = vector.shape_cast %888 : vector<1x128x384xbf16> to vector<128x384xbf16>
    %cst_416 = arith.constant dense<0.000000e+00> : vector<8x384xf32>
    %890 = tpu.matmul %887, %889, %cst_416 {dimension_numbers = #tpu.dot_dimension_numbers<[1], [0], [0], [1], [0, 0, 1, 1], [], []>} : vector<8x128xbf16>, vector<128x384xbf16>, vector<8x384xf32> -> vector<8x384xf32>
    %c5_417 = arith.constant 5 : index
    %c0_418 = arith.constant 0 : index
    %c0_419 = arith.constant 0 : index
    %891 = vector.load %arg5[%c5_417, %c0_418, %c0_419] : memref<6x1x384xf32, #tpu.memory_space<vmem>>, vector<1x1x384xf32>
    %892 = vector.shape_cast %891 : vector<1x1x384xf32> to vector<1x384xf32>
    %893 = vector.broadcast %892 : vector<1x384xf32> to vector<8x384xf32>
    %894 = arith.addf %890, %893 : vector<8x384xf32>
    %895 = arith.truncf %894 : vector<8x384xf32> to vector<8x384xbf16>
    %896 = vector.extract_strided_slice %895 {offsets = [0, 0], sizes = [8, 32], strides = [1, 1]} : vector<8x384xbf16> to vector<8x32xbf16>
    %897 = vector.extract_strided_slice %895 {offsets = [0, 128], sizes = [8, 32], strides = [1, 1]} : vector<8x384xbf16> to vector<8x32xbf16>
    %898 = vector.extract_strided_slice %895 {offsets = [0, 256], sizes = [8, 32], strides = [1, 1]} : vector<8x384xbf16> to vector<8x32xbf16>
    %cst_420 = arith.constant dense<0.000000e+00> : vector<8x8xf32>
    %899 = tpu.matmul %896, %897, %cst_420 {dimension_numbers = #tpu.dot_dimension_numbers<[1], [1], [0], [0], [0, 0, 1, 0], [], []>} : vector<8x32xbf16>, vector<8x32xbf16>, vector<8x8xf32> -> vector<8x8xf32>
    %cst_421 = arith.constant dense<0xFF800000> : vector<8xf32>
    %900 = vector.multi_reduction <maximumf>, %899, %cst_421 [1] : vector<8x8xf32> to vector<8xf32>
    %901 = vector.shape_cast %900 : vector<8xf32> to vector<8x1xf32>
    %902 = vector.broadcast %901 : vector<8x1xf32> to vector<8x8xf32>
    %903 = arith.subf %899, %902 : vector<8x8xf32>
    %904 = math.exp %903 : vector<8x8xf32>
    %cst_422 = arith.constant dense<0.000000e+00> : vector<8xf32>
    %905 = vector.multi_reduction <add>, %904, %cst_422 [1] : vector<8x8xf32> to vector<8xf32>
    %906 = vector.shape_cast %905 : vector<8xf32> to vector<8x1xf32>
    %907 = tpu.reciprocal %906 {approx = true} : vector<8x1xf32> -> vector<8x1xf32>
    %908 = vector.broadcast %907 : vector<8x1xf32> to vector<8x8xf32>
    %909 = arith.mulf %904, %908 : vector<8x8xf32>
    %910 = arith.truncf %909 : vector<8x8xf32> to vector<8x8xbf16>
    %cst_423 = arith.constant dense<0.000000e+00> : vector<8x32xf32>
    %911 = tpu.matmul %910, %898, %cst_423 {dimension_numbers = #tpu.dot_dimension_numbers<[1], [0], [0], [1], [0, 0, 1, 1], [], []>} : vector<8x8xbf16>, vector<8x32xbf16>, vector<8x32xf32> -> vector<8x32xf32>
    %c0_424 = arith.constant 0 : index
    %c0_425 = arith.constant 0 : index
    %912 = vector.load %arg15[%c0_424, %c0_425] : memref<8x128xf32, #tpu.memory_space<vmem>>, vector<8x32xf32>
    tpu.vector_store %arg15[%c0_424, %c0_425], %911 {strides = array<i32>} : memref<8x128xf32, #tpu.memory_space<vmem>>, vector<8x32xf32>,
    %913 = vector.extract_strided_slice %895 {offsets = [0, 32], sizes = [8, 32], strides = [1, 1]} : vector<8x384xbf16> to vector<8x32xbf16>
    %914 = vector.extract_strided_slice %895 {offsets = [0, 160], sizes = [8, 32], strides = [1, 1]} : vector<8x384xbf16> to vector<8x32xbf16>
    %915 = vector.extract_strided_slice %895 {offsets = [0, 288], sizes = [8, 32], strides = [1, 1]} : vector<8x384xbf16> to vector<8x32xbf16>
    %cst_426 = arith.constant dense<0.000000e+00> : vector<8x8xf32>
    %916 = tpu.matmul %913, %914, %cst_426 {dimension_numbers = #tpu.dot_dimension_numbers<[1], [1], [0], [0], [0, 0, 1, 0], [], []>} : vector<8x32xbf16>, vector<8x32xbf16>, vector<8x8xf32> -> vector<8x8xf32>
    %cst_427 = arith.constant dense<0xFF800000> : vector<8xf32>
    %917 = vector.multi_reduction <maximumf>, %916, %cst_427 [1] : vector<8x8xf32> to vector<8xf32>
    %918 = vector.shape_cast %917 : vector<8xf32> to vector<8x1xf32>
    %919 = vector.broadcast %918 : vector<8x1xf32> to vector<8x8xf32>
    %920 = arith.subf %916, %919 : vector<8x8xf32>
    %921 = math.exp %920 : vector<8x8xf32>
    %cst_428 = arith.constant dense<0.000000e+00> : vector<8xf32>
    %922 = vector.multi_reduction <add>, %921, %cst_428 [1] : vector<8x8xf32> to vector<8xf32>
    %923 = vector.shape_cast %922 : vector<8xf32> to vector<8x1xf32>
    %924 = tpu.reciprocal %923 {approx = true} : vector<8x1xf32> -> vector<8x1xf32>
    %925 = vector.broadcast %924 : vector<8x1xf32> to vector<8x8xf32>
    %926 = arith.mulf %921, %925 : vector<8x8xf32>
    %927 = arith.truncf %926 : vector<8x8xf32> to vector<8x8xbf16>
    %cst_429 = arith.constant dense<0.000000e+00> : vector<8x32xf32>
    %928 = tpu.matmul %927, %915, %cst_429 {dimension_numbers = #tpu.dot_dimension_numbers<[1], [0], [0], [1], [0, 0, 1, 1], [], []>} : vector<8x8xbf16>, vector<8x32xbf16>, vector<8x32xf32> -> vector<8x32xf32>
    %c0_430 = arith.constant 0 : index
    %c32_431 = arith.constant 32 : index
    %929 = vector.load %arg15[%c0_430, %c32_431] : memref<8x128xf32, #tpu.memory_space<vmem>>, vector<8x32xf32>
    tpu.vector_store %arg15[%c0_430, %c32_431], %928 {strides = array<i32>} : memref<8x128xf32, #tpu.memory_space<vmem>>, vector<8x32xf32>,
    %930 = vector.extract_strided_slice %895 {offsets = [0, 64], sizes = [8, 32], strides = [1, 1]} : vector<8x384xbf16> to vector<8x32xbf16>
    %931 = vector.extract_strided_slice %895 {offsets = [0, 192], sizes = [8, 32], strides = [1, 1]} : vector<8x384xbf16> to vector<8x32xbf16>
    %932 = vector.extract_strided_slice %895 {offsets = [0, 320], sizes = [8, 32], strides = [1, 1]} : vector<8x384xbf16> to vector<8x32xbf16>
    %cst_432 = arith.constant dense<0.000000e+00> : vector<8x8xf32>
    %933 = tpu.matmul %930, %931, %cst_432 {dimension_numbers = #tpu.dot_dimension_numbers<[1], [1], [0], [0], [0, 0, 1, 0], [], []>} : vector<8x32xbf16>, vector<8x32xbf16>, vector<8x8xf32> -> vector<8x8xf32>
    %cst_433 = arith.constant dense<0xFF800000> : vector<8xf32>
    %934 = vector.multi_reduction <maximumf>, %933, %cst_433 [1] : vector<8x8xf32> to vector<8xf32>
    %935 = vector.shape_cast %934 : vector<8xf32> to vector<8x1xf32>
    %936 = vector.broadcast %935 : vector<8x1xf32> to vector<8x8xf32>
    %937 = arith.subf %933, %936 : vector<8x8xf32>
    %938 = math.exp %937 : vector<8x8xf32>
    %cst_434 = arith.constant dense<0.000000e+00> : vector<8xf32>
    %939 = vector.multi_reduction <add>, %938, %cst_434 [1] : vector<8x8xf32> to vector<8xf32>
    %940 = vector.shape_cast %939 : vector<8xf32> to vector<8x1xf32>
    %941 = tpu.reciprocal %940 {approx = true} : vector<8x1xf32> -> vector<8x1xf32>
    %942 = vector.broadcast %941 : vector<8x1xf32> to vector<8x8xf32>
    %943 = arith.mulf %938, %942 : vector<8x8xf32>
    %944 = arith.truncf %943 : vector<8x8xf32> to vector<8x8xbf16>
    %cst_435 = arith.constant dense<0.000000e+00> : vector<8x32xf32>
    %945 = tpu.matmul %944, %932, %cst_435 {dimension_numbers = #tpu.dot_dimension_numbers<[1], [0], [0], [1], [0, 0, 1, 1], [], []>} : vector<8x8xbf16>, vector<8x32xbf16>, vector<8x32xf32> -> vector<8x32xf32>
    %c0_436 = arith.constant 0 : index
    %c64_437 = arith.constant 64 : index
    %946 = vector.load %arg15[%c0_436, %c64_437] : memref<8x128xf32, #tpu.memory_space<vmem>>, vector<8x32xf32>
    tpu.vector_store %arg15[%c0_436, %c64_437], %945 {strides = array<i32>} : memref<8x128xf32, #tpu.memory_space<vmem>>, vector<8x32xf32>,
    %947 = vector.extract_strided_slice %895 {offsets = [0, 96], sizes = [8, 32], strides = [1, 1]} : vector<8x384xbf16> to vector<8x32xbf16>
    %948 = vector.extract_strided_slice %895 {offsets = [0, 224], sizes = [8, 32], strides = [1, 1]} : vector<8x384xbf16> to vector<8x32xbf16>
    %949 = vector.extract_strided_slice %895 {offsets = [0, 352], sizes = [8, 32], strides = [1, 1]} : vector<8x384xbf16> to vector<8x32xbf16>
    %cst_438 = arith.constant dense<0.000000e+00> : vector<8x8xf32>
    %950 = tpu.matmul %947, %948, %cst_438 {dimension_numbers = #tpu.dot_dimension_numbers<[1], [1], [0], [0], [0, 0, 1, 0], [], []>} : vector<8x32xbf16>, vector<8x32xbf16>, vector<8x8xf32> -> vector<8x8xf32>
    %cst_439 = arith.constant dense<0xFF800000> : vector<8xf32>
    %951 = vector.multi_reduction <maximumf>, %950, %cst_439 [1] : vector<8x8xf32> to vector<8xf32>
    %952 = vector.shape_cast %951 : vector<8xf32> to vector<8x1xf32>
    %953 = vector.broadcast %952 : vector<8x1xf32> to vector<8x8xf32>
    %954 = arith.subf %950, %953 : vector<8x8xf32>
    %955 = math.exp %954 : vector<8x8xf32>
    %cst_440 = arith.constant dense<0.000000e+00> : vector<8xf32>
    %956 = vector.multi_reduction <add>, %955, %cst_440 [1] : vector<8x8xf32> to vector<8xf32>
    %957 = vector.shape_cast %956 : vector<8xf32> to vector<8x1xf32>
    %958 = tpu.reciprocal %957 {approx = true} : vector<8x1xf32> -> vector<8x1xf32>
    %959 = vector.broadcast %958 : vector<8x1xf32> to vector<8x8xf32>
    %960 = arith.mulf %955, %959 : vector<8x8xf32>
    %961 = arith.truncf %960 : vector<8x8xf32> to vector<8x8xbf16>
    %cst_441 = arith.constant dense<0.000000e+00> : vector<8x32xf32>
    %962 = tpu.matmul %961, %949, %cst_441 {dimension_numbers = #tpu.dot_dimension_numbers<[1], [0], [0], [1], [0, 0, 1, 1], [], []>} : vector<8x8xbf16>, vector<8x32xbf16>, vector<8x32xf32> -> vector<8x32xf32>
    %c0_442 = arith.constant 0 : index
    %c96_443 = arith.constant 96 : index
    %963 = vector.load %arg15[%c0_442, %c96_443] : memref<8x128xf32, #tpu.memory_space<vmem>>, vector<8x32xf32>
    tpu.vector_store %arg15[%c0_442, %c96_443], %962 {strides = array<i32>} : memref<8x128xf32, #tpu.memory_space<vmem>>, vector<8x32xf32>,
    %c0_444 = arith.constant 0 : index
    %c0_445 = arith.constant 0 : index
    %964 = vector.load %arg15[%c0_444, %c0_445] : memref<8x128xf32, #tpu.memory_space<vmem>>, vector<8x128xf32>
    %965 = arith.truncf %964 : vector<8x128xf32> to vector<8x128xbf16>
    %c5_446 = arith.constant 5 : index
    %c0_447 = arith.constant 0 : index
    %c0_448 = arith.constant 0 : index
    %966 = vector.load %arg6[%c5_446, %c0_447, %c0_448] : memref<6x128x128xbf16, #tpu.memory_space<vmem>>, vector<1x128x128xbf16>
    %967 = vector.shape_cast %966 : vector<1x128x128xbf16> to vector<128x128xbf16>
    %cst_449 = arith.constant dense<0.000000e+00> : vector<8x128xf32>
    %968 = tpu.matmul %965, %967, %cst_449 {dimension_numbers = #tpu.dot_dimension_numbers<[1], [0], [0], [1], [0, 0, 1, 1], [], []>} : vector<8x128xbf16>, vector<128x128xbf16>, vector<8x128xf32> -> vector<8x128xf32>
    %c5_450 = arith.constant 5 : index
    %c0_451 = arith.constant 0 : index
    %c0_452 = arith.constant 0 : index
    %969 = vector.load %arg7[%c5_450, %c0_451, %c0_452] : memref<6x1x128xf32, #tpu.memory_space<vmem>>, vector<1x1x128xf32>
    %970 = vector.shape_cast %969 : vector<1x1x128xf32> to vector<1x128xf32>
    %971 = vector.broadcast %970 : vector<1x128xf32> to vector<8x128xf32>
    %972 = arith.addf %968, %971 : vector<8x128xf32>
    %973 = arith.addf %860, %972 : vector<8x128xf32>
    %c5_453 = arith.constant 5 : index
    %c0_454 = arith.constant 0 : index
    %c0_455 = arith.constant 0 : index
    %974 = vector.load %arg8[%c5_453, %c0_454, %c0_455] : memref<6x1x128xf32, #tpu.memory_space<vmem>>, vector<1x1x128xf32>
    %975 = vector.shape_cast %974 : vector<1x1x128xf32> to vector<1x128xf32>
    %c5_456 = arith.constant 5 : index
    %c0_457 = arith.constant 0 : index
    %c0_458 = arith.constant 0 : index
    %976 = vector.load %arg9[%c5_456, %c0_457, %c0_458] : memref<6x1x128xf32, #tpu.memory_space<vmem>>, vector<1x1x128xf32>
    %977 = vector.shape_cast %976 : vector<1x1x128xf32> to vector<1x128xf32>
    %cst_459 = arith.constant dense<0.000000e+00> : vector<8xf32>
    %978 = vector.multi_reduction <add>, %973, %cst_459 [1] : vector<8x128xf32> to vector<8xf32>
    %979 = vector.shape_cast %978 : vector<8xf32> to vector<8x1xf32>
    %cst_460 = arith.constant 1.280000e+02 : f32
    %980 = vector.broadcast %cst_460 : f32 to vector<8x1xf32>
    %981 = arith.divf %979, %980 : vector<8x1xf32>
    %982 = vector.broadcast %981 : vector<8x1xf32> to vector<8x128xf32>
    %983 = arith.subf %973, %982 : vector<8x128xf32>
    %984 = arith.mulf %983, %983 : vector<8x128xf32>
    %cst_461 = arith.constant dense<0.000000e+00> : vector<8xf32>
    %985 = vector.multi_reduction <add>, %984, %cst_461 [1] : vector<8x128xf32> to vector<8xf32>
    %986 = vector.shape_cast %985 : vector<8xf32> to vector<8x1xf32>
    %cst_462 = arith.constant 1.280000e+02 : f32
    %987 = vector.broadcast %cst_462 : f32 to vector<8x1xf32>
    %988 = arith.divf %986, %987 : vector<8x1xf32>
    %989 = vector.broadcast %981 : vector<8x1xf32> to vector<8x128xf32>
    %990 = arith.subf %973, %989 : vector<8x128xf32>
    %cst_463 = arith.constant 9.99999997E-7 : f32
    %991 = vector.broadcast %cst_463 : f32 to vector<8x1xf32>
    %992 = arith.addf %988, %991 : vector<8x1xf32>
    %993 = math.rsqrt %992 : vector<8x1xf32>
    %994 = vector.broadcast %993 : vector<8x1xf32> to vector<8x128xf32>
    %995 = arith.mulf %990, %994 : vector<8x128xf32>
    %996 = vector.broadcast %975 : vector<1x128xf32> to vector<8x128xf32>
    %997 = arith.mulf %995, %996 : vector<8x128xf32>
    %998 = vector.broadcast %977 : vector<1x128xf32> to vector<8x128xf32>
    %999 = arith.addf %997, %998 : vector<8x128xf32>
    %1000 = arith.truncf %999 : vector<8x128xf32> to vector<8x128xbf16>
    %c5_464 = arith.constant 5 : index
    %c0_465 = arith.constant 0 : index
    %c0_466 = arith.constant 0 : index
    %1001 = vector.load %arg10[%c5_464, %c0_465, %c0_466] : memref<6x128x256xbf16, #tpu.memory_space<vmem>>, vector<1x128x256xbf16>
    %1002 = vector.shape_cast %1001 : vector<1x128x256xbf16> to vector<128x256xbf16>
    %cst_467 = arith.constant dense<0.000000e+00> : vector<8x256xf32>
    %1003 = tpu.matmul %1000, %1002, %cst_467 {dimension_numbers = #tpu.dot_dimension_numbers<[1], [0], [0], [1], [0, 0, 1, 1], [], []>} : vector<8x128xbf16>, vector<128x256xbf16>, vector<8x256xf32> -> vector<8x256xf32>
    %c5_468 = arith.constant 5 : index
    %c0_469 = arith.constant 0 : index
    %c0_470 = arith.constant 0 : index
    %1004 = vector.load %arg11[%c5_468, %c0_469, %c0_470] : memref<6x1x256xf32, #tpu.memory_space<vmem>>, vector<1x1x256xf32>
    %1005 = vector.shape_cast %1004 : vector<1x1x256xf32> to vector<1x256xf32>
    %1006 = vector.broadcast %1005 : vector<1x256xf32> to vector<8x256xf32>
    %1007 = arith.addf %1003, %1006 : vector<8x256xf32>
    %cst_471 = arith.constant 5.000000e-01 : f32
    %1008 = vector.broadcast %cst_471 : f32 to vector<8x256xf32>
    %1009 = arith.mulf %1008, %1007 : vector<8x256xf32>
    %cst_472 = arith.constant 0.707106769 : f32
    %1010 = vector.broadcast %cst_472 : f32 to vector<8x256xf32>
    %1011 = arith.mulf %1007, %1010 : vector<8x256xf32>
    %1012 = math.erf %1011 : vector<8x256xf32>
    %cst_473 = arith.constant 1.000000e+00 : f32
    %1013 = vector.broadcast %cst_473 : f32 to vector<8x256xf32>
    %1014 = arith.addf %1013, %1012 : vector<8x256xf32>
    %1015 = arith.mulf %1009, %1014 : vector<8x256xf32>
    %1016 = arith.truncf %1015 : vector<8x256xf32> to vector<8x256xbf16>
    %c5_474 = arith.constant 5 : index
    %c0_475 = arith.constant 0 : index
    %c0_476 = arith.constant 0 : index
    %1017 = vector.load %arg12[%c5_474, %c0_475, %c0_476] : memref<6x256x128xbf16, #tpu.memory_space<vmem>>, vector<1x256x128xbf16>
    %1018 = vector.shape_cast %1017 : vector<1x256x128xbf16> to vector<256x128xbf16>
    %cst_477 = arith.constant dense<0.000000e+00> : vector<8x128xf32>
    %1019 = tpu.matmul %1016, %1018, %cst_477 {dimension_numbers = #tpu.dot_dimension_numbers<[1], [0], [0], [1], [0, 0, 1, 1], [], []>} : vector<8x256xbf16>, vector<256x128xbf16>, vector<8x128xf32> -> vector<8x128xf32>
    %c5_478 = arith.constant 5 : index
    %c0_479 = arith.constant 0 : index
    %c0_480 = arith.constant 0 : index
    %1020 = vector.load %arg13[%c5_478, %c0_479, %c0_480] : memref<6x1x128xf32, #tpu.memory_space<vmem>>, vector<1x1x128xf32>
    %1021 = vector.shape_cast %1020 : vector<1x1x128xf32> to vector<1x128xf32>
    %1022 = vector.broadcast %1021 : vector<1x128xf32> to vector<8x128xf32>
    %1023 = arith.addf %1019, %1022 : vector<8x128xf32>
    %cst_481 = arith.constant 5.000000e-01 : f32
    %1024 = vector.broadcast %cst_481 : f32 to vector<8x128xf32>
    %1025 = arith.mulf %1024, %1023 : vector<8x128xf32>
    %cst_482 = arith.constant 0.707106769 : f32
    %1026 = vector.broadcast %cst_482 : f32 to vector<8x128xf32>
    %1027 = arith.mulf %1023, %1026 : vector<8x128xf32>
    %1028 = math.erf %1027 : vector<8x128xf32>
    %cst_483 = arith.constant 1.000000e+00 : f32
    %1029 = vector.broadcast %cst_483 : f32 to vector<8x128xf32>
    %1030 = arith.addf %1029, %1028 : vector<8x128xf32>
    %1031 = arith.mulf %1025, %1030 : vector<8x128xf32>
    %1032 = arith.addf %973, %1031 : vector<8x128xf32>
    %c0_484 = arith.constant 0 : index
    %c0_485 = arith.constant 0 : index
    %1033 = vector.load %arg14[%c0_484, %c0_485] : memref<8x128xf32, #tpu.memory_space<vmem>>, vector<8x128xf32>
    tpu.vector_store %arg14[%c0_484, %c0_485], %1032 {strides = array<i32>} : memref<8x128xf32, #tpu.memory_space<vmem>>, vector<8x128xf32>,
    return
  }
  func.func @transform_0(%arg0: i32) -> (i32, i32) {
    %c0_i32 = arith.constant 0 : i32
    %c0_i32_0 = arith.constant 0 : i32
    return %arg0, %c0_i32 : i32, i32
  }
  func.func @transform_1(%arg0: i32) -> (i32, i32, i32) {
    %c0_i32 = arith.constant 0 : i32
    %c0_i32_0 = arith.constant 0 : i32
    %c0_i32_1 = arith.constant 0 : i32
    %c0_i32_2 = arith.constant 0 : i32
    return %c0_i32, %c0_i32_0, %c0_i32_1 : i32, i32, i32
  }
  func.func @transform_2(%arg0: i32) -> (i32, i32, i32) {
    %c0_i32 = arith.constant 0 : i32
    %c0_i32_0 = arith.constant 0 : i32
    %c0_i32_1 = arith.constant 0 : i32
    %c0_i32_2 = arith.constant 0 : i32
    return %c0_i32, %c0_i32_0, %c0_i32_1 : i32, i32, i32
  }
  func.func @transform_3(%arg0: i32) -> (i32, i32, i32) {
    %c0_i32 = arith.constant 0 : i32
    %c0_i32_0 = arith.constant 0 : i32
    %c0_i32_1 = arith.constant 0 : i32
    %c0_i32_2 = arith.constant 0 : i32
    return %c0_i32, %c0_i32_0, %c0_i32_1 : i32, i32, i32
  }
  func.func @transform_4(%arg0: i32) -> (i32, i32, i32) {
    %c0_i32 = arith.constant 0 : i32
    %c0_i32_0 = arith.constant 0 : i32
    %c0_i32_1 = arith.constant 0 : i32
    %c0_i32_2 = arith.constant 0 : i32
    return %c0_i32, %c0_i32_0, %c0_i32_1 : i32, i32, i32
  }
  func.func @transform_5(%arg0: i32) -> (i32, i32, i32) {
    %c0_i32 = arith.constant 0 : i32
    %c0_i32_0 = arith.constant 0 : i32
    %c0_i32_1 = arith.constant 0 : i32
    %c0_i32_2 = arith.constant 0 : i32
    return %c0_i32, %c0_i32_0, %c0_i32_1 : i32, i32, i32
  }
  func.func @transform_6(%arg0: i32) -> (i32, i32, i32) {
    %c0_i32 = arith.constant 0 : i32
    %c0_i32_0 = arith.constant 0 : i32
    %c0_i32_1 = arith.constant 0 : i32
    %c0_i32_2 = arith.constant 0 : i32
    return %c0_i32, %c0_i32_0, %c0_i32_1 : i32, i32, i32
  }
  func.func @transform_7(%arg0: i32) -> (i32, i32, i32) {
    %c0_i32 = arith.constant 0 : i32
    %c0_i32_0 = arith.constant 0 : i32
    %c0_i32_1 = arith.constant 0 : i32
    %c0_i32_2 = arith.constant 0 : i32
    return %c0_i32, %c0_i32_0, %c0_i32_1 : i32, i32, i32
  }
  func.func @transform_8(%arg0: i32) -> (i32, i32, i32) {
    %c0_i32 = arith.constant 0 : i32
    %c0_i32_0 = arith.constant 0 : i32
    %c0_i32_1 = arith.constant 0 : i32
    %c0_i32_2 = arith.constant 0 : i32
    return %c0_i32, %c0_i32_0, %c0_i32_1 : i32, i32, i32
  }
  func.func @transform_9(%arg0: i32) -> (i32, i32, i32) {
    %c0_i32 = arith.constant 0 : i32
    %c0_i32_0 = arith.constant 0 : i32
    %c0_i32_1 = arith.constant 0 : i32
    %c0_i32_2 = arith.constant 0 : i32
    return %c0_i32, %c0_i32_0, %c0_i32_1 : i32, i32, i32
  }
  func.func @transform_10(%arg0: i32) -> (i32, i32, i32) {
    %c0_i32 = arith.constant 0 : i32
    %c0_i32_0 = arith.constant 0 : i32
    %c0_i32_1 = arith.constant 0 : i32
    %c0_i32_2 = arith.constant 0 : i32
    return %c0_i32, %c0_i32_0, %c0_i32_1 : i32, i32, i32
  }
  func.func @transform_11(%arg0: i32) -> (i32, i32, i32) {
    %c0_i32 = arith.constant 0 : i32
    %c0_i32_0 = arith.constant 0 : i32
    %c0_i32_1 = arith.constant 0 : i32
    %c0_i32_2 = arith.constant 0 : i32
    return %c0_i32, %c0_i32_0, %c0_i32_1 : i32, i32, i32
  }
  func.func @transform_12(%arg0: i32) -> (i32, i32, i32) {
    %c0_i32 = arith.constant 0 : i32
    %c0_i32_0 = arith.constant 0 : i32
    %c0_i32_1 = arith.constant 0 : i32
    %c0_i32_2 = arith.constant 0 : i32
    return %c0_i32, %c0_i32_0, %c0_i32_1 : i32, i32, i32
  }
  func.func @transform_13(%arg0: i32) -> (i32, i32) {
    %c0_i32 = arith.constant 0 : i32
    %c0_i32_0 = arith.constant 0 : i32
    return %arg0, %c0_i32 : i32, i32
  }
}

</mosaic_0001>

<llo_original>
// kernel: tpu_custom_call.1
$region0: #{tpu_custom_call.1}
  #allocation0 [shape = 'u32[]', space=smem, size = 0x4, offset = 0x4, fixed_abs, tag = 'smem constant byte address 0x4 - core index']
  #allocation1 [shape = 'u32[144,128]{1,0:T(1,128)}', space=vmem, size = 0x12000, scoped, tag = 'internal scratch']
  #allocation2 [shape = 'f32[8,128]{1,0:T(8,128)}', space=vmem, size = 0x1000, scoped, tag = 'scratch operand']
  %s0 = inlined_call_operand.hbm [shape: f32[16,128], index: 0, kind: input, shape index: {}]
  %s1 = inlined_call_operand.hbm [shape: f32[6,1,128], index: 1, kind: input, shape index: {}]
  %s2 = inlined_call_operand.hbm [shape: f32[6,1,128], index: 2, kind: input, shape index: {}]
  %s3 = inlined_call_operand.hbm [shape: bf16[6,128,384], index: 3, kind: input, shape index: {}]
  %s4 = inlined_call_operand.hbm [shape: f32[6,1,384], index: 4, kind: input, shape index: {}]
  %s5 = inlined_call_operand.hbm [shape: bf16[6,128,128], index: 5, kind: input, shape index: {}]
  %s6 = inlined_call_operand.vmem [shape: f32[6,1,128], index: 6, kind: input, shape index: {}]
  %s7 = inlined_call_operand.hbm [shape: f32[6,1,128], index: 7, kind: input, shape index: {}]
  %s8 = inlined_call_operand.hbm [shape: f32[6,1,128], index: 8, kind: input, shape index: {}]
  %s9 = inlined_call_operand.hbm [shape: bf16[6,128,256], index: 9, kind: input, shape index: {}]
  %s10 = inlined_call_operand.vmem [shape: f32[6,1,256], index: 10, kind: input, shape index: {}]
  %s11 = inlined_call_operand.hbm [shape: bf16[6,256,128], index: 11, kind: input, shape index: {}]
  %s12 = inlined_call_operand.hbm [shape: f32[6,1,128], index: 12, kind: input, shape index: {}]
  %s13 = inlined_call_operand.hbm [shape: f32[16,128], index: 13, kind: output, shape index: {}]
  %s14 = sld [smem:[#allocation0]]
  $region129: #{tpu_custom_call.1} parent=0
    _
  %s16 = ssub.s32 1, %s14
  %s17 = scalar_select 0, %s16, %s14
  $region1: #{tpu_custom_call.1} parent=0
    #allocation3 [shape = 'u8[8192]{0}', space=vmem, size = 0x2000, scoped, tag = 'input window, operand 0']
    #allocation4 [shape = 's32[2]{0}', space=sflag, size = 0x8, scoped, tag = 'scoped memory for tpu_custom_call.1']
    #allocation5 [shape = 's32[2]{0}', space=sflag, size = 0x8, scoped, tag = 'scoped memory for tpu_custom_call.1']
    #allocation6 [shape = 'u8[3072]{0}', space=vmem, size = 0xc00, scoped, tag = 'input window, operand 1, single buffered']
    #allocation7 [shape = 's32[1]{0}', space=sflag, size = 0x4, scoped, tag = 'scoped memory for tpu_custom_call.1']
    #allocation8 [shape = 'u8[3072]{0}', space=vmem, size = 0xc00, scoped, tag = 'input window, operand 2, single buffered']
    #allocation9 [shape = 'u8[589824]{0}', space=vmem, size = 0x90000, scoped, tag = 'input window, operand 3, single buffered']
    #allocation10 [shape = 's32[1]{0}', space=sflag, size = 0x4, scoped, tag = 'scoped memory for tpu_custom_call.1']
    #allocation11 [shape = 'u8[9216]{0}', space=vmem, size = 0x2400, scoped, tag = 'input window, operand 4, single buffered']
    #allocation12 [shape = 'u8[196608]{0}', space=vmem, size = 0x30000, scoped, tag = 'input window, operand 5, single buffered']
    #allocation13 [shape = 's32[1]{0}', space=sflag, size = 0x4, scoped, tag = 'scoped memory for tpu_custom_call.1']
    #allocation14 [shape = 'u8[3072]{0}', space=vmem, size = 0xc00, scoped, tag = 'input window, operand 7, single buffered']
    #allocation15 [shape = 'u8[3072]{0}', space=vmem, size = 0xc00, scoped, tag = 'input window, operand 8, single buffered']
    #allocation16 [shape = 's32[1]{0}', space=sflag, size = 0x4, scoped, tag = 'scoped memory for tpu_custom_call.1']
    #allocation17 [shape = 'u8[393216]{0}', space=vmem, size = 0x60000, scoped, tag = 'input window, operand 9, single buffered']
    #allocation18 [shape = 'u8[393216]{0}', space=vmem, size = 0x60000, scoped, tag = 'input window, operand 11, single buffered']
    #allocation19 [shape = 's32[1]{0}', space=sflag, size = 0x4, scoped, tag = 'scoped memory for tpu_custom_call.1']
    #allocation20 [shape = 'u8[3072]{0}', space=vmem, size = 0xc00, scoped, tag = 'input window, operand 12, single buffered']
    #allocation21 [shape = 'u8[8192]{0}', space=vmem, size = 0x2000, scoped, tag = 'output window, operand 0']
    %18 = vsyncpa [#allocation4], 0
    %s19 = scalar_lea.sflag [#allocation4], 1
    %20 = vsyncpa %s19, 0
    %21 = vsyncpa [#allocation7], 0
    %22 = vsyncpa [#allocation10], 0
    %23 = vsyncpa [#allocation13], 0
    %24 = vsyncpa [#allocation16], 0
    %25 = vsyncpa [#allocation19], 0
    %26 = vsyncpa [#allocation5], 0
    %s27 = scalar_lea.sflag [#allocation5], 1
    %28 = vsyncpa %s27, 0
    loop: start=0, step=1, limit=4
    $region2: #{tpu_custom_call.1} parent=1 // loop_pre_header
      _
    $region3: #{tpu_custom_call.1} parent=1 // loop_header
      %s30 = sphi 0, %s34
      %p31 = scmp.ge.s32.totalorder %s30, 4
      %s40 = sphi 0, %s42
      %s43 = sphi 0, %s40
      %s44 = sphi 0, %s43
      %s60 = sphi 0, %s44
      %s64 = sphi 0, %s64
      %s66 = sphi 0, %s64
      %s67 = sphi 0, %s66
      %s81 = sphi 0, %s67
      %s85 = sphi 0, %s85
      %s87 = sphi 0, %s85
      %s88 = sphi 0, %s87
      %s102 = sphi 0, %s88
      %s106 = sphi 0, %s106
      %s108 = sphi 0, %s106
      %s109 = sphi 0, %s108
      %s123 = sphi 0, %s109
      %s127 = sphi 0, %s127
      %s129 = sphi 0, %s127
      %s130 = sphi 0, %s129
      %s144 = sphi 0, %s130
      %s148 = sphi 0, %s148
      %s150 = sphi 0, %s148
      %s151 = sphi 0, %s150
      %s165 = sphi 0, %s151
      %s169 = sphi 0, %s169
      %s171 = sphi 0, %s169
      %s172 = sphi 0, %s171
      %s186 = sphi 0, %s172
      %s190 = sphi 0, %s190
      %s192 = sphi 0, %s190
      %s193 = sphi 0, %s192
      %s207 = sphi 0, %s193
      %s211 = sphi 0, %s211
      %s213 = sphi 0, %s211
      %s214 = sphi 0, %s213
      %s228 = sphi 0, %s214
      %s232 = sphi 0, %s232
      %s234 = sphi 0, %s232
      %s235 = sphi 0, %s234
      %s249 = sphi 0, %s235
      %s253 = sphi 0, %s253
      %s255 = sphi 0, %s253
      %s256 = sphi 0, %s255
      %s270 = sphi 0, %s256
      %s274 = sphi 0, %s274
      %s276 = sphi 0, %s274
      %s277 = sphi 0, %s276
      %s291 = sphi 0, %s277
      %s295 = sphi 0, %s295
      %s297 = sphi 0, %s295
      %s298 = sphi 0, %s297
      %s312 = sphi 0, %s298
      %s318 = sphi 0, %s320
      %s321 = sphi 0, %s318
      %s322 = sphi 0, %s321
      %s338 = sphi 0, %s322
    $region4: #{tpu_custom_call.1} parent=1 // loop_header_branch
      %33 = sbr.rel (%p31) target = $region8
    $region5: #{tpu_custom_call.1} parent=1 // loop_body
      %s35 = ssub.s32 %s30, 1
      %s36 = ssub.s32 %s30, 2
      %s37 = sadd.s32 %s30, 1
      %s38 = ssub.s32 %s30, %s37
      %p39 = scmp.eq.s32.totalorder %s38, 0
      %s41 = sadd.s32 %s40, 1
      %s42 = scalar_select %p39, %s40, %s41
      %p45 = pneg %p39
      %p46 = scmp.eq.s32.totalorder %s30, 1
      %p47 = por %p45, %p46
      %p48 = scmp.ne.s32.totalorder %s40, %s43
      %p49 = scmp.eq.s32.totalorder %s30, 0
      %p50 = por %p48, %p49
      %p51 = scmp.ne.s32.totalorder %s40, %s43
      %p52 = scmp.eq.s32.totalorder %s35, 1
      %p53 = por %p51, %p52
      %p54 = scmp.ne.s32.totalorder %s43, %s44
      %p55 = scmp.eq.s32.totalorder %s35, 0
      %p56 = por %p54, %p55
      %p57 = scmp.ne.s32.totalorder %s43, %s44
      %p58 = scmp.eq.s32.totalorder %s36, 1
      %p59 = por %p57, %p58
      %p61 = scmp.ne.s32.totalorder %s44, %s60
      %p62 = scmp.eq.s32.totalorder %s36, 0
      %p63 = por %p61, %p62
      %s65 = sadd.s32 %s64, 1
      %p68 = scmp.eq.s32.totalorder %s30, 1
      %p69 = scmp.ne.s32.totalorder %s64, %s66
      %p70 = scmp.eq.s32.totalorder %s30, 0
      %p71 = por %p69, %p70
      %p72 = scmp.ne.s32.totalorder %s64, %s66
      %p73 = scmp.eq.s32.totalorder %s35, 1
      %p74 = por %p72, %p73
      %p75 = scmp.ne.s32.totalorder %s66, %s67
      %p76 = scmp.eq.s32.totalorder %s35, 0
      %p77 = por %p75, %p76
      %p78 = scmp.ne.s32.totalorder %s66, %s67
      %p79 = scmp.eq.s32.totalorder %s36, 1
      %p80 = por %p78, %p79
      %p82 = scmp.ne.s32.totalorder %s67, %s81
      %p83 = scmp.eq.s32.totalorder %s36, 0
      %p84 = por %p82, %p83
      %s86 = sadd.s32 %s85, 1
      %p89 = scmp.eq.s32.totalorder %s30, 1
      %p90 = scmp.ne.s32.totalorder %s85, %s87
      %p91 = scmp.eq.s32.totalorder %s30, 0
      %p92 = por %p90, %p91
      %p93 = scmp.ne.s32.totalorder %s85, %s87
      %p94 = scmp.eq.s32.totalorder %s35, 1
      %p95 = por %p93, %p94
      %p96 = scmp.ne.s32.totalorder %s87, %s88
      %p97 = scmp.eq.s32.totalorder %s35, 0
      %p98 = por %p96, %p97
      %p99 = scmp.ne.s32.totalorder %s87, %s88
      %p100 = scmp.eq.s32.totalorder %s36, 1
      %p101 = por %p99, %p100
      %p103 = scmp.ne.s32.totalorder %s88, %s102
      %p104 = scmp.eq.s32.totalorder %s36, 0
      %p105 = por %p103, %p104
      %s107 = sadd.s32 %s106, 1
      %p110 = scmp.eq.s32.totalorder %s30, 1
      %p111 = scmp.ne.s32.totalorder %s106, %s108
      %p112 = scmp.eq.s32.totalorder %s30, 0
      %p113 = por %p111, %p112
      %p114 = scmp.ne.s32.totalorder %s106, %s108
      %p115 = scmp.eq.s32.totalorder %s35, 1
      %p116 = por %p114, %p115
      %p117 = scmp.ne.s32.totalorder %s108, %s109
      %p118 = scmp.eq.s32.totalorder %s35, 0
      %p119 = por %p117, %p118
      %p120 = scmp.ne.s32.totalorder %s108, %s109
      %p121 = scmp.eq.s32.totalorder %s36, 1
      %p122 = por %p120, %p121
      %p124 = scmp.ne.s32.totalorder %s109, %s123
      %p125 = scmp.eq.s32.totalorder %s36, 0
      %p126 = por %p124, %p125
      %s128 = sadd.s32 %s127, 1
      %p131 = scmp.eq.s32.totalorder %s30, 1
      %p132 = scmp.ne.s32.totalorder %s127, %s129
      %p133 = scmp.eq.s32.totalorder %s30, 0
      %p134 = por %p132, %p133
      %p135 = scmp.ne.s32.totalorder %s127, %s129
      %p136 = scmp.eq.s32.totalorder %s35, 1
      %p137 = por %p135, %p136
      %p138 = scmp.ne.s32.totalorder %s129, %s130
      %p139 = scmp.eq.s32.totalorder %s35, 0
      %p140 = por %p138, %p139
      %p141 = scmp.ne.s32.totalorder %s129, %s130
      %p142 = scmp.eq.s32.totalorder %s36, 1
      %p143 = por %p141, %p142
      %p145 = scmp.ne.s32.totalorder %s130, %s144
      %p146 = scmp.eq.s32.totalorder %s36, 0
      %p147 = por %p145, %p146
      %s149 = sadd.s32 %s148, 1
      %p152 = scmp.eq.s32.totalorder %s30, 1
      %p153 = scmp.ne.s32.totalorder %s148, %s150
      %p154 = scmp.eq.s32.totalorder %s30, 0
      %p155 = por %p153, %p154
      %p156 = scmp.ne.s32.totalorder %s148, %s150
      %p157 = scmp.eq.s32.totalorder %s35, 1
      %p158 = por %p156, %p157
      %p159 = scmp.ne.s32.totalorder %s150, %s151
      %p160 = scmp.eq.s32.totalorder %s35, 0
      %p161 = por %p159, %p160
      %p162 = scmp.ne.s32.totalorder %s150, %s151
      %p163 = scmp.eq.s32.totalorder %s36, 1
      %p164 = por %p162, %p163
      %p166 = scmp.ne.s32.totalorder %s151, %s165
      %p167 = scmp.eq.s32.totalorder %s36, 0
      %p168 = por %p166, %p167
      %s170 = sadd.s32 %s169, 1
      %p173 = scmp.eq.s32.totalorder %s30, 1
      %p174 = scmp.ne.s32.totalorder %s169, %s171
      %p175 = scmp.eq.s32.totalorder %s30, 0
      %p176 = por %p174, %p175
      %p177 = scmp.ne.s32.totalorder %s169, %s171
      %p178 = scmp.eq.s32.totalorder %s35, 1
      %p179 = por %p177, %p178
      %p180 = scmp.ne.s32.totalorder %s171, %s172
      %p181 = scmp.eq.s32.totalorder %s35, 0
      %p182 = por %p180, %p181
      %p183 = scmp.ne.s32.totalorder %s171, %s172
      %p184 = scmp.eq.s32.totalorder %s36, 1
      %p185 = por %p183, %p184
      %p187 = scmp.ne.s32.totalorder %s172, %s186
      %p188 = scmp.eq.s32.totalorder %s36, 0
      %p189 = por %p187, %p188
      %s191 = sadd.s32 %s190, 1
      %p194 = scmp.eq.s32.totalorder %s30, 1
      %p195 = scmp.ne.s32.totalorder %s190, %s192
      %p196 = scmp.eq.s32.totalorder %s30, 0
      %p197 = por %p195, %p196
      %p198 = scmp.ne.s32.totalorder %s190, %s192
      %p199 = scmp.eq.s32.totalorder %s35, 1
      %p200 = por %p198, %p199
      %p201 = scmp.ne.s32.totalorder %s192, %s193
      %p202 = scmp.eq.s32.totalorder %s35, 0
      %p203 = por %p201, %p202
      %p204 = scmp.ne.s32.totalorder %s192, %s193
      %p205 = scmp.eq.s32.totalorder %s36, 1
      %p206 = por %p204, %p205
      %p208 = scmp.ne.s32.totalorder %s193, %s207
      %p209 = scmp.eq.s32.totalorder %s36, 0
      %p210 = por %p208, %p209
      %s212 = sadd.s32 %s211, 1
      %p215 = scmp.eq.s32.totalorder %s30, 1
      %p216 = scmp.ne.s32.totalorder %s211, %s213
      %p217 = scmp.eq.s32.totalorder %s30, 0
      %p218 = por %p216, %p217
      %p219 = scmp.ne.s32.totalorder %s211, %s213
      %p220 = scmp.eq.s32.totalorder %s35, 1
      %p221 = por %p219, %p220
      %p222 = scmp.ne.s32.totalorder %s213, %s214
      %p223 = scmp.eq.s32.totalorder %s35, 0
      %p224 = por %p222, %p223
      %p225 = scmp.ne.s32.totalorder %s213, %s214
      %p226 = scmp.eq.s32.totalorder %s36, 1
      %p227 = por %p225, %p226
      %p229 = scmp.ne.s32.totalorder %s214, %s228
      %p230 = scmp.eq.s32.totalorder %s36, 0
      %p231 = por %p229, %p230
      %s233 = sadd.s32 %s232, 1
      %p236 = scmp.eq.s32.totalorder %s30, 1
      %p237 = scmp.ne.s32.totalorder %s232, %s234
      %p238 = scmp.eq.s32.totalorder %s30, 0
      %p239 = por %p237, %p238
      %p240 = scmp.ne.s32.totalorder %s232, %s234
      %p241 = scmp.eq.s32.totalorder %s35, 1
      %p242 = por %p240, %p241
      %p243 = scmp.ne.s32.totalorder %s234, %s235
      %p244 = scmp.eq.s32.totalorder %s35, 0
      %p245 = por %p243, %p244
      %p246 = scmp.ne.s32.totalorder %s234, %s235
      %p247 = scmp.eq.s32.totalorder %s36, 1
      %p248 = por %p246, %p247
      %p250 = scmp.ne.s32.totalorder %s235, %s249
      %p251 = scmp.eq.s32.totalorder %s36, 0
      %p252 = por %p250, %p251
      %s254 = sadd.s32 %s253, 1
      %p257 = scmp.eq.s32.totalorder %s30, 1
      %p258 = scmp.ne.s32.totalorder %s253, %s255
      %p259 = scmp.eq.s32.totalorder %s30, 0
      %p260 = por %p258, %p259
      %p261 = scmp.ne.s32.totalorder %s253, %s255
      %p262 = scmp.eq.s32.totalorder %s35, 1
      %p263 = por %p261, %p262
      %p264 = scmp.ne.s32.totalorder %s255, %s256
      %p265 = scmp.eq.s32.totalorder %s35, 0
      %p266 = por %p264, %p265
      %p267 = scmp.ne.s32.totalorder %s255, %s256
      %p268 = scmp.eq.s32.totalorder %s36, 1
      %p269 = por %p267, %p268
      %p271 = scmp.ne.s32.totalorder %s256, %s270
      %p272 = scmp.eq.s32.totalorder %s36, 0
      %p273 = por %p271, %p272
      %s275 = sadd.s32 %s274, 1
      %p278 = scmp.eq.s32.totalorder %s30, 1
      %p279 = scmp.ne.s32.totalorder %s274, %s276
      %p280 = scmp.eq.s32.totalorder %s30, 0
      %p281 = por %p279, %p280
      %p282 = scmp.ne.s32.totalorder %s274, %s276
      %p283 = scmp.eq.s32.totalorder %s35, 1
      %p284 = por %p282, %p283
      %p285 = scmp.ne.s32.totalorder %s276, %s277
      %p286 = scmp.eq.s32.totalorder %s35, 0
      %p287 = por %p285, %p286
      %p288 = scmp.ne.s32.totalorder %s276, %s277
      %p289 = scmp.eq.s32.totalorder %s36, 1
      %p290 = por %p288, %p289
      %p292 = scmp.ne.s32.totalorder %s277, %s291
      %p293 = scmp.eq.s32.totalorder %s36, 0
      %p294 = por %p292, %p293
      %s296 = sadd.s32 %s295, 1
      %p299 = scmp.eq.s32.totalorder %s30, 1
      %p300 = scmp.ne.s32.totalorder %s295, %s297
      %p301 = scmp.eq.s32.totalorder %s30, 0
      %p302 = por %p300, %p301
      %p303 = scmp.ne.s32.totalorder %s295, %s297
      %p304 = scmp.eq.s32.totalorder %s35, 1
      %p305 = por %p303, %p304
      %p306 = scmp.ne.s32.totalorder %s297, %s298
      %p307 = scmp.eq.s32.totalorder %s35, 0
      %p308 = por %p306, %p307
      %p309 = scmp.ne.s32.totalorder %s297, %s298
      %p310 = scmp.eq.s32.totalorder %s36, 1
      %p311 = por %p309, %p310
      %p313 = scmp.ne.s32.totalorder %s298, %s312
      %p314 = scmp.eq.s32.totalorder %s36, 0
      %p315 = por %p313, %p314
      %s316 = ssub.s32 %s30, %s37
      %p317 = scmp.eq.s32.totalorder %s316, 0
      %s319 = sadd.s32 %s318, 1
      %s320 = scalar_select %p317, %s318, %s319
      %p323 = pneg %p317
      %p324 = scmp.eq.s32.totalorder %s30, 1
      %p325 = por %p323, %p324
      %p326 = scmp.ne.s32.totalorder %s318, %s321
      %p327 = scmp.eq.s32.totalorder %s30, 0
      %p328 = por %p326, %p327
      %p329 = scmp.ne.s32.totalorder %s318, %s321
      %p330 = scmp.eq.s32.totalorder %s35, 1
      %p331 = por %p329, %p330
      %p332 = scmp.ne.s32.totalorder %s321, %s322
      %p333 = scmp.eq.s32.totalorder %s35, 0
      %p334 = por %p332, %p333
      %p335 = scmp.ne.s32.totalorder %s321, %s322
      %p336 = scmp.eq.s32.totalorder %s36, 1
      %p337 = por %p335, %p336
      %p339 = scmp.ne.s32.totalorder %s322, %s338
      %p340 = scmp.eq.s32.totalorder %s36, 0
      %p341 = por %p339, %p340
      %p342 = scmp.le.s32.totalorder 1, %s30
      %p343 = scmp.lt.s32.totalorder %s30, 3
      %p344 = pnand %p342, %p343
      %p345 = pneg %p344
      // Predicated region
      $region9: #{tpu_custom_call.1} parent=5 // pred_check
        _
      $region10: #{tpu_custom_call.1} parent=5 // pred_check_branch
        %347 = sbr.rel (%p344) target = $region12
      $region11: #{tpu_custom_call.1} parent=5 // pred_region
        %s348 = ssub.s32 %s30, 1
        // Predicated region
        $region13: #{tpu_custom_call.1} parent=11 // pred_check
          %p349 = pneg %p77
        $region14: #{tpu_custom_call.1} parent=11 // pred_check_branch
          %351 = sbr.rel (%p349) target = $region16
        $region15: #{tpu_custom_call.1} parent=11 // pred_region
          %s353 = ssub.s32 96, 96
          %354 = vsyncadd [#allocation7], %s353
          %s355 = sshll.u32 [#allocation6], 4
          %s356 = int_to_ptr.vmem [resolvable:$true] %s355
          %361 = dma.hbm_to_vmem [thread:$0]  %s1, 96, %s356, [#allocation7], 16, 16, 1
        $region16: #{tpu_custom_call.1} parent=11 // pred_fallthru
          _
        // Predicated region
        $region17: #{tpu_custom_call.1} parent=11 // pred_check
          %p362 = pneg %p98
        $region18: #{tpu_custom_call.1} parent=11 // pred_check_branch
          %364 = sbr.rel (%p362) target = $region20
        $region19: #{tpu_custom_call.1} parent=11 // pred_region
          %s366 = ssub.s32 96, 96
          %367 = vsyncadd [#allocation7], %s366
          %s368 = sshll.u32 [#allocation8], 4
          %s369 = int_to_ptr.vmem [resolvable:$true] %s368
          %374 = dma.hbm_to_vmem [thread:$0]  %s2, 96, %s369, [#allocation7], 16, 16, 1
        $region20: #{tpu_custom_call.1} parent=11 // pred_fallthru
          _
        // Predicated region
        $region21: #{tpu_custom_call.1} parent=11 // pred_check
          %p375 = pneg %p119
        $region22: #{tpu_custom_call.1} parent=11 // pred_check_branch
          %377 = sbr.rel (%p375) target = $region24
        $region23: #{tpu_custom_call.1} parent=11 // pred_region
          %s379 = ssub.s32 18432, 18432
          %380 = vsyncadd [#allocation10], %s379
          %s381 = sshll.u32 [#allocation9], 4
          %s382 = int_to_ptr.vmem [resolvable:$true] %s381
          %387 = dma.hbm_to_vmem [thread:$0]  %s3, 18432, %s382, [#allocation10], 192, 192, 12
        $region24: #{tpu_custom_call.1} parent=11 // pred_fallthru
          _
        // Predicated region
        $region25: #{tpu_custom_call.1} parent=11 // pred_check
          %p388 = pneg %p140
        $region26: #{tpu_custom_call.1} parent=11 // pred_check_branch
          %390 = sbr.rel (%p388) target = $region28
        $region27: #{tpu_custom_call.1} parent=11 // pred_region
          %s392 = ssub.s32 288, 288
          %393 = vsyncadd [#allocation10], %s392
          %s394 = sshll.u32 [#allocation11], 4
          %s395 = int_to_ptr.vmem [resolvable:$true] %s394
          %400 = dma.hbm_to_vmem [thread:$0]  %s4, 288, %s395, [#allocation10], 48, 48, 3
        $region28: #{tpu_custom_call.1} parent=11 // pred_fallthru
          _
        // Predicated region
        $region29: #{tpu_custom_call.1} parent=11 // pred_check
          %p401 = pneg %p161
        $region30: #{tpu_custom_call.1} parent=11 // pred_check_branch
          %403 = sbr.rel (%p401) target = $region32
        $region31: #{tpu_custom_call.1} parent=11 // pred_region
          %s405 = ssub.s32 6144, 6144
          %406 = vsyncadd [#allocation13], %s405
          %s407 = sshll.u32 [#allocation12], 4
          %s408 = int_to_ptr.vmem [resolvable:$true] %s407
          %413 = dma.hbm_to_vmem [thread:$0]  %s5, 6144, %s408, [#allocation13], 64, 64, 4
        $region32: #{tpu_custom_call.1} parent=11 // pred_fallthru
          _
        // Predicated region
        $region33: #{tpu_custom_call.1} parent=11 // pred_check
          %p414 = pneg %p182
        $region34: #{tpu_custom_call.1} parent=11 // pred_check_branch
          %416 = sbr.rel (%p414) target = $region36
        $region35: #{tpu_custom_call.1} parent=11 // pred_region
          _
        $region36: #{tpu_custom_call.1} parent=11 // pred_fallthru
          _
        // Predicated region
        $region37: #{tpu_custom_call.1} parent=11 // pred_check
          %p417 = pneg %p203
        $region38: #{tpu_custom_call.1} parent=11 // pred_check_branch
          %419 = sbr.rel (%p417) target = $region40
        $region39: #{tpu_custom_call.1} parent=11 // pred_region
          %s421 = ssub.s32 96, 96
          %422 = vsyncadd [#allocation13], %s421
          %s423 = sshll.u32 [#allocation14], 4
          %s424 = int_to_ptr.vmem [resolvable:$true] %s423
          %429 = dma.hbm_to_vmem [thread:$0]  %s7, 96, %s424, [#allocation13], 16, 16, 1
        $region40: #{tpu_custom_call.1} parent=11 // pred_fallthru
          _
        // Predicated region
        $region41: #{tpu_custom_call.1} parent=11 // pred_check
          %p430 = pneg %p224
        $region42: #{tpu_custom_call.1} parent=11 // pred_check_branch
          %432 = sbr.rel (%p430) target = $region44
        $region43: #{tpu_custom_call.1} parent=11 // pred_region
          %s434 = ssub.s32 96, 96
          %435 = vsyncadd [#allocation16], %s434
          %s436 = sshll.u32 [#allocation15], 4
          %s437 = int_to_ptr.vmem [resolvable:$true] %s436
          %442 = dma.hbm_to_vmem [thread:$0]  %s8, 96, %s437, [#allocation16], 16, 16, 1
        $region44: #{tpu_custom_call.1} parent=11 // pred_fallthru
          _
        // Predicated region
        $region45: #{tpu_custom_call.1} parent=11 // pred_check
          %p443 = pneg %p245
        $region46: #{tpu_custom_call.1} parent=11 // pred_check_branch
          %445 = sbr.rel (%p443) target = $region48
        $region47: #{tpu_custom_call.1} parent=11 // pred_region
          %s447 = ssub.s32 12288, 12288
          %448 = vsyncadd [#allocation16], %s447
          %s449 = sshll.u32 [#allocation17], 4
          %s450 = int_to_ptr.vmem [resolvable:$true] %s449
          %455 = dma.hbm_to_vmem [thread:$0]  %s9, 12288, %s450, [#allocation16], 128, 128, 8
        $region48: #{tpu_custom_call.1} parent=11 // pred_fallthru
          _
        // Predicated region
        $region49: #{tpu_custom_call.1} parent=11 // pred_check
          %p456 = pneg %p266
        $region50: #{tpu_custom_call.1} parent=11 // pred_check_branch
          %458 = sbr.rel (%p456) target = $region52
        $region51: #{tpu_custom_call.1} parent=11 // pred_region
          _
        $region52: #{tpu_custom_call.1} parent=11 // pred_fallthru
          _
        // Predicated region
        $region53: #{tpu_custom_call.1} parent=11 // pred_check
          %p459 = pneg %p287
        $region54: #{tpu_custom_call.1} parent=11 // pred_check_branch
          %461 = sbr.rel (%p459) target = $region56
        $region55: #{tpu_custom_call.1} parent=11 // pred_region
          %s463 = ssub.s32 12288, 12288
          %464 = vsyncadd [#allocation19], %s463
          %s465 = sshll.u32 [#allocation18], 4
          %s466 = int_to_ptr.vmem [resolvable:$true] %s465
          %471 = dma.hbm_to_vmem [thread:$0]  %s11, 12288, %s466, [#allocation19], 64, 64, 4
        $region56: #{tpu_custom_call.1} parent=11 // pred_fallthru
          _
        // Predicated region
        $region57: #{tpu_custom_call.1} parent=11 // pred_check
          %p472 = pneg %p308
        $region58: #{tpu_custom_call.1} parent=11 // pred_check_branch
          %474 = sbr.rel (%p472) target = $region60
        $region59: #{tpu_custom_call.1} parent=11 // pred_region
          %s476 = ssub.s32 96, 96
          %477 = vsyncadd [#allocation19], %s476
          %s478 = sshll.u32 [#allocation20], 4
          %s479 = int_to_ptr.vmem [resolvable:$true] %s478
          %484 = dma.hbm_to_vmem [thread:$0]  %s12, 96, %s479, [#allocation19], 16, 16, 1
        $region60: #{tpu_custom_call.1} parent=11 // pred_fallthru
          _
      $region12: #{tpu_custom_call.1} parent=5 // pred_fallthru
        _
      %p485 = scmp.lt.s32.totalorder %s30, 2
      // Predicated region
      $region61: #{tpu_custom_call.1} parent=5 // pred_check
        %p486 = pneg %p485
      $region62: #{tpu_custom_call.1} parent=5 // pred_check_branch
        %488 = sbr.rel (%p486) target = $region64
      $region63: #{tpu_custom_call.1} parent=5 // pred_region
        // Predicated region
        $region65: #{tpu_custom_call.1} parent=63 // pred_check
          %p489 = pneg %p50
        $region66: #{tpu_custom_call.1} parent=63 // pred_check_branch
          %491 = sbr.rel (%p489) target = $region68
        $region67: #{tpu_custom_call.1} parent=63 // pred_region
          %s492 = sand.u32 %s40, 1
          %s493 = scalar_lea.sflag [#allocation4], %s492
          %s494 = sand.u32 %s40, 1
          %s495 = smul.addr %s494, 8
          %s496 = scalar_lea.vmem [#allocation3], %s495
          %s498 = ssub.s32 128, 128
          %499 = vsyncadd %s493, %s498
          %s500 = smul.addr %s30, 128
          %s501 = scalar_lea.hbm %s0, %s500
          %s503 = sshll.u32 %s496, 4
          %s504 = int_to_ptr.vmem [resolvable:$true] %s503
          %506 = dma.hbm_to_vmem [thread:$0]  %s501, 128, %s504, %s493
        $region68: #{tpu_custom_call.1} parent=63 // pred_fallthru
          _
      $region64: #{tpu_custom_call.1} parent=5 // pred_fallthru
        _
      %p507 = scmp.le.s32.totalorder 1, %s30
      %p508 = scmp.lt.s32.totalorder %s30, 3
      %p509 = pnand %p507, %p508
      %p510 = pneg %p509
      // Predicated region
      $region69: #{tpu_custom_call.1} parent=5 // pred_check
        _
      $region70: #{tpu_custom_call.1} parent=5 // pred_check_branch
        %512 = sbr.rel (%p509) target = $region72
      $region71: #{tpu_custom_call.1} parent=5 // pred_region
        %s513 = ssub.s32 %s30, 1
        %s514 = sand.u32 %s43, 1
        %s515 = scalar_lea.sflag [#allocation4], %s514
        %s516 = sand.u32 %s43, 1
        %s517 = smul.addr %s516, 8
        %s518 = scalar_lea.vmem [#allocation3], %s517
        // Predicated region
        $region73: #{tpu_custom_call.1} parent=71 // pred_check
          %p519 = pneg %p56
        $region74: #{tpu_custom_call.1} parent=71 // pred_check_branch
          %521 = sbr.rel (%p519) target = $region76
        $region75: #{tpu_custom_call.1} parent=71 // pred_region
          %522 = dma.done %s515, 128
        $region76: #{tpu_custom_call.1} parent=71 // pred_fallthru
          _
        // Predicated region
        $region77: #{tpu_custom_call.1} parent=71 // pred_check
          %p523 = pneg %p77
        $region78: #{tpu_custom_call.1} parent=71 // pred_check_branch
          %525 = sbr.rel (%p523) target = $region80
        $region79: #{tpu_custom_call.1} parent=71 // pred_region
          %526 = dma.done [#allocation7], 96
        $region80: #{tpu_custom_call.1} parent=71 // pred_fallthru
          _
        // Predicated region
        $region81: #{tpu_custom_call.1} parent=71 // pred_check
          %p527 = pneg %p98
        $region82: #{tpu_custom_call.1} parent=71 // pred_check_branch
          %529 = sbr.rel (%p527) target = $region84
        $region83: #{tpu_custom_call.1} parent=71 // pred_region
          %530 = dma.done [#allocation7], 96
        $region84: #{tpu_custom_call.1} parent=71 // pred_fallthru
          _
        // Predicated region
        $region85: #{tpu_custom_call.1} parent=71 // pred_check
          %p531 = pneg %p119
        $region86: #{tpu_custom_call.1} parent=71 // pred_check_branch
          %533 = sbr.rel (%p531) target = $region88
        $region87: #{tpu_custom_call.1} parent=71 // pred_region
          %534 = dma.done [#allocation10], 18432
        $region88: #{tpu_custom_call.1} parent=71 // pred_fallthru
          _
        // Predicated region
        $region89: #{tpu_custom_call.1} parent=71 // pred_check
          %p535 = pneg %p140
        $region90: #{tpu_custom_call.1} parent=71 // pred_check_branch
          %537 = sbr.rel (%p535) target = $region92
        $region91: #{tpu_custom_call.1} parent=71 // pred_region
          %538 = dma.done [#allocation10], 288
        $region92: #{tpu_custom_call.1} parent=71 // pred_fallthru
          _
        // Predicated region
        $region93: #{tpu_custom_call.1} parent=71 // pred_check
          %p539 = pneg %p161
        $region94: #{tpu_custom_call.1} parent=71 // pred_check_branch
          %541 = sbr.rel (%p539) target = $region96
        $region95: #{tpu_custom_call.1} parent=71 // pred_region
          %542 = dma.done [#allocation13], 6144
        $region96: #{tpu_custom_call.1} parent=71 // pred_fallthru
          _
        // Predicated region
        $region97: #{tpu_custom_call.1} parent=71 // pred_check
          %p543 = pneg %p203
        $region98: #{tpu_custom_call.1} parent=71 // pred_check_branch
          %545 = sbr.rel (%p543) target = $region100
        $region99: #{tpu_custom_call.1} parent=71 // pred_region
          %546 = dma.done [#allocation13], 96
        $region100: #{tpu_custom_call.1} parent=71 // pred_fallthru
          _
        // Predicated region
        $region101: #{tpu_custom_call.1} parent=71 // pred_check
          %p547 = pneg %p224
        $region102: #{tpu_custom_call.1} parent=71 // pred_check_branch
          %549 = sbr.rel (%p547) target = $region104
        $region103: #{tpu_custom_call.1} parent=71 // pred_region
          %550 = dma.done [#allocation16], 96
        $region104: #{tpu_custom_call.1} parent=71 // pred_fallthru
          _
        // Predicated region
        $region105: #{tpu_custom_call.1} parent=71 // pred_check
          %p551 = pneg %p245
        $region106: #{tpu_custom_call.1} parent=71 // pred_check_branch
          %553 = sbr.rel (%p551) target = $region108
        $region107: #{tpu_custom_call.1} parent=71 // pred_region
          %554 = dma.done [#allocation16], 12288
        $region108: #{tpu_custom_call.1} parent=71 // pred_fallthru
          _
        // Predicated region
        $region109: #{tpu_custom_call.1} parent=71 // pred_check
          %p555 = pneg %p287
        $region110: #{tpu_custom_call.1} parent=71 // pred_check_branch
          %557 = sbr.rel (%p555) target = $region112
        $region111: #{tpu_custom_call.1} parent=71 // pred_region
          %558 = dma.done [#allocation19], 12288
        $region112: #{tpu_custom_call.1} parent=71 // pred_fallthru
          _
        // Predicated region
        $region113: #{tpu_custom_call.1} parent=71 // pred_check
          %p559 = pneg %p308
        $region114: #{tpu_custom_call.1} parent=71 // pred_check_branch
          %561 = sbr.rel (%p559) target = $region116
        $region115: #{tpu_custom_call.1} parent=71 // pred_region
          %562 = dma.done [#allocation19], 96
        $region116: #{tpu_custom_call.1} parent=71 // pred_fallthru
          _
        %s563 = sand.u32 %s43, 1
        %s564 = scalar_lea.sflag [#allocation4], %s563
        %s565 = sand.u32 %s43, 1
        %s566 = smul.addr %s565, 8
        %s567 = scalar_lea.vmem [#allocation3], %s566
        %p568 = pneg %p56
        %p569 = pneg %p53
        %p570 = pneg %p77
        %p571 = pneg %p74
        %p572 = pneg %p98
        %p573 = pneg %p95
        %p574 = pneg %p119
        %p575 = pneg %p116
        %p576 = pneg %p140
        %p577 = pneg %p137
        %p578 = pneg %p161
        %p579 = pneg %p158
        %p580 = pneg %p182
        %p581 = pneg %p179
        %p582 = pneg %p203
        %p583 = pneg %p200
        %p584 = pneg %p224
        %p585 = pneg %p221
        %p586 = pneg %p245
        %p587 = pneg %p242
        %p588 = pneg %p266
        %p589 = pneg %p263
        %p590 = pneg %p287
        %p591 = pneg %p284
        %p592 = pneg %p308
        %p593 = pneg %p305
        %p594 = pneg %p334
        %p595 = pneg %p331
        %s596 = sand.u32 %s321, 1
        %s597 = scalar_lea.sflag [#allocation5], %s596
        %s598 = sand.u32 %s321, 1
        %s599 = smul.addr %s598, 8
        %s600 = scalar_lea.vmem [#allocation21], %s599
        %v602 = vld [vmem:[%s518] sm:$0xff]
        %v603 = vld [vmem:[#allocation6] sm:$0x1]
        %v604 = vld [vmem:[#allocation8] sm:$0x1]
        %605 = vadd.xlane.f32.xlu0 %v602
        %v606 = vpop.xlane.xlu0 %605
        %v607 = vrcp.pop 128.0
        %v608 = vmul.f32 %v606, %v607
        %v609 = vsub.f32 %v602, %v608
        %v610 = vmul.f32 %v609, %v609
        %611 = vadd.xlane.f32.xlu0 %v610
        %v612 = vpop.xlane.xlu0 %611
        %v613 = vmul.f32 %v612, %v607
        %v614 = vadd.f32 %v613, 1e-06
        %v615 = vrsqrt.pop %v614
        %v616 = vmul.f32 %v609, %v615
        %v618 = vlaneseq
        %v619 = vshrl.u32 %v618, 7
        %v620 = vsub.s32 0, %v619
        %v621 = vrot.slane %v603, %v620
        %v623 = vmul.f32 %v616, %v621
        %v625 = vlaneseq
        %v626 = vshrl.u32 %v625, 7
        %v627 = vsub.s32 0, %v626
        %v628 = vrot.slane %v604, %v627
        %v630 = vadd.f32 %v623, %v628
        %v631 = vpack.c.bf16 %v630, %v630
        %v632 = vld [vmem:[#allocation9] sm:$0xff]
        %v633 = vld [vmem:[#allocation9 + $0x8] sm:$0xf]
        %v634 = vld [vmem:[#allocation9 + $0xc] sm:$0xff]
        %v635 = vld [vmem:[#allocation9 + $0x14] sm:$0xf]
        %v636 = vld [vmem:[#allocation9 + $0x18] sm:$0xff]
        %v637 = vld [vmem:[#allocation9 + $0x20] sm:$0xf]
        %v638 = vld [vmem:[#allocation9 + $0x24] sm:$0xff]
        %v639 = vld [vmem:[#allocation9 + $0x2c] sm:$0xf]
        %v640 = vld [vmem:[#allocation9 + $0x30] sm:$0xff]
        %v641 = vld [vmem:[#allocation9 + $0x38] sm:$0xf]
        %v642 = vld [vmem:[#allocation9 + $0x3c] sm:$0xff]
        %v643 = vld [vmem:[#allocation9 + $0x44] sm:$0xf]
        %v644 = vld [vmem:[#allocation9 + $0x48] sm:$0xff]
        %v645 = vld [vmem:[#allocation9 + $0x50] sm:$0xf]
        %v646 = vld [vmem:[#allocation9 + $0x54] sm:$0xff]
        %v647 = vld [vmem:[#allocation9 + $0x5c] sm:$0xf]
        %v648 = vld [vmem:[#allocation9 + $0x60] sm:$0xff]
        %v649 = vld [vmem:[#allocation9 + $0x68] sm:$0xf]
        %v650 = vld [vmem:[#allocation9 + $0x6c] sm:$0xff]
        %v651 = vld [vmem:[#allocation9 + $0x74] sm:$0xf]
        %v652 = vld [vmem:[#allocation9 + $0x78] sm:$0xff]
        %v653 = vld [vmem:[#allocation9 + $0x80] sm:$0xf]
        %v654 = vld [vmem:[#allocation9 + $0x84] sm:$0xff]
        %v655 = vld [vmem:[#allocation9 + $0x8c] sm:$0xf]
        %v656 = vld [vmem:[#allocation9 + $0x90] sm:$0xff]
        %v657 = vld [vmem:[#allocation9 + $0x98] sm:$0xf]
        %v658 = vld [vmem:[#allocation9 + $0x9c] sm:$0xff]
        %v659 = vld [vmem:[#allocation9 + $0xa4] sm:$0xf]
        %v660 = vld [vmem:[#allocation9 + $0xa8] sm:$0xff]
        %v661 = vld [vmem:[#allocation9 + $0xb0] sm:$0xf]
        %v662 = vld [vmem:[#allocation9 + $0xb4] sm:$0xff]
        %v663 = vld [vmem:[#allocation9 + $0xbc] sm:$0xf]
        %v664 = vld [vmem:[#allocation11] sm:$0x7]
        %v666 = vlaneseq
        %v667 = vshrl.u32 %v666, 7
        %v668 = vsub.s32 0, %v667
        %v669 = vrot.slane %v664, %v668
        %v670 = vlaneseq
        %v671 = vshrl.u32 %v670, 7
        %v672 = vsub.s32 1, %v671
        %v673 = vrot.slane %v664, %v672
        %v674 = vlaneseq
        %v675 = vshrl.u32 %v674, 7
        %v676 = vsub.s32 2, %v675
        %v677 = vrot.slane %v664, %v676
        %v713 = vunpack.c.l.b16 %v632
        %v714 = vunpack.c.h.b16 %v632
        %v715 = vunpack.c.l.b16 %v633
        %v716 = vunpack.c.l.b16 %v634
        %v717 = vunpack.c.h.b16 %v634
        %v718 = vunpack.c.l.b16 %v635
        %v719 = vunpack.c.l.b16 %v636
        %v720 = vunpack.c.h.b16 %v636
        %v721 = vunpack.c.l.b16 %v637
        %v722 = vunpack.c.l.b16 %v638
        %v723 = vunpack.c.h.b16 %v638
        %v724 = vunpack.c.l.b16 %v639
        %v725 = vunpack.c.l.b16 %v640
        %v726 = vunpack.c.h.b16 %v640
        %v727 = vunpack.c.l.b16 %v641
        %v728 = vunpack.c.l.b16 %v642
        %v729 = vunpack.c.h.b16 %v642
        %v730 = vunpack.c.l.b16 %v643
        %v731 = vunpack.c.l.b16 %v644
        %v732 = vunpack.c.h.b16 %v644
        %v733 = vunpack.c.l.b16 %v645
        %v734 = vunpack.c.l.b16 %v646
        %v735 = vunpack.c.h.b16 %v646
        %v736 = vunpack.c.l.b16 %v647
        %v737 = vunpack.c.l.b16 %v648
        %v738 = vunpack.c.h.b16 %v648
        %v739 = vunpack.c.l.b16 %v649
        %v740 = vunpack.c.l.b16 %v650
        %v741 = vunpack.c.h.b16 %v650
        %v742 = vunpack.c.l.b16 %v651
        %v743 = vunpack.c.l.b16 %v652
        %v744 = vunpack.c.h.b16 %v652
        %v745 = vunpack.c.l.b16 %v653
        %v746 = vunpack.c.l.b16 %v654
        %v747 = vunpack.c.h.b16 %v654
        %v748 = vunpack.c.l.b16 %v655
        %v749 = vunpack.c.l.b16 %v656
        %v750 = vunpack.c.h.b16 %v656
        %v751 = vunpack.c.l.b16 %v657
        %v752 = vunpack.c.l.b16 %v658
        %v753 = vunpack.c.h.b16 %v658
        %v754 = vunpack.c.l.b16 %v659
        %v755 = vunpack.c.l.b16 %v660
        %v756 = vunpack.c.h.b16 %v660
        %v757 = vunpack.c.l.b16 %v661
        %v758 = vunpack.c.l.b16 %v662
        %v759 = vunpack.c.h.b16 %v662
        %v760 = vunpack.c.l.b16 %v663
        %v761 = vpack.c.b16 %v716, %v713
        %v762 = vpack.c.b16 %v717, %v714
        %v763 = vpack.c.b16 %v718, %v715
        %v764 = vpack.c.b16 %v722, %v719
        %v765 = vpack.c.b16 %v723, %v720
        %v766 = vpack.c.b16 %v724, %v721
        %v767 = vpack.c.b16 %v728, %v725
        %v768 = vpack.c.b16 %v729, %v726
        %v769 = vpack.c.b16 %v730, %v727
        %v770 = vpack.c.b16 %v734, %v731
        %v771 = vpack.c.b16 %v735, %v732
        %v772 = vpack.c.b16 %v736, %v733
        %v773 = vpack.c.b16 %v740, %v737
        %v774 = vpack.c.b16 %v741, %v738
        %v775 = vpack.c.b16 %v742, %v739
        %v776 = vpack.c.b16 %v746, %v743
        %v777 = vpack.c.b16 %v747, %v744
        %v778 = vpack.c.b16 %v748, %v745
        %v779 = vpack.c.b16 %v752, %v749
        %v780 = vpack.c.b16 %v753, %v750
        %v781 = vpack.c.b16 %v754, %v751
        %v782 = vpack.c.b16 %v758, %v755
        %v783 = vpack.c.b16 %v759, %v756
        %v784 = vpack.c.b16 %v760, %v757
        %809 = vmatprep.subr.bf16.mxu0 %v783
        %810 = vmatpush1.bf16.msra.mxu0 %v782
        %811 = vmatprep.subr.bf16.mxu0 %v780
        %812 = vmatpush1.bf16.msra.mxu0 %v779
        %813 = vmatprep.subr.bf16.mxu0 %v777
        %814 = vmatpush1.bf16.msra.mxu0 %v776
        %815 = vmatprep.subr.bf16.mxu0 %v774
        %816 = vmatpush1.bf16.msra.mxu0 %v773
        %817 = vmatprep.subr.bf16.mxu0 %v771
        %818 = vmatpush1.bf16.msra.mxu0 %v770
        %819 = vmatprep.subr.bf16.mxu0 %v768
        %820 = vmatpush1.bf16.msra.mxu0 %v767
        %821 = vmatprep.subr.bf16.mxu0 %v765
        %822 = vmatpush1.bf16.msra.mxu0 %v764
        %823 = vmatprep.subr.bf16.mxu0 %v762
        %824 = vmatpush1.bf16.msra.mxu0 %v761
        %825 = vmatprep.subr.bf16.mxu0 0
        %826 = vmatpush2.bf16.msra.mxu0 0
        %827 = vmatprep.subr.bf16.mxu0 0
        %828 = vmatpush2.bf16.msra.mxu0 0
        %829 = vmatprep.subr.bf16.mxu0 0
        %830 = vmatpush2.bf16.msra.mxu0 0
        %831 = vmatprep.subr.bf16.mxu0 0
        %832 = vmatpush2.bf16.msra.mxu0 0
        %833 = vmatprep.subr.bf16.mxu0 0
        %834 = vmatpush2.bf16.msra.mxu0 0
        %835 = vmatprep.subr.bf16.mxu0 0
        %836 = vmatpush2.bf16.msra.mxu0 0
        %837 = vmatprep.subr.bf16.mxu0 0
        %838 = vmatpush2.bf16.msra.mxu0 0
        %839 = vmatprep.subr.bf16.mxu0 0
        %840 = vmatpush2.bf16.msra.mxu0 0
        %841 = vmatprep.mubr.bf16.mxu0 0
        %842 = vmatmul.mubr.bf16.gmra.mxu0 %v631
        %v843 = vpop.f32.mrf.mxu0
        %v844 = vadd.f32 %v669, %v843
        %v845 = vpop.f32.mrf.mxu0
        %v846 = vadd.f32 %v673, %v845
        %v847 = vpop.f32.mrf.mxu0
        %v848 = vpop.f32.mrf.mxu0
        %849 = vdwg.mxu0
        %850 = vmatprep.subr.bf16.mxu0 0
        %851 = vmatpush1.bf16.msra.mxu0 %v784
        %852 = vmatprep.subr.bf16.mxu0 0
        %853 = vmatpush1.bf16.msra.mxu0 %v781
        %854 = vmatprep.subr.bf16.mxu0 0
        %855 = vmatpush1.bf16.msra.mxu0 %v778
        %856 = vmatprep.subr.bf16.mxu0 0
        %857 = vmatpush1.bf16.msra.mxu0 %v775
        %858 = vmatprep.subr.bf16.mxu0 0
        %859 = vmatpush1.bf16.msra.mxu0 %v772
        %860 = vmatprep.subr.bf16.mxu0 0
        %861 = vmatpush1.bf16.msra.mxu0 %v769
        %862 = vmatprep.subr.bf16.mxu0 0
        %863 = vmatpush1.bf16.msra.mxu0 %v766
        %864 = vmatprep.subr.bf16.mxu0 0
        %865 = vmatpush1.bf16.msra.mxu0 %v763
        %866 = vmatprep.subr.bf16.mxu0 0
        %867 = vmatpush2.bf16.msra.mxu0 0
        %868 = vmatprep.subr.bf16.mxu0 0
        %869 = vmatpush2.bf16.msra.mxu0 0
        %870 = vmatprep.subr.bf16.mxu0 0
        %871 = vmatpush2.bf16.msra.mxu0 0
        %872 = vmatprep.subr.bf16.mxu0 0
        %873 = vmatpush2.bf16.msra.mxu0 0
        %874 = vmatprep.subr.bf16.mxu0 0
        %875 = vmatpush2.bf16.msra.mxu0 0
        %876 = vmatprep.subr.bf16.mxu0 0
        %877 = vmatpush2.bf16.msra.mxu0 0
        %878 = vmatprep.subr.bf16.mxu0 0
        %879 = vmatpush2.bf16.msra.mxu0 0
        %880 = vmatprep.subr.bf16.mxu0 0
        %881 = vmatpush2.bf16.msra.mxu0 0
        %882 = vmatprep.mubr.bf16.mxu0 0
        %883 = vmatmul.mubr.bf16.gmra.mxu0 %v631
        %v884 = vpop.f32.mrf.mxu0
        %v885 = vadd.f32 %v677, %v884
        %v886 = vpop.f32.mrf.mxu0
        %v887 = vpop.f32.mrf.mxu0
        %v888 = vpop.f32.mrf.mxu0
        %889 = vdwg.mxu0
        %v890 = vpack.c.bf16 %v844, %v844
        %v891 = vpack.c.bf16 %v846, %v846
        %v892 = vpack.c.bf16 %v885, %v885
        %vm893 = vcmask 261120
        %v895 = vsel %vm893, %v890, 0
        %v898 = vsel %vm893, %v891, 0
        %900 = vmatprep.subr.bf16.mxu0 0
        %901 = vmatpush1.bf16.xpose.msra.mxu0 0
        %902 = vmatprep.subr.bf16.mxu0 0
        %903 = vmatpush1.bf16.xpose.msra.mxu0 0
        %904 = vmatprep.subr.bf16.mxu0 0
        %905 = vmatpush1.bf16.xpose.msra.mxu0 0
        %906 = vmatprep.subr.bf16.mxu0 0
        %907 = vmatpush1.bf16.xpose.msra.mxu0 0
        %908 = vmatprep.subr.bf16.mxu0 0
        %909 = vmatpush1.bf16.xpose.msra.mxu0 0
        %910 = vmatprep.subr.bf16.mxu0 0
        %911 = vmatpush1.bf16.xpose.msra.mxu0 0
        %912 = vmatprep.subr.bf16.mxu0 0
        %913 = vmatpush1.bf16.xpose.msra.mxu0 0
        %914 = vmatprep.subr.bf16.mxu0 0
        %915 = vmatpush1.bf16.xpose.msra.mxu0 %v898
        %916 = vmatprep.subr.bf16.mxu0 0
        %917 = vmatpush2.bf16.xpose.msra.mxu0 0
        %918 = vmatprep.subr.bf16.mxu0 0
        %919 = vmatpush2.bf16.xpose.msra.mxu0 0
        %920 = vmatprep.subr.bf16.mxu0 0
        %921 = vmatpush2.bf16.xpose.msra.mxu0 0
        %922 = vmatprep.subr.bf16.mxu0 0
        %923 = vmatpush2.bf16.xpose.msra.mxu0 0
        %924 = vmatprep.subr.bf16.mxu0 0
        %925 = vmatpush2.bf16.xpose.msra.mxu0 0
        %926 = vmatprep.subr.bf16.mxu0 0
        %927 = vmatpush2.bf16.xpose.msra.mxu0 0
        %928 = vmatprep.subr.bf16.mxu0 0
        %929 = vmatpush2.bf16.xpose.msra.mxu0 0
        %930 = vmatprep.subr.bf16.mxu0 0
        %931 = vmatpush2.bf16.xpose.msra.mxu0 0
        %932 = vmatprep.mubr.bf16.mxu0 0
        %933 = vmatmul.mubr.bf16.gmra.mxu0 %v895
        %v934 = vpop.f32.mrf.mxu0
        %v935 = vadd.f32 0.0, %v934
        %v936 = vpop.f32.mrf.mxu0
        %v937 = vpop.f32.mrf.mxu0
        %v938 = vpop.f32.mrf.mxu0
        %939 = vdwg.mxu0
        %vm940 = vcmask 64512
        %v941 = vsel %vm940, %v935, -inf
        %942 = vmax.xlane.f32.xlu0 %v941
        %v943 = vpop.xlane.xlu0 %942
        %v944 = vsub.f32 %v935, %v943
        %v945 = vmul.f32 %v944, 1.442695
        %v946 = vpow.pop %v945
        %v947 = vsel %vm940, %v946, 0.0
        %948 = vadd.xlane.f32.xlu0 %v947
        %v949 = vpop.xlane.xlu0 %948
        %v950 = vrcp.pop %v949
        %v951 = vmul.f32 %v946, %v950
        %v952 = vpack.c.bf16 %v951, %v951
        %v954 = vsel %vm940, %v952, 0
        %vm956 = vcmask 1043456
        %v958 = vsel %vm956, %v892, 0
        %960 = vmatprep.subr.bf16.mxu0 0
        %961 = vmatpush1.bf16.msra.mxu0 0
        %962 = vmatprep.subr.bf16.mxu0 0
        %963 = vmatpush1.bf16.msra.mxu0 0
        %964 = vmatprep.subr.bf16.mxu0 0
        %965 = vmatpush1.bf16.msra.mxu0 0
        %966 = vmatprep.subr.bf16.mxu0 0
        %967 = vmatpush1.bf16.msra.mxu0 0
        %968 = vmatprep.subr.bf16.mxu0 0
        %969 = vmatpush1.bf16.msra.mxu0 0
        %970 = vmatprep.subr.bf16.mxu0 0
        %971 = vmatpush1.bf16.msra.mxu0 0
        %972 = vmatprep.subr.bf16.mxu0 0
        %973 = vmatpush1.bf16.msra.mxu0 0
        %974 = vmatprep.subr.bf16.mxu0 0
        %975 = vmatpush1.bf16.msra.mxu0 %v958
        %976 = vmatprep.subr.bf16.mxu0 0
        %977 = vmatpush2.bf16.msra.mxu0 0
        %978 = vmatprep.subr.bf16.mxu0 0
        %979 = vmatpush2.bf16.msra.mxu0 0
        %980 = vmatprep.subr.bf16.mxu0 0
        %981 = vmatpush2.bf16.msra.mxu0 0
        %982 = vmatprep.subr.bf16.mxu0 0
        %983 = vmatpush2.bf16.msra.mxu0 0
        %984 = vmatprep.subr.bf16.mxu0 0
        %985 = vmatpush2.bf16.msra.mxu0 0
        %986 = vmatprep.subr.bf16.mxu0 0
        %987 = vmatpush2.bf16.msra.mxu0 0
        %988 = vmatprep.subr.bf16.mxu0 0
        %989 = vmatpush2.bf16.msra.mxu0 0
        %990 = vmatprep.subr.bf16.mxu0 0
        %991 = vmatpush2.bf16.msra.mxu0 0
        %992 = vmatprep.mubr.bf16.mxu0 0
        %993 = vmatmul.mubr.bf16.gmra.mxu0 %v954
        %v994 = vpop.f32.mrf.mxu0
        %v995 = vadd.f32 0.0, %v994
        %v996 = vpop.f32.mrf.mxu0
        %v997 = vpop.f32.mrf.mxu0
        %v998 = vpop.f32.mrf.mxu0
        %999 = vdwg.mxu0
        %1000 = vst.msk [vmem:[#allocation2] sm:$0xff] %vm893, %v995
        %1002 = vrot.lane.b32.xlu0 %v890, 96
        %v1003 = vpop.permute.xlu0 %1002
        %1005 = vrot.lane.b32.xlu0 %v891, 96
        %v1006 = vpop.permute.xlu0 %1005
        %v1008 = vsel %vm893, %v1003, 0
        %v1011 = vsel %vm893, %v1006, 0
        %1013 = vmatprep.subr.bf16.mxu0 0
        %1014 = vmatpush1.bf16.xpose.msra.mxu0 0
        %1015 = vmatprep.subr.bf16.mxu0 0
        %1016 = vmatpush1.bf16.xpose.msra.mxu0 0
        %1017 = vmatprep.subr.bf16.mxu0 0
        %1018 = vmatpush1.bf16.xpose.msra.mxu0 0
        %1019 = vmatprep.subr.bf16.mxu0 0
        %1020 = vmatpush1.bf16.xpose.msra.mxu0 0
        %1021 = vmatprep.subr.bf16.mxu0 0
        %1022 = vmatpush1.bf16.xpose.msra.mxu0 0
        %1023 = vmatprep.subr.bf16.mxu0 0
        %1024 = vmatpush1.bf16.xpose.msra.mxu0 0
        %1025 = vmatprep.subr.bf16.mxu0 0
        %1026 = vmatpush1.bf16.xpose.msra.mxu0 0
        %1027 = vmatprep.subr.bf16.mxu0 0
        %1028 = vmatpush1.bf16.xpose.msra.mxu0 %v1011
        %1029 = vmatprep.subr.bf16.mxu0 0
        %1030 = vmatpush2.bf16.xpose.msra.mxu0 0
        %1031 = vmatprep.subr.bf16.mxu0 0
        %1032 = vmatpush2.bf16.xpose.msra.mxu0 0
        %1033 = vmatprep.subr.bf16.mxu0 0
        %1034 = vmatpush2.bf16.xpose.msra.mxu0 0
        %1035 = vmatprep.subr.bf16.mxu0 0
        %1036 = vmatpush2.bf16.xpose.msra.mxu0 0
        %1037 = vmatprep.subr.bf16.mxu0 0
        %1038 = vmatpush2.bf16.xpose.msra.mxu0 0
        %1039 = vmatprep.subr.bf16.mxu0 0
        %1040 = vmatpush2.bf16.xpose.msra.mxu0 0
        %1041 = vmatprep.subr.bf16.mxu0 0
        %1042 = vmatpush2.bf16.xpose.msra.mxu0 0
        %1043 = vmatprep.subr.bf16.mxu0 0
        %1044 = vmatpush2.bf16.xpose.msra.mxu0 0
        %1045 = vmatprep.mubr.bf16.mxu0 0
        %1046 = vmatmul.mubr.bf16.gmra.mxu0 %v1008
        %v1047 = vpop.f32.mrf.mxu0
        %v1048 = vadd.f32 0.0, %v1047
        %v1049 = vpop.f32.mrf.mxu0
        %v1050 = vpop.f32.mrf.mxu0
        %v1051 = vpop.f32.mrf.mxu0
        %1052 = vdwg.mxu0
        %v1053 = vsel %vm940, %v1048, -inf
        %1054 = vmax.xlane.f32.xlu0 %v1053
        %v1055 = vpop.xlane.xlu0 %1054
        %v1056 = vsub.f32 %v1048, %v1055
        %v1057 = vmul.f32 %v1056, 1.442695
        %v1058 = vpow.pop %v1057
        %v1059 = vsel %vm940, %v1058, 0.0
        %1060 = vadd.xlane.f32.xlu0 %v1059
        %v1061 = vpop.xlane.xlu0 %1060
        %v1062 = vrcp.pop %v1061
        %v1063 = vmul.f32 %v1058, %v1062
        %v1064 = vpack.c.bf16 %v1063, %v1063
        %1066 = vrot.lane.b32.xlu0 %v892, 96
        %v1067 = vpop.permute.xlu0 %1066
        %v1069 = vsel %vm940, %v1064, 0
        %v1072 = vsel %vm956, %v1067, 0
        %1074 = vmatprep.subr.bf16.mxu0 0
        %1075 = vmatpush1.bf16.msra.mxu0 0
        %1076 = vmatprep.subr.bf16.mxu0 0
        %1077 = vmatpush1.bf16.msra.mxu0 0
        %1078 = vmatprep.subr.bf16.mxu0 0
        %1079 = vmatpush1.bf16.msra.mxu0 0
        %1080 = vmatprep.subr.bf16.mxu0 0
        %1081 = vmatpush1.bf16.msra.mxu0 0
        %1082 = vmatprep.subr.bf16.mxu0 0
        %1083 = vmatpush1.bf16.msra.mxu0 0
        %1084 = vmatprep.subr.bf16.mxu0 0
        %1085 = vmatpush1.bf16.msra.mxu0 0
        %1086 = vmatprep.subr.bf16.mxu0 0
        %1087 = vmatpush1.bf16.msra.mxu0 0
        %1088 = vmatprep.subr.bf16.mxu0 0
        %1089 = vmatpush1.bf16.msra.mxu0 %v1072
        %1090 = vmatprep.subr.bf16.mxu0 0
        %1091 = vmatpush2.bf16.msra.mxu0 0
        %1092 = vmatprep.subr.bf16.mxu0 0
        %1093 = vmatpush2.bf16.msra.mxu0 0
        %1094 = vmatprep.subr.bf16.mxu0 0
        %1095 = vmatpush2.bf16.msra.mxu0 0
        %1096 = vmatprep.subr.bf16.mxu0 0
        %1097 = vmatpush2.bf16.msra.mxu0 0
        %1098 = vmatprep.subr.bf16.mxu0 0
        %1099 = vmatpush2.bf16.msra.mxu0 0
        %1100 = vmatprep.subr.bf16.mxu0 0
        %1101 = vmatpush2.bf16.msra.mxu0 0
        %1102 = vmatprep.subr.bf16.mxu0 0
        %1103 = vmatpush2.bf16.msra.mxu0 0
        %1104 = vmatprep.subr.bf16.mxu0 0
        %1105 = vmatpush2.bf16.msra.mxu0 0
        %1106 = vmatprep.mubr.bf16.mxu0 0
        %1107 = vmatmul.mubr.bf16.gmra.mxu0 %v1069
        %v1108 = vpop.f32.mrf.mxu0
        %v1109 = vadd.f32 0.0, %v1108
        %v1110 = vpop.f32.mrf.mxu0
        %v1111 = vpop.f32.mrf.mxu0
        %v1112 = vpop.f32.mrf.mxu0
        %1113 = vdwg.mxu0
        %1115 = vrot.lane.b32.xlu0 %v1109, 32
        %v1116 = vpop.permute.xlu0 %1115
        %vm1118 = vcmask 523520
        %1119 = vst.msk [vmem:[#allocation2] sm:$0xff] %vm1118, %v1116
        %1120 = vrot.lane.b32.xlu0 %v890, 64
        %v1121 = vpop.permute.xlu0 %1120
        %1122 = vrot.lane.b32.xlu0 %v891, 64
        %v1123 = vpop.permute.xlu0 %1122
        %v1125 = vsel %vm893, %v1121, 0
        %v1128 = vsel %vm893, %v1123, 0
        %1130 = vmatprep.subr.bf16.mxu0 0
        %1131 = vmatpush1.bf16.xpose.msra.mxu0 0
        %1132 = vmatprep.subr.bf16.mxu0 0
        %1133 = vmatpush1.bf16.xpose.msra.mxu0 0
        %1134 = vmatprep.subr.bf16.mxu0 0
        %1135 = vmatpush1.bf16.xpose.msra.mxu0 0
        %1136 = vmatprep.subr.bf16.mxu0 0
        %1137 = vmatpush1.bf16.xpose.msra.mxu0 0
        %1138 = vmatprep.subr.bf16.mxu0 0
        %1139 = vmatpush1.bf16.xpose.msra.mxu0 0
        %1140 = vmatprep.subr.bf16.mxu0 0
        %1141 = vmatpush1.bf16.xpose.msra.mxu0 0
        %1142 = vmatprep.subr.bf16.mxu0 0
        %1143 = vmatpush1.bf16.xpose.msra.mxu0 0
        %1144 = vmatprep.subr.bf16.mxu0 0
        %1145 = vmatpush1.bf16.xpose.msra.mxu0 %v1128
        %1146 = vmatprep.subr.bf16.mxu0 0
        %1147 = vmatpush2.bf16.xpose.msra.mxu0 0
        %1148 = vmatprep.subr.bf16.mxu0 0
        %1149 = vmatpush2.bf16.xpose.msra.mxu0 0
        %1150 = vmatprep.subr.bf16.mxu0 0
        %1151 = vmatpush2.bf16.xpose.msra.mxu0 0
        %1152 = vmatprep.subr.bf16.mxu0 0
        %1153 = vmatpush2.bf16.xpose.msra.mxu0 0
        %1154 = vmatprep.subr.bf16.mxu0 0
        %1155 = vmatpush2.bf16.xpose.msra.mxu0 0
        %1156 = vmatprep.subr.bf16.mxu0 0
        %1157 = vmatpush2.bf16.xpose.msra.mxu0 0
        %1158 = vmatprep.subr.bf16.mxu0 0
        %1159 = vmatpush2.bf16.xpose.msra.mxu0 0
        %1160 = vmatprep.subr.bf16.mxu0 0
        %1161 = vmatpush2.bf16.xpose.msra.mxu0 0
        %1162 = vmatprep.mubr.bf16.mxu0 0
        %1163 = vmatmul.mubr.bf16.gmra.mxu0 %v1125
        %v1164 = vpop.f32.mrf.mxu0
        %v1165 = vadd.f32 0.0, %v1164
        %v1166 = vpop.f32.mrf.mxu0
        %v1167 = vpop.f32.mrf.mxu0
        %v1168 = vpop.f32.mrf.mxu0
        %1169 = vdwg.mxu0
        %v1170 = vsel %vm940, %v1165, -inf
        %1171 = vmax.xlane.f32.xlu0 %v1170
        %v1172 = vpop.xlane.xlu0 %1171
        %v1173 = vsub.f32 %v1165, %v1172
        %v1174 = vmul.f32 %v1173, 1.442695
        %v1175 = vpow.pop %v1174
        %v1176 = vsel %vm940, %v1175, 0.0
        %1177 = vadd.xlane.f32.xlu0 %v1176
        %v1178 = vpop.xlane.xlu0 %1177
        %v1179 = vrcp.pop %v1178
        %v1180 = vmul.f32 %v1175, %v1179
        %v1181 = vpack.c.bf16 %v1180, %v1180
        %1182 = vrot.lane.b32.xlu0 %v892, 64
        %v1183 = vpop.permute.xlu0 %1182
        %v1185 = vsel %vm940, %v1181, 0
        %v1188 = vsel %vm956, %v1183, 0
        %1190 = vmatprep.subr.bf16.mxu0 0
        %1191 = vmatpush1.bf16.msra.mxu0 0
        %1192 = vmatprep.subr.bf16.mxu0 0
        %1193 = vmatpush1.bf16.msra.mxu0 0
        %1194 = vmatprep.subr.bf16.mxu0 0
        %1195 = vmatpush1.bf16.msra.mxu0 0
        %1196 = vmatprep.subr.bf16.mxu0 0
        %1197 = vmatpush1.bf16.msra.mxu0 0
        %1198 = vmatprep.subr.bf16.mxu0 0
        %1199 = vmatpush1.bf16.msra.mxu0 0
        %1200 = vmatprep.subr.bf16.mxu0 0
        %1201 = vmatpush1.bf16.msra.mxu0 0
        %1202 = vmatprep.subr.bf16.mxu0 0
        %1203 = vmatpush1.bf16.msra.mxu0 0
        %1204 = vmatprep.subr.bf16.mxu0 0
        %1205 = vmatpush1.bf16.msra.mxu0 %v1188
        %1206 = vmatprep.subr.bf16.mxu0 0
        %1207 = vmatpush2.bf16.msra.mxu0 0
        %1208 = vmatprep.subr.bf16.mxu0 0
        %1209 = vmatpush2.bf16.msra.mxu0 0
        %1210 = vmatprep.subr.bf16.mxu0 0
        %1211 = vmatpush2.bf16.msra.mxu0 0
        %1212 = vmatprep.subr.bf16.mxu0 0
        %1213 = vmatpush2.bf16.msra.mxu0 0
        %1214 = vmatprep.subr.bf16.mxu0 0
        %1215 = vmatpush2.bf16.msra.mxu0 0
        %1216 = vmatprep.subr.bf16.mxu0 0
        %1217 = vmatpush2.bf16.msra.mxu0 0
        %1218 = vmatprep.subr.bf16.mxu0 0
        %1219 = vmatpush2.bf16.msra.mxu0 0
        %1220 = vmatprep.subr.bf16.mxu0 0
        %1221 = vmatpush2.bf16.msra.mxu0 0
        %1222 = vmatprep.mubr.bf16.mxu0 0
        %1223 = vmatmul.mubr.bf16.gmra.mxu0 %v1185
        %v1224 = vpop.f32.mrf.mxu0
        %v1225 = vadd.f32 0.0, %v1224
        %v1226 = vpop.f32.mrf.mxu0
        %v1227 = vpop.f32.mrf.mxu0
        %v1228 = vpop.f32.mrf.mxu0
        %1229 = vdwg.mxu0
        %1231 = vrot.lane.b32.xlu0 %v1225, 64
        %v1232 = vpop.permute.xlu0 %1231
        %vm1234 = vcmask 785920
        %1235 = vst.msk [vmem:[#allocation2] sm:$0xff] %vm1234, %v1232
        %1236 = vrot.lane.b32.xlu0 %v890, 32
        %v1237 = vpop.permute.xlu0 %1236
        %1238 = vrot.lane.b32.xlu0 %v891, 32
        %v1239 = vpop.permute.xlu0 %1238
        %v1241 = vsel %vm893, %v1237, 0
        %v1244 = vsel %vm893, %v1239, 0
        %1246 = vmatprep.subr.bf16.mxu0 0
        %1247 = vmatpush1.bf16.xpose.msra.mxu0 0
        %1248 = vmatprep.subr.bf16.mxu0 0
        %1249 = vmatpush1.bf16.xpose.msra.mxu0 0
        %1250 = vmatprep.subr.bf16.mxu0 0
        %1251 = vmatpush1.bf16.xpose.msra.mxu0 0
        %1252 = vmatprep.subr.bf16.mxu0 0
        %1253 = vmatpush1.bf16.xpose.msra.mxu0 0
        %1254 = vmatprep.subr.bf16.mxu0 0
        %1255 = vmatpush1.bf16.xpose.msra.mxu0 0
        %1256 = vmatprep.subr.bf16.mxu0 0
        %1257 = vmatpush1.bf16.xpose.msra.mxu0 0
        %1258 = vmatprep.subr.bf16.mxu0 0
        %1259 = vmatpush1.bf16.xpose.msra.mxu0 0
        %1260 = vmatprep.subr.bf16.mxu0 0
        %1261 = vmatpush1.bf16.xpose.msra.mxu0 %v1244
        %1262 = vmatprep.subr.bf16.mxu0 0
        %1263 = vmatpush2.bf16.xpose.msra.mxu0 0
        %1264 = vmatprep.subr.bf16.mxu0 0
        %1265 = vmatpush2.bf16.xpose.msra.mxu0 0
        %1266 = vmatprep.subr.bf16.mxu0 0
        %1267 = vmatpush2.bf16.xpose.msra.mxu0 0
        %1268 = vmatprep.subr.bf16.mxu0 0
        %1269 = vmatpush2.bf16.xpose.msra.mxu0 0
        %1270 = vmatprep.subr.bf16.mxu0 0
        %1271 = vmatpush2.bf16.xpose.msra.mxu0 0
        %1272 = vmatprep.subr.bf16.mxu0 0
        %1273 = vmatpush2.bf16.xpose.msra.mxu0 0
        %1274 = vmatprep.subr.bf16.mxu0 0
        %1275 = vmatpush2.bf16.xpose.msra.mxu0 0
        %1276 = vmatprep.subr.bf16.mxu0 0
        %1277 = vmatpush2.bf16.xpose.msra.mxu0 0
        %1278 = vmatprep.mubr.bf16.mxu0 0
        %1279 = vmatmul.mubr.bf16.gmra.mxu0 %v1241
        %v1280 = vpop.f32.mrf.mxu0
        %v1281 = vadd.f32 0.0, %v1280
        %v1282 = vpop.f32.mrf.mxu0
        %v1283 = vpop.f32.mrf.mxu0
        %v1284 = vpop.f32.mrf.mxu0
        %1285 = vdwg.mxu0
        %v1286 = vsel %vm940, %v1281, -inf
        %1287 = vmax.xlane.f32.xlu0 %v1286
        %v1288 = vpop.xlane.xlu0 %1287
        %v1289 = vsub.f32 %v1281, %v1288
        %v1290 = vmul.f32 %v1289, 1.442695
        %v1291 = vpow.pop %v1290
        %v1292 = vsel %vm940, %v1291, 0.0
        %1293 = vadd.xlane.f32.xlu0 %v1292
        %v1294 = vpop.xlane.xlu0 %1293
        %v1295 = vrcp.pop %v1294
        %v1296 = vmul.f32 %v1291, %v1295
        %v1297 = vpack.c.bf16 %v1296, %v1296
        %1298 = vrot.lane.b32.xlu0 %v892, 32
        %v1299 = vpop.permute.xlu0 %1298
        %v1301 = vsel %vm940, %v1297, 0
        %v1304 = vsel %vm956, %v1299, 0
        %1306 = vmatprep.subr.bf16.mxu0 0
        %1307 = vmatpush1.bf16.msra.mxu0 0
        %1308 = vmatprep.subr.bf16.mxu0 0
        %1309 = vmatpush1.bf16.msra.mxu0 0
        %1310 = vmatprep.subr.bf16.mxu0 0
        %1311 = vmatpush1.bf16.msra.mxu0 0
        %1312 = vmatprep.subr.bf16.mxu0 0
        %1313 = vmatpush1.bf16.msra.mxu0 0
        %1314 = vmatprep.subr.bf16.mxu0 0
        %1315 = vmatpush1.bf16.msra.mxu0 0
        %1316 = vmatprep.subr.bf16.mxu0 0
        %1317 = vmatpush1.bf16.msra.mxu0 0
        %1318 = vmatprep.subr.bf16.mxu0 0
        %1319 = vmatpush1.bf16.msra.mxu0 0
        %1320 = vmatprep.subr.bf16.mxu0 0
        %1321 = vmatpush1.bf16.msra.mxu0 %v1304
        %1322 = vmatprep.subr.bf16.mxu0 0
        %1323 = vmatpush2.bf16.msra.mxu0 0
        %1324 = vmatprep.subr.bf16.mxu0 0
        %1325 = vmatpush2.bf16.msra.mxu0 0
        %1326 = vmatprep.subr.bf16.mxu0 0
        %1327 = vmatpush2.bf16.msra.mxu0 0
        %1328 = vmatprep.subr.bf16.mxu0 0
        %1329 = vmatpush2.bf16.msra.mxu0 0
        %1330 = vmatprep.subr.bf16.mxu0 0
        %1331 = vmatpush2.bf16.msra.mxu0 0
        %1332 = vmatprep.subr.bf16.mxu0 0
        %1333 = vmatpush2.bf16.msra.mxu0 0
        %1334 = vmatprep.subr.bf16.mxu0 0
        %1335 = vmatpush2.bf16.msra.mxu0 0
        %1336 = vmatprep.subr.bf16.mxu0 0
        %1337 = vmatpush2.bf16.msra.mxu0 0
        %1338 = vmatprep.mubr.bf16.mxu0 0
        %1339 = vmatmul.mubr.bf16.gmra.mxu0 %v1301
        %v1340 = vpop.f32.mrf.mxu0
        %v1341 = vadd.f32 0.0, %v1340
        %v1342 = vpop.f32.mrf.mxu0
        %v1343 = vpop.f32.mrf.mxu0
        %v1344 = vpop.f32.mrf.mxu0
        %1345 = vdwg.mxu0
        %1347 = vrot.lane.b32.xlu0 %v1341, 96
        %v1348 = vpop.permute.xlu0 %1347
        %vm1350 = vcmask 1048320
        %1351 = vst.msk [vmem:[#allocation2] sm:$0xff] %vm1350, %v1348
        %v1352 = vld [vmem:[#allocation2] sm:$0xff]
        %v1353 = vpack.c.bf16 %v1352, %v1352
        %v1354 = vld [vmem:[#allocation12] sm:$0xf]
        %v1355 = vld [vmem:[#allocation12 + $0x4] sm:$0xf]
        %v1356 = vld [vmem:[#allocation12 + $0x8] sm:$0xf]
        %v1357 = vld [vmem:[#allocation12 + $0xc] sm:$0xf]
        %v1358 = vld [vmem:[#allocation12 + $0x10] sm:$0xf]
        %v1359 = vld [vmem:[#allocation12 + $0x14] sm:$0xf]
        %v1360 = vld [vmem:[#allocation12 + $0x18] sm:$0xf]
        %v1361 = vld [vmem:[#allocation12 + $0x1c] sm:$0xf]
        %v1362 = vld [vmem:[#allocation12 + $0x20] sm:$0xf]
        %v1363 = vld [vmem:[#allocation12 + $0x24] sm:$0xf]
        %v1364 = vld [vmem:[#allocation12 + $0x28] sm:$0xf]
        %v1365 = vld [vmem:[#allocation12 + $0x2c] sm:$0xf]
        %v1366 = vld [vmem:[#allocation12 + $0x30] sm:$0xf]
        %v1367 = vld [vmem:[#allocation12 + $0x34] sm:$0xf]
        %v1368 = vld [vmem:[#allocation12 + $0x38] sm:$0xf]
        %v1369 = vld [vmem:[#allocation12 + $0x3c] sm:$0xf]
        %v1370 = vld [vmem:[%s6] sm:$0x1]
        %v1372 = vlaneseq
        %v1373 = vshrl.u32 %v1372, 7
        %v1374 = vsub.s32 0, %v1373
        %v1375 = vrot.slane %v1370, %v1374
        %v1393 = vunpack.c.l.b16 %v1354
        %v1394 = vunpack.c.l.b16 %v1355
        %v1395 = vunpack.c.l.b16 %v1356
        %v1396 = vunpack.c.l.b16 %v1357
        %v1397 = vunpack.c.l.b16 %v1358
        %v1398 = vunpack.c.l.b16 %v1359
        %v1399 = vunpack.c.l.b16 %v1360
        %v1400 = vunpack.c.l.b16 %v1361
        %v1401 = vunpack.c.l.b16 %v1362
        %v1402 = vunpack.c.l.b16 %v1363
        %v1403 = vunpack.c.l.b16 %v1364
        %v1404 = vunpack.c.l.b16 %v1365
        %v1405 = vunpack.c.l.b16 %v1366
        %v1406 = vunpack.c.l.b16 %v1367
        %v1407 = vunpack.c.l.b16 %v1368
        %v1408 = vunpack.c.l.b16 %v1369
        %v1409 = vpack.c.b16 %v1394, %v1393
        %v1410 = vpack.c.b16 %v1396, %v1395
        %v1411 = vpack.c.b16 %v1398, %v1397
        %v1412 = vpack.c.b16 %v1400, %v1399
        %v1413 = vpack.c.b16 %v1402, %v1401
        %v1414 = vpack.c.b16 %v1404, %v1403
        %v1415 = vpack.c.b16 %v1406, %v1405
        %v1416 = vpack.c.b16 %v1408, %v1407
        %1425 = vmatprep.subr.bf16.mxu0 0
        %1426 = vmatpush1.bf16.msra.mxu0 %v1416
        %1427 = vmatprep.subr.bf16.mxu0 0
        %1428 = vmatpush1.bf16.msra.mxu0 %v1415
        %1429 = vmatprep.subr.bf16.mxu0 0
        %1430 = vmatpush1.bf16.msra.mxu0 %v1414
        %1431 = vmatprep.subr.bf16.mxu0 0
        %1432 = vmatpush1.bf16.msra.mxu0 %v1413
        %1433 = vmatprep.subr.bf16.mxu0 0
        %1434 = vmatpush1.bf16.msra.mxu0 %v1412
        %1435 = vmatprep.subr.bf16.mxu0 0
        %1436 = vmatpush1.bf16.msra.mxu0 %v1411
        %1437 = vmatprep.subr.bf16.mxu0 0
        %1438 = vmatpush1.bf16.msra.mxu0 %v1410
        %1439 = vmatprep.subr.bf16.mxu0 0
        %1440 = vmatpush1.bf16.msra.mxu0 %v1409
        %1441 = vmatprep.subr.bf16.mxu0 0
        %1442 = vmatpush2.bf16.msra.mxu0 0
        %1443 = vmatprep.subr.bf16.mxu0 0
        %1444 = vmatpush2.bf16.msra.mxu0 0
        %1445 = vmatprep.subr.bf16.mxu0 0
        %1446 = vmatpush2.bf16.msra.mxu0 0
        %1447 = vmatprep.subr.bf16.mxu0 0
        %1448 = vmatpush2.bf16.msra.mxu0 0
        %1449 = vmatprep.subr.bf16.mxu0 0
        %1450 = vmatpush2.bf16.msra.mxu0 0
        %1451 = vmatprep.subr.bf16.mxu0 0
        %1452 = vmatpush2.bf16.msra.mxu0 0
        %1453 = vmatprep.subr.bf16.mxu0 0
        %1454 = vmatpush2.bf16.msra.mxu0 0
        %1455 = vmatprep.subr.bf16.mxu0 0
        %1456 = vmatpush2.bf16.msra.mxu0 0
        %1457 = vmatprep.mubr.bf16.mxu0 0
        %1458 = vmatmul.mubr.bf16.gmra.mxu0 %v1353
        %v1459 = vpop.f32.mrf.mxu0
        %v1460 = vadd.f32 %v1375, %v1459
        %v1461 = vpop.f32.mrf.mxu0
        %v1462 = vpop.f32.mrf.mxu0
        %v1463 = vpop.f32.mrf.mxu0
        %1464 = vdwg.mxu0
        %v1465 = vadd.f32 %v602, %v1460
        %v1466 = vld [vmem:[#allocation14] sm:$0x1]
        %v1467 = vld [vmem:[#allocation15] sm:$0x1]
        %1468 = vadd.xlane.f32.xlu0 %v1465
        %v1469 = vpop.xlane.xlu0 %1468
        %v1470 = vmul.f32 %v1469, %v607
        %v1471 = vsub.f32 %v1465, %v1470
        %v1472 = vmul.f32 %v1471, %v1471
        %1473 = vadd.xlane.f32.xlu0 %v1472
        %v1474 = vpop.xlane.xlu0 %1473
        %v1475 = vmul.f32 %v1474, %v607
        %v1476 = vadd.f32 %v1475, 1e-06
        %v1477 = vrsqrt.pop %v1476
        %v1478 = vmul.f32 %v1471, %v1477
        %v1480 = vlaneseq
        %v1481 = vshrl.u32 %v1480, 7
        %v1482 = vsub.s32 0, %v1481
        %v1483 = vrot.slane %v1466, %v1482
        %v1485 = vmul.f32 %v1478, %v1483
        %v1487 = vlaneseq
        %v1488 = vshrl.u32 %v1487, 7
        %v1489 = vsub.s32 0, %v1488
        %v1490 = vrot.slane %v1467, %v1489
        %v1492 = vadd.f32 %v1485, %v1490
        %v1493 = vpack.c.bf16 %v1492, %v1492
        %v1494 = vld [vmem:[#allocation17] sm:$0xff]
        %v1495 = vld [vmem:[#allocation17 + $0x8] sm:$0xff]
        %v1496 = vld [vmem:[#allocation17 + $0x10] sm:$0xff]
        %v1497 = vld [vmem:[#allocation17 + $0x18] sm:$0xff]
        %v1498 = vld [vmem:[#allocation17 + $0x20] sm:$0xff]
        %v1499 = vld [vmem:[#allocation17 + $0x28] sm:$0xff]
        %v1500 = vld [vmem:[#allocation17 + $0x30] sm:$0xff]
        %v1501 = vld [vmem:[#allocation17 + $0x38] sm:$0xff]
        %v1502 = vld [vmem:[#allocation17 + $0x40] sm:$0xff]
        %v1503 = vld [vmem:[#allocation17 + $0x48] sm:$0xff]
        %v1504 = vld [vmem:[#allocation17 + $0x50] sm:$0xff]
        %v1505 = vld [vmem:[#allocation17 + $0x58] sm:$0xff]
        %v1506 = vld [vmem:[#allocation17 + $0x60] sm:$0xff]
        %v1507 = vld [vmem:[#allocation17 + $0x68] sm:$0xff]
        %v1508 = vld [vmem:[#allocation17 + $0x70] sm:$0xff]
        %v1509 = vld [vmem:[#allocation17 + $0x78] sm:$0xff]
        %v1510 = vld [vmem:[%s10] sm:$0x3]
        %v1512 = vlaneseq
        %v1513 = vshrl.u32 %v1512, 7
        %v1514 = vsub.s32 0, %v1513
        %v1515 = vrot.slane %v1510, %v1514
        %v1516 = vlaneseq
        %v1517 = vshrl.u32 %v1516, 7
        %v1518 = vsub.s32 1, %v1517
        %v1519 = vrot.slane %v1510, %v1518
        %v1538 = vunpack.c.l.b16 %v1494
        %v1539 = vunpack.c.h.b16 %v1494
        %v1540 = vunpack.c.l.b16 %v1495
        %v1541 = vunpack.c.h.b16 %v1495
        %v1542 = vunpack.c.l.b16 %v1496
        %v1543 = vunpack.c.h.b16 %v1496
        %v1544 = vunpack.c.l.b16 %v1497
        %v1545 = vunpack.c.h.b16 %v1497
        %v1546 = vunpack.c.l.b16 %v1498
        %v1547 = vunpack.c.h.b16 %v1498
        %v1548 = vunpack.c.l.b16 %v1499
        %v1549 = vunpack.c.h.b16 %v1499
        %v1550 = vunpack.c.l.b16 %v1500
        %v1551 = vunpack.c.h.b16 %v1500
        %v1552 = vunpack.c.l.b16 %v1501
        %v1553 = vunpack.c.h.b16 %v1501
        %v1554 = vunpack.c.l.b16 %v1502
        %v1555 = vunpack.c.h.b16 %v1502
        %v1556 = vunpack.c.l.b16 %v1503
        %v1557 = vunpack.c.h.b16 %v1503
        %v1558 = vunpack.c.l.b16 %v1504
        %v1559 = vunpack.c.h.b16 %v1504
        %v1560 = vunpack.c.l.b16 %v1505
        %v1561 = vunpack.c.h.b16 %v1505
        %v1562 = vunpack.c.l.b16 %v1506
        %v1563 = vunpack.c.h.b16 %v1506
        %v1564 = vunpack.c.l.b16 %v1507
        %v1565 = vunpack.c.h.b16 %v1507
        %v1566 = vunpack.c.l.b16 %v1508
        %v1567 = vunpack.c.h.b16 %v1508
        %v1568 = vunpack.c.l.b16 %v1509
        %v1569 = vunpack.c.h.b16 %v1509
        %v1570 = vpack.c.b16 %v1540, %v1538
        %v1571 = vpack.c.b16 %v1541, %v1539
        %v1572 = vpack.c.b16 %v1544, %v1542
        %v1573 = vpack.c.b16 %v1545, %v1543
        %v1574 = vpack.c.b16 %v1548, %v1546
        %v1575 = vpack.c.b16 %v1549, %v1547
        %v1576 = vpack.c.b16 %v1552, %v1550
        %v1577 = vpack.c.b16 %v1553, %v1551
        %v1578 = vpack.c.b16 %v1556, %v1554
        %v1579 = vpack.c.b16 %v1557, %v1555
        %v1580 = vpack.c.b16 %v1560, %v1558
        %v1581 = vpack.c.b16 %v1561, %v1559
        %v1582 = vpack.c.b16 %v1564, %v1562
        %v1583 = vpack.c.b16 %v1565, %v1563
        %v1584 = vpack.c.b16 %v1568, %v1566
        %v1585 = vpack.c.b16 %v1569, %v1567
        %1602 = vmatprep.subr.bf16.mxu0 %v1585
        %1603 = vmatpush1.bf16.msra.mxu0 %v1584
        %1604 = vmatprep.subr.bf16.mxu0 %v1583
        %1605 = vmatpush1.bf16.msra.mxu0 %v1582
        %1606 = vmatprep.subr.bf16.mxu0 %v1581
        %1607 = vmatpush1.bf16.msra.mxu0 %v1580
        %1608 = vmatprep.subr.bf16.mxu0 %v1579
        %1609 = vmatpush1.bf16.msra.mxu0 %v1578
        %1610 = vmatprep.subr.bf16.mxu0 %v1577
        %1611 = vmatpush1.bf16.msra.mxu0 %v1576
        %1612 = vmatprep.subr.bf16.mxu0 %v1575
        %1613 = vmatpush1.bf16.msra.mxu0 %v1574
        %1614 = vmatprep.subr.bf16.mxu0 %v1573
        %1615 = vmatpush1.bf16.msra.mxu0 %v1572
        %1616 = vmatprep.subr.bf16.mxu0 %v1571
        %1617 = vmatpush1.bf16.msra.mxu0 %v1570
        %1618 = vmatprep.subr.bf16.mxu0 0
        %1619 = vmatpush2.bf16.msra.mxu0 0
        %1620 = vmatprep.subr.bf16.mxu0 0
        %1621 = vmatpush2.bf16.msra.mxu0 0
        %1622 = vmatprep.subr.bf16.mxu0 0
        %1623 = vmatpush2.bf16.msra.mxu0 0
        %1624 = vmatprep.subr.bf16.mxu0 0
        %1625 = vmatpush2.bf16.msra.mxu0 0
        %1626 = vmatprep.subr.bf16.mxu0 0
        %1627 = vmatpush2.bf16.msra.mxu0 0
        %1628 = vmatprep.subr.bf16.mxu0 0
        %1629 = vmatpush2.bf16.msra.mxu0 0
        %1630 = vmatprep.subr.bf16.mxu0 0
        %1631 = vmatpush2.bf16.msra.mxu0 0
        %1632 = vmatprep.subr.bf16.mxu0 0
        %1633 = vmatpush2.bf16.msra.mxu0 0
        %1634 = vmatprep.mubr.bf16.mxu0 0
        %1635 = vmatmul.mubr.bf16.gmra.mxu0 %v1493
        %v1636 = vpop.f32.mrf.mxu0
        %v1637 = vadd.f32 %v1515, %v1636
        %v1638 = vpop.f32.mrf.mxu0
        %v1639 = vadd.f32 %v1519, %v1638
        %v1640 = vpop.f32.mrf.mxu0
        %v1641 = vpop.f32.mrf.mxu0
        %1642 = vdwg.mxu0
        %v1643 = vmul.f32 %v1637, 0.5
        %v1644 = vmul.f32 %v1639, 0.5
        %v1645 = vmul.f32 %v1637, 0.70710677
        %v1646 = vmul.f32 %v1639, 0.70710677
        %v1647 = verf.f32.pop %v1645
        %v1648 = verf.f32.pop %v1646
        %v1649 = vadd.f32 %v1647, 1.0
        %v1650 = vadd.f32 %v1648, 1.0
        %v1651 = vmul.f32 %v1643, %v1649
        %v1652 = vmul.f32 %v1644, %v1650
        %v1653 = vpack.c.bf16 %v1651, %v1651
        %v1654 = vpack.c.bf16 %v1652, %v1652
        %v1655 = vld [vmem:[#allocation18] sm:$0xf]
        %v1656 = vld [vmem:[#allocation18 + $0x4] sm:$0xf]
        %v1657 = vld [vmem:[#allocation18 + $0x8] sm:$0xf]
        %v1658 = vld [vmem:[#allocation18 + $0xc] sm:$0xf]
        %v1659 = vld [vmem:[#allocation18 + $0x10] sm:$0xf]
        %v1660 = vld [vmem:[#allocation18 + $0x14] sm:$0xf]
        %v1661 = vld [vmem:[#allocation18 + $0x18] sm:$0xf]
        %v1662 = vld [vmem:[#allocation18 + $0x1c] sm:$0xf]
        %v1663 = vld [vmem:[#allocation18 + $0x20] sm:$0xf]
        %v1664 = vld [vmem:[#allocation18 + $0x24] sm:$0xf]
        %v1665 = vld [vmem:[#allocation18 + $0x28] sm:$0xf]
        %v1666 = vld [vmem:[#allocation18 + $0x2c] sm:$0xf]
        %v1667 = vld [vmem:[#allocation18 + $0x30] sm:$0xf]
        %v1668 = vld [vmem:[#allocation18 + $0x34] sm:$0xf]
        %v1669 = vld [vmem:[#allocation18 + $0x38] sm:$0xf]
        %v1670 = vld [vmem:[#allocation18 + $0x3c] sm:$0xf]
        %v1671 = vld [vmem:[#allocation18 + $0x40] sm:$0xf]
        %v1672 = vld [vmem:[#allocation18 + $0x44] sm:$0xf]
        %v1673 = vld [vmem:[#allocation18 + $0x48] sm:$0xf]
        %v1674 = vld [vmem:[#allocation18 + $0x4c] sm:$0xf]
        %v1675 = vld [vmem:[#allocation18 + $0x50] sm:$0xf]
        %v1676 = vld [vmem:[#allocation18 + $0x54] sm:$0xf]
        %v1677 = vld [vmem:[#allocation18 + $0x58] sm:$0xf]
        %v1678 = vld [vmem:[#allocation18 + $0x5c] sm:$0xf]
        %v1679 = vld [vmem:[#allocation18 + $0x60] sm:$0xf]
        %v1680 = vld [vmem:[#allocation18 + $0x64] sm:$0xf]
        %v1681 = vld [vmem:[#allocation18 + $0x68] sm:$0xf]
        %v1682 = vld [vmem:[#allocation18 + $0x6c] sm:$0xf]
        %v1683 = vld [vmem:[#allocation18 + $0x70] sm:$0xf]
        %v1684 = vld [vmem:[#allocation18 + $0x74] sm:$0xf]
        %v1685 = vld [vmem:[#allocation18 + $0x78] sm:$0xf]
        %v1686 = vld [vmem:[#allocation18 + $0x7c] sm:$0xf]
        %v1687 = vld [vmem:[#allocation20] sm:$0x1]
        %v1689 = vlaneseq
        %v1690 = vshrl.u32 %v1689, 7
        %v1691 = vsub.s32 0, %v1690
        %v1692 = vrot.slane %v1687, %v1691
        %v1726 = vunpack.c.l.b16 %v1655
        %v1727 = vunpack.c.l.b16 %v1656
        %v1728 = vunpack.c.l.b16 %v1657
        %v1729 = vunpack.c.l.b16 %v1658
        %v1730 = vunpack.c.l.b16 %v1659
        %v1731 = vunpack.c.l.b16 %v1660
        %v1732 = vunpack.c.l.b16 %v1661
        %v1733 = vunpack.c.l.b16 %v1662
        %v1734 = vunpack.c.l.b16 %v1663
        %v1735 = vunpack.c.l.b16 %v1664
        %v1736 = vunpack.c.l.b16 %v1665
        %v1737 = vunpack.c.l.b16 %v1666
        %v1738 = vunpack.c.l.b16 %v1667
        %v1739 = vunpack.c.l.b16 %v1668
        %v1740 = vunpack.c.l.b16 %v1669
        %v1741 = vunpack.c.l.b16 %v1670
        %v1742 = vunpack.c.l.b16 %v1671
        %v1743 = vunpack.c.l.b16 %v1672
        %v1744 = vunpack.c.l.b16 %v1673
        %v1745 = vunpack.c.l.b16 %v1674
        %v1746 = vunpack.c.l.b16 %v1675
        %v1747 = vunpack.c.l.b16 %v1676
        %v1748 = vunpack.c.l.b16 %v1677
        %v1749 = vunpack.c.l.b16 %v1678
        %v1750 = vunpack.c.l.b16 %v1679
        %v1751 = vunpack.c.l.b16 %v1680
        %v1752 = vunpack.c.l.b16 %v1681
        %v1753 = vunpack.c.l.b16 %v1682
        %v1754 = vunpack.c.l.b16 %v1683
        %v1755 = vunpack.c.l.b16 %v1684
        %v1756 = vunpack.c.l.b16 %v1685
        %v1757 = vunpack.c.l.b16 %v1686
        %v1758 = vpack.c.b16 %v1727, %v1726
        %v1759 = vpack.c.b16 %v1729, %v1728
        %v1760 = vpack.c.b16 %v1731, %v1730
        %v1761 = vpack.c.b16 %v1733, %v1732
        %v1762 = vpack.c.b16 %v1735, %v1734
        %v1763 = vpack.c.b16 %v1737, %v1736
        %v1764 = vpack.c.b16 %v1739, %v1738
        %v1765 = vpack.c.b16 %v1741, %v1740
        %v1766 = vpack.c.b16 %v1743, %v1742
        %v1767 = vpack.c.b16 %v1745, %v1744
        %v1768 = vpack.c.b16 %v1747, %v1746
        %v1769 = vpack.c.b16 %v1749, %v1748
        %v1770 = vpack.c.b16 %v1751, %v1750
        %v1771 = vpack.c.b16 %v1753, %v1752
        %v1772 = vpack.c.b16 %v1755, %v1754
        %v1773 = vpack.c.b16 %v1757, %v1756
        %1790 = vmatprep.subr.bf16.mxu0 0
        %1791 = vmatpush1.bf16.msra.mxu0 %v1765
        %1792 = vmatprep.subr.bf16.mxu0 0
        %1793 = vmatpush1.bf16.msra.mxu0 %v1764
        %1794 = vmatprep.subr.bf16.mxu0 0
        %1795 = vmatpush1.bf16.msra.mxu0 %v1763
        %1796 = vmatprep.subr.bf16.mxu0 0
        %1797 = vmatpush1.bf16.msra.mxu0 %v1762
        %1798 = vmatprep.subr.bf16.mxu0 0
        %1799 = vmatpush1.bf16.msra.mxu0 %v1761
        %1800 = vmatprep.subr.bf16.mxu0 0
        %1801 = vmatpush1.bf16.msra.mxu0 %v1760
        %1802 = vmatprep.subr.bf16.mxu0 0
        %1803 = vmatpush1.bf16.msra.mxu0 %v1759
        %1804 = vmatprep.subr.bf16.mxu0 0
        %1805 = vmatpush1.bf16.msra.mxu0 %v1758
        %1806 = vmatprep.subr.bf16.mxu0 0
        %1807 = vmatpush2.bf16.msra.mxu0 %v1773
        %1808 = vmatprep.subr.bf16.mxu0 0
        %1809 = vmatpush2.bf16.msra.mxu0 %v1772
        %1810 = vmatprep.subr.bf16.mxu0 0
        %1811 = vmatpush2.bf16.msra.mxu0 %v1771
        %1812 = vmatprep.subr.bf16.mxu0 0
        %1813 = vmatpush2.bf16.msra.mxu0 %v1770
        %1814 = vmatprep.subr.bf16.mxu0 0
        %1815 = vmatpush2.bf16.msra.mxu0 %v1769
        %1816 = vmatprep.subr.bf16.mxu0 0
        %1817 = vmatpush2.bf16.msra.mxu0 %v1768
        %1818 = vmatprep.subr.bf16.mxu0 0
        %1819 = vmatpush2.bf16.msra.mxu0 %v1767
        %1820 = vmatprep.subr.bf16.mxu0 0
        %1821 = vmatpush2.bf16.msra.mxu0 %v1766
        %1822 = vmatprep.mubr.bf16.mxu0 %v1654
        %1823 = vmatmul.mubr.bf16.gmra.mxu0 %v1653
        %v1824 = vpop.f32.mrf.mxu0
        %v1825 = vadd.f32 %v1692, %v1824
        %v1826 = vpop.f32.mrf.mxu0
        %v1827 = vpop.f32.mrf.mxu0
        %v1828 = vpop.f32.mrf.mxu0
        %1829 = vdwg.mxu0
        %v1830 = vmul.f32 %v1825, 0.5
        %v1831 = vmul.f32 %v1825, 0.70710677
        %v1832 = verf.f32.pop %v1831
        %v1833 = vadd.f32 %v1832, 1.0
        %v1834 = vmul.f32 %v1830, %v1833
        %v1835 = vadd.f32 %v1465, %v1834
        %s1836 = scalar_lea.vmem [#allocation6], 1
        %v1837 = vld [vmem:[%s1836] sm:$0x1]
        %s1838 = scalar_lea.vmem [#allocation8], 1
        %v1839 = vld [vmem:[%s1838] sm:$0x1]
        %1840 = vadd.xlane.f32.xlu0 %v1835
        %v1841 = vpop.xlane.xlu0 %1840
        %v1842 = vmul.f32 %v1841, %v607
        %v1843 = vsub.f32 %v1835, %v1842
        %v1844 = vmul.f32 %v1843, %v1843
        %1845 = vadd.xlane.f32.xlu0 %v1844
        %v1846 = vpop.xlane.xlu0 %1845
        %v1847 = vmul.f32 %v1846, %v607
        %v1848 = vadd.f32 %v1847, 1e-06
        %v1849 = vrsqrt.pop %v1848
        %v1850 = vmul.f32 %v1843, %v1849
        %v1852 = vlaneseq
        %v1853 = vshrl.u32 %v1852, 7
        %v1854 = vsub.s32 0, %v1853
        %v1855 = vrot.slane %v1837, %v1854
        %v1857 = vmul.f32 %v1850, %v1855
        %v1859 = vlaneseq
        %v1860 = vshrl.u32 %v1859, 7
        %v1861 = vsub.s32 0, %v1860
        %v1862 = vrot.slane %v1839, %v1861
        %v1864 = vadd.f32 %v1857, %v1862
        %v1865 = vpack.c.bf16 %v1864, %v1864
        %s1866 = scalar_lea.vmem [#allocation9], 192
        %v1867 = vld [vmem:[%s1866] sm:$0xff]
        %v1868 = vld [vmem:[%s1866 + $0x8] sm:$0xf]
        %v1869 = vld [vmem:[%s1866 + $0xc] sm:$0xff]
        %v1870 = vld [vmem:[%s1866 + $0x14] sm:$0xf]
        %v1871 = vld [vmem:[%s1866 + $0x18] sm:$0xff]
        %v1872 = vld [vmem:[%s1866 + $0x20] sm:$0xf]
        %v1873 = vld [vmem:[%s1866 + $0x24] sm:$0xff]
        %v1874 = vld [vmem:[%s1866 + $0x2c] sm:$0xf]
        %v1875 = vld [vmem:[%s1866 + $0x30] sm:$0xff]
        %v1876 = vld [vmem:[%s1866 + $0x38] sm:$0xf]
        %v1877 = vld [vmem:[%s1866 + $0x3c] sm:$0xff]
        %v1878 = vld [vmem:[%s1866 + $0x44] sm:$0xf]
        %v1879 = vld [vmem:[%s1866 + $0x48] sm:$0xff]
        %v1880 = vld [vmem:[%s1866 + $0x50] sm:$0xf]
        %v1881 = vld [vmem:[%s1866 + $0x54] sm:$0xff]
        %v1882 = vld [vmem:[%s1866 + $0x5c] sm:$0xf]
        %v1883 = vld [vmem:[%s1866 + $0x60] sm:$0xff]
        %v1884 = vld [vmem:[%s1866 + $0x68] sm:$0xf]
        %v1885 = vld [vmem:[%s1866 + $0x6c] sm:$0xff]
        %v1886 = vld [vmem:[%s1866 + $0x74] sm:$0xf]
        %v1887 = vld [vmem:[%s1866 + $0x78] sm:$0xff]
        %v1888 = vld [vmem:[%s1866 + $0x80] sm:$0xf]
        %v1889 = vld [vmem:[%s1866 + $0x84] sm:$0xff]
        %v1890 = vld [vmem:[%s1866 + $0x8c] sm:$0xf]
        %v1891 = vld [vmem:[%s1866 + $0x90] sm:$0xff]
        %v1892 = vld [vmem:[%s1866 + $0x98] sm:$0xf]
        %v1893 = vld [vmem:[%s1866 + $0x9c] sm:$0xff]
        %v1894 = vld [vmem:[%s1866 + $0xa4] sm:$0xf]
        %v1895 = vld [vmem:[%s1866 + $0xa8] sm:$0xff]
        %v1896 = vld [vmem:[%s1866 + $0xb0] sm:$0xf]
        %v1897 = vld [vmem:[%s1866 + $0xb4] sm:$0xff]
        %v1898 = vld [vmem:[%s1866 + $0xbc] sm:$0xf]
        %s1899 = scalar_lea.vmem [#allocation11], 3
        %v1900 = vld [vmem:[%s1899] sm:$0x7]
        %v1902 = vlaneseq
        %v1903 = vshrl.u32 %v1902, 7
        %v1904 = vsub.s32 0, %v1903
        %v1905 = vrot.slane %v1900, %v1904
        %v1906 = vlaneseq
        %v1907 = vshrl.u32 %v1906, 7
        %v1908 = vsub.s32 1, %v1907
        %v1909 = vrot.slane %v1900, %v1908
        %v1910 = vlaneseq
        %v1911 = vshrl.u32 %v1910, 7
        %v1912 = vsub.s32 2, %v1911
        %v1913 = vrot.slane %v1900, %v1912
        %v1949 = vunpack.c.l.b16 %v1867
        %v1950 = vunpack.c.h.b16 %v1867
        %v1951 = vunpack.c.l.b16 %v1868
        %v1952 = vunpack.c.l.b16 %v1869
        %v1953 = vunpack.c.h.b16 %v1869
        %v1954 = vunpack.c.l.b16 %v1870
        %v1955 = vunpack.c.l.b16 %v1871
        %v1956 = vunpack.c.h.b16 %v1871
        %v1957 = vunpack.c.l.b16 %v1872
        %v1958 = vunpack.c.l.b16 %v1873
        %v1959 = vunpack.c.h.b16 %v1873
        %v1960 = vunpack.c.l.b16 %v1874
        %v1961 = vunpack.c.l.b16 %v1875
        %v1962 = vunpack.c.h.b16 %v1875
        %v1963 = vunpack.c.l.b16 %v1876
        %v1964 = vunpack.c.l.b16 %v1877
        %v1965 = vunpack.c.h.b16 %v1877
        %v1966 = vunpack.c.l.b16 %v1878
        %v1967 = vunpack.c.l.b16 %v1879
        %v1968 = vunpack.c.h.b16 %v1879
        %v1969 = vunpack.c.l.b16 %v1880
        %v1970 = vunpack.c.l.b16 %v1881
        %v1971 = vunpack.c.h.b16 %v1881
        %v1972 = vunpack.c.l.b16 %v1882
        %v1973 = vunpack.c.l.b16 %v1883
        %v1974 = vunpack.c.h.b16 %v1883
        %v1975 = vunpack.c.l.b16 %v1884
        %v1976 = vunpack.c.l.b16 %v1885
        %v1977 = vunpack.c.h.b16 %v1885
        %v1978 = vunpack.c.l.b16 %v1886
        %v1979 = vunpack.c.l.b16 %v1887
        %v1980 = vunpack.c.h.b16 %v1887
        %v1981 = vunpack.c.l.b16 %v1888
        %v1982 = vunpack.c.l.b16 %v1889
        %v1983 = vunpack.c.h.b16 %v1889
        %v1984 = vunpack.c.l.b16 %v1890
        %v1985 = vunpack.c.l.b16 %v1891
        %v1986 = vunpack.c.h.b16 %v1891
        %v1987 = vunpack.c.l.b16 %v1892
        %v1988 = vunpack.c.l.b16 %v1893
        %v1989 = vunpack.c.h.b16 %v1893
        %v1990 = vunpack.c.l.b16 %v1894
        %v1991 = vunpack.c.l.b16 %v1895
        %v1992 = vunpack.c.h.b16 %v1895
        %v1993 = vunpack.c.l.b16 %v1896
        %v1994 = vunpack.c.l.b16 %v1897
        %v1995 = vunpack.c.h.b16 %v1897
        %v1996 = vunpack.c.l.b16 %v1898
        %v1997 = vpack.c.b16 %v1952, %v1949
        %v1998 = vpack.c.b16 %v1953, %v1950
        %v1999 = vpack.c.b16 %v1954, %v1951
        %v2000 = vpack.c.b16 %v1958, %v1955
        %v2001 = vpack.c.b16 %v1959, %v1956
        %v2002 = vpack.c.b16 %v1960, %v1957
        %v2003 = vpack.c.b16 %v1964, %v1961
        %v2004 = vpack.c.b16 %v1965, %v1962
        %v2005 = vpack.c.b16 %v1966, %v1963
        %v2006 = vpack.c.b16 %v1970, %v1967
        %v2007 = vpack.c.b16 %v1971, %v1968
        %v2008 = vpack.c.b16 %v1972, %v1969
        %v2009 = vpack.c.b16 %v1976, %v1973
        %v2010 = vpack.c.b16 %v1977, %v1974
        %v2011 = vpack.c.b16 %v1978, %v1975
        %v2012 = vpack.c.b16 %v1982, %v1979
        %v2013 = vpack.c.b16 %v1983, %v1980
        %v2014 = vpack.c.b16 %v1984, %v1981
        %v2015 = vpack.c.b16 %v1988, %v1985
        %v2016 = vpack.c.b16 %v1989, %v1986
        %v2017 = vpack.c.b16 %v1990, %v1987
        %v2018 = vpack.c.b16 %v1994, %v1991
        %v2019 = vpack.c.b16 %v1995, %v1992
        %v2020 = vpack.c.b16 %v1996, %v1993
        %2045 = vmatprep.subr.bf16.mxu0 %v2019
        %2046 = vmatpush1.bf16.msra.mxu0 %v2018
        %2047 = vmatprep.subr.bf16.mxu0 %v2016
        %2048 = vmatpush1.bf16.msra.mxu0 %v2015
        %2049 = vmatprep.subr.bf16.mxu0 %v2013
        %2050 = vmatpush1.bf16.msra.mxu0 %v2012
        %2051 = vmatprep.subr.bf16.mxu0 %v2010
        %2052 = vmatpush1.bf16.msra.mxu0 %v2009
        %2053 = vmatprep.subr.bf16.mxu0 %v2007
        %2054 = vmatpush1.bf16.msra.mxu0 %v2006
        %2055 = vmatprep.subr.bf16.mxu0 %v2004
        %2056 = vmatpush1.bf16.msra.mxu0 %v2003
        %2057 = vmatprep.subr.bf16.mxu0 %v2001
        %2058 = vmatpush1.bf16.msra.mxu0 %v2000
        %2059 = vmatprep.subr.bf16.mxu0 %v1998
        %2060 = vmatpush1.bf16.msra.mxu0 %v1997
        %2061 = vmatprep.subr.bf16.mxu0 0
        %2062 = vmatpush2.bf16.msra.mxu0 0
        %2063 = vmatprep.subr.bf16.mxu0 0
        %2064 = vmatpush2.bf16.msra.mxu0 0
        %2065 = vmatprep.subr.bf16.mxu0 0
        %2066 = vmatpush2.bf16.msra.mxu0 0
        %2067 = vmatprep.subr.bf16.mxu0 0
        %2068 = vmatpush2.bf16.msra.mxu0 0
        %2069 = vmatprep.subr.bf16.mxu0 0
        %2070 = vmatpush2.bf16.msra.mxu0 0
        %2071 = vmatprep.subr.bf16.mxu0 0
        %2072 = vmatpush2.bf16.msra.mxu0 0
        %2073 = vmatprep.subr.bf16.mxu0 0
        %2074 = vmatpush2.bf16.msra.mxu0 0
        %2075 = vmatprep.subr.bf16.mxu0 0
        %2076 = vmatpush2.bf16.msra.mxu0 0
        %2077 = vmatprep.mubr.bf16.mxu0 0
        %2078 = vmatmul.mubr.bf16.gmra.mxu0 %v1865
        %v2079 = vpop.f32.mrf.mxu0
        %v2080 = vadd.f32 %v1905, %v2079
        %v2081 = vpop.f32.mrf.mxu0
        %v2082 = vadd.f32 %v1909, %v2081
        %v2083 = vpop.f32.mrf.mxu0
        %v2084 = vpop.f32.mrf.mxu0
        %2085 = vdwg.mxu0
        %2086 = vmatprep.subr.bf16.mxu0 0
        %2087 = vmatpush1.bf16.msra.mxu0 %v2020
        %2088 = vmatprep.subr.bf16.mxu0 0
        %2089 = vmatpush1.bf16.msra.mxu0 %v2017
        %2090 = vmatprep.subr.bf16.mxu0 0
        %2091 = vmatpush1.bf16.msra.mxu0 %v2014
        %2092 = vmatprep.subr.bf16.mxu0 0
        %2093 = vmatpush1.bf16.msra.mxu0 %v2011
        %2094 = vmatprep.subr.bf16.mxu0 0
        %2095 = vmatpush1.bf16.msra.mxu0 %v2008
        %2096 = vmatprep.subr.bf16.mxu0 0
        %2097 = vmatpush1.bf16.msra.mxu0 %v2005
        %2098 = vmatprep.subr.bf16.mxu0 0
        %2099 = vmatpush1.bf16.msra.mxu0 %v2002
        %2100 = vmatprep.subr.bf16.mxu0 0
        %2101 = vmatpush1.bf16.msra.mxu0 %v1999
        %2102 = vmatprep.subr.bf16.mxu0 0
        %2103 = vmatpush2.bf16.msra.mxu0 0
        %2104 = vmatprep.subr.bf16.mxu0 0
        %2105 = vmatpush2.bf16.msra.mxu0 0
        %2106 = vmatprep.subr.bf16.mxu0 0
        %2107 = vmatpush2.bf16.msra.mxu0 0
        %2108 = vmatprep.subr.bf16.mxu0 0
        %2109 = vmatpush2.bf16.msra.mxu0 0
        %2110 = vmatprep.subr.bf16.mxu0 0
        %2111 = vmatpush2.bf16.msra.mxu0 0
        %2112 = vmatprep.subr.bf16.mxu0 0
        %2113 = vmatpush2.bf16.msra.mxu0 0
        %2114 = vmatprep.subr.bf16.mxu0 0
        %2115 = vmatpush2.bf16.msra.mxu0 0
        %2116 = vmatprep.subr.bf16.mxu0 0
        %2117 = vmatpush2.bf16.msra.mxu0 0
        %2118 = vmatprep.mubr.bf16.mxu0 0
        %2119 = vmatmul.mubr.bf16.gmra.mxu0 %v1865
        %v2120 = vpop.f32.mrf.mxu0
        %v2121 = vadd.f32 %v1913, %v2120
        %v2122 = vpop.f32.mrf.mxu0
        %v2123 = vpop.f32.mrf.mxu0
        %v2124 = vpop.f32.mrf.mxu0
        %2125 = vdwg.mxu0
        %v2126 = vpack.c.bf16 %v2080, %v2080
        %v2127 = vpack.c.bf16 %v2082, %v2082
        %v2128 = vpack.c.bf16 %v2121, %v2121
        %v2130 = vsel %vm893, %v2126, 0
        %v2133 = vsel %vm893, %v2127, 0
        %2135 = vmatprep.subr.bf16.mxu0 0
        %2136 = vmatpush1.bf16.xpose.msra.mxu0 0
        %2137 = vmatprep.subr.bf16.mxu0 0
        %2138 = vmatpush1.bf16.xpose.msra.mxu0 0
        %2139 = vmatprep.subr.bf16.mxu0 0
        %2140 = vmatpush1.bf16.xpose.msra.mxu0 0
        %2141 = vmatprep.subr.bf16.mxu0 0
        %2142 = vmatpush1.bf16.xpose.msra.mxu0 0
        %2143 = vmatprep.subr.bf16.mxu0 0
        %2144 = vmatpush1.bf16.xpose.msra.mxu0 0
        %2145 = vmatprep.subr.bf16.mxu0 0
        %2146 = vmatpush1.bf16.xpose.msra.mxu0 0
        %2147 = vmatprep.subr.bf16.mxu0 0
        %2148 = vmatpush1.bf16.xpose.msra.mxu0 0
        %2149 = vmatprep.subr.bf16.mxu0 0
        %2150 = vmatpush1.bf16.xpose.msra.mxu0 %v2133
        %2151 = vmatprep.subr.bf16.mxu0 0
        %2152 = vmatpush2.bf16.xpose.msra.mxu0 0
        %2153 = vmatprep.subr.bf16.mxu0 0
        %2154 = vmatpush2.bf16.xpose.msra.mxu0 0
        %2155 = vmatprep.subr.bf16.mxu0 0
        %2156 = vmatpush2.bf16.xpose.msra.mxu0 0
        %2157 = vmatprep.subr.bf16.mxu0 0
        %2158 = vmatpush2.bf16.xpose.msra.mxu0 0
        %2159 = vmatprep.subr.bf16.mxu0 0
        %2160 = vmatpush2.bf16.xpose.msra.mxu0 0
        %2161 = vmatprep.subr.bf16.mxu0 0
        %2162 = vmatpush2.bf16.xpose.msra.mxu0 0
        %2163 = vmatprep.subr.bf16.mxu0 0
        %2164 = vmatpush2.bf16.xpose.msra.mxu0 0
        %2165 = vmatprep.subr.bf16.mxu0 0
        %2166 = vmatpush2.bf16.xpose.msra.mxu0 0
        %2167 = vmatprep.mubr.bf16.mxu0 0
        %2168 = vmatmul.mubr.bf16.gmra.mxu0 %v2130
        %v2169 = vpop.f32.mrf.mxu0
        %v2170 = vadd.f32 0.0, %v2169
        %v2171 = vpop.f32.mrf.mxu0
        %v2172 = vpop.f32.mrf.mxu0
        %v2173 = vpop.f32.mrf.mxu0
        %2174 = vdwg.mxu0
        %v2175 = vsel %vm940, %v2170, -inf
        %2176 = vmax.xlane.f32.xlu0 %v2175
        %v2177 = vpop.xlane.xlu0 %2176
        %v2178 = vsub.f32 %v2170, %v2177
        %v2179 = vmul.f32 %v2178, 1.442695
        %v2180 = vpow.pop %v2179
        %v2181 = vsel %vm940, %v2180, 0.0
        %2182 = vadd.xlane.f32.xlu0 %v2181
        %v2183 = vpop.xlane.xlu0 %2182
        %v2184 = vrcp.pop %v2183
        %v2185 = vmul.f32 %v2180, %v2184
        %v2186 = vpack.c.bf16 %v2185, %v2185
        %v2188 = vsel %vm940, %v2186, 0
        %v2191 = vsel %vm956, %v2128, 0
        %2193 = vmatprep.subr.bf16.mxu0 0
        %2194 = vmatpush1.bf16.msra.mxu0 0
        %2195 = vmatprep.subr.bf16.mxu0 0
        %2196 = vmatpush1.bf16.msra.mxu0 0
        %2197 = vmatprep.subr.bf16.mxu0 0
        %2198 = vmatpush1.bf16.msra.mxu0 0
        %2199 = vmatprep.subr.bf16.mxu0 0
        %2200 = vmatpush1.bf16.msra.mxu0 0
        %2201 = vmatprep.subr.bf16.mxu0 0
        %2202 = vmatpush1.bf16.msra.mxu0 0
        %2203 = vmatprep.subr.bf16.mxu0 0
        %2204 = vmatpush1.bf16.msra.mxu0 0
        %2205 = vmatprep.subr.bf16.mxu0 0
        %2206 = vmatpush1.bf16.msra.mxu0 0
        %2207 = vmatprep.subr.bf16.mxu0 0
        %2208 = vmatpush1.bf16.msra.mxu0 %v2191
        %2209 = vmatprep.subr.bf16.mxu0 0
        %2210 = vmatpush2.bf16.msra.mxu0 0
        %2211 = vmatprep.subr.bf16.mxu0 0
        %2212 = vmatpush2.bf16.msra.mxu0 0
        %2213 = vmatprep.subr.bf16.mxu0 0
        %2214 = vmatpush2.bf16.msra.mxu0 0
        %2215 = vmatprep.subr.bf16.mxu0 0
        %2216 = vmatpush2.bf16.msra.mxu0 0
        %2217 = vmatprep.subr.bf16.mxu0 0
        %2218 = vmatpush2.bf16.msra.mxu0 0
        %2219 = vmatprep.subr.bf16.mxu0 0
        %2220 = vmatpush2.bf16.msra.mxu0 0
        %2221 = vmatprep.subr.bf16.mxu0 0
        %2222 = vmatpush2.bf16.msra.mxu0 0
        %2223 = vmatprep.subr.bf16.mxu0 0
        %2224 = vmatpush2.bf16.msra.mxu0 0
        %2225 = vmatprep.mubr.bf16.mxu0 0
        %2226 = vmatmul.mubr.bf16.gmra.mxu0 %v2188
        %v2227 = vpop.f32.mrf.mxu0
        %v2228 = vadd.f32 0.0, %v2227
        %v2229 = vpop.f32.mrf.mxu0
        %v2230 = vpop.f32.mrf.mxu0
        %v2231 = vpop.f32.mrf.mxu0
        %2232 = vdwg.mxu0
        %2233 = vst.msk [vmem:[#allocation2] sm:$0xff] %vm893, %v2228
        %2235 = vrot.lane.b32.xlu0 %v2126, 96
        %v2236 = vpop.permute.xlu0 %2235
        %2238 = vrot.lane.b32.xlu0 %v2127, 96
        %v2239 = vpop.permute.xlu0 %2238
        %v2241 = vsel %vm893, %v2236, 0
        %v2244 = vsel %vm893, %v2239, 0
        %2246 = vmatprep.subr.bf16.mxu0 0
        %2247 = vmatpush1.bf16.xpose.msra.mxu0 0
        %2248 = vmatprep.subr.bf16.mxu0 0
        %2249 = vmatpush1.bf16.xpose.msra.mxu0 0
        %2250 = vmatprep.subr.bf16.mxu0 0
        %2251 = vmatpush1.bf16.xpose.msra.mxu0 0
        %2252 = vmatprep.subr.bf16.mxu0 0
        %2253 = vmatpush1.bf16.xpose.msra.mxu0 0
        %2254 = vmatprep.subr.bf16.mxu0 0
        %2255 = vmatpush1.bf16.xpose.msra.mxu0 0
        %2256 = vmatprep.subr.bf16.mxu0 0
        %2257 = vmatpush1.bf16.xpose.msra.mxu0 0
        %2258 = vmatprep.subr.bf16.mxu0 0
        %2259 = vmatpush1.bf16.xpose.msra.mxu0 0
        %2260 = vmatprep.subr.bf16.mxu0 0
        %2261 = vmatpush1.bf16.xpose.msra.mxu0 %v2244
        %2262 = vmatprep.subr.bf16.mxu0 0
        %2263 = vmatpush2.bf16.xpose.msra.mxu0 0
        %2264 = vmatprep.subr.bf16.mxu0 0
        %2265 = vmatpush2.bf16.xpose.msra.mxu0 0
        %2266 = vmatprep.subr.bf16.mxu0 0
        %2267 = vmatpush2.bf16.xpose.msra.mxu0 0
        %2268 = vmatprep.subr.bf16.mxu0 0
        %2269 = vmatpush2.bf16.xpose.msra.mxu0 0
        %2270 = vmatprep.subr.bf16.mxu0 0
        %2271 = vmatpush2.bf16.xpose.msra.mxu0 0
        %2272 = vmatprep.subr.bf16.mxu0 0
        %2273 = vmatpush2.bf16.xpose.msra.mxu0 0
        %2274 = vmatprep.subr.bf16.mxu0 0
        %2275 = vmatpush2.bf16.xpose.msra.mxu0 0
        %2276 = vmatprep.subr.bf16.mxu0 0
        %2277 = vmatpush2.bf16.xpose.msra.mxu0 0
        %2278 = vmatprep.mubr.bf16.mxu0 0
        %2279 = vmatmul.mubr.bf16.gmra.mxu0 %v2241
        %v2280 = vpop.f32.mrf.mxu0
        %v2281 = vadd.f32 0.0, %v2280
        %v2282 = vpop.f32.mrf.mxu0
        %v2283 = vpop.f32.mrf.mxu0
        %v2284 = vpop.f32.mrf.mxu0
        %2285 = vdwg.mxu0
        %v2286 = vsel %vm940, %v2281, -inf
        %2287 = vmax.xlane.f32.xlu0 %v2286
        %v2288 = vpop.xlane.xlu0 %2287
        %v2289 = vsub.f32 %v2281, %v2288
        %v2290 = vmul.f32 %v2289, 1.442695
        %v2291 = vpow.pop %v2290
        %v2292 = vsel %vm940, %v2291, 0.0
        %2293 = vadd.xlane.f32.xlu0 %v2292
        %v2294 = vpop.xlane.xlu0 %2293
        %v2295 = vrcp.pop %v2294
        %v2296 = vmul.f32 %v2291, %v2295
        %v2297 = vpack.c.bf16 %v2296, %v2296
        %2299 = vrot.lane.b32.xlu0 %v2128, 96
        %v2300 = vpop.permute.xlu0 %2299
        %v2302 = vsel %vm940, %v2297, 0
        %v2305 = vsel %vm956, %v2300, 0
        %2307 = vmatprep.subr.bf16.mxu0 0
        %2308 = vmatpush1.bf16.msra.mxu0 0
        %2309 = vmatprep.subr.bf16.mxu0 0
        %2310 = vmatpush1.bf16.msra.mxu0 0
        %2311 = vmatprep.subr.bf16.mxu0 0
        %2312 = vmatpush1.bf16.msra.mxu0 0
        %2313 = vmatprep.subr.bf16.mxu0 0
        %2314 = vmatpush1.bf16.msra.mxu0 0
        %2315 = vmatprep.subr.bf16.mxu0 0
        %2316 = vmatpush1.bf16.msra.mxu0 0
        %2317 = vmatprep.subr.bf16.mxu0 0
        %2318 = vmatpush1.bf16.msra.mxu0 0
        %2319 = vmatprep.subr.bf16.mxu0 0
        %2320 = vmatpush1.bf16.msra.mxu0 0
        %2321 = vmatprep.subr.bf16.mxu0 0
        %2322 = vmatpush1.bf16.msra.mxu0 %v2305
        %2323 = vmatprep.subr.bf16.mxu0 0
        %2324 = vmatpush2.bf16.msra.mxu0 0
        %2325 = vmatprep.subr.bf16.mxu0 0
        %2326 = vmatpush2.bf16.msra.mxu0 0
        %2327 = vmatprep.subr.bf16.mxu0 0
        %2328 = vmatpush2.bf16.msra.mxu0 0
        %2329 = vmatprep.subr.bf16.mxu0 0
        %2330 = vmatpush2.bf16.msra.mxu0 0
        %2331 = vmatprep.subr.bf16.mxu0 0
        %2332 = vmatpush2.bf16.msra.mxu0 0
        %2333 = vmatprep.subr.bf16.mxu0 0
        %2334 = vmatpush2.bf16.msra.mxu0 0
        %2335 = vmatprep.subr.bf16.mxu0 0
        %2336 = vmatpush2.bf16.msra.mxu0 0
        %2337 = vmatprep.subr.bf16.mxu0 0
        %2338 = vmatpush2.bf16.msra.mxu0 0
        %2339 = vmatprep.mubr.bf16.mxu0 0
        %2340 = vmatmul.mubr.bf16.gmra.mxu0 %v2302
        %v2341 = vpop.f32.mrf.mxu0
        %v2342 = vadd.f32 0.0, %v2341
        %v2343 = vpop.f32.mrf.mxu0
        %v2344 = vpop.f32.mrf.mxu0
        %v2345 = vpop.f32.mrf.mxu0
        %2346 = vdwg.mxu0
        %2348 = vrot.lane.b32.xlu0 %v2342, 32
        %v2349 = vpop.permute.xlu0 %2348
        %2351 = vst.msk [vmem:[#allocation2] sm:$0xff] %vm1118, %v2349
        %2352 = vrot.lane.b32.xlu0 %v2126, 64
        %v2353 = vpop.permute.xlu0 %2352
        %2354 = vrot.lane.b32.xlu0 %v2127, 64
        %v2355 = vpop.permute.xlu0 %2354
        %v2357 = vsel %vm893, %v2353, 0
        %v2360 = vsel %vm893, %v2355, 0
        %2362 = vmatprep.subr.bf16.mxu0 0
        %2363 = vmatpush1.bf16.xpose.msra.mxu0 0
        %2364 = vmatprep.subr.bf16.mxu0 0
        %2365 = vmatpush1.bf16.xpose.msra.mxu0 0
        %2366 = vmatprep.subr.bf16.mxu0 0
        %2367 = vmatpush1.bf16.xpose.msra.mxu0 0
        %2368 = vmatprep.subr.bf16.mxu0 0
        %2369 = vmatpush1.bf16.xpose.msra.mxu0 0
        %2370 = vmatprep.subr.bf16.mxu0 0
        %2371 = vmatpush1.bf16.xpose.msra.mxu0 0
        %2372 = vmatprep.subr.bf16.mxu0 0
        %2373 = vmatpush1.bf16.xpose.msra.mxu0 0
        %2374 = vmatprep.subr.bf16.mxu0 0
        %2375 = vmatpush1.bf16.xpose.msra.mxu0 0
        %2376 = vmatprep.subr.bf16.mxu0 0
        %2377 = vmatpush1.bf16.xpose.msra.mxu0 %v2360
        %2378 = vmatprep.subr.bf16.mxu0 0
        %2379 = vmatpush2.bf16.xpose.msra.mxu0 0
        %2380 = vmatprep.subr.bf16.mxu0 0
        %2381 = vmatpush2.bf16.xpose.msra.mxu0 0
        %2382 = vmatprep.subr.bf16.mxu0 0
        %2383 = vmatpush2.bf16.xpose.msra.mxu0 0
        %2384 = vmatprep.subr.bf16.mxu0 0
        %2385 = vmatpush2.bf16.xpose.msra.mxu0 0
        %2386 = vmatprep.subr.bf16.mxu0 0
        %2387 = vmatpush2.bf16.xpose.msra.mxu0 0
        %2388 = vmatprep.subr.bf16.mxu0 0
        %2389 = vmatpush2.bf16.xpose.msra.mxu0 0
        %2390 = vmatprep.subr.bf16.mxu0 0
        %2391 = vmatpush2.bf16.xpose.msra.mxu0 0
        %2392 = vmatprep.subr.bf16.mxu0 0
        %2393 = vmatpush2.bf16.xpose.msra.mxu0 0
        %2394 = vmatprep.mubr.bf16.mxu0 0
        %2395 = vmatmul.mubr.bf16.gmra.mxu0 %v2357
        %v2396 = vpop.f32.mrf.mxu0
        %v2397 = vadd.f32 0.0, %v2396
        %v2398 = vpop.f32.mrf.mxu0
        %v2399 = vpop.f32.mrf.mxu0
        %v2400 = vpop.f32.mrf.mxu0
        %2401 = vdwg.mxu0
        %v2402 = vsel %vm940, %v2397, -inf
        %2403 = vmax.xlane.f32.xlu0 %v2402
        %v2404 = vpop.xlane.xlu0 %2403
        %v2405 = vsub.f32 %v2397, %v2404
        %v2406 = vmul.f32 %v2405, 1.442695
        %v2407 = vpow.pop %v2406
        %v2408 = vsel %vm940, %v2407, 0.0
        %2409 = vadd.xlane.f32.xlu0 %v2408
        %v2410 = vpop.xlane.xlu0 %2409
        %v2411 = vrcp.pop %v2410
        %v2412 = vmul.f32 %v2407, %v2411
        %v2413 = vpack.c.bf16 %v2412, %v2412
        %2414 = vrot.lane.b32.xlu0 %v2128, 64
        %v2415 = vpop.permute.xlu0 %2414
        %v2417 = vsel %vm940, %v2413, 0
        %v2420 = vsel %vm956, %v2415, 0
        %2422 = vmatprep.subr.bf16.mxu0 0
        %2423 = vmatpush1.bf16.msra.mxu0 0
        %2424 = vmatprep.subr.bf16.mxu0 0
        %2425 = vmatpush1.bf16.msra.mxu0 0
        %2426 = vmatprep.subr.bf16.mxu0 0
        %2427 = vmatpush1.bf16.msra.mxu0 0
        %2428 = vmatprep.subr.bf16.mxu0 0
        %2429 = vmatpush1.bf16.msra.mxu0 0
        %2430 = vmatprep.subr.bf16.mxu0 0
        %2431 = vmatpush1.bf16.msra.mxu0 0
        %2432 = vmatprep.subr.bf16.mxu0 0
        %2433 = vmatpush1.bf16.msra.mxu0 0
        %2434 = vmatprep.subr.bf16.mxu0 0
        %2435 = vmatpush1.bf16.msra.mxu0 0
        %2436 = vmatprep.subr.bf16.mxu0 0
        %2437 = vmatpush1.bf16.msra.mxu0 %v2420
        %2438 = vmatprep.subr.bf16.mxu0 0
        %2439 = vmatpush2.bf16.msra.mxu0 0
        %2440 = vmatprep.subr.bf16.mxu0 0
        %2441 = vmatpush2.bf16.msra.mxu0 0
        %2442 = vmatprep.subr.bf16.mxu0 0
        %2443 = vmatpush2.bf16.msra.mxu0 0
        %2444 = vmatprep.subr.bf16.mxu0 0
        %2445 = vmatpush2.bf16.msra.mxu0 0
        %2446 = vmatprep.subr.bf16.mxu0 0
        %2447 = vmatpush2.bf16.msra.mxu0 0
        %2448 = vmatprep.subr.bf16.mxu0 0
        %2449 = vmatpush2.bf16.msra.mxu0 0
        %2450 = vmatprep.subr.bf16.mxu0 0
        %2451 = vmatpush2.bf16.msra.mxu0 0
        %2452 = vmatprep.subr.bf16.mxu0 0
        %2453 = vmatpush2.bf16.msra.mxu0 0
        %2454 = vmatprep.mubr.bf16.mxu0 0
        %2455 = vmatmul.mubr.bf16.gmra.mxu0 %v2417
        %v2456 = vpop.f32.mrf.mxu0
        %v2457 = vadd.f32 0.0, %v2456
        %v2458 = vpop.f32.mrf.mxu0
        %v2459 = vpop.f32.mrf.mxu0
        %v2460 = vpop.f32.mrf.mxu0
        %2461 = vdwg.mxu0
        %2463 = vrot.lane.b32.xlu0 %v2457, 64
        %v2464 = vpop.permute.xlu0 %2463
        %2466 = vst.msk [vmem:[#allocation2] sm:$0xff] %vm1234, %v2464
        %2467 = vrot.lane.b32.xlu0 %v2126, 32
        %v2468 = vpop.permute.xlu0 %2467
        %2469 = vrot.lane.b32.xlu0 %v2127, 32
        %v2470 = vpop.permute.xlu0 %2469
        %v2472 = vsel %vm893, %v2468, 0
        %v2475 = vsel %vm893, %v2470, 0
        %2477 = vmatprep.subr.bf16.mxu0 0
        %2478 = vmatpush1.bf16.xpose.msra.mxu0 0
        %2479 = vmatprep.subr.bf16.mxu0 0
        %2480 = vmatpush1.bf16.xpose.msra.mxu0 0
        %2481 = vmatprep.subr.bf16.mxu0 0
        %2482 = vmatpush1.bf16.xpose.msra.mxu0 0
        %2483 = vmatprep.subr.bf16.mxu0 0
        %2484 = vmatpush1.bf16.xpose.msra.mxu0 0
        %2485 = vmatprep.subr.bf16.mxu0 0
        %2486 = vmatpush1.bf16.xpose.msra.mxu0 0
        %2487 = vmatprep.subr.bf16.mxu0 0
        %2488 = vmatpush1.bf16.xpose.msra.mxu0 0
        %2489 = vmatprep.subr.bf16.mxu0 0
        %2490 = vmatpush1.bf16.xpose.msra.mxu0 0
        %2491 = vmatprep.subr.bf16.mxu0 0
        %2492 = vmatpush1.bf16.xpose.msra.mxu0 %v2475
        %2493 = vmatprep.subr.bf16.mxu0 0
        %2494 = vmatpush2.bf16.xpose.msra.mxu0 0
        %2495 = vmatprep.subr.bf16.mxu0 0
        %2496 = vmatpush2.bf16.xpose.msra.mxu0 0
        %2497 = vmatprep.subr.bf16.mxu0 0
        %2498 = vmatpush2.bf16.xpose.msra.mxu0 0
        %2499 = vmatprep.subr.bf16.mxu0 0
        %2500 = vmatpush2.bf16.xpose.msra.mxu0 0
        %2501 = vmatprep.subr.bf16.mxu0 0
        %2502 = vmatpush2.bf16.xpose.msra.mxu0 0
        %2503 = vmatprep.subr.bf16.mxu0 0
        %2504 = vmatpush2.bf16.xpose.msra.mxu0 0
        %2505 = vmatprep.subr.bf16.mxu0 0
        %2506 = vmatpush2.bf16.xpose.msra.mxu0 0
        %2507 = vmatprep.subr.bf16.mxu0 0
        %2508 = vmatpush2.bf16.xpose.msra.mxu0 0
        %2509 = vmatprep.mubr.bf16.mxu0 0
        %2510 = vmatmul.mubr.bf16.gmra.mxu0 %v2472
        %v2511 = vpop.f32.mrf.mxu0
        %v2512 = vadd.f32 0.0, %v2511
        %v2513 = vpop.f32.mrf.mxu0
        %v2514 = vpop.f32.mrf.mxu0
        %v2515 = vpop.f32.mrf.mxu0
        %2516 = vdwg.mxu0
        %v2517 = vsel %vm940, %v2512, -inf
        %2518 = vmax.xlane.f32.xlu0 %v2517
        %v2519 = vpop.xlane.xlu0 %2518
        %v2520 = vsub.f32 %v2512, %v2519
        %v2521 = vmul.f32 %v2520, 1.442695
        %v2522 = vpow.pop %v2521
        %v2523 = vsel %vm940, %v2522, 0.0
        %2524 = vadd.xlane.f32.xlu0 %v2523
        %v2525 = vpop.xlane.xlu0 %2524
        %v2526 = vrcp.pop %v2525
        %v2527 = vmul.f32 %v2522, %v2526
        %v2528 = vpack.c.bf16 %v2527, %v2527
        %2529 = vrot.lane.b32.xlu0 %v2128, 32
        %v2530 = vpop.permute.xlu0 %2529
        %v2532 = vsel %vm940, %v2528, 0
        %v2535 = vsel %vm956, %v2530, 0
        %2537 = vmatprep.subr.bf16.mxu0 0
        %2538 = vmatpush1.bf16.msra.mxu0 0
        %2539 = vmatprep.subr.bf16.mxu0 0
        %2540 = vmatpush1.bf16.msra.mxu0 0
        %2541 = vmatprep.subr.bf16.mxu0 0
        %2542 = vmatpush1.bf16.msra.mxu0 0
        %2543 = vmatprep.subr.bf16.mxu0 0
        %2544 = vmatpush1.bf16.msra.mxu0 0
        %2545 = vmatprep.subr.bf16.mxu0 0
        %2546 = vmatpush1.bf16.msra.mxu0 0
        %2547 = vmatprep.subr.bf16.mxu0 0
        %2548 = vmatpush1.bf16.msra.mxu0 0
        %2549 = vmatprep.subr.bf16.mxu0 0
        %2550 = vmatpush1.bf16.msra.mxu0 0
        %2551 = vmatprep.subr.bf16.mxu0 0
        %2552 = vmatpush1.bf16.msra.mxu0 %v2535
        %2553 = vmatprep.subr.bf16.mxu0 0
        %2554 = vmatpush2.bf16.msra.mxu0 0
        %2555 = vmatprep.subr.bf16.mxu0 0
        %2556 = vmatpush2.bf16.msra.mxu0 0
        %2557 = vmatprep.subr.bf16.mxu0 0
        %2558 = vmatpush2.bf16.msra.mxu0 0
        %2559 = vmatprep.subr.bf16.mxu0 0
        %2560 = vmatpush2.bf16.msra.mxu0 0
        %2561 = vmatprep.subr.bf16.mxu0 0
        %2562 = vmatpush2.bf16.msra.mxu0 0
        %2563 = vmatprep.subr.bf16.mxu0 0
        %2564 = vmatpush2.bf16.msra.mxu0 0
        %2565 = vmatprep.subr.bf16.mxu0 0
        %2566 = vmatpush2.bf16.msra.mxu0 0
        %2567 = vmatprep.subr.bf16.mxu0 0
        %2568 = vmatpush2.bf16.msra.mxu0 0
        %2569 = vmatprep.mubr.bf16.mxu0 0
        %2570 = vmatmul.mubr.bf16.gmra.mxu0 %v2532
        %v2571 = vpop.f32.mrf.mxu0
        %v2572 = vadd.f32 0.0, %v2571
        %v2573 = vpop.f32.mrf.mxu0
        %v2574 = vpop.f32.mrf.mxu0
        %v2575 = vpop.f32.mrf.mxu0
        %2576 = vdwg.mxu0
        %2578 = vrot.lane.b32.xlu0 %v2572, 96
        %v2579 = vpop.permute.xlu0 %2578
        %2581 = vst.msk [vmem:[#allocation2] sm:$0xff] %vm1350, %v2579
        %v2582 = vld [vmem:[#allocation2] sm:$0xff]
        %v2583 = vpack.c.bf16 %v2582, %v2582
        %s2584 = scalar_lea.vmem [#allocation12], 64
        %v2585 = vld [vmem:[%s2584] sm:$0xf]
        %v2586 = vld [vmem:[%s2584 + $0x4] sm:$0xf]
        %v2587 = vld [vmem:[%s2584 + $0x8] sm:$0xf]
        %v2588 = vld [vmem:[%s2584 + $0xc] sm:$0xf]
        %v2589 = vld [vmem:[%s2584 + $0x10] sm:$0xf]
        %v2590 = vld [vmem:[%s2584 + $0x14] sm:$0xf]
        %v2591 = vld [vmem:[%s2584 + $0x18] sm:$0xf]
        %v2592 = vld [vmem:[%s2584 + $0x1c] sm:$0xf]
        %v2593 = vld [vmem:[%s2584 + $0x20] sm:$0xf]
        %v2594 = vld [vmem:[%s2584 + $0x24] sm:$0xf]
        %v2595 = vld [vmem:[%s2584 + $0x28] sm:$0xf]
        %v2596 = vld [vmem:[%s2584 + $0x2c] sm:$0xf]
        %v2597 = vld [vmem:[%s2584 + $0x30] sm:$0xf]
        %v2598 = vld [vmem:[%s2584 + $0x34] sm:$0xf]
        %v2599 = vld [vmem:[%s2584 + $0x38] sm:$0xf]
        %v2600 = vld [vmem:[%s2584 + $0x3c] sm:$0xf]
        %s2601 = scalar_lea.vmem %s6, 1
        %v2602 = vld [vmem:[%s2601] sm:$0x1]
        %v2604 = vlaneseq
        %v2605 = vshrl.u32 %v2604, 7
        %v2606 = vsub.s32 0, %v2605
        %v2607 = vrot.slane %v2602, %v2606
        %v2625 = vunpack.c.l.b16 %v2585
        %v2626 = vunpack.c.l.b16 %v2586
        %v2627 = vunpack.c.l.b16 %v2587
        %v2628 = vunpack.c.l.b16 %v2588
        %v2629 = vunpack.c.l.b16 %v2589
        %v2630 = vunpack.c.l.b16 %v2590
        %v2631 = vunpack.c.l.b16 %v2591
        %v2632 = vunpack.c.l.b16 %v2592
        %v2633 = vunpack.c.l.b16 %v2593
        %v2634 = vunpack.c.l.b16 %v2594
        %v2635 = vunpack.c.l.b16 %v2595
        %v2636 = vunpack.c.l.b16 %v2596
        %v2637 = vunpack.c.l.b16 %v2597
        %v2638 = vunpack.c.l.b16 %v2598
        %v2639 = vunpack.c.l.b16 %v2599
        %v2640 = vunpack.c.l.b16 %v2600
        %v2641 = vpack.c.b16 %v2626, %v2625
        %v2642 = vpack.c.b16 %v2628, %v2627
        %v2643 = vpack.c.b16 %v2630, %v2629
        %v2644 = vpack.c.b16 %v2632, %v2631
        %v2645 = vpack.c.b16 %v2634, %v2633
        %v2646 = vpack.c.b16 %v2636, %v2635
        %v2647 = vpack.c.b16 %v2638, %v2637
        %v2648 = vpack.c.b16 %v2640, %v2639
        %2657 = vmatprep.subr.bf16.mxu0 0
        %2658 = vmatpush1.bf16.msra.mxu0 %v2648
        %2659 = vmatprep.subr.bf16.mxu0 0
        %2660 = vmatpush1.bf16.msra.mxu0 %v2647
        %2661 = vmatprep.subr.bf16.mxu0 0
        %2662 = vmatpush1.bf16.msra.mxu0 %v2646
        %2663 = vmatprep.subr.bf16.mxu0 0
        %2664 = vmatpush1.bf16.msra.mxu0 %v2645
        %2665 = vmatprep.subr.bf16.mxu0 0
        %2666 = vmatpush1.bf16.msra.mxu0 %v2644
        %2667 = vmatprep.subr.bf16.mxu0 0
        %2668 = vmatpush1.bf16.msra.mxu0 %v2643
        %2669 = vmatprep.subr.bf16.mxu0 0
        %2670 = vmatpush1.bf16.msra.mxu0 %v2642
        %2671 = vmatprep.subr.bf16.mxu0 0
        %2672 = vmatpush1.bf16.msra.mxu0 %v2641
        %2673 = vmatprep.subr.bf16.mxu0 0
        %2674 = vmatpush2.bf16.msra.mxu0 0
        %2675 = vmatprep.subr.bf16.mxu0 0
        %2676 = vmatpush2.bf16.msra.mxu0 0
        %2677 = vmatprep.subr.bf16.mxu0 0
        %2678 = vmatpush2.bf16.msra.mxu0 0
        %2679 = vmatprep.subr.bf16.mxu0 0
        %2680 = vmatpush2.bf16.msra.mxu0 0
        %2681 = vmatprep.subr.bf16.mxu0 0
        %2682 = vmatpush2.bf16.msra.mxu0 0
        %2683 = vmatprep.subr.bf16.mxu0 0
        %2684 = vmatpush2.bf16.msra.mxu0 0
        %2685 = vmatprep.subr.bf16.mxu0 0
        %2686 = vmatpush2.bf16.msra.mxu0 0
        %2687 = vmatprep.subr.bf16.mxu0 0
        %2688 = vmatpush2.bf16.msra.mxu0 0
        %2689 = vmatprep.mubr.bf16.mxu0 0
        %2690 = vmatmul.mubr.bf16.gmra.mxu0 %v2583
        %v2691 = vpop.f32.mrf.mxu0
        %v2692 = vadd.f32 %v2607, %v2691
        %v2693 = vpop.f32.mrf.mxu0
        %v2694 = vpop.f32.mrf.mxu0
        %v2695 = vpop.f32.mrf.mxu0
        %2696 = vdwg.mxu0
        %v2697 = vadd.f32 %v1835, %v2692
        %s2698 = scalar_lea.vmem [#allocation14], 1
        %v2699 = vld [vmem:[%s2698] sm:$0x1]
        %s2700 = scalar_lea.vmem [#allocation15], 1
        %v2701 = vld [vmem:[%s2700] sm:$0x1]
        %2702 = vadd.xlane.f32.xlu0 %v2697
        %v2703 = vpop.xlane.xlu0 %2702
        %v2704 = vmul.f32 %v2703, %v607
        %v2705 = vsub.f32 %v2697, %v2704
        %v2706 = vmul.f32 %v2705, %v2705
        %2707 = vadd.xlane.f32.xlu0 %v2706
        %v2708 = vpop.xlane.xlu0 %2707
        %v2709 = vmul.f32 %v2708, %v607
        %v2710 = vadd.f32 %v2709, 1e-06
        %v2711 = vrsqrt.pop %v2710
        %v2712 = vmul.f32 %v2705, %v2711
        %v2714 = vlaneseq
        %v2715 = vshrl.u32 %v2714, 7
        %v2716 = vsub.s32 0, %v2715
        %v2717 = vrot.slane %v2699, %v2716
        %v2719 = vmul.f32 %v2712, %v2717
        %v2721 = vlaneseq
        %v2722 = vshrl.u32 %v2721, 7
        %v2723 = vsub.s32 0, %v2722
        %v2724 = vrot.slane %v2701, %v2723
        %v2726 = vadd.f32 %v2719, %v2724
        %v2727 = vpack.c.bf16 %v2726, %v2726
        %s2728 = scalar_lea.vmem [#allocation17], 128
        %v2729 = vld [vmem:[%s2728] sm:$0xff]
        %v2730 = vld [vmem:[%s2728 + $0x8] sm:$0xff]
        %v2731 = vld [vmem:[%s2728 + $0x10] sm:$0xff]
        %v2732 = vld [vmem:[%s2728 + $0x18] sm:$0xff]
        %v2733 = vld [vmem:[%s2728 + $0x20] sm:$0xff]
        %v2734 = vld [vmem:[%s2728 + $0x28] sm:$0xff]
        %v2735 = vld [vmem:[%s2728 + $0x30] sm:$0xff]
        %v2736 = vld [vmem:[%s2728 + $0x38] sm:$0xff]
        %v2737 = vld [vmem:[%s2728 + $0x40] sm:$0xff]
        %v2738 = vld [vmem:[%s2728 + $0x48] sm:$0xff]
        %v2739 = vld [vmem:[%s2728 + $0x50] sm:$0xff]
        %v2740 = vld [vmem:[%s2728 + $0x58] sm:$0xff]
        %v2741 = vld [vmem:[%s2728 + $0x60] sm:$0xff]
        %v2742 = vld [vmem:[%s2728 + $0x68] sm:$0xff]
        %v2743 = vld [vmem:[%s2728 + $0x70] sm:$0xff]
        %v2744 = vld [vmem:[%s2728 + $0x78] sm:$0xff]
        %s2745 = scalar_lea.vmem %s10, 2
        %v2746 = vld [vmem:[%s2745] sm:$0x3]
        %v2748 = vlaneseq
        %v2749 = vshrl.u32 %v2748, 7
        %v2750 = vsub.s32 0, %v2749
        %v2751 = vrot.slane %v2746, %v2750
        %v2752 = vlaneseq
        %v2753 = vshrl.u32 %v2752, 7
        %v2754 = vsub.s32 1, %v2753
        %v2755 = vrot.slane %v2746, %v2754
        %v2774 = vunpack.c.l.b16 %v2729
        %v2775 = vunpack.c.h.b16 %v2729
        %v2776 = vunpack.c.l.b16 %v2730
        %v2777 = vunpack.c.h.b16 %v2730
        %v2778 = vunpack.c.l.b16 %v2731
        %v2779 = vunpack.c.h.b16 %v2731
        %v2780 = vunpack.c.l.b16 %v2732
        %v2781 = vunpack.c.h.b16 %v2732
        %v2782 = vunpack.c.l.b16 %v2733
        %v2783 = vunpack.c.h.b16 %v2733
        %v2784 = vunpack.c.l.b16 %v2734
        %v2785 = vunpack.c.h.b16 %v2734
        %v2786 = vunpack.c.l.b16 %v2735
        %v2787 = vunpack.c.h.b16 %v2735
        %v2788 = vunpack.c.l.b16 %v2736
        %v2789 = vunpack.c.h.b16 %v2736
        %v2790 = vunpack.c.l.b16 %v2737
        %v2791 = vunpack.c.h.b16 %v2737
        %v2792 = vunpack.c.l.b16 %v2738
        %v2793 = vunpack.c.h.b16 %v2738
        %v2794 = vunpack.c.l.b16 %v2739
        %v2795 = vunpack.c.h.b16 %v2739
        %v2796 = vunpack.c.l.b16 %v2740
        %v2797 = vunpack.c.h.b16 %v2740
        %v2798 = vunpack.c.l.b16 %v2741
        %v2799 = vunpack.c.h.b16 %v2741
        %v2800 = vunpack.c.l.b16 %v2742
        %v2801 = vunpack.c.h.b16 %v2742
        %v2802 = vunpack.c.l.b16 %v2743
        %v2803 = vunpack.c.h.b16 %v2743
        %v2804 = vunpack.c.l.b16 %v2744
        %v2805 = vunpack.c.h.b16 %v2744
        %v2806 = vpack.c.b16 %v2776, %v2774
        %v2807 = vpack.c.b16 %v2777, %v2775
        %v2808 = vpack.c.b16 %v2780, %v2778
        %v2809 = vpack.c.b16 %v2781, %v2779
        %v2810 = vpack.c.b16 %v2784, %v2782
        %v2811 = vpack.c.b16 %v2785, %v2783
        %v2812 = vpack.c.b16 %v2788, %v2786
        %v2813 = vpack.c.b16 %v2789, %v2787
        %v2814 = vpack.c.b16 %v2792, %v2790
        %v2815 = vpack.c.b16 %v2793, %v2791
        %v2816 = vpack.c.b16 %v2796, %v2794
        %v2817 = vpack.c.b16 %v2797, %v2795
        %v2818 = vpack.c.b16 %v2800, %v2798
        %v2819 = vpack.c.b16 %v2801, %v2799
        %v2820 = vpack.c.b16 %v2804, %v2802
        %v2821 = vpack.c.b16 %v2805, %v2803
        %2838 = vmatprep.subr.bf16.mxu0 %v2821
        %2839 = vmatpush1.bf16.msra.mxu0 %v2820
        %2840 = vmatprep.subr.bf16.mxu0 %v2819
        %2841 = vmatpush1.bf16.msra.mxu0 %v2818
        %2842 = vmatprep.subr.bf16.mxu0 %v2817
        %2843 = vmatpush1.bf16.msra.mxu0 %v2816
        %2844 = vmatprep.subr.bf16.mxu0 %v2815
        %2845 = vmatpush1.bf16.msra.mxu0 %v2814
        %2846 = vmatprep.subr.bf16.mxu0 %v2813
        %2847 = vmatpush1.bf16.msra.mxu0 %v2812
        %2848 = vmatprep.subr.bf16.mxu0 %v2811
        %2849 = vmatpush1.bf16.msra.mxu0 %v2810
        %2850 = vmatprep.subr.bf16.mxu0 %v2809
        %2851 = vmatpush1.bf16.msra.mxu0 %v2808
        %2852 = vmatprep.subr.bf16.mxu0 %v2807
        %2853 = vmatpush1.bf16.msra.mxu0 %v2806
        %2854 = vmatprep.subr.bf16.mxu0 0
        %2855 = vmatpush2.bf16.msra.mxu0 0
        %2856 = vmatprep.subr.bf16.mxu0 0
        %2857 = vmatpush2.bf16.msra.mxu0 0
        %2858 = vmatprep.subr.bf16.mxu0 0
        %2859 = vmatpush2.bf16.msra.mxu0 0
        %2860 = vmatprep.subr.bf16.mxu0 0
        %2861 = vmatpush2.bf16.msra.mxu0 0
        %2862 = vmatprep.subr.bf16.mxu0 0
        %2863 = vmatpush2.bf16.msra.mxu0 0
        %2864 = vmatprep.subr.bf16.mxu0 0
        %2865 = vmatpush2.bf16.msra.mxu0 0
        %2866 = vmatprep.subr.bf16.mxu0 0
        %2867 = vmatpush2.bf16.msra.mxu0 0
        %2868 = vmatprep.subr.bf16.mxu0 0
        %2869 = vmatpush2.bf16.msra.mxu0 0
        %2870 = vmatprep.mubr.bf16.mxu0 0
        %2871 = vmatmul.mubr.bf16.gmra.mxu0 %v2727
        %v2872 = vpop.f32.mrf.mxu0
        %v2873 = vadd.f32 %v2751, %v2872
        %v2874 = vpop.f32.mrf.mxu0
        %v2875 = vadd.f32 %v2755, %v2874
        %v2876 = vpop.f32.mrf.mxu0
        %v2877 = vpop.f32.mrf.mxu0
        %2878 = vdwg.mxu0
        %v2879 = vmul.f32 %v2873, 0.5
        %v2880 = vmul.f32 %v2875, 0.5
        %v2881 = vmul.f32 %v2873, 0.70710677
        %v2882 = vmul.f32 %v2875, 0.70710677
        %v2883 = verf.f32.pop %v2881
        %v2884 = verf.f32.pop %v2882
        %v2885 = vadd.f32 %v2883, 1.0
        %v2886 = vadd.f32 %v2884, 1.0
        %v2887 = vmul.f32 %v2879, %v2885
        %v2888 = vmul.f32 %v2880, %v2886
        %v2889 = vpack.c.bf16 %v2887, %v2887
        %v2890 = vpack.c.bf16 %v2888, %v2888
        %s2891 = scalar_lea.vmem [#allocation18], 128
        %v2892 = vld [vmem:[%s2891] sm:$0xf]
        %v2893 = vld [vmem:[%s2891 + $0x4] sm:$0xf]
        %v2894 = vld [vmem:[%s2891 + $0x8] sm:$0xf]
        %v2895 = vld [vmem:[%s2891 + $0xc] sm:$0xf]
        %v2896 = vld [vmem:[%s2891 + $0x10] sm:$0xf]
        %v2897 = vld [vmem:[%s2891 + $0x14] sm:$0xf]
        %v2898 = vld [vmem:[%s2891 + $0x18] sm:$0xf]
        %v2899 = vld [vmem:[%s2891 + $0x1c] sm:$0xf]
        %v2900 = vld [vmem:[%s2891 + $0x20] sm:$0xf]
        %v2901 = vld [vmem:[%s2891 + $0x24] sm:$0xf]
        %v2902 = vld [vmem:[%s2891 + $0x28] sm:$0xf]
        %v2903 = vld [vmem:[%s2891 + $0x2c] sm:$0xf]
        %v2904 = vld [vmem:[%s2891 + $0x30] sm:$0xf]
        %v2905 = vld [vmem:[%s2891 + $0x34] sm:$0xf]
        %v2906 = vld [vmem:[%s2891 + $0x38] sm:$0xf]
        %v2907 = vld [vmem:[%s2891 + $0x3c] sm:$0xf]
        %v2908 = vld [vmem:[%s2891 + $0x40] sm:$0xf]
        %v2909 = vld [vmem:[%s2891 + $0x44] sm:$0xf]
        %v2910 = vld [vmem:[%s2891 + $0x48] sm:$0xf]
        %v2911 = vld [vmem:[%s2891 + $0x4c] sm:$0xf]
        %v2912 = vld [vmem:[%s2891 + $0x50] sm:$0xf]
        %v2913 = vld [vmem:[%s2891 + $0x54] sm:$0xf]
        %v2914 = vld [vmem:[%s2891 + $0x58] sm:$0xf]
        %v2915 = vld [vmem:[%s2891 + $0x5c] sm:$0xf]
        %v2916 = vld [vmem:[%s2891 + $0x60] sm:$0xf]
        %v2917 = vld [vmem:[%s2891 + $0x64] sm:$0xf]
        %v2918 = vld [vmem:[%s2891 + $0x68] sm:$0xf]
        %v2919 = vld [vmem:[%s2891 + $0x6c] sm:$0xf]
        %v2920 = vld [vmem:[%s2891 + $0x70] sm:$0xf]
        %v2921 = vld [vmem:[%s2891 + $0x74] sm:$0xf]
        %v2922 = vld [vmem:[%s2891 + $0x78] sm:$0xf]
        %v2923 = vld [vmem:[%s2891 + $0x7c] sm:$0xf]
        %s2924 = scalar_lea.vmem [#allocation20], 1
        %v2925 = vld [vmem:[%s2924] sm:$0x1]
        %v2927 = vlaneseq
        %v2928 = vshrl.u32 %v2927, 7
        %v2929 = vsub.s32 0, %v2928
        %v2930 = vrot.slane %v2925, %v2929
        %v2964 = vunpack.c.l.b16 %v2892
        %v2965 = vunpack.c.l.b16 %v2893
        %v2966 = vunpack.c.l.b16 %v2894
        %v2967 = vunpack.c.l.b16 %v2895
        %v2968 = vunpack.c.l.b16 %v2896
        %v2969 = vunpack.c.l.b16 %v2897
        %v2970 = vunpack.c.l.b16 %v2898
        %v2971 = vunpack.c.l.b16 %v2899
        %v2972 = vunpack.c.l.b16 %v2900
        %v2973 = vunpack.c.l.b16 %v2901
        %v2974 = vunpack.c.l.b16 %v2902
        %v2975 = vunpack.c.l.b16 %v2903
        %v2976 = vunpack.c.l.b16 %v2904
        %v2977 = vunpack.c.l.b16 %v2905
        %v2978 = vunpack.c.l.b16 %v2906
        %v2979 = vunpack.c.l.b16 %v2907
        %v2980 = vunpack.c.l.b16 %v2908
        %v2981 = vunpack.c.l.b16 %v2909
        %v2982 = vunpack.c.l.b16 %v2910
        %v2983 = vunpack.c.l.b16 %v2911
        %v2984 = vunpack.c.l.b16 %v2912
        %v2985 = vunpack.c.l.b16 %v2913
        %v2986 = vunpack.c.l.b16 %v2914
        %v2987 = vunpack.c.l.b16 %v2915
        %v2988 = vunpack.c.l.b16 %v2916
        %v2989 = vunpack.c.l.b16 %v2917
        %v2990 = vunpack.c.l.b16 %v2918
        %v2991 = vunpack.c.l.b16 %v2919
        %v2992 = vunpack.c.l.b16 %v2920
        %v2993 = vunpack.c.l.b16 %v2921
        %v2994 = vunpack.c.l.b16 %v2922
        %v2995 = vunpack.c.l.b16 %v2923
        %v2996 = vpack.c.b16 %v2965, %v2964
        %v2997 = vpack.c.b16 %v2967, %v2966
        %v2998 = vpack.c.b16 %v2969, %v2968
        %v2999 = vpack.c.b16 %v2971, %v2970
        %v3000 = vpack.c.b16 %v2973, %v2972
        %v3001 = vpack.c.b16 %v2975, %v2974
        %v3002 = vpack.c.b16 %v2977, %v2976
        %v3003 = vpack.c.b16 %v2979, %v2978
        %v3004 = vpack.c.b16 %v2981, %v2980
        %v3005 = vpack.c.b16 %v2983, %v2982
        %v3006 = vpack.c.b16 %v2985, %v2984
        %v3007 = vpack.c.b16 %v2987, %v2986
        %v3008 = vpack.c.b16 %v2989, %v2988
        %v3009 = vpack.c.b16 %v2991, %v2990
        %v3010 = vpack.c.b16 %v2993, %v2992
        %v3011 = vpack.c.b16 %v2995, %v2994
        %3028 = vmatprep.subr.bf16.mxu0 0
        %3029 = vmatpush1.bf16.msra.mxu0 %v3003
        %3030 = vmatprep.subr.bf16.mxu0 0
        %3031 = vmatpush1.bf16.msra.mxu0 %v3002
        %3032 = vmatprep.subr.bf16.mxu0 0
        %3033 = vmatpush1.bf16.msra.mxu0 %v3001
        %3034 = vmatprep.subr.bf16.mxu0 0
        %3035 = vmatpush1.bf16.msra.mxu0 %v3000
        %3036 = vmatprep.subr.bf16.mxu0 0
        %3037 = vmatpush1.bf16.msra.mxu0 %v2999
        %3038 = vmatprep.subr.bf16.mxu0 0
        %3039 = vmatpush1.bf16.msra.mxu0 %v2998
        %3040 = vmatprep.subr.bf16.mxu0 0
        %3041 = vmatpush1.bf16.msra.mxu0 %v2997
        %3042 = vmatprep.subr.bf16.mxu0 0
        %3043 = vmatpush1.bf16.msra.mxu0 %v2996
        %3044 = vmatprep.subr.bf16.mxu0 0
        %3045 = vmatpush2.bf16.msra.mxu0 %v3011
        %3046 = vmatprep.subr.bf16.mxu0 0
        %3047 = vmatpush2.bf16.msra.mxu0 %v3010
        %3048 = vmatprep.subr.bf16.mxu0 0
        %3049 = vmatpush2.bf16.msra.mxu0 %v3009
        %3050 = vmatprep.subr.bf16.mxu0 0
        %3051 = vmatpush2.bf16.msra.mxu0 %v3008
        %3052 = vmatprep.subr.bf16.mxu0 0
        %3053 = vmatpush2.bf16.msra.mxu0 %v3007
        %3054 = vmatprep.subr.bf16.mxu0 0
        %3055 = vmatpush2.bf16.msra.mxu0 %v3006
        %3056 = vmatprep.subr.bf16.mxu0 0
        %3057 = vmatpush2.bf16.msra.mxu0 %v3005
        %3058 = vmatprep.subr.bf16.mxu0 0
        %3059 = vmatpush2.bf16.msra.mxu0 %v3004
        %3060 = vmatprep.mubr.bf16.mxu0 %v2890
        %3061 = vmatmul.mubr.bf16.gmra.mxu0 %v2889
        %v3062 = vpop.f32.mrf.mxu0
        %v3063 = vadd.f32 %v2930, %v3062
        %v3064 = vpop.f32.mrf.mxu0
        %v3065 = vpop.f32.mrf.mxu0
        %v3066 = vpop.f32.mrf.mxu0
        %3067 = vdwg.mxu0
        %v3068 = vmul.f32 %v3063, 0.5
        %v3069 = vmul.f32 %v3063, 0.70710677
        %v3070 = verf.f32.pop %v3069
        %v3071 = vadd.f32 %v3070, 1.0
        %v3072 = vmul.f32 %v3068, %v3071
        %v3073 = vadd.f32 %v2697, %v3072
        %s3074 = scalar_lea.vmem [#allocation6], 2
        %v3075 = vld [vmem:[%s3074] sm:$0x1]
        %s3076 = scalar_lea.vmem [#allocation8], 2
        %v3077 = vld [vmem:[%s3076] sm:$0x1]
        %3078 = vadd.xlane.f32.xlu0 %v3073
        %v3079 = vpop.xlane.xlu0 %3078
        %v3080 = vmul.f32 %v3079, %v607
        %v3081 = vsub.f32 %v3073, %v3080
        %v3082 = vmul.f32 %v3081, %v3081
        %3083 = vadd.xlane.f32.xlu0 %v3082
        %v3084 = vpop.xlane.xlu0 %3083
        %v3085 = vmul.f32 %v3084, %v607
        %v3086 = vadd.f32 %v3085, 1e-06
        %v3087 = vrsqrt.pop %v3086
        %v3088 = vmul.f32 %v3081, %v3087
        %v3090 = vlaneseq
        %v3091 = vshrl.u32 %v3090, 7
        %v3092 = vsub.s32 0, %v3091
        %v3093 = vrot.slane %v3075, %v3092
        %v3095 = vmul.f32 %v3088, %v3093
        %v3097 = vlaneseq
        %v3098 = vshrl.u32 %v3097, 7
        %v3099 = vsub.s32 0, %v3098
        %v3100 = vrot.slane %v3077, %v3099
        %v3102 = vadd.f32 %v3095, %v3100
        %v3103 = vpack.c.bf16 %v3102, %v3102
        %s3104 = scalar_lea.vmem [#allocation9], 384
        %v3105 = vld [vmem:[%s3104] sm:$0xff]
        %v3106 = vld [vmem:[%s3104 + $0x8] sm:$0xf]
        %v3107 = vld [vmem:[%s3104 + $0xc] sm:$0xff]
        %v3108 = vld [vmem:[%s3104 + $0x14] sm:$0xf]
        %v3109 = vld [vmem:[%s3104 + $0x18] sm:$0xff]
        %v3110 = vld [vmem:[%s3104 + $0x20] sm:$0xf]
        %v3111 = vld [vmem:[%s3104 + $0x24] sm:$0xff]
        %v3112 = vld [vmem:[%s3104 + $0x2c] sm:$0xf]
        %v3113 = vld [vmem:[%s3104 + $0x30] sm:$0xff]
        %v3114 = vld [vmem:[%s3104 + $0x38] sm:$0xf]
        %v3115 = vld [vmem:[%s3104 + $0x3c] sm:$0xff]
        %v3116 = vld [vmem:[%s3104 + $0x44] sm:$0xf]
        %v3117 = vld [vmem:[%s3104 + $0x48] sm:$0xff]
        %v3118 = vld [vmem:[%s3104 + $0x50] sm:$0xf]
        %v3119 = vld [vmem:[%s3104 + $0x54] sm:$0xff]
        %v3120 = vld [vmem:[%s3104 + $0x5c] sm:$0xf]
        %v3121 = vld [vmem:[%s3104 + $0x60] sm:$0xff]
        %v3122 = vld [vmem:[%s3104 + $0x68] sm:$0xf]
        %v3123 = vld [vmem:[%s3104 + $0x6c] sm:$0xff]
        %v3124 = vld [vmem:[%s3104 + $0x74] sm:$0xf]
        %v3125 = vld [vmem:[%s3104 + $0x78] sm:$0xff]
        %v3126 = vld [vmem:[%s3104 + $0x80] sm:$0xf]
        %v3127 = vld [vmem:[%s3104 + $0x84] sm:$0xff]
        %v3128 = vld [vmem:[%s3104 + $0x8c] sm:$0xf]
        %v3129 = vld [vmem:[%s3104 + $0x90] sm:$0xff]
        %v3130 = vld [vmem:[%s3104 + $0x98] sm:$0xf]
        %v3131 = vld [vmem:[%s3104 + $0x9c] sm:$0xff]
        %v3132 = vld [vmem:[%s3104 + $0xa4] sm:$0xf]
        %v3133 = vld [vmem:[%s3104 + $0xa8] sm:$0xff]
        %v3134 = vld [vmem:[%s3104 + $0xb0] sm:$0xf]
        %v3135 = vld [vmem:[%s3104 + $0xb4] sm:$0xff]
        %v3136 = vld [vmem:[%s3104 + $0xbc] sm:$0xf]
        %s3137 = scalar_lea.vmem [#allocation11], 6
        %v3138 = vld [vmem:[%s3137] sm:$0x7]
        %v3140 = vlaneseq
        %v3141 = vshrl.u32 %v3140, 7
        %v3142 = vsub.s32 0, %v3141
        %v3143 = vrot.slane %v3138, %v3142
        %v3144 = vlaneseq
        %v3145 = vshrl.u32 %v3144, 7
        %v3146 = vsub.s32 1, %v3145
        %v3147 = vrot.slane %v3138, %v3146
        %v3148 = vlaneseq
        %v3149 = vshrl.u32 %v3148, 7
        %v3150 = vsub.s32 2, %v3149
        %v3151 = vrot.slane %v3138, %v3150
        %v3187 = vunpack.c.l.b16 %v3105
        %v3188 = vunpack.c.h.b16 %v3105
        %v3189 = vunpack.c.l.b16 %v3106
        %v3190 = vunpack.c.l.b16 %v3107
        %v3191 = vunpack.c.h.b16 %v3107
        %v3192 = vunpack.c.l.b16 %v3108
        %v3193 = vunpack.c.l.b16 %v3109
        %v3194 = vunpack.c.h.b16 %v3109
        %v3195 = vunpack.c.l.b16 %v3110
        %v3196 = vunpack.c.l.b16 %v3111
        %v3197 = vunpack.c.h.b16 %v3111
        %v3198 = vunpack.c.l.b16 %v3112
        %v3199 = vunpack.c.l.b16 %v3113
        %v3200 = vunpack.c.h.b16 %v3113
        %v3201 = vunpack.c.l.b16 %v3114
        %v3202 = vunpack.c.l.b16 %v3115
        %v3203 = vunpack.c.h.b16 %v3115
        %v3204 = vunpack.c.l.b16 %v3116
        %v3205 = vunpack.c.l.b16 %v3117
        %v3206 = vunpack.c.h.b16 %v3117
        %v3207 = vunpack.c.l.b16 %v3118
        %v3208 = vunpack.c.l.b16 %v3119
        %v3209 = vunpack.c.h.b16 %v3119
        %v3210 = vunpack.c.l.b16 %v3120
        %v3211 = vunpack.c.l.b16 %v3121
        %v3212 = vunpack.c.h.b16 %v3121
        %v3213 = vunpack.c.l.b16 %v3122
        %v3214 = vunpack.c.l.b16 %v3123
        %v3215 = vunpack.c.h.b16 %v3123
        %v3216 = vunpack.c.l.b16 %v3124
        %v3217 = vunpack.c.l.b16 %v3125
        %v3218 = vunpack.c.h.b16 %v3125
        %v3219 = vunpack.c.l.b16 %v3126
        %v3220 = vunpack.c.l.b16 %v3127
        %v3221 = vunpack.c.h.b16 %v3127
        %v3222 = vunpack.c.l.b16 %v3128
        %v3223 = vunpack.c.l.b16 %v3129
        %v3224 = vunpack.c.h.b16 %v3129
        %v3225 = vunpack.c.l.b16 %v3130
        %v3226 = vunpack.c.l.b16 %v3131
        %v3227 = vunpack.c.h.b16 %v3131
        %v3228 = vunpack.c.l.b16 %v3132
        %v3229 = vunpack.c.l.b16 %v3133
        %v3230 = vunpack.c.h.b16 %v3133
        %v3231 = vunpack.c.l.b16 %v3134
        %v3232 = vunpack.c.l.b16 %v3135
        %v3233 = vunpack.c.h.b16 %v3135
        %v3234 = vunpack.c.l.b16 %v3136
        %v3235 = vpack.c.b16 %v3190, %v3187
        %v3236 = vpack.c.b16 %v3191, %v3188
        %v3237 = vpack.c.b16 %v3192, %v3189
        %v3238 = vpack.c.b16 %v3196, %v3193
        %v3239 = vpack.c.b16 %v3197, %v3194
        %v3240 = vpack.c.b16 %v3198, %v3195
        %v3241 = vpack.c.b16 %v3202, %v3199
        %v3242 = vpack.c.b16 %v3203, %v3200
        %v3243 = vpack.c.b16 %v3204, %v3201
        %v3244 = vpack.c.b16 %v3208, %v3205
        %v3245 = vpack.c.b16 %v3209, %v3206
        %v3246 = vpack.c.b16 %v3210, %v3207
        %v3247 = vpack.c.b16 %v3214, %v3211
        %v3248 = vpack.c.b16 %v3215, %v3212
        %v3249 = vpack.c.b16 %v3216, %v3213
        %v3250 = vpack.c.b16 %v3220, %v3217
        %v3251 = vpack.c.b16 %v3221, %v3218
        %v3252 = vpack.c.b16 %v3222, %v3219
        %v3253 = vpack.c.b16 %v3226, %v3223
        %v3254 = vpack.c.b16 %v3227, %v3224
        %v3255 = vpack.c.b16 %v3228, %v3225
        %v3256 = vpack.c.b16 %v3232, %v3229
        %v3257 = vpack.c.b16 %v3233, %v3230
        %v3258 = vpack.c.b16 %v3234, %v3231
        %3283 = vmatprep.subr.bf16.mxu0 %v3257
        %3284 = vmatpush1.bf16.msra.mxu0 %v3256
        %3285 = vmatprep.subr.bf16.mxu0 %v3254
        %3286 = vmatpush1.bf16.msra.mxu0 %v3253
        %3287 = vmatprep.subr.bf16.mxu0 %v3251
        %3288 = vmatpush1.bf16.msra.mxu0 %v3250
        %3289 = vmatprep.subr.bf16.mxu0 %v3248
        %3290 = vmatpush1.bf16.msra.mxu0 %v3247
        %3291 = vmatprep.subr.bf16.mxu0 %v3245
        %3292 = vmatpush1.bf16.msra.mxu0 %v3244
        %3293 = vmatprep.subr.bf16.mxu0 %v3242
        %3294 = vmatpush1.bf16.msra.mxu0 %v3241
        %3295 = vmatprep.subr.bf16.mxu0 %v3239
        %3296 = vmatpush1.bf16.msra.mxu0 %v3238
        %3297 = vmatprep.subr.bf16.mxu0 %v3236
        %3298 = vmatpush1.bf16.msra.mxu0 %v3235
        %3299 = vmatprep.subr.bf16.mxu0 0
        %3300 = vmatpush2.bf16.msra.mxu0 0
        %3301 = vmatprep.subr.bf16.mxu0 0
        %3302 = vmatpush2.bf16.msra.mxu0 0
        %3303 = vmatprep.subr.bf16.mxu0 0
        %3304 = vmatpush2.bf16.msra.mxu0 0
        %3305 = vmatprep.subr.bf16.mxu0 0
        %3306 = vmatpush2.bf16.msra.mxu0 0
        %3307 = vmatprep.subr.bf16.mxu0 0
        %3308 = vmatpush2.bf16.msra.mxu0 0
        %3309 = vmatprep.subr.bf16.mxu0 0
        %3310 = vmatpush2.bf16.msra.mxu0 0
        %3311 = vmatprep.subr.bf16.mxu0 0
        %3312 = vmatpush2.bf16.msra.mxu0 0
        %3313 = vmatprep.subr.bf16.mxu0 0
        %3314 = vmatpush2.bf16.msra.mxu0 0
        %3315 = vmatprep.mubr.bf16.mxu0 0
        %3316 = vmatmul.mubr.bf16.gmra.mxu0 %v3103
        %v3317 = vpop.f32.mrf.mxu0
        %v3318 = vadd.f32 %v3143, %v3317
        %v3319 = vpop.f32.mrf.mxu0
        %v3320 = vadd.f32 %v3147, %v3319
        %v3321 = vpop.f32.mrf.mxu0
        %v3322 = vpop.f32.mrf.mxu0
        %3323 = vdwg.mxu0
        %3324 = vmatprep.subr.bf16.mxu0 0
        %3325 = vmatpush1.bf16.msra.mxu0 %v3258
        %3326 = vmatprep.subr.bf16.mxu0 0
        %3327 = vmatpush1.bf16.msra.mxu0 %v3255
        %3328 = vmatprep.subr.bf16.mxu0 0
        %3329 = vmatpush1.bf16.msra.mxu0 %v3252
        %3330 = vmatprep.subr.bf16.mxu0 0
        %3331 = vmatpush1.bf16.msra.mxu0 %v3249
        %3332 = vmatprep.subr.bf16.mxu0 0
        %3333 = vmatpush1.bf16.msra.mxu0 %v3246
        %3334 = vmatprep.subr.bf16.mxu0 0
        %3335 = vmatpush1.bf16.msra.mxu0 %v3243
        %3336 = vmatprep.subr.bf16.mxu0 0
        %3337 = vmatpush1.bf16.msra.mxu0 %v3240
        %3338 = vmatprep.subr.bf16.mxu0 0
        %3339 = vmatpush1.bf16.msra.mxu0 %v3237
        %3340 = vmatprep.subr.bf16.mxu0 0
        %3341 = vmatpush2.bf16.msra.mxu0 0
        %3342 = vmatprep.subr.bf16.mxu0 0
        %3343 = vmatpush2.bf16.msra.mxu0 0
        %3344 = vmatprep.subr.bf16.mxu0 0
        %3345 = vmatpush2.bf16.msra.mxu0 0
        %3346 = vmatprep.subr.bf16.mxu0 0
        %3347 = vmatpush2.bf16.msra.mxu0 0
        %3348 = vmatprep.subr.bf16.mxu0 0
        %3349 = vmatpush2.bf16.msra.mxu0 0
        %3350 = vmatprep.subr.bf16.mxu0 0
        %3351 = vmatpush2.bf16.msra.mxu0 0
        %3352 = vmatprep.subr.bf16.mxu0 0
        %3353 = vmatpush2.bf16.msra.mxu0 0
        %3354 = vmatprep.subr.bf16.mxu0 0
        %3355 = vmatpush2.bf16.msra.mxu0 0
        %3356 = vmatprep.mubr.bf16.mxu0 0
        %3357 = vmatmul.mubr.bf16.gmra.mxu0 %v3103
        %v3358 = vpop.f32.mrf.mxu0
        %v3359 = vadd.f32 %v3151, %v3358
        %v3360 = vpop.f32.mrf.mxu0
        %v3361 = vpop.f32.mrf.mxu0
        %v3362 = vpop.f32.mrf.mxu0
        %3363 = vdwg.mxu0
        %v3364 = vpack.c.bf16 %v3318, %v3318
        %v3365 = vpack.c.bf16 %v3320, %v3320
        %v3366 = vpack.c.bf16 %v3359, %v3359
        %v3368 = vsel %vm893, %v3364, 0
        %v3371 = vsel %vm893, %v3365, 0
        %3373 = vmatprep.subr.bf16.mxu0 0
        %3374 = vmatpush1.bf16.xpose.msra.mxu0 0
        %3375 = vmatprep.subr.bf16.mxu0 0
        %3376 = vmatpush1.bf16.xpose.msra.mxu0 0
        %3377 = vmatprep.subr.bf16.mxu0 0
        %3378 = vmatpush1.bf16.xpose.msra.mxu0 0
        %3379 = vmatprep.subr.bf16.mxu0 0
        %3380 = vmatpush1.bf16.xpose.msra.mxu0 0
        %3381 = vmatprep.subr.bf16.mxu0 0
        %3382 = vmatpush1.bf16.xpose.msra.mxu0 0
        %3383 = vmatprep.subr.bf16.mxu0 0
        %3384 = vmatpush1.bf16.xpose.msra.mxu0 0
        %3385 = vmatprep.subr.bf16.mxu0 0
        %3386 = vmatpush1.bf16.xpose.msra.mxu0 0
        %3387 = vmatprep.subr.bf16.mxu0 0
        %3388 = vmatpush1.bf16.xpose.msra.mxu0 %v3371
        %3389 = vmatprep.subr.bf16.mxu0 0
        %3390 = vmatpush2.bf16.xpose.msra.mxu0 0
        %3391 = vmatprep.subr.bf16.mxu0 0
        %3392 = vmatpush2.bf16.xpose.msra.mxu0 0
        %3393 = vmatprep.subr.bf16.mxu0 0
        %3394 = vmatpush2.bf16.xpose.msra.mxu0 0
        %3395 = vmatprep.subr.bf16.mxu0 0
        %3396 = vmatpush2.bf16.xpose.msra.mxu0 0
        %3397 = vmatprep.subr.bf16.mxu0 0
        %3398 = vmatpush2.bf16.xpose.msra.mxu0 0
        %3399 = vmatprep.subr.bf16.mxu0 0
        %3400 = vmatpush2.bf16.xpose.msra.mxu0 0
        %3401 = vmatprep.subr.bf16.mxu0 0
        %3402 = vmatpush2.bf16.xpose.msra.mxu0 0
        %3403 = vmatprep.subr.bf16.mxu0 0
        %3404 = vmatpush2.bf16.xpose.msra.mxu0 0
        %3405 = vmatprep.mubr.bf16.mxu0 0
        %3406 = vmatmul.mubr.bf16.gmra.mxu0 %v3368
        %v3407 = vpop.f32.mrf.mxu0
        %v3408 = vadd.f32 0.0, %v3407
        %v3409 = vpop.f32.mrf.mxu0
        %v3410 = vpop.f32.mrf.mxu0
        %v3411 = vpop.f32.mrf.mxu0
        %3412 = vdwg.mxu0
        %v3413 = vsel %vm940, %v3408, -inf
        %3414 = vmax.xlane.f32.xlu0 %v3413
        %v3415 = vpop.xlane.xlu0 %3414
        %v3416 = vsub.f32 %v3408, %v3415
        %v3417 = vmul.f32 %v3416, 1.442695
        %v3418 = vpow.pop %v3417
        %v3419 = vsel %vm940, %v3418, 0.0
        %3420 = vadd.xlane.f32.xlu0 %v3419
        %v3421 = vpop.xlane.xlu0 %3420
        %v3422 = vrcp.pop %v3421
        %v3423 = vmul.f32 %v3418, %v3422
        %v3424 = vpack.c.bf16 %v3423, %v3423
        %v3426 = vsel %vm940, %v3424, 0
        %v3429 = vsel %vm956, %v3366, 0
        %3431 = vmatprep.subr.bf16.mxu0 0
        %3432 = vmatpush1.bf16.msra.mxu0 0
        %3433 = vmatprep.subr.bf16.mxu0 0
        %3434 = vmatpush1.bf16.msra.mxu0 0
        %3435 = vmatprep.subr.bf16.mxu0 0
        %3436 = vmatpush1.bf16.msra.mxu0 0
        %3437 = vmatprep.subr.bf16.mxu0 0
        %3438 = vmatpush1.bf16.msra.mxu0 0
        %3439 = vmatprep.subr.bf16.mxu0 0
        %3440 = vmatpush1.bf16.msra.mxu0 0
        %3441 = vmatprep.subr.bf16.mxu0 0
        %3442 = vmatpush1.bf16.msra.mxu0 0
        %3443 = vmatprep.subr.bf16.mxu0 0
        %3444 = vmatpush1.bf16.msra.mxu0 0
        %3445 = vmatprep.subr.bf16.mxu0 0
        %3446 = vmatpush1.bf16.msra.mxu0 %v3429
        %3447 = vmatprep.subr.bf16.mxu0 0
        %3448 = vmatpush2.bf16.msra.mxu0 0
        %3449 = vmatprep.subr.bf16.mxu0 0
        %3450 = vmatpush2.bf16.msra.mxu0 0
        %3451 = vmatprep.subr.bf16.mxu0 0
        %3452 = vmatpush2.bf16.msra.mxu0 0
        %3453 = vmatprep.subr.bf16.mxu0 0
        %3454 = vmatpush2.bf16.msra.mxu0 0
        %3455 = vmatprep.subr.bf16.mxu0 0
        %3456 = vmatpush2.bf16.msra.mxu0 0
        %3457 = vmatprep.subr.bf16.mxu0 0
        %3458 = vmatpush2.bf16.msra.mxu0 0
        %3459 = vmatprep.subr.bf16.mxu0 0
        %3460 = vmatpush2.bf16.msra.mxu0 0
        %3461 = vmatprep.subr.bf16.mxu0 0
        %3462 = vmatpush2.bf16.msra.mxu0 0
        %3463 = vmatprep.mubr.bf16.mxu0 0
        %3464 = vmatmul.mubr.bf16.gmra.mxu0 %v3426
        %v3465 = vpop.f32.mrf.mxu0
        %v3466 = vadd.f32 0.0, %v3465
        %v3467 = vpop.f32.mrf.mxu0
        %v3468 = vpop.f32.mrf.mxu0
        %v3469 = vpop.f32.mrf.mxu0
        %3470 = vdwg.mxu0
        %3471 = vst.msk [vmem:[#allocation2] sm:$0xff] %vm893, %v3466
        %3473 = vrot.lane.b32.xlu0 %v3364, 96
        %v3474 = vpop.permute.xlu0 %3473
        %3476 = vrot.lane.b32.xlu0 %v3365, 96
        %v3477 = vpop.permute.xlu0 %3476
        %v3479 = vsel %vm893, %v3474, 0
        %v3482 = vsel %vm893, %v3477, 0
        %3484 = vmatprep.subr.bf16.mxu0 0
        %3485 = vmatpush1.bf16.xpose.msra.mxu0 0
        %3486 = vmatprep.subr.bf16.mxu0 0
        %3487 = vmatpush1.bf16.xpose.msra.mxu0 0
        %3488 = vmatprep.subr.bf16.mxu0 0
        %3489 = vmatpush1.bf16.xpose.msra.mxu0 0
        %3490 = vmatprep.subr.bf16.mxu0 0
        %3491 = vmatpush1.bf16.xpose.msra.mxu0 0
        %3492 = vmatprep.subr.bf16.mxu0 0
        %3493 = vmatpush1.bf16.xpose.msra.mxu0 0
        %3494 = vmatprep.subr.bf16.mxu0 0
        %3495 = vmatpush1.bf16.xpose.msra.mxu0 0
        %3496 = vmatprep.subr.bf16.mxu0 0
        %3497 = vmatpush1.bf16.xpose.msra.mxu0 0
        %3498 = vmatprep.subr.bf16.mxu0 0
        %3499 = vmatpush1.bf16.xpose.msra.mxu0 %v3482
        %3500 = vmatprep.subr.bf16.mxu0 0
        %3501 = vmatpush2.bf16.xpose.msra.mxu0 0
        %3502 = vmatprep.subr.bf16.mxu0 0
        %3503 = vmatpush2.bf16.xpose.msra.mxu0 0
        %3504 = vmatprep.subr.bf16.mxu0 0
        %3505 = vmatpush2.bf16.xpose.msra.mxu0 0
        %3506 = vmatprep.subr.bf16.mxu0 0
        %3507 = vmatpush2.bf16.xpose.msra.mxu0 0
        %3508 = vmatprep.subr.bf16.mxu0 0
        %3509 = vmatpush2.bf16.xpose.msra.mxu0 0
        %3510 = vmatprep.subr.bf16.mxu0 0
        %3511 = vmatpush2.bf16.xpose.msra.mxu0 0
        %3512 = vmatprep.subr.bf16.mxu0 0
        %3513 = vmatpush2.bf16.xpose.msra.mxu0 0
        %3514 = vmatprep.subr.bf16.mxu0 0
        %3515 = vmatpush2.bf16.xpose.msra.mxu0 0
        %3516 = vmatprep.mubr.bf16.mxu0 0
        %3517 = vmatmul.mubr.bf16.gmra.mxu0 %v3479
        %v3518 = vpop.f32.mrf.mxu0
        %v3519 = vadd.f32 0.0, %v3518
        %v3520 = vpop.f32.mrf.mxu0
        %v3521 = vpop.f32.mrf.mxu0
        %v3522 = vpop.f32.mrf.mxu0
        %3523 = vdwg.mxu0
        %v3524 = vsel %vm940, %v3519, -inf
        %3525 = vmax.xlane.f32.xlu0 %v3524
        %v3526 = vpop.xlane.xlu0 %3525
        %v3527 = vsub.f32 %v3519, %v3526
        %v3528 = vmul.f32 %v3527, 1.442695
        %v3529 = vpow.pop %v3528
        %v3530 = vsel %vm940, %v3529, 0.0
        %3531 = vadd.xlane.f32.xlu0 %v3530
        %v3532 = vpop.xlane.xlu0 %3531
        %v3533 = vrcp.pop %v3532
        %v3534 = vmul.f32 %v3529, %v3533
        %v3535 = vpack.c.bf16 %v3534, %v3534
        %3537 = vrot.lane.b32.xlu0 %v3366, 96
        %v3538 = vpop.permute.xlu0 %3537
        %v3540 = vsel %vm940, %v3535, 0
        %v3543 = vsel %vm956, %v3538, 0
        %3545 = vmatprep.subr.bf16.mxu0 0
        %3546 = vmatpush1.bf16.msra.mxu0 0
        %3547 = vmatprep.subr.bf16.mxu0 0
        %3548 = vmatpush1.bf16.msra.mxu0 0
        %3549 = vmatprep.subr.bf16.mxu0 0
        %3550 = vmatpush1.bf16.msra.mxu0 0
        %3551 = vmatprep.subr.bf16.mxu0 0
        %3552 = vmatpush1.bf16.msra.mxu0 0
        %3553 = vmatprep.subr.bf16.mxu0 0
        %3554 = vmatpush1.bf16.msra.mxu0 0
        %3555 = vmatprep.subr.bf16.mxu0 0
        %3556 = vmatpush1.bf16.msra.mxu0 0
        %3557 = vmatprep.subr.bf16.mxu0 0
        %3558 = vmatpush1.bf16.msra.mxu0 0
        %3559 = vmatprep.subr.bf16.mxu0 0
        %3560 = vmatpush1.bf16.msra.mxu0 %v3543
        %3561 = vmatprep.subr.bf16.mxu0 0
        %3562 = vmatpush2.bf16.msra.mxu0 0
        %3563 = vmatprep.subr.bf16.mxu0 0
        %3564 = vmatpush2.bf16.msra.mxu0 0
        %3565 = vmatprep.subr.bf16.mxu0 0
        %3566 = vmatpush2.bf16.msra.mxu0 0
        %3567 = vmatprep.subr.bf16.mxu0 0
        %3568 = vmatpush2.bf16.msra.mxu0 0
        %3569 = vmatprep.subr.bf16.mxu0 0
        %3570 = vmatpush2.bf16.msra.mxu0 0
        %3571 = vmatprep.subr.bf16.mxu0 0
        %3572 = vmatpush2.bf16.msra.mxu0 0
        %3573 = vmatprep.subr.bf16.mxu0 0
        %3574 = vmatpush2.bf16.msra.mxu0 0
        %3575 = vmatprep.subr.bf16.mxu0 0
        %3576 = vmatpush2.bf16.msra.mxu0 0
        %3577 = vmatprep.mubr.bf16.mxu0 0
        %3578 = vmatmul.mubr.bf16.gmra.mxu0 %v3540
        %v3579 = vpop.f32.mrf.mxu0
        %v3580 = vadd.f32 0.0, %v3579
        %v3581 = vpop.f32.mrf.mxu0
        %v3582 = vpop.f32.mrf.mxu0
        %v3583 = vpop.f32.mrf.mxu0
        %3584 = vdwg.mxu0
        %3586 = vrot.lane.b32.xlu0 %v3580, 32
        %v3587 = vpop.permute.xlu0 %3586
        %3589 = vst.msk [vmem:[#allocation2] sm:$0xff] %vm1118, %v3587
        %3590 = vrot.lane.b32.xlu0 %v3364, 64
        %v3591 = vpop.permute.xlu0 %3590
        %3592 = vrot.lane.b32.xlu0 %v3365, 64
        %v3593 = vpop.permute.xlu0 %3592
        %v3595 = vsel %vm893, %v3591, 0
        %v3598 = vsel %vm893, %v3593, 0
        %3600 = vmatprep.subr.bf16.mxu0 0
        %3601 = vmatpush1.bf16.xpose.msra.mxu0 0
        %3602 = vmatprep.subr.bf16.mxu0 0
        %3603 = vmatpush1.bf16.xpose.msra.mxu0 0
        %3604 = vmatprep.subr.bf16.mxu0 0
        %3605 = vmatpush1.bf16.xpose.msra.mxu0 0
        %3606 = vmatprep.subr.bf16.mxu0 0
        %3607 = vmatpush1.bf16.xpose.msra.mxu0 0
        %3608 = vmatprep.subr.bf16.mxu0 0
        %3609 = vmatpush1.bf16.xpose.msra.mxu0 0
        %3610 = vmatprep.subr.bf16.mxu0 0
        %3611 = vmatpush1.bf16.xpose.msra.mxu0 0
        %3612 = vmatprep.subr.bf16.mxu0 0
        %3613 = vmatpush1.bf16.xpose.msra.mxu0 0
        %3614 = vmatprep.subr.bf16.mxu0 0
        %3615 = vmatpush1.bf16.xpose.msra.mxu0 %v3598
        %3616 = vmatprep.subr.bf16.mxu0 0
        %3617 = vmatpush2.bf16.xpose.msra.mxu0 0
        %3618 = vmatprep.subr.bf16.mxu0 0
        %3619 = vmatpush2.bf16.xpose.msra.mxu0 0
        %3620 = vmatprep.subr.bf16.mxu0 0
        %3621 = vmatpush2.bf16.xpose.msra.mxu0 0
        %3622 = vmatprep.subr.bf16.mxu0 0
        %3623 = vmatpush2.bf16.xpose.msra.mxu0 0
        %3624 = vmatprep.subr.bf16.mxu0 0
        %3625 = vmatpush2.bf16.xpose.msra.mxu0 0
        %3626 = vmatprep.subr.bf16.mxu0 0
        %3627 = vmatpush2.bf16.xpose.msra.mxu0 0
        %3628 = vmatprep.subr.bf16.mxu0 0
        %3629 = vmatpush2.bf16.xpose.msra.mxu0 0
        %3630 = vmatprep.subr.bf16.mxu0 0
        %3631 = vmatpush2.bf16.xpose.msra.mxu0 0
        %3632 = vmatprep.mubr.bf16.mxu0 0
        %3633 = vmatmul.mubr.bf16.gmra.mxu0 %v3595
        %v3634 = vpop.f32.mrf.mxu0
        %v3635 = vadd.f32 0.0, %v3634
        %v3636 = vpop.f32.mrf.mxu0
        %v3637 = vpop.f32.mrf.mxu0
        %v3638 = vpop.f32.mrf.mxu0
        %3639 = vdwg.mxu0
        %v3640 = vsel %vm940, %v3635, -inf
        %3641 = vmax.xlane.f32.xlu0 %v3640
        %v3642 = vpop.xlane.xlu0 %3641
        %v3643 = vsub.f32 %v3635, %v3642
        %v3644 = vmul.f32 %v3643, 1.442695
        %v3645 = vpow.pop %v3644
        %v3646 = vsel %vm940, %v3645, 0.0
        %3647 = vadd.xlane.f32.xlu0 %v3646
        %v3648 = vpop.xlane.xlu0 %3647
        %v3649 = vrcp.pop %v3648
        %v3650 = vmul.f32 %v3645, %v3649
        %v3651 = vpack.c.bf16 %v3650, %v3650
        %3652 = vrot.lane.b32.xlu0 %v3366, 64
        %v3653 = vpop.permute.xlu0 %3652
        %v3655 = vsel %vm940, %v3651, 0
        %v3658 = vsel %vm956, %v3653, 0
        %3660 = vmatprep.subr.bf16.mxu0 0
        %3661 = vmatpush1.bf16.msra.mxu0 0
        %3662 = vmatprep.subr.bf16.mxu0 0
        %3663 = vmatpush1.bf16.msra.mxu0 0
        %3664 = vmatprep.subr.bf16.mxu0 0
        %3665 = vmatpush1.bf16.msra.mxu0 0
        %3666 = vmatprep.subr.bf16.mxu0 0
        %3667 = vmatpush1.bf16.msra.mxu0 0
        %3668 = vmatprep.subr.bf16.mxu0 0
        %3669 = vmatpush1.bf16.msra.mxu0 0
        %3670 = vmatprep.subr.bf16.mxu0 0
        %3671 = vmatpush1.bf16.msra.mxu0 0
        %3672 = vmatprep.subr.bf16.mxu0 0
        %3673 = vmatpush1.bf16.msra.mxu0 0
        %3674 = vmatprep.subr.bf16.mxu0 0
        %3675 = vmatpush1.bf16.msra.mxu0 %v3658
        %3676 = vmatprep.subr.bf16.mxu0 0
        %3677 = vmatpush2.bf16.msra.mxu0 0
        %3678 = vmatprep.subr.bf16.mxu0 0
        %3679 = vmatpush2.bf16.msra.mxu0 0
        %3680 = vmatprep.subr.bf16.mxu0 0
        %3681 = vmatpush2.bf16.msra.mxu0 0
        %3682 = vmatprep.subr.bf16.mxu0 0
        %3683 = vmatpush2.bf16.msra.mxu0 0
        %3684 = vmatprep.subr.bf16.mxu0 0
        %3685 = vmatpush2.bf16.msra.mxu0 0
        %3686 = vmatprep.subr.bf16.mxu0 0
        %3687 = vmatpush2.bf16.msra.mxu0 0
        %3688 = vmatprep.subr.bf16.mxu0 0
        %3689 = vmatpush2.bf16.msra.mxu0 0
        %3690 = vmatprep.subr.bf16.mxu0 0
        %3691 = vmatpush2.bf16.msra.mxu0 0
        %3692 = vmatprep.mubr.bf16.mxu0 0
        %3693 = vmatmul.mubr.bf16.gmra.mxu0 %v3655
        %v3694 = vpop.f32.mrf.mxu0
        %v3695 = vadd.f32 0.0, %v3694
        %v3696 = vpop.f32.mrf.mxu0
        %v3697 = vpop.f32.mrf.mxu0
        %v3698 = vpop.f32.mrf.mxu0
        %3699 = vdwg.mxu0
        %3701 = vrot.lane.b32.xlu0 %v3695, 64
        %v3702 = vpop.permute.xlu0 %3701
        %3704 = vst.msk [vmem:[#allocation2] sm:$0xff] %vm1234, %v3702
        %3705 = vrot.lane.b32.xlu0 %v3364, 32
        %v3706 = vpop.permute.xlu0 %3705
        %3707 = vrot.lane.b32.xlu0 %v3365, 32
        %v3708 = vpop.permute.xlu0 %3707
        %v3710 = vsel %vm893, %v3706, 0
        %v3713 = vsel %vm893, %v3708, 0
        %3715 = vmatprep.subr.bf16.mxu0 0
        %3716 = vmatpush1.bf16.xpose.msra.mxu0 0
        %3717 = vmatprep.subr.bf16.mxu0 0
        %3718 = vmatpush1.bf16.xpose.msra.mxu0 0
        %3719 = vmatprep.subr.bf16.mxu0 0
        %3720 = vmatpush1.bf16.xpose.msra.mxu0 0
        %3721 = vmatprep.subr.bf16.mxu0 0
        %3722 = vmatpush1.bf16.xpose.msra.mxu0 0
        %3723 = vmatprep.subr.bf16.mxu0 0
        %3724 = vmatpush1.bf16.xpose.msra.mxu0 0
        %3725 = vmatprep.subr.bf16.mxu0 0
        %3726 = vmatpush1.bf16.xpose.msra.mxu0 0
        %3727 = vmatprep.subr.bf16.mxu0 0
        %3728 = vmatpush1.bf16.xpose.msra.mxu0 0
        %3729 = vmatprep.subr.bf16.mxu0 0
        %3730 = vmatpush1.bf16.xpose.msra.mxu0 %v3713
        %3731 = vmatprep.subr.bf16.mxu0 0
        %3732 = vmatpush2.bf16.xpose.msra.mxu0 0
        %3733 = vmatprep.subr.bf16.mxu0 0
        %3734 = vmatpush2.bf16.xpose.msra.mxu0 0
        %3735 = vmatprep.subr.bf16.mxu0 0
        %3736 = vmatpush2.bf16.xpose.msra.mxu0 0
        %3737 = vmatprep.subr.bf16.mxu0 0
        %3738 = vmatpush2.bf16.xpose.msra.mxu0 0
        %3739 = vmatprep.subr.bf16.mxu0 0
        %3740 = vmatpush2.bf16.xpose.msra.mxu0 0
        %3741 = vmatprep.subr.bf16.mxu0 0
        %3742 = vmatpush2.bf16.xpose.msra.mxu0 0
        %3743 = vmatprep.subr.bf16.mxu0 0
        %3744 = vmatpush2.bf16.xpose.msra.mxu0 0
        %3745 = vmatprep.subr.bf16.mxu0 0
        %3746 = vmatpush2.bf16.xpose.msra.mxu0 0
        %3747 = vmatprep.mubr.bf16.mxu0 0
        %3748 = vmatmul.mubr.bf16.gmra.mxu0 %v3710
        %v3749 = vpop.f32.mrf.mxu0
        %v3750 = vadd.f32 0.0, %v3749
        %v3751 = vpop.f32.mrf.mxu0
        %v3752 = vpop.f32.mrf.mxu0
        %v3753 = vpop.f32.mrf.mxu0
        %3754 = vdwg.mxu0
        %v3755 = vsel %vm940, %v3750, -inf
        %3756 = vmax.xlane.f32.xlu0 %v3755
        %v3757 = vpop.xlane.xlu0 %3756
        %v3758 = vsub.f32 %v3750, %v3757
        %v3759 = vmul.f32 %v3758, 1.442695
        %v3760 = vpow.pop %v3759
        %v3761 = vsel %vm940, %v3760, 0.0
        %3762 = vadd.xlane.f32.xlu0 %v3761
        %v3763 = vpop.xlane.xlu0 %3762
        %v3764 = vrcp.pop %v3763
        %v3765 = vmul.f32 %v3760, %v3764
        %v3766 = vpack.c.bf16 %v3765, %v3765
        %3767 = vrot.lane.b32.xlu0 %v3366, 32
        %v3768 = vpop.permute.xlu0 %3767
        %v3770 = vsel %vm940, %v3766, 0
        %v3773 = vsel %vm956, %v3768, 0
        %3775 = vmatprep.subr.bf16.mxu0 0
        %3776 = vmatpush1.bf16.msra.mxu0 0
        %3777 = vmatprep.subr.bf16.mxu0 0
        %3778 = vmatpush1.bf16.msra.mxu0 0
        %3779 = vmatprep.subr.bf16.mxu0 0
        %3780 = vmatpush1.bf16.msra.mxu0 0
        %3781 = vmatprep.subr.bf16.mxu0 0
        %3782 = vmatpush1.bf16.msra.mxu0 0
        %3783 = vmatprep.subr.bf16.mxu0 0
        %3784 = vmatpush1.bf16.msra.mxu0 0
        %3785 = vmatprep.subr.bf16.mxu0 0
        %3786 = vmatpush1.bf16.msra.mxu0 0
        %3787 = vmatprep.subr.bf16.mxu0 0
        %3788 = vmatpush1.bf16.msra.mxu0 0
        %3789 = vmatprep.subr.bf16.mxu0 0
        %3790 = vmatpush1.bf16.msra.mxu0 %v3773
        %3791 = vmatprep.subr.bf16.mxu0 0
        %3792 = vmatpush2.bf16.msra.mxu0 0
        %3793 = vmatprep.subr.bf16.mxu0 0
        %3794 = vmatpush2.bf16.msra.mxu0 0
        %3795 = vmatprep.subr.bf16.mxu0 0
        %3796 = vmatpush2.bf16.msra.mxu0 0
        %3797 = vmatprep.subr.bf16.mxu0 0
        %3798 = vmatpush2.bf16.msra.mxu0 0
        %3799 = vmatprep.subr.bf16.mxu0 0
        %3800 = vmatpush2.bf16.msra.mxu0 0
        %3801 = vmatprep.subr.bf16.mxu0 0
        %3802 = vmatpush2.bf16.msra.mxu0 0
        %3803 = vmatprep.subr.bf16.mxu0 0
        %3804 = vmatpush2.bf16.msra.mxu0 0
        %3805 = vmatprep.subr.bf16.mxu0 0
        %3806 = vmatpush2.bf16.msra.mxu0 0
        %3807 = vmatprep.mubr.bf16.mxu0 0
        %3808 = vmatmul.mubr.bf16.gmra.mxu0 %v3770
        %v3809 = vpop.f32.mrf.mxu0
        %v3810 = vadd.f32 0.0, %v3809
        %v3811 = vpop.f32.mrf.mxu0
        %v3812 = vpop.f32.mrf.mxu0
        %v3813 = vpop.f32.mrf.mxu0
        %3814 = vdwg.mxu0
        %3816 = vrot.lane.b32.xlu0 %v3810, 96
        %v3817 = vpop.permute.xlu0 %3816
        %3819 = vst.msk [vmem:[#allocation2] sm:$0xff] %vm1350, %v3817
        %v3820 = vld [vmem:[#allocation2] sm:$0xff]
        %v3821 = vpack.c.bf16 %v3820, %v3820
        %s3822 = scalar_lea.vmem [#allocation12], 128
        %v3823 = vld [vmem:[%s3822] sm:$0xf]
        %v3824 = vld [vmem:[%s3822 + $0x4] sm:$0xf]
        %v3825 = vld [vmem:[%s3822 + $0x8] sm:$0xf]
        %v3826 = vld [vmem:[%s3822 + $0xc] sm:$0xf]
        %v3827 = vld [vmem:[%s3822 + $0x10] sm:$0xf]
        %v3828 = vld [vmem:[%s3822 + $0x14] sm:$0xf]
        %v3829 = vld [vmem:[%s3822 + $0x18] sm:$0xf]
        %v3830 = vld [vmem:[%s3822 + $0x1c] sm:$0xf]
        %v3831 = vld [vmem:[%s3822 + $0x20] sm:$0xf]
        %v3832 = vld [vmem:[%s3822 + $0x24] sm:$0xf]
        %v3833 = vld [vmem:[%s3822 + $0x28] sm:$0xf]
        %v3834 = vld [vmem:[%s3822 + $0x2c] sm:$0xf]
        %v3835 = vld [vmem:[%s3822 + $0x30] sm:$0xf]
        %v3836 = vld [vmem:[%s3822 + $0x34] sm:$0xf]
        %v3837 = vld [vmem:[%s3822 + $0x38] sm:$0xf]
        %v3838 = vld [vmem:[%s3822 + $0x3c] sm:$0xf]
        %s3839 = scalar_lea.vmem %s6, 2
        %v3840 = vld [vmem:[%s3839] sm:$0x1]
        %v3842 = vlaneseq
        %v3843 = vshrl.u32 %v3842, 7
        %v3844 = vsub.s32 0, %v3843
        %v3845 = vrot.slane %v3840, %v3844
        %v3863 = vunpack.c.l.b16 %v3823
        %v3864 = vunpack.c.l.b16 %v3824
        %v3865 = vunpack.c.l.b16 %v3825
        %v3866 = vunpack.c.l.b16 %v3826
        %v3867 = vunpack.c.l.b16 %v3827
        %v3868 = vunpack.c.l.b16 %v3828
        %v3869 = vunpack.c.l.b16 %v3829
        %v3870 = vunpack.c.l.b16 %v3830
        %v3871 = vunpack.c.l.b16 %v3831
        %v3872 = vunpack.c.l.b16 %v3832
        %v3873 = vunpack.c.l.b16 %v3833
        %v3874 = vunpack.c.l.b16 %v3834
        %v3875 = vunpack.c.l.b16 %v3835
        %v3876 = vunpack.c.l.b16 %v3836
        %v3877 = vunpack.c.l.b16 %v3837
        %v3878 = vunpack.c.l.b16 %v3838
        %v3879 = vpack.c.b16 %v3864, %v3863
        %v3880 = vpack.c.b16 %v3866, %v3865
        %v3881 = vpack.c.b16 %v3868, %v3867
        %v3882 = vpack.c.b16 %v3870, %v3869
        %v3883 = vpack.c.b16 %v3872, %v3871
        %v3884 = vpack.c.b16 %v3874, %v3873
        %v3885 = vpack.c.b16 %v3876, %v3875
        %v3886 = vpack.c.b16 %v3878, %v3877
        %3895 = vmatprep.subr.bf16.mxu0 0
        %3896 = vmatpush1.bf16.msra.mxu0 %v3886
        %3897 = vmatprep.subr.bf16.mxu0 0
        %3898 = vmatpush1.bf16.msra.mxu0 %v3885
        %3899 = vmatprep.subr.bf16.mxu0 0
        %3900 = vmatpush1.bf16.msra.mxu0 %v3884
        %3901 = vmatprep.subr.bf16.mxu0 0
        %3902 = vmatpush1.bf16.msra.mxu0 %v3883
        %3903 = vmatprep.subr.bf16.mxu0 0
        %3904 = vmatpush1.bf16.msra.mxu0 %v3882
        %3905 = vmatprep.subr.bf16.mxu0 0
        %3906 = vmatpush1.bf16.msra.mxu0 %v3881
        %3907 = vmatprep.subr.bf16.mxu0 0
        %3908 = vmatpush1.bf16.msra.mxu0 %v3880
        %3909 = vmatprep.subr.bf16.mxu0 0
        %3910 = vmatpush1.bf16.msra.mxu0 %v3879
        %3911 = vmatprep.subr.bf16.mxu0 0
        %3912 = vmatpush2.bf16.msra.mxu0 0
        %3913 = vmatprep.subr.bf16.mxu0 0
        %3914 = vmatpush2.bf16.msra.mxu0 0
        %3915 = vmatprep.subr.bf16.mxu0 0
        %3916 = vmatpush2.bf16.msra.mxu0 0
        %3917 = vmatprep.subr.bf16.mxu0 0
        %3918 = vmatpush2.bf16.msra.mxu0 0
        %3919 = vmatprep.subr.bf16.mxu0 0
        %3920 = vmatpush2.bf16.msra.mxu0 0
        %3921 = vmatprep.subr.bf16.mxu0 0
        %3922 = vmatpush2.bf16.msra.mxu0 0
        %3923 = vmatprep.subr.bf16.mxu0 0
        %3924 = vmatpush2.bf16.msra.mxu0 0
        %3925 = vmatprep.subr.bf16.mxu0 0
        %3926 = vmatpush2.bf16.msra.mxu0 0
        %3927 = vmatprep.mubr.bf16.mxu0 0
        %3928 = vmatmul.mubr.bf16.gmra.mxu0 %v3821
        %v3929 = vpop.f32.mrf.mxu0
        %v3930 = vadd.f32 %v3845, %v3929
        %v3931 = vpop.f32.mrf.mxu0
        %v3932 = vpop.f32.mrf.mxu0
        %v3933 = vpop.f32.mrf.mxu0
        %3934 = vdwg.mxu0
        %v3935 = vadd.f32 %v3073, %v3930
        %s3936 = scalar_lea.vmem [#allocation14], 2
        %v3937 = vld [vmem:[%s3936] sm:$0x1]
        %s3938 = scalar_lea.vmem [#allocation15], 2
        %v3939 = vld [vmem:[%s3938] sm:$0x1]
        %3940 = vadd.xlane.f32.xlu0 %v3935
        %v3941 = vpop.xlane.xlu0 %3940
        %v3942 = vmul.f32 %v3941, %v607
        %v3943 = vsub.f32 %v3935, %v3942
        %v3944 = vmul.f32 %v3943, %v3943
        %3945 = vadd.xlane.f32.xlu0 %v3944
        %v3946 = vpop.xlane.xlu0 %3945
        %v3947 = vmul.f32 %v3946, %v607
        %v3948 = vadd.f32 %v3947, 1e-06
        %v3949 = vrsqrt.pop %v3948
        %v3950 = vmul.f32 %v3943, %v3949
        %v3952 = vlaneseq
        %v3953 = vshrl.u32 %v3952, 7
        %v3954 = vsub.s32 0, %v3953
        %v3955 = vrot.slane %v3937, %v3954
        %v3957 = vmul.f32 %v3950, %v3955
        %v3959 = vlaneseq
        %v3960 = vshrl.u32 %v3959, 7
        %v3961 = vsub.s32 0, %v3960
        %v3962 = vrot.slane %v3939, %v3961
        %v3964 = vadd.f32 %v3957, %v3962
        %v3965 = vpack.c.bf16 %v3964, %v3964
        %s3966 = scalar_lea.vmem [#allocation17], 256
        %v3967 = vld [vmem:[%s3966] sm:$0xff]
        %v3968 = vld [vmem:[%s3966 + $0x8] sm:$0xff]
        %v3969 = vld [vmem:[%s3966 + $0x10] sm:$0xff]
        %v3970 = vld [vmem:[%s3966 + $0x18] sm:$0xff]
        %v3971 = vld [vmem:[%s3966 + $0x20] sm:$0xff]
        %v3972 = vld [vmem:[%s3966 + $0x28] sm:$0xff]
        %v3973 = vld [vmem:[%s3966 + $0x30] sm:$0xff]
        %v3974 = vld [vmem:[%s3966 + $0x38] sm:$0xff]
        %v3975 = vld [vmem:[%s3966 + $0x40] sm:$0xff]
        %v3976 = vld [vmem:[%s3966 + $0x48] sm:$0xff]
        %v3977 = vld [vmem:[%s3966 + $0x50] sm:$0xff]
        %v3978 = vld [vmem:[%s3966 + $0x58] sm:$0xff]
        %v3979 = vld [vmem:[%s3966 + $0x60] sm:$0xff]
        %v3980 = vld [vmem:[%s3966 + $0x68] sm:$0xff]
        %v3981 = vld [vmem:[%s3966 + $0x70] sm:$0xff]
        %v3982 = vld [vmem:[%s3966 + $0x78] sm:$0xff]
        %s3983 = scalar_lea.vmem %s10, 4
        %v3984 = vld [vmem:[%s3983] sm:$0x3]
        %v3986 = vlaneseq
        %v3987 = vshrl.u32 %v3986, 7
        %v3988 = vsub.s32 0, %v3987
        %v3989 = vrot.slane %v3984, %v3988
        %v3990 = vlaneseq
        %v3991 = vshrl.u32 %v3990, 7
        %v3992 = vsub.s32 1, %v3991
        %v3993 = vrot.slane %v3984, %v3992
        %v4012 = vunpack.c.l.b16 %v3967
        %v4013 = vunpack.c.h.b16 %v3967
        %v4014 = vunpack.c.l.b16 %v3968
        %v4015 = vunpack.c.h.b16 %v3968
        %v4016 = vunpack.c.l.b16 %v3969
        %v4017 = vunpack.c.h.b16 %v3969
        %v4018 = vunpack.c.l.b16 %v3970
        %v4019 = vunpack.c.h.b16 %v3970
        %v4020 = vunpack.c.l.b16 %v3971
        %v4021 = vunpack.c.h.b16 %v3971
        %v4022 = vunpack.c.l.b16 %v3972
        %v4023 = vunpack.c.h.b16 %v3972
        %v4024 = vunpack.c.l.b16 %v3973
        %v4025 = vunpack.c.h.b16 %v3973
        %v4026 = vunpack.c.l.b16 %v3974
        %v4027 = vunpack.c.h.b16 %v3974
        %v4028 = vunpack.c.l.b16 %v3975
        %v4029 = vunpack.c.h.b16 %v3975
        %v4030 = vunpack.c.l.b16 %v3976
        %v4031 = vunpack.c.h.b16 %v3976
        %v4032 = vunpack.c.l.b16 %v3977
        %v4033 = vunpack.c.h.b16 %v3977
        %v4034 = vunpack.c.l.b16 %v3978
        %v4035 = vunpack.c.h.b16 %v3978
        %v4036 = vunpack.c.l.b16 %v3979
        %v4037 = vunpack.c.h.b16 %v3979
        %v4038 = vunpack.c.l.b16 %v3980
        %v4039 = vunpack.c.h.b16 %v3980
        %v4040 = vunpack.c.l.b16 %v3981
        %v4041 = vunpack.c.h.b16 %v3981
        %v4042 = vunpack.c.l.b16 %v3982
        %v4043 = vunpack.c.h.b16 %v3982
        %v4044 = vpack.c.b16 %v4014, %v4012
        %v4045 = vpack.c.b16 %v4015, %v4013
        %v4046 = vpack.c.b16 %v4018, %v4016
        %v4047 = vpack.c.b16 %v4019, %v4017
        %v4048 = vpack.c.b16 %v4022, %v4020
        %v4049 = vpack.c.b16 %v4023, %v4021
        %v4050 = vpack.c.b16 %v4026, %v4024
        %v4051 = vpack.c.b16 %v4027, %v4025
        %v4052 = vpack.c.b16 %v4030, %v4028
        %v4053 = vpack.c.b16 %v4031, %v4029
        %v4054 = vpack.c.b16 %v4034, %v4032
        %v4055 = vpack.c.b16 %v4035, %v4033
        %v4056 = vpack.c.b16 %v4038, %v4036
        %v4057 = vpack.c.b16 %v4039, %v4037
        %v4058 = vpack.c.b16 %v4042, %v4040
        %v4059 = vpack.c.b16 %v4043, %v4041
        %4076 = vmatprep.subr.bf16.mxu0 %v4059
        %4077 = vmatpush1.bf16.msra.mxu0 %v4058
        %4078 = vmatprep.subr.bf16.mxu0 %v4057
        %4079 = vmatpush1.bf16.msra.mxu0 %v4056
        %4080 = vmatprep.subr.bf16.mxu0 %v4055
        %4081 = vmatpush1.bf16.msra.mxu0 %v4054
        %4082 = vmatprep.subr.bf16.mxu0 %v4053
        %4083 = vmatpush1.bf16.msra.mxu0 %v4052
        %4084 = vmatprep.subr.bf16.mxu0 %v4051
        %4085 = vmatpush1.bf16.msra.mxu0 %v4050
        %4086 = vmatprep.subr.bf16.mxu0 %v4049
        %4087 = vmatpush1.bf16.msra.mxu0 %v4048
        %4088 = vmatprep.subr.bf16.mxu0 %v4047
        %4089 = vmatpush1.bf16.msra.mxu0 %v4046
        %4090 = vmatprep.subr.bf16.mxu0 %v4045
        %4091 = vmatpush1.bf16.msra.mxu0 %v4044
        %4092 = vmatprep.subr.bf16.mxu0 0
        %4093 = vmatpush2.bf16.msra.mxu0 0
        %4094 = vmatprep.subr.bf16.mxu0 0
        %4095 = vmatpush2.bf16.msra.mxu0 0
        %4096 = vmatprep.subr.bf16.mxu0 0
        %4097 = vmatpush2.bf16.msra.mxu0 0
        %4098 = vmatprep.subr.bf16.mxu0 0
        %4099 = vmatpush2.bf16.msra.mxu0 0
        %4100 = vmatprep.subr.bf16.mxu0 0
        %4101 = vmatpush2.bf16.msra.mxu0 0
        %4102 = vmatprep.subr.bf16.mxu0 0
        %4103 = vmatpush2.bf16.msra.mxu0 0
        %4104 = vmatprep.subr.bf16.mxu0 0
        %4105 = vmatpush2.bf16.msra.mxu0 0
        %4106 = vmatprep.subr.bf16.mxu0 0
        %4107 = vmatpush2.bf16.msra.mxu0 0
        %4108 = vmatprep.mubr.bf16.mxu0 0
        %4109 = vmatmul.mubr.bf16.gmra.mxu0 %v3965
        %v4110 = vpop.f32.mrf.mxu0
        %v4111 = vadd.f32 %v3989, %v4110
        %v4112 = vpop.f32.mrf.mxu0
        %v4113 = vadd.f32 %v3993, %v4112
        %v4114 = vpop.f32.mrf.mxu0
        %v4115 = vpop.f32.mrf.mxu0
        %4116 = vdwg.mxu0
        %v4117 = vmul.f32 %v4111, 0.5
        %v4118 = vmul.f32 %v4113, 0.5
        %v4119 = vmul.f32 %v4111, 0.70710677
        %v4120 = vmul.f32 %v4113, 0.70710677
        %v4121 = verf.f32.pop %v4119
        %v4122 = verf.f32.pop %v4120
        %v4123 = vadd.f32 %v4121, 1.0
        %v4124 = vadd.f32 %v4122, 1.0
        %v4125 = vmul.f32 %v4117, %v4123
        %v4126 = vmul.f32 %v4118, %v4124
        %v4127 = vpack.c.bf16 %v4125, %v4125
        %v4128 = vpack.c.bf16 %v4126, %v4126
        %s4129 = scalar_lea.vmem [#allocation18], 256
        %v4130 = vld [vmem:[%s4129] sm:$0xf]
        %v4131 = vld [vmem:[%s4129 + $0x4] sm:$0xf]
        %v4132 = vld [vmem:[%s4129 + $0x8] sm:$0xf]
        %v4133 = vld [vmem:[%s4129 + $0xc] sm:$0xf]
        %v4134 = vld [vmem:[%s4129 + $0x10] sm:$0xf]
        %v4135 = vld [vmem:[%s4129 + $0x14] sm:$0xf]
        %v4136 = vld [vmem:[%s4129 + $0x18] sm:$0xf]
        %v4137 = vld [vmem:[%s4129 + $0x1c] sm:$0xf]
        %v4138 = vld [vmem:[%s4129 + $0x20] sm:$0xf]
        %v4139 = vld [vmem:[%s4129 + $0x24] sm:$0xf]
        %v4140 = vld [vmem:[%s4129 + $0x28] sm:$0xf]
        %v4141 = vld [vmem:[%s4129 + $0x2c] sm:$0xf]
        %v4142 = vld [vmem:[%s4129 + $0x30] sm:$0xf]
        %v4143 = vld [vmem:[%s4129 + $0x34] sm:$0xf]
        %v4144 = vld [vmem:[%s4129 + $0x38] sm:$0xf]
        %v4145 = vld [vmem:[%s4129 + $0x3c] sm:$0xf]
        %v4146 = vld [vmem:[%s4129 + $0x40] sm:$0xf]
        %v4147 = vld [vmem:[%s4129 + $0x44] sm:$0xf]
        %v4148 = vld [vmem:[%s4129 + $0x48] sm:$0xf]
        %v4149 = vld [vmem:[%s4129 + $0x4c] sm:$0xf]
        %v4150 = vld [vmem:[%s4129 + $0x50] sm:$0xf]
        %v4151 = vld [vmem:[%s4129 + $0x54] sm:$0xf]
        %v4152 = vld [vmem:[%s4129 + $0x58] sm:$0xf]
        %v4153 = vld [vmem:[%s4129 + $0x5c] sm:$0xf]
        %v4154 = vld [vmem:[%s4129 + $0x60] sm:$0xf]
        %v4155 = vld [vmem:[%s4129 + $0x64] sm:$0xf]
        %v4156 = vld [vmem:[%s4129 + $0x68] sm:$0xf]
        %v4157 = vld [vmem:[%s4129 + $0x6c] sm:$0xf]
        %v4158 = vld [vmem:[%s4129 + $0x70] sm:$0xf]
        %v4159 = vld [vmem:[%s4129 + $0x74] sm:$0xf]
        %v4160 = vld [vmem:[%s4129 + $0x78] sm:$0xf]
        %v4161 = vld [vmem:[%s4129 + $0x7c] sm:$0xf]
        %s4162 = scalar_lea.vmem [#allocation20], 2
        %v4163 = vld [vmem:[%s4162] sm:$0x1]
        %v4165 = vlaneseq
        %v4166 = vshrl.u32 %v4165, 7
        %v4167 = vsub.s32 0, %v4166
        %v4168 = vrot.slane %v4163, %v4167
        %v4202 = vunpack.c.l.b16 %v4130
        %v4203 = vunpack.c.l.b16 %v4131
        %v4204 = vunpack.c.l.b16 %v4132
        %v4205 = vunpack.c.l.b16 %v4133
        %v4206 = vunpack.c.l.b16 %v4134
        %v4207 = vunpack.c.l.b16 %v4135
        %v4208 = vunpack.c.l.b16 %v4136
        %v4209 = vunpack.c.l.b16 %v4137
        %v4210 = vunpack.c.l.b16 %v4138
        %v4211 = vunpack.c.l.b16 %v4139
        %v4212 = vunpack.c.l.b16 %v4140
        %v4213 = vunpack.c.l.b16 %v4141
        %v4214 = vunpack.c.l.b16 %v4142
        %v4215 = vunpack.c.l.b16 %v4143
        %v4216 = vunpack.c.l.b16 %v4144
        %v4217 = vunpack.c.l.b16 %v4145
        %v4218 = vunpack.c.l.b16 %v4146
        %v4219 = vunpack.c.l.b16 %v4147
        %v4220 = vunpack.c.l.b16 %v4148
        %v4221 = vunpack.c.l.b16 %v4149
        %v4222 = vunpack.c.l.b16 %v4150
        %v4223 = vunpack.c.l.b16 %v4151
        %v4224 = vunpack.c.l.b16 %v4152
        %v4225 = vunpack.c.l.b16 %v4153
        %v4226 = vunpack.c.l.b16 %v4154
        %v4227 = vunpack.c.l.b16 %v4155
        %v4228 = vunpack.c.l.b16 %v4156
        %v4229 = vunpack.c.l.b16 %v4157
        %v4230 = vunpack.c.l.b16 %v4158
        %v4231 = vunpack.c.l.b16 %v4159
        %v4232 = vunpack.c.l.b16 %v4160
        %v4233 = vunpack.c.l.b16 %v4161
        %v4234 = vpack.c.b16 %v4203, %v4202
        %v4235 = vpack.c.b16 %v4205, %v4204
        %v4236 = vpack.c.b16 %v4207, %v4206
        %v4237 = vpack.c.b16 %v4209, %v4208
        %v4238 = vpack.c.b16 %v4211, %v4210
        %v4239 = vpack.c.b16 %v4213, %v4212
        %v4240 = vpack.c.b16 %v4215, %v4214
        %v4241 = vpack.c.b16 %v4217, %v4216
        %v4242 = vpack.c.b16 %v4219, %v4218
        %v4243 = vpack.c.b16 %v4221, %v4220
        %v4244 = vpack.c.b16 %v4223, %v4222
        %v4245 = vpack.c.b16 %v4225, %v4224
        %v4246 = vpack.c.b16 %v4227, %v4226
        %v4247 = vpack.c.b16 %v4229, %v4228
        %v4248 = vpack.c.b16 %v4231, %v4230
        %v4249 = vpack.c.b16 %v4233, %v4232
        %4266 = vmatprep.subr.bf16.mxu0 0
        %4267 = vmatpush1.bf16.msra.mxu0 %v4241
        %4268 = vmatprep.subr.bf16.mxu0 0
        %4269 = vmatpush1.bf16.msra.mxu0 %v4240
        %4270 = vmatprep.subr.bf16.mxu0 0
        %4271 = vmatpush1.bf16.msra.mxu0 %v4239
        %4272 = vmatprep.subr.bf16.mxu0 0
        %4273 = vmatpush1.bf16.msra.mxu0 %v4238
        %4274 = vmatprep.subr.bf16.mxu0 0
        %4275 = vmatpush1.bf16.msra.mxu0 %v4237
        %4276 = vmatprep.subr.bf16.mxu0 0
        %4277 = vmatpush1.bf16.msra.mxu0 %v4236
        %4278 = vmatprep.subr.bf16.mxu0 0
        %4279 = vmatpush1.bf16.msra.mxu0 %v4235
        %4280 = vmatprep.subr.bf16.mxu0 0
        %4281 = vmatpush1.bf16.msra.mxu0 %v4234
        %4282 = vmatprep.subr.bf16.mxu0 0
        %4283 = vmatpush2.bf16.msra.mxu0 %v4249
        %4284 = vmatprep.subr.bf16.mxu0 0
        %4285 = vmatpush2.bf16.msra.mxu0 %v4248
        %4286 = vmatprep.subr.bf16.mxu0 0
        %4287 = vmatpush2.bf16.msra.mxu0 %v4247
        %4288 = vmatprep.subr.bf16.mxu0 0
        %4289 = vmatpush2.bf16.msra.mxu0 %v4246
        %4290 = vmatprep.subr.bf16.mxu0 0
        %4291 = vmatpush2.bf16.msra.mxu0 %v4245
        %4292 = vmatprep.subr.bf16.mxu0 0
        %4293 = vmatpush2.bf16.msra.mxu0 %v4244
        %4294 = vmatprep.subr.bf16.mxu0 0
        %4295 = vmatpush2.bf16.msra.mxu0 %v4243
        %4296 = vmatprep.subr.bf16.mxu0 0
        %4297 = vmatpush2.bf16.msra.mxu0 %v4242
        %4298 = vmatprep.mubr.bf16.mxu0 %v4128
        %4299 = vmatmul.mubr.bf16.gmra.mxu0 %v4127
        %v4300 = vpop.f32.mrf.mxu0
        %v4301 = vadd.f32 %v4168, %v4300
        %v4302 = vpop.f32.mrf.mxu0
        %v4303 = vpop.f32.mrf.mxu0
        %v4304 = vpop.f32.mrf.mxu0
        %4305 = vdwg.mxu0
        %v4306 = vmul.f32 %v4301, 0.5
        %v4307 = vmul.f32 %v4301, 0.70710677
        %v4308 = verf.f32.pop %v4307
        %v4309 = vadd.f32 %v4308, 1.0
        %v4310 = vmul.f32 %v4306, %v4309
        %v4311 = vadd.f32 %v3935, %v4310
        %s4312 = scalar_lea.vmem [#allocation6], 3
        %v4313 = vld [vmem:[%s4312] sm:$0x1]
        %s4314 = scalar_lea.vmem [#allocation8], 3
        %v4315 = vld [vmem:[%s4314] sm:$0x1]
        %4316 = vadd.xlane.f32.xlu0 %v4311
        %v4317 = vpop.xlane.xlu0 %4316
        %v4318 = vmul.f32 %v4317, %v607
        %v4319 = vsub.f32 %v4311, %v4318
        %v4320 = vmul.f32 %v4319, %v4319
        %4321 = vadd.xlane.f32.xlu0 %v4320
        %v4322 = vpop.xlane.xlu0 %4321
        %v4323 = vmul.f32 %v4322, %v607
        %v4324 = vadd.f32 %v4323, 1e-06
        %v4325 = vrsqrt.pop %v4324
        %v4326 = vmul.f32 %v4319, %v4325
        %v4328 = vlaneseq
        %v4329 = vshrl.u32 %v4328, 7
        %v4330 = vsub.s32 0, %v4329
        %v4331 = vrot.slane %v4313, %v4330
        %v4333 = vmul.f32 %v4326, %v4331
        %v4335 = vlaneseq
        %v4336 = vshrl.u32 %v4335, 7
        %v4337 = vsub.s32 0, %v4336
        %v4338 = vrot.slane %v4315, %v4337
        %v4340 = vadd.f32 %v4333, %v4338
        %v4341 = vpack.c.bf16 %v4340, %v4340
        %s4342 = scalar_lea.vmem [#allocation9], 576
        %v4343 = vld [vmem:[%s4342] sm:$0xff]
        %v4344 = vld [vmem:[%s4342 + $0x8] sm:$0xf]
        %v4345 = vld [vmem:[%s4342 + $0xc] sm:$0xff]
        %v4346 = vld [vmem:[%s4342 + $0x14] sm:$0xf]
        %v4347 = vld [vmem:[%s4342 + $0x18] sm:$0xff]
        %v4348 = vld [vmem:[%s4342 + $0x20] sm:$0xf]
        %v4349 = vld [vmem:[%s4342 + $0x24] sm:$0xff]
        %v4350 = vld [vmem:[%s4342 + $0x2c] sm:$0xf]
        %v4351 = vld [vmem:[%s4342 + $0x30] sm:$0xff]
        %v4352 = vld [vmem:[%s4342 + $0x38] sm:$0xf]
        %v4353 = vld [vmem:[%s4342 + $0x3c] sm:$0xff]
        %v4354 = vld [vmem:[%s4342 + $0x44] sm:$0xf]
        %v4355 = vld [vmem:[%s4342 + $0x48] sm:$0xff]
        %v4356 = vld [vmem:[%s4342 + $0x50] sm:$0xf]
        %v4357 = vld [vmem:[%s4342 + $0x54] sm:$0xff]
        %v4358 = vld [vmem:[%s4342 + $0x5c] sm:$0xf]
        %v4359 = vld [vmem:[%s4342 + $0x60] sm:$0xff]
        %v4360 = vld [vmem:[%s4342 + $0x68] sm:$0xf]
        %v4361 = vld [vmem:[%s4342 + $0x6c] sm:$0xff]
        %v4362 = vld [vmem:[%s4342 + $0x74] sm:$0xf]
        %v4363 = vld [vmem:[%s4342 + $0x78] sm:$0xff]
        %v4364 = vld [vmem:[%s4342 + $0x80] sm:$0xf]
        %v4365 = vld [vmem:[%s4342 + $0x84] sm:$0xff]
        %v4366 = vld [vmem:[%s4342 + $0x8c] sm:$0xf]
        %v4367 = vld [vmem:[%s4342 + $0x90] sm:$0xff]
        %v4368 = vld [vmem:[%s4342 + $0x98] sm:$0xf]
        %v4369 = vld [vmem:[%s4342 + $0x9c] sm:$0xff]
        %v4370 = vld [vmem:[%s4342 + $0xa4] sm:$0xf]
        %v4371 = vld [vmem:[%s4342 + $0xa8] sm:$0xff]
        %v4372 = vld [vmem:[%s4342 + $0xb0] sm:$0xf]
        %v4373 = vld [vmem:[%s4342 + $0xb4] sm:$0xff]
        %v4374 = vld [vmem:[%s4342 + $0xbc] sm:$0xf]
        %s4375 = scalar_lea.vmem [#allocation11], 9
        %v4376 = vld [vmem:[%s4375] sm:$0x7]
        %v4378 = vlaneseq
        %v4379 = vshrl.u32 %v4378, 7
        %v4380 = vsub.s32 0, %v4379
        %v4381 = vrot.slane %v4376, %v4380
        %v4382 = vlaneseq
        %v4383 = vshrl.u32 %v4382, 7
        %v4384 = vsub.s32 1, %v4383
        %v4385 = vrot.slane %v4376, %v4384
        %v4386 = vlaneseq
        %v4387 = vshrl.u32 %v4386, 7
        %v4388 = vsub.s32 2, %v4387
        %v4389 = vrot.slane %v4376, %v4388
        %v4425 = vunpack.c.l.b16 %v4343
        %v4426 = vunpack.c.h.b16 %v4343
        %v4427 = vunpack.c.l.b16 %v4344
        %v4428 = vunpack.c.l.b16 %v4345
        %v4429 = vunpack.c.h.b16 %v4345
        %v4430 = vunpack.c.l.b16 %v4346
        %v4431 = vunpack.c.l.b16 %v4347
        %v4432 = vunpack.c.h.b16 %v4347
        %v4433 = vunpack.c.l.b16 %v4348
        %v4434 = vunpack.c.l.b16 %v4349
        %v4435 = vunpack.c.h.b16 %v4349
        %v4436 = vunpack.c.l.b16 %v4350
        %v4437 = vunpack.c.l.b16 %v4351
        %v4438 = vunpack.c.h.b16 %v4351
        %v4439 = vunpack.c.l.b16 %v4352
        %v4440 = vunpack.c.l.b16 %v4353
        %v4441 = vunpack.c.h.b16 %v4353
        %v4442 = vunpack.c.l.b16 %v4354
        %v4443 = vunpack.c.l.b16 %v4355
        %v4444 = vunpack.c.h.b16 %v4355
        %v4445 = vunpack.c.l.b16 %v4356
        %v4446 = vunpack.c.l.b16 %v4357
        %v4447 = vunpack.c.h.b16 %v4357
        %v4448 = vunpack.c.l.b16 %v4358
        %v4449 = vunpack.c.l.b16 %v4359
        %v4450 = vunpack.c.h.b16 %v4359
        %v4451 = vunpack.c.l.b16 %v4360
        %v4452 = vunpack.c.l.b16 %v4361
        %v4453 = vunpack.c.h.b16 %v4361
        %v4454 = vunpack.c.l.b16 %v4362
        %v4455 = vunpack.c.l.b16 %v4363
        %v4456 = vunpack.c.h.b16 %v4363
        %v4457 = vunpack.c.l.b16 %v4364
        %v4458 = vunpack.c.l.b16 %v4365
        %v4459 = vunpack.c.h.b16 %v4365
        %v4460 = vunpack.c.l.b16 %v4366
        %v4461 = vunpack.c.l.b16 %v4367
        %v4462 = vunpack.c.h.b16 %v4367
        %v4463 = vunpack.c.l.b16 %v4368
        %v4464 = vunpack.c.l.b16 %v4369
        %v4465 = vunpack.c.h.b16 %v4369
        %v4466 = vunpack.c.l.b16 %v4370
        %v4467 = vunpack.c.l.b16 %v4371
        %v4468 = vunpack.c.h.b16 %v4371
        %v4469 = vunpack.c.l.b16 %v4372
        %v4470 = vunpack.c.l.b16 %v4373
        %v4471 = vunpack.c.h.b16 %v4373
        %v4472 = vunpack.c.l.b16 %v4374
        %v4473 = vpack.c.b16 %v4428, %v4425
        %v4474 = vpack.c.b16 %v4429, %v4426
        %v4475 = vpack.c.b16 %v4430, %v4427
        %v4476 = vpack.c.b16 %v4434, %v4431
        %v4477 = vpack.c.b16 %v4435, %v4432
        %v4478 = vpack.c.b16 %v4436, %v4433
        %v4479 = vpack.c.b16 %v4440, %v4437
        %v4480 = vpack.c.b16 %v4441, %v4438
        %v4481 = vpack.c.b16 %v4442, %v4439
        %v4482 = vpack.c.b16 %v4446, %v4443
        %v4483 = vpack.c.b16 %v4447, %v4444
        %v4484 = vpack.c.b16 %v4448, %v4445
        %v4485 = vpack.c.b16 %v4452, %v4449
        %v4486 = vpack.c.b16 %v4453, %v4450
        %v4487 = vpack.c.b16 %v4454, %v4451
        %v4488 = vpack.c.b16 %v4458, %v4455
        %v4489 = vpack.c.b16 %v4459, %v4456
        %v4490 = vpack.c.b16 %v4460, %v4457
        %v4491 = vpack.c.b16 %v4464, %v4461
        %v4492 = vpack.c.b16 %v4465, %v4462
        %v4493 = vpack.c.b16 %v4466, %v4463
        %v4494 = vpack.c.b16 %v4470, %v4467
        %v4495 = vpack.c.b16 %v4471, %v4468
        %v4496 = vpack.c.b16 %v4472, %v4469
        %4521 = vmatprep.subr.bf16.mxu0 %v4495
        %4522 = vmatpush1.bf16.msra.mxu0 %v4494
        %4523 = vmatprep.subr.bf16.mxu0 %v4492
        %4524 = vmatpush1.bf16.msra.mxu0 %v4491
        %4525 = vmatprep.subr.bf16.mxu0 %v4489
        %4526 = vmatpush1.bf16.msra.mxu0 %v4488
        %4527 = vmatprep.subr.bf16.mxu0 %v4486
        %4528 = vmatpush1.bf16.msra.mxu0 %v4485
        %4529 = vmatprep.subr.bf16.mxu0 %v4483
        %4530 = vmatpush1.bf16.msra.mxu0 %v4482
        %4531 = vmatprep.subr.bf16.mxu0 %v4480
        %4532 = vmatpush1.bf16.msra.mxu0 %v4479
        %4533 = vmatprep.subr.bf16.mxu0 %v4477
        %4534 = vmatpush1.bf16.msra.mxu0 %v4476
        %4535 = vmatprep.subr.bf16.mxu0 %v4474
        %4536 = vmatpush1.bf16.msra.mxu0 %v4473
        %4537 = vmatprep.subr.bf16.mxu0 0
        %4538 = vmatpush2.bf16.msra.mxu0 0
        %4539 = vmatprep.subr.bf16.mxu0 0
        %4540 = vmatpush2.bf16.msra.mxu0 0
        %4541 = vmatprep.subr.bf16.mxu0 0
        %4542 = vmatpush2.bf16.msra.mxu0 0
        %4543 = vmatprep.subr.bf16.mxu0 0
        %4544 = vmatpush2.bf16.msra.mxu0 0
        %4545 = vmatprep.subr.bf16.mxu0 0
        %4546 = vmatpush2.bf16.msra.mxu0 0
        %4547 = vmatprep.subr.bf16.mxu0 0
        %4548 = vmatpush2.bf16.msra.mxu0 0
        %4549 = vmatprep.subr.bf16.mxu0 0
        %4550 = vmatpush2.bf16.msra.mxu0 0
        %4551 = vmatprep.subr.bf16.mxu0 0
        %4552 = vmatpush2.bf16.msra.mxu0 0
        %4553 = vmatprep.mubr.bf16.mxu0 0
        %4554 = vmatmul.mubr.bf16.gmra.mxu0 %v4341
        %v4555 = vpop.f32.mrf.mxu0
        %v4556 = vadd.f32 %v4381, %v4555
        %v4557 = vpop.f32.mrf.mxu0
        %v4558 = vadd.f32 %v4385, %v4557
        %v4559 = vpop.f32.mrf.mxu0
        %v4560 = vpop.f32.mrf.mxu0
        %4561 = vdwg.mxu0
        %4562 = vmatprep.subr.bf16.mxu0 0
        %4563 = vmatpush1.bf16.msra.mxu0 %v4496
        %4564 = vmatprep.subr.bf16.mxu0 0
        %4565 = vmatpush1.bf16.msra.mxu0 %v4493
        %4566 = vmatprep.subr.bf16.mxu0 0
        %4567 = vmatpush1.bf16.msra.mxu0 %v4490
        %4568 = vmatprep.subr.bf16.mxu0 0
        %4569 = vmatpush1.bf16.msra.mxu0 %v4487
        %4570 = vmatprep.subr.bf16.mxu0 0
        %4571 = vmatpush1.bf16.msra.mxu0 %v4484
        %4572 = vmatprep.subr.bf16.mxu0 0
        %4573 = vmatpush1.bf16.msra.mxu0 %v4481
        %4574 = vmatprep.subr.bf16.mxu0 0
        %4575 = vmatpush1.bf16.msra.mxu0 %v4478
        %4576 = vmatprep.subr.bf16.mxu0 0
        %4577 = vmatpush1.bf16.msra.mxu0 %v4475
        %4578 = vmatprep.subr.bf16.mxu0 0
        %4579 = vmatpush2.bf16.msra.mxu0 0
        %4580 = vmatprep.subr.bf16.mxu0 0
        %4581 = vmatpush2.bf16.msra.mxu0 0
        %4582 = vmatprep.subr.bf16.mxu0 0
        %4583 = vmatpush2.bf16.msra.mxu0 0
        %4584 = vmatprep.subr.bf16.mxu0 0
        %4585 = vmatpush2.bf16.msra.mxu0 0
        %4586 = vmatprep.subr.bf16.mxu0 0
        %4587 = vmatpush2.bf16.msra.mxu0 0
        %4588 = vmatprep.subr.bf16.mxu0 0
        %4589 = vmatpush2.bf16.msra.mxu0 0
        %4590 = vmatprep.subr.bf16.mxu0 0
        %4591 = vmatpush2.bf16.msra.mxu0 0
        %4592 = vmatprep.subr.bf16.mxu0 0
        %4593 = vmatpush2.bf16.msra.mxu0 0
        %4594 = vmatprep.mubr.bf16.mxu0 0
        %4595 = vmatmul.mubr.bf16.gmra.mxu0 %v4341
        %v4596 = vpop.f32.mrf.mxu0
        %v4597 = vadd.f32 %v4389, %v4596
        %v4598 = vpop.f32.mrf.mxu0
        %v4599 = vpop.f32.mrf.mxu0
        %v4600 = vpop.f32.mrf.mxu0
        %4601 = vdwg.mxu0
        %v4602 = vpack.c.bf16 %v4556, %v4556
        %v4603 = vpack.c.bf16 %v4558, %v4558
        %v4604 = vpack.c.bf16 %v4597, %v4597
        %v4606 = vsel %vm893, %v4602, 0
        %v4609 = vsel %vm893, %v4603, 0
        %4611 = vmatprep.subr.bf16.mxu0 0
        %4612 = vmatpush1.bf16.xpose.msra.mxu0 0
        %4613 = vmatprep.subr.bf16.mxu0 0
        %4614 = vmatpush1.bf16.xpose.msra.mxu0 0
        %4615 = vmatprep.subr.bf16.mxu0 0
        %4616 = vmatpush1.bf16.xpose.msra.mxu0 0
        %4617 = vmatprep.subr.bf16.mxu0 0
        %4618 = vmatpush1.bf16.xpose.msra.mxu0 0
        %4619 = vmatprep.subr.bf16.mxu0 0
        %4620 = vmatpush1.bf16.xpose.msra.mxu0 0
        %4621 = vmatprep.subr.bf16.mxu0 0
        %4622 = vmatpush1.bf16.xpose.msra.mxu0 0
        %4623 = vmatprep.subr.bf16.mxu0 0
        %4624 = vmatpush1.bf16.xpose.msra.mxu0 0
        %4625 = vmatprep.subr.bf16.mxu0 0
        %4626 = vmatpush1.bf16.xpose.msra.mxu0 %v4609
        %4627 = vmatprep.subr.bf16.mxu0 0
        %4628 = vmatpush2.bf16.xpose.msra.mxu0 0
        %4629 = vmatprep.subr.bf16.mxu0 0
        %4630 = vmatpush2.bf16.xpose.msra.mxu0 0
        %4631 = vmatprep.subr.bf16.mxu0 0
        %4632 = vmatpush2.bf16.xpose.msra.mxu0 0
        %4633 = vmatprep.subr.bf16.mxu0 0
        %4634 = vmatpush2.bf16.xpose.msra.mxu0 0
        %4635 = vmatprep.subr.bf16.mxu0 0
        %4636 = vmatpush2.bf16.xpose.msra.mxu0 0
        %4637 = vmatprep.subr.bf16.mxu0 0
        %4638 = vmatpush2.bf16.xpose.msra.mxu0 0
        %4639 = vmatprep.subr.bf16.mxu0 0
        %4640 = vmatpush2.bf16.xpose.msra.mxu0 0
        %4641 = vmatprep.subr.bf16.mxu0 0
        %4642 = vmatpush2.bf16.xpose.msra.mxu0 0
        %4643 = vmatprep.mubr.bf16.mxu0 0
        %4644 = vmatmul.mubr.bf16.gmra.mxu0 %v4606
        %v4645 = vpop.f32.mrf.mxu0
        %v4646 = vadd.f32 0.0, %v4645
        %v4647 = vpop.f32.mrf.mxu0
        %v4648 = vpop.f32.mrf.mxu0
        %v4649 = vpop.f32.mrf.mxu0
        %4650 = vdwg.mxu0
        %v4651 = vsel %vm940, %v4646, -inf
        %4652 = vmax.xlane.f32.xlu0 %v4651
        %v4653 = vpop.xlane.xlu0 %4652
        %v4654 = vsub.f32 %v4646, %v4653
        %v4655 = vmul.f32 %v4654, 1.442695
        %v4656 = vpow.pop %v4655
        %v4657 = vsel %vm940, %v4656, 0.0
        %4658 = vadd.xlane.f32.xlu0 %v4657
        %v4659 = vpop.xlane.xlu0 %4658
        %v4660 = vrcp.pop %v4659
        %v4661 = vmul.f32 %v4656, %v4660
        %v4662 = vpack.c.bf16 %v4661, %v4661
        %v4664 = vsel %vm940, %v4662, 0
        %v4667 = vsel %vm956, %v4604, 0
        %4669 = vmatprep.subr.bf16.mxu0 0
        %4670 = vmatpush1.bf16.msra.mxu0 0
        %4671 = vmatprep.subr.bf16.mxu0 0
        %4672 = vmatpush1.bf16.msra.mxu0 0
        %4673 = vmatprep.subr.bf16.mxu0 0
        %4674 = vmatpush1.bf16.msra.mxu0 0
        %4675 = vmatprep.subr.bf16.mxu0 0
        %4676 = vmatpush1.bf16.msra.mxu0 0
        %4677 = vmatprep.subr.bf16.mxu0 0
        %4678 = vmatpush1.bf16.msra.mxu0 0
        %4679 = vmatprep.subr.bf16.mxu0 0
        %4680 = vmatpush1.bf16.msra.mxu0 0
        %4681 = vmatprep.subr.bf16.mxu0 0
        %4682 = vmatpush1.bf16.msra.mxu0 0
        %4683 = vmatprep.subr.bf16.mxu0 0
        %4684 = vmatpush1.bf16.msra.mxu0 %v4667
        %4685 = vmatprep.subr.bf16.mxu0 0
        %4686 = vmatpush2.bf16.msra.mxu0 0
        %4687 = vmatprep.subr.bf16.mxu0 0
        %4688 = vmatpush2.bf16.msra.mxu0 0
        %4689 = vmatprep.subr.bf16.mxu0 0
        %4690 = vmatpush2.bf16.msra.mxu0 0
        %4691 = vmatprep.subr.bf16.mxu0 0
        %4692 = vmatpush2.bf16.msra.mxu0 0
        %4693 = vmatprep.subr.bf16.mxu0 0
        %4694 = vmatpush2.bf16.msra.mxu0 0
        %4695 = vmatprep.subr.bf16.mxu0 0
        %4696 = vmatpush2.bf16.msra.mxu0 0
        %4697 = vmatprep.subr.bf16.mxu0 0
        %4698 = vmatpush2.bf16.msra.mxu0 0
        %4699 = vmatprep.subr.bf16.mxu0 0
        %4700 = vmatpush2.bf16.msra.mxu0 0
        %4701 = vmatprep.mubr.bf16.mxu0 0
        %4702 = vmatmul.mubr.bf16.gmra.mxu0 %v4664
        %v4703 = vpop.f32.mrf.mxu0
        %v4704 = vadd.f32 0.0, %v4703
        %v4705 = vpop.f32.mrf.mxu0
        %v4706 = vpop.f32.mrf.mxu0
        %v4707 = vpop.f32.mrf.mxu0
        %4708 = vdwg.mxu0
        %4709 = vst.msk [vmem:[#allocation2] sm:$0xff] %vm893, %v4704
        %4711 = vrot.lane.b32.xlu0 %v4602, 96
        %v4712 = vpop.permute.xlu0 %4711
        %4714 = vrot.lane.b32.xlu0 %v4603, 96
        %v4715 = vpop.permute.xlu0 %4714
        %v4717 = vsel %vm893, %v4712, 0
        %v4720 = vsel %vm893, %v4715, 0
        %4722 = vmatprep.subr.bf16.mxu0 0
        %4723 = vmatpush1.bf16.xpose.msra.mxu0 0
        %4724 = vmatprep.subr.bf16.mxu0 0
        %4725 = vmatpush1.bf16.xpose.msra.mxu0 0
        %4726 = vmatprep.subr.bf16.mxu0 0
        %4727 = vmatpush1.bf16.xpose.msra.mxu0 0
        %4728 = vmatprep.subr.bf16.mxu0 0
        %4729 = vmatpush1.bf16.xpose.msra.mxu0 0
        %4730 = vmatprep.subr.bf16.mxu0 0
        %4731 = vmatpush1.bf16.xpose.msra.mxu0 0
        %4732 = vmatprep.subr.bf16.mxu0 0
        %4733 = vmatpush1.bf16.xpose.msra.mxu0 0
        %4734 = vmatprep.subr.bf16.mxu0 0
        %4735 = vmatpush1.bf16.xpose.msra.mxu0 0
        %4736 = vmatprep.subr.bf16.mxu0 0
        %4737 = vmatpush1.bf16.xpose.msra.mxu0 %v4720
        %4738 = vmatprep.subr.bf16.mxu0 0
        %4739 = vmatpush2.bf16.xpose.msra.mxu0 0
        %4740 = vmatprep.subr.bf16.mxu0 0
        %4741 = vmatpush2.bf16.xpose.msra.mxu0 0
        %4742 = vmatprep.subr.bf16.mxu0 0
        %4743 = vmatpush2.bf16.xpose.msra.mxu0 0
        %4744 = vmatprep.subr.bf16.mxu0 0
        %4745 = vmatpush2.bf16.xpose.msra.mxu0 0
        %4746 = vmatprep.subr.bf16.mxu0 0
        %4747 = vmatpush2.bf16.xpose.msra.mxu0 0
        %4748 = vmatprep.subr.bf16.mxu0 0
        %4749 = vmatpush2.bf16.xpose.msra.mxu0 0
        %4750 = vmatprep.subr.bf16.mxu0 0
        %4751 = vmatpush2.bf16.xpose.msra.mxu0 0
        %4752 = vmatprep.subr.bf16.mxu0 0
        %4753 = vmatpush2.bf16.xpose.msra.mxu0 0
        %4754 = vmatprep.mubr.bf16.mxu0 0
        %4755 = vmatmul.mubr.bf16.gmra.mxu0 %v4717
        %v4756 = vpop.f32.mrf.mxu0
        %v4757 = vadd.f32 0.0, %v4756
        %v4758 = vpop.f32.mrf.mxu0
        %v4759 = vpop.f32.mrf.mxu0
        %v4760 = vpop.f32.mrf.mxu0
        %4761 = vdwg.mxu0
        %v4762 = vsel %vm940, %v4757, -inf
        %4763 = vmax.xlane.f32.xlu0 %v4762
        %v4764 = vpop.xlane.xlu0 %4763
        %v4765 = vsub.f32 %v4757, %v4764
        %v4766 = vmul.f32 %v4765, 1.442695
        %v4767 = vpow.pop %v4766
        %v4768 = vsel %vm940, %v4767, 0.0
        %4769 = vadd.xlane.f32.xlu0 %v4768
        %v4770 = vpop.xlane.xlu0 %4769
        %v4771 = vrcp.pop %v4770
        %v4772 = vmul.f32 %v4767, %v4771
        %v4773 = vpack.c.bf16 %v4772, %v4772
        %4775 = vrot.lane.b32.xlu0 %v4604, 96
        %v4776 = vpop.permute.xlu0 %4775
        %v4778 = vsel %vm940, %v4773, 0
        %v4781 = vsel %vm956, %v4776, 0
        %4783 = vmatprep.subr.bf16.mxu0 0
        %4784 = vmatpush1.bf16.msra.mxu0 0
        %4785 = vmatprep.subr.bf16.mxu0 0
        %4786 = vmatpush1.bf16.msra.mxu0 0
        %4787 = vmatprep.subr.bf16.mxu0 0
        %4788 = vmatpush1.bf16.msra.mxu0 0
        %4789 = vmatprep.subr.bf16.mxu0 0
        %4790 = vmatpush1.bf16.msra.mxu0 0
        %4791 = vmatprep.subr.bf16.mxu0 0
        %4792 = vmatpush1.bf16.msra.mxu0 0
        %4793 = vmatprep.subr.bf16.mxu0 0
        %4794 = vmatpush1.bf16.msra.mxu0 0
        %4795 = vmatprep.subr.bf16.mxu0 0
        %4796 = vmatpush1.bf16.msra.mxu0 0
        %4797 = vmatprep.subr.bf16.mxu0 0
        %4798 = vmatpush1.bf16.msra.mxu0 %v4781
        %4799 = vmatprep.subr.bf16.mxu0 0
        %4800 = vmatpush2.bf16.msra.mxu0 0
        %4801 = vmatprep.subr.bf16.mxu0 0
        %4802 = vmatpush2.bf16.msra.mxu0 0
        %4803 = vmatprep.subr.bf16.mxu0 0
        %4804 = vmatpush2.bf16.msra.mxu0 0
        %4805 = vmatprep.subr.bf16.mxu0 0
        %4806 = vmatpush2.bf16.msra.mxu0 0
        %4807 = vmatprep.subr.bf16.mxu0 0
        %4808 = vmatpush2.bf16.msra.mxu0 0
        %4809 = vmatprep.subr.bf16.mxu0 0
        %4810 = vmatpush2.bf16.msra.mxu0 0
        %4811 = vmatprep.subr.bf16.mxu0 0
        %4812 = vmatpush2.bf16.msra.mxu0 0
        %4813 = vmatprep.subr.bf16.mxu0 0
        %4814 = vmatpush2.bf16.msra.mxu0 0
        %4815 = vmatprep.mubr.bf16.mxu0 0
        %4816 = vmatmul.mubr.bf16.gmra.mxu0 %v4778
        %v4817 = vpop.f32.mrf.mxu0
        %v4818 = vadd.f32 0.0, %v4817
        %v4819 = vpop.f32.mrf.mxu0
        %v4820 = vpop.f32.mrf.mxu0
        %v4821 = vpop.f32.mrf.mxu0
        %4822 = vdwg.mxu0
        %4824 = vrot.lane.b32.xlu0 %v4818, 32
        %v4825 = vpop.permute.xlu0 %4824
        %4827 = vst.msk [vmem:[#allocation2] sm:$0xff] %vm1118, %v4825
        %4828 = vrot.lane.b32.xlu0 %v4602, 64
        %v4829 = vpop.permute.xlu0 %4828
        %4830 = vrot.lane.b32.xlu0 %v4603, 64
        %v4831 = vpop.permute.xlu0 %4830
        %v4833 = vsel %vm893, %v4829, 0
        %v4836 = vsel %vm893, %v4831, 0
        %4838 = vmatprep.subr.bf16.mxu0 0
        %4839 = vmatpush1.bf16.xpose.msra.mxu0 0
        %4840 = vmatprep.subr.bf16.mxu0 0
        %4841 = vmatpush1.bf16.xpose.msra.mxu0 0
        %4842 = vmatprep.subr.bf16.mxu0 0
        %4843 = vmatpush1.bf16.xpose.msra.mxu0 0
        %4844 = vmatprep.subr.bf16.mxu0 0
        %4845 = vmatpush1.bf16.xpose.msra.mxu0 0
        %4846 = vmatprep.subr.bf16.mxu0 0
        %4847 = vmatpush1.bf16.xpose.msra.mxu0 0
        %4848 = vmatprep.subr.bf16.mxu0 0
        %4849 = vmatpush1.bf16.xpose.msra.mxu0 0
        %4850 = vmatprep.subr.bf16.mxu0 0
        %4851 = vmatpush1.bf16.xpose.msra.mxu0 0
        %4852 = vmatprep.subr.bf16.mxu0 0
        %4853 = vmatpush1.bf16.xpose.msra.mxu0 %v4836
        %4854 = vmatprep.subr.bf16.mxu0 0
        %4855 = vmatpush2.bf16.xpose.msra.mxu0 0
        %4856 = vmatprep.subr.bf16.mxu0 0
        %4857 = vmatpush2.bf16.xpose.msra.mxu0 0
        %4858 = vmatprep.subr.bf16.mxu0 0
        %4859 = vmatpush2.bf16.xpose.msra.mxu0 0
        %4860 = vmatprep.subr.bf16.mxu0 0
        %4861 = vmatpush2.bf16.xpose.msra.mxu0 0
        %4862 = vmatprep.subr.bf16.mxu0 0
        %4863 = vmatpush2.bf16.xpose.msra.mxu0 0
        %4864 = vmatprep.subr.bf16.mxu0 0
        %4865 = vmatpush2.bf16.xpose.msra.mxu0 0
        %4866 = vmatprep.subr.bf16.mxu0 0
        %4867 = vmatpush2.bf16.xpose.msra.mxu0 0
        %4868 = vmatprep.subr.bf16.mxu0 0
        %4869 = vmatpush2.bf16.xpose.msra.mxu0 0
        %4870 = vmatprep.mubr.bf16.mxu0 0
        %4871 = vmatmul.mubr.bf16.gmra.mxu0 %v4833
        %v4872 = vpop.f32.mrf.mxu0
        %v4873 = vadd.f32 0.0, %v4872
        %v4874 = vpop.f32.mrf.mxu0
        %v4875 = vpop.f32.mrf.mxu0
        %v4876 = vpop.f32.mrf.mxu0
        %4877 = vdwg.mxu0
        %v4878 = vsel %vm940, %v4873, -inf
        %4879 = vmax.xlane.f32.xlu0 %v4878
        %v4880 = vpop.xlane.xlu0 %4879
        %v4881 = vsub.f32 %v4873, %v4880
        %v4882 = vmul.f32 %v4881, 1.442695
        %v4883 = vpow.pop %v4882
        %v4884 = vsel %vm940, %v4883, 0.0
        %4885 = vadd.xlane.f32.xlu0 %v4884
        %v4886 = vpop.xlane.xlu0 %4885
        %v4887 = vrcp.pop %v4886
        %v4888 = vmul.f32 %v4883, %v4887
        %v4889 = vpack.c.bf16 %v4888, %v4888
        %4890 = vrot.lane.b32.xlu0 %v4604, 64
        %v4891 = vpop.permute.xlu0 %4890
        %v4893 = vsel %vm940, %v4889, 0
        %v4896 = vsel %vm956, %v4891, 0
        %4898 = vmatprep.subr.bf16.mxu0 0
        %4899 = vmatpush1.bf16.msra.mxu0 0
        %4900 = vmatprep.subr.bf16.mxu0 0
        %4901 = vmatpush1.bf16.msra.mxu0 0
        %4902 = vmatprep.subr.bf16.mxu0 0
        %4903 = vmatpush1.bf16.msra.mxu0 0
        %4904 = vmatprep.subr.bf16.mxu0 0
        %4905 = vmatpush1.bf16.msra.mxu0 0
        %4906 = vmatprep.subr.bf16.mxu0 0
        %4907 = vmatpush1.bf16.msra.mxu0 0
        %4908 = vmatprep.subr.bf16.mxu0 0
        %4909 = vmatpush1.bf16.msra.mxu0 0
        %4910 = vmatprep.subr.bf16.mxu0 0
        %4911 = vmatpush1.bf16.msra.mxu0 0
        %4912 = vmatprep.subr.bf16.mxu0 0
        %4913 = vmatpush1.bf16.msra.mxu0 %v4896
        %4914 = vmatprep.subr.bf16.mxu0 0
        %4915 = vmatpush2.bf16.msra.mxu0 0
        %4916 = vmatprep.subr.bf16.mxu0 0
        %4917 = vmatpush2.bf16.msra.mxu0 0
        %4918 = vmatprep.subr.bf16.mxu0 0
        %4919 = vmatpush2.bf16.msra.mxu0 0
        %4920 = vmatprep.subr.bf16.mxu0 0
        %4921 = vmatpush2.bf16.msra.mxu0 0
        %4922 = vmatprep.subr.bf16.mxu0 0
        %4923 = vmatpush2.bf16.msra.mxu0 0
        %4924 = vmatprep.subr.bf16.mxu0 0
        %4925 = vmatpush2.bf16.msra.mxu0 0
        %4926 = vmatprep.subr.bf16.mxu0 0
        %4927 = vmatpush2.bf16.msra.mxu0 0
        %4928 = vmatprep.subr.bf16.mxu0 0
        %4929 = vmatpush2.bf16.msra.mxu0 0
        %4930 = vmatprep.mubr.bf16.mxu0 0
        %4931 = vmatmul.mubr.bf16.gmra.mxu0 %v4893
        %v4932 = vpop.f32.mrf.mxu0
        %v4933 = vadd.f32 0.0, %v4932
        %v4934 = vpop.f32.mrf.mxu0
        %v4935 = vpop.f32.mrf.mxu0
        %v4936 = vpop.f32.mrf.mxu0
        %4937 = vdwg.mxu0
        %4939 = vrot.lane.b32.xlu0 %v4933, 64
        %v4940 = vpop.permute.xlu0 %4939
        %4942 = vst.msk [vmem:[#allocation2] sm:$0xff] %vm1234, %v4940
        %4943 = vrot.lane.b32.xlu0 %v4602, 32
        %v4944 = vpop.permute.xlu0 %4943
        %4945 = vrot.lane.b32.xlu0 %v4603, 32
        %v4946 = vpop.permute.xlu0 %4945
        %v4948 = vsel %vm893, %v4944, 0
        %v4951 = vsel %vm893, %v4946, 0
        %4953 = vmatprep.subr.bf16.mxu0 0
        %4954 = vmatpush1.bf16.xpose.msra.mxu0 0
        %4955 = vmatprep.subr.bf16.mxu0 0
        %4956 = vmatpush1.bf16.xpose.msra.mxu0 0
        %4957 = vmatprep.subr.bf16.mxu0 0
        %4958 = vmatpush1.bf16.xpose.msra.mxu0 0
        %4959 = vmatprep.subr.bf16.mxu0 0
        %4960 = vmatpush1.bf16.xpose.msra.mxu0 0
        %4961 = vmatprep.subr.bf16.mxu0 0
        %4962 = vmatpush1.bf16.xpose.msra.mxu0 0
        %4963 = vmatprep.subr.bf16.mxu0 0
        %4964 = vmatpush1.bf16.xpose.msra.mxu0 0
        %4965 = vmatprep.subr.bf16.mxu0 0
        %4966 = vmatpush1.bf16.xpose.msra.mxu0 0
        %4967 = vmatprep.subr.bf16.mxu0 0
        %4968 = vmatpush1.bf16.xpose.msra.mxu0 %v4951
        %4969 = vmatprep.subr.bf16.mxu0 0
        %4970 = vmatpush2.bf16.xpose.msra.mxu0 0
        %4971 = vmatprep.subr.bf16.mxu0 0
        %4972 = vmatpush2.bf16.xpose.msra.mxu0 0
        %4973 = vmatprep.subr.bf16.mxu0 0
        %4974 = vmatpush2.bf16.xpose.msra.mxu0 0
        %4975 = vmatprep.subr.bf16.mxu0 0
        %4976 = vmatpush2.bf16.xpose.msra.mxu0 0
        %4977 = vmatprep.subr.bf16.mxu0 0
        %4978 = vmatpush2.bf16.xpose.msra.mxu0 0
        %4979 = vmatprep.subr.bf16.mxu0 0
        %4980 = vmatpush2.bf16.xpose.msra.mxu0 0
        %4981 = vmatprep.subr.bf16.mxu0 0
        %4982 = vmatpush2.bf16.xpose.msra.mxu0 0
        %4983 = vmatprep.subr.bf16.mxu0 0
        %4984 = vmatpush2.bf16.xpose.msra.mxu0 0
        %4985 = vmatprep.mubr.bf16.mxu0 0
        %4986 = vmatmul.mubr.bf16.gmra.mxu0 %v4948
        %v4987 = vpop.f32.mrf.mxu0
        %v4988 = vadd.f32 0.0, %v4987
        %v4989 = vpop.f32.mrf.mxu0
        %v4990 = vpop.f32.mrf.mxu0
        %v4991 = vpop.f32.mrf.mxu0
        %4992 = vdwg.mxu0
        %v4993 = vsel %vm940, %v4988, -inf
        %4994 = vmax.xlane.f32.xlu0 %v4993
        %v4995 = vpop.xlane.xlu0 %4994
        %v4996 = vsub.f32 %v4988, %v4995
        %v4997 = vmul.f32 %v4996, 1.442695
        %v4998 = vpow.pop %v4997
        %v4999 = vsel %vm940, %v4998, 0.0
        %5000 = vadd.xlane.f32.xlu0 %v4999
        %v5001 = vpop.xlane.xlu0 %5000
        %v5002 = vrcp.pop %v5001
        %v5003 = vmul.f32 %v4998, %v5002
        %v5004 = vpack.c.bf16 %v5003, %v5003
        %5005 = vrot.lane.b32.xlu0 %v4604, 32
        %v5006 = vpop.permute.xlu0 %5005
        %v5008 = vsel %vm940, %v5004, 0
        %v5011 = vsel %vm956, %v5006, 0
        %5013 = vmatprep.subr.bf16.mxu0 0
        %5014 = vmatpush1.bf16.msra.mxu0 0
        %5015 = vmatprep.subr.bf16.mxu0 0
        %5016 = vmatpush1.bf16.msra.mxu0 0
        %5017 = vmatprep.subr.bf16.mxu0 0
        %5018 = vmatpush1.bf16.msra.mxu0 0
        %5019 = vmatprep.subr.bf16.mxu0 0
        %5020 = vmatpush1.bf16.msra.mxu0 0
        %5021 = vmatprep.subr.bf16.mxu0 0
        %5022 = vmatpush1.bf16.msra.mxu0 0
        %5023 = vmatprep.subr.bf16.mxu0 0
        %5024 = vmatpush1.bf16.msra.mxu0 0
        %5025 = vmatprep.subr.bf16.mxu0 0
        %5026 = vmatpush1.bf16.msra.mxu0 0
        %5027 = vmatprep.subr.bf16.mxu0 0
        %5028 = vmatpush1.bf16.msra.mxu0 %v5011
        %5029 = vmatprep.subr.bf16.mxu0 0
        %5030 = vmatpush2.bf16.msra.mxu0 0
        %5031 = vmatprep.subr.bf16.mxu0 0
        %5032 = vmatpush2.bf16.msra.mxu0 0
        %5033 = vmatprep.subr.bf16.mxu0 0
        %5034 = vmatpush2.bf16.msra.mxu0 0
        %5035 = vmatprep.subr.bf16.mxu0 0
        %5036 = vmatpush2.bf16.msra.mxu0 0
        %5037 = vmatprep.subr.bf16.mxu0 0
        %5038 = vmatpush2.bf16.msra.mxu0 0
        %5039 = vmatprep.subr.bf16.mxu0 0
        %5040 = vmatpush2.bf16.msra.mxu0 0
        %5041 = vmatprep.subr.bf16.mxu0 0
        %5042 = vmatpush2.bf16.msra.mxu0 0
        %5043 = vmatprep.subr.bf16.mxu0 0
        %5044 = vmatpush2.bf16.msra.mxu0 0
        %5045 = vmatprep.mubr.bf16.mxu0 0
        %5046 = vmatmul.mubr.bf16.gmra.mxu0 %v5008
        %v5047 = vpop.f32.mrf.mxu0
        %v5048 = vadd.f32 0.0, %v5047
        %v5049 = vpop.f32.mrf.mxu0
        %v5050 = vpop.f32.mrf.mxu0
        %v5051 = vpop.f32.mrf.mxu0
        %5052 = vdwg.mxu0
        %5054 = vrot.lane.b32.xlu0 %v5048, 96
        %v5055 = vpop.permute.xlu0 %5054
        %5057 = vst.msk [vmem:[#allocation2] sm:$0xff] %vm1350, %v5055
        %v5058 = vld [vmem:[#allocation2] sm:$0xff]
        %v5059 = vpack.c.bf16 %v5058, %v5058
        %s5060 = scalar_lea.vmem [#allocation12], 192
        %v5061 = vld [vmem:[%s5060] sm:$0xf]
        %v5062 = vld [vmem:[%s5060 + $0x4] sm:$0xf]
        %v5063 = vld [vmem:[%s5060 + $0x8] sm:$0xf]
        %v5064 = vld [vmem:[%s5060 + $0xc] sm:$0xf]
        %v5065 = vld [vmem:[%s5060 + $0x10] sm:$0xf]
        %v5066 = vld [vmem:[%s5060 + $0x14] sm:$0xf]
        %v5067 = vld [vmem:[%s5060 + $0x18] sm:$0xf]
        %v5068 = vld [vmem:[%s5060 + $0x1c] sm:$0xf]
        %v5069 = vld [vmem:[%s5060 + $0x20] sm:$0xf]
        %v5070 = vld [vmem:[%s5060 + $0x24] sm:$0xf]
        %v5071 = vld [vmem:[%s5060 + $0x28] sm:$0xf]
        %v5072 = vld [vmem:[%s5060 + $0x2c] sm:$0xf]
        %v5073 = vld [vmem:[%s5060 + $0x30] sm:$0xf]
        %v5074 = vld [vmem:[%s5060 + $0x34] sm:$0xf]
        %v5075 = vld [vmem:[%s5060 + $0x38] sm:$0xf]
        %v5076 = vld [vmem:[%s5060 + $0x3c] sm:$0xf]
        %s5077 = scalar_lea.vmem %s6, 3
        %v5078 = vld [vmem:[%s5077] sm:$0x1]
        %v5080 = vlaneseq
        %v5081 = vshrl.u32 %v5080, 7
        %v5082 = vsub.s32 0, %v5081
        %v5083 = vrot.slane %v5078, %v5082
        %v5101 = vunpack.c.l.b16 %v5061
        %v5102 = vunpack.c.l.b16 %v5062
        %v5103 = vunpack.c.l.b16 %v5063
        %v5104 = vunpack.c.l.b16 %v5064
        %v5105 = vunpack.c.l.b16 %v5065
        %v5106 = vunpack.c.l.b16 %v5066
        %v5107 = vunpack.c.l.b16 %v5067
        %v5108 = vunpack.c.l.b16 %v5068
        %v5109 = vunpack.c.l.b16 %v5069
        %v5110 = vunpack.c.l.b16 %v5070
        %v5111 = vunpack.c.l.b16 %v5071
        %v5112 = vunpack.c.l.b16 %v5072
        %v5113 = vunpack.c.l.b16 %v5073
        %v5114 = vunpack.c.l.b16 %v5074
        %v5115 = vunpack.c.l.b16 %v5075
        %v5116 = vunpack.c.l.b16 %v5076
        %v5117 = vpack.c.b16 %v5102, %v5101
        %v5118 = vpack.c.b16 %v5104, %v5103
        %v5119 = vpack.c.b16 %v5106, %v5105
        %v5120 = vpack.c.b16 %v5108, %v5107
        %v5121 = vpack.c.b16 %v5110, %v5109
        %v5122 = vpack.c.b16 %v5112, %v5111
        %v5123 = vpack.c.b16 %v5114, %v5113
        %v5124 = vpack.c.b16 %v5116, %v5115
        %5133 = vmatprep.subr.bf16.mxu0 0
        %5134 = vmatpush1.bf16.msra.mxu0 %v5124
        %5135 = vmatprep.subr.bf16.mxu0 0
        %5136 = vmatpush1.bf16.msra.mxu0 %v5123
        %5137 = vmatprep.subr.bf16.mxu0 0
        %5138 = vmatpush1.bf16.msra.mxu0 %v5122
        %5139 = vmatprep.subr.bf16.mxu0 0
        %5140 = vmatpush1.bf16.msra.mxu0 %v5121
        %5141 = vmatprep.subr.bf16.mxu0 0
        %5142 = vmatpush1.bf16.msra.mxu0 %v5120
        %5143 = vmatprep.subr.bf16.mxu0 0
        %5144 = vmatpush1.bf16.msra.mxu0 %v5119
        %5145 = vmatprep.subr.bf16.mxu0 0
        %5146 = vmatpush1.bf16.msra.mxu0 %v5118
        %5147 = vmatprep.subr.bf16.mxu0 0
        %5148 = vmatpush1.bf16.msra.mxu0 %v5117
        %5149 = vmatprep.subr.bf16.mxu0 0
        %5150 = vmatpush2.bf16.msra.mxu0 0
        %5151 = vmatprep.subr.bf16.mxu0 0
        %5152 = vmatpush2.bf16.msra.mxu0 0
        %5153 = vmatprep.subr.bf16.mxu0 0
        %5154 = vmatpush2.bf16.msra.mxu0 0
        %5155 = vmatprep.subr.bf16.mxu0 0
        %5156 = vmatpush2.bf16.msra.mxu0 0
        %5157 = vmatprep.subr.bf16.mxu0 0
        %5158 = vmatpush2.bf16.msra.mxu0 0
        %5159 = vmatprep.subr.bf16.mxu0 0
        %5160 = vmatpush2.bf16.msra.mxu0 0
        %5161 = vmatprep.subr.bf16.mxu0 0
        %5162 = vmatpush2.bf16.msra.mxu0 0
        %5163 = vmatprep.subr.bf16.mxu0 0
        %5164 = vmatpush2.bf16.msra.mxu0 0
        %5165 = vmatprep.mubr.bf16.mxu0 0
        %5166 = vmatmul.mubr.bf16.gmra.mxu0 %v5059
        %v5167 = vpop.f32.mrf.mxu0
        %v5168 = vadd.f32 %v5083, %v5167
        %v5169 = vpop.f32.mrf.mxu0
        %v5170 = vpop.f32.mrf.mxu0
        %v5171 = vpop.f32.mrf.mxu0
        %5172 = vdwg.mxu0
        %v5173 = vadd.f32 %v4311, %v5168
        %s5174 = scalar_lea.vmem [#allocation14], 3
        %v5175 = vld [vmem:[%s5174] sm:$0x1]
        %s5176 = scalar_lea.vmem [#allocation15], 3
        %v5177 = vld [vmem:[%s5176] sm:$0x1]
        %5178 = vadd.xlane.f32.xlu0 %v5173
        %v5179 = vpop.xlane.xlu0 %5178
        %v5180 = vmul.f32 %v5179, %v607
        %v5181 = vsub.f32 %v5173, %v5180
        %v5182 = vmul.f32 %v5181, %v5181
        %5183 = vadd.xlane.f32.xlu0 %v5182
        %v5184 = vpop.xlane.xlu0 %5183
        %v5185 = vmul.f32 %v5184, %v607
        %v5186 = vadd.f32 %v5185, 1e-06
        %v5187 = vrsqrt.pop %v5186
        %v5188 = vmul.f32 %v5181, %v5187
        %v5190 = vlaneseq
        %v5191 = vshrl.u32 %v5190, 7
        %v5192 = vsub.s32 0, %v5191
        %v5193 = vrot.slane %v5175, %v5192
        %v5195 = vmul.f32 %v5188, %v5193
        %v5197 = vlaneseq
        %v5198 = vshrl.u32 %v5197, 7
        %v5199 = vsub.s32 0, %v5198
        %v5200 = vrot.slane %v5177, %v5199
        %v5202 = vadd.f32 %v5195, %v5200
        %v5203 = vpack.c.bf16 %v5202, %v5202
        %s5204 = scalar_lea.vmem [#allocation17], 384
        %v5205 = vld [vmem:[%s5204] sm:$0xff]
        %v5206 = vld [vmem:[%s5204 + $0x8] sm:$0xff]
        %v5207 = vld [vmem:[%s5204 + $0x10] sm:$0xff]
        %v5208 = vld [vmem:[%s5204 + $0x18] sm:$0xff]
        %v5209 = vld [vmem:[%s5204 + $0x20] sm:$0xff]
        %v5210 = vld [vmem:[%s5204 + $0x28] sm:$0xff]
        %v5211 = vld [vmem:[%s5204 + $0x30] sm:$0xff]
        %v5212 = vld [vmem:[%s5204 + $0x38] sm:$0xff]
        %v5213 = vld [vmem:[%s5204 + $0x40] sm:$0xff]
        %v5214 = vld [vmem:[%s5204 + $0x48] sm:$0xff]
        %v5215 = vld [vmem:[%s5204 + $0x50] sm:$0xff]
        %v5216 = vld [vmem:[%s5204 + $0x58] sm:$0xff]
        %v5217 = vld [vmem:[%s5204 + $0x60] sm:$0xff]
        %v5218 = vld [vmem:[%s5204 + $0x68] sm:$0xff]
        %v5219 = vld [vmem:[%s5204 + $0x70] sm:$0xff]
        %v5220 = vld [vmem:[%s5204 + $0x78] sm:$0xff]
        %s5221 = scalar_lea.vmem %s10, 6
        %v5222 = vld [vmem:[%s5221] sm:$0x3]
        %v5224 = vlaneseq
        %v5225 = vshrl.u32 %v5224, 7
        %v5226 = vsub.s32 0, %v5225
        %v5227 = vrot.slane %v5222, %v5226
        %v5228 = vlaneseq
        %v5229 = vshrl.u32 %v5228, 7
        %v5230 = vsub.s32 1, %v5229
        %v5231 = vrot.slane %v5222, %v5230
        %v5250 = vunpack.c.l.b16 %v5205
        %v5251 = vunpack.c.h.b16 %v5205
        %v5252 = vunpack.c.l.b16 %v5206
        %v5253 = vunpack.c.h.b16 %v5206
        %v5254 = vunpack.c.l.b16 %v5207
        %v5255 = vunpack.c.h.b16 %v5207
        %v5256 = vunpack.c.l.b16 %v5208
        %v5257 = vunpack.c.h.b16 %v5208
        %v5258 = vunpack.c.l.b16 %v5209
        %v5259 = vunpack.c.h.b16 %v5209
        %v5260 = vunpack.c.l.b16 %v5210
        %v5261 = vunpack.c.h.b16 %v5210
        %v5262 = vunpack.c.l.b16 %v5211
        %v5263 = vunpack.c.h.b16 %v5211
        %v5264 = vunpack.c.l.b16 %v5212
        %v5265 = vunpack.c.h.b16 %v5212
        %v5266 = vunpack.c.l.b16 %v5213
        %v5267 = vunpack.c.h.b16 %v5213
        %v5268 = vunpack.c.l.b16 %v5214
        %v5269 = vunpack.c.h.b16 %v5214
        %v5270 = vunpack.c.l.b16 %v5215
        %v5271 = vunpack.c.h.b16 %v5215
        %v5272 = vunpack.c.l.b16 %v5216
        %v5273 = vunpack.c.h.b16 %v5216
        %v5274 = vunpack.c.l.b16 %v5217
        %v5275 = vunpack.c.h.b16 %v5217
        %v5276 = vunpack.c.l.b16 %v5218
        %v5277 = vunpack.c.h.b16 %v5218
        %v5278 = vunpack.c.l.b16 %v5219
        %v5279 = vunpack.c.h.b16 %v5219
        %v5280 = vunpack.c.l.b16 %v5220
        %v5281 = vunpack.c.h.b16 %v5220
        %v5282 = vpack.c.b16 %v5252, %v5250
        %v5283 = vpack.c.b16 %v5253, %v5251
        %v5284 = vpack.c.b16 %v5256, %v5254
        %v5285 = vpack.c.b16 %v5257, %v5255
        %v5286 = vpack.c.b16 %v5260, %v5258
        %v5287 = vpack.c.b16 %v5261, %v5259
        %v5288 = vpack.c.b16 %v5264, %v5262
        %v5289 = vpack.c.b16 %v5265, %v5263
        %v5290 = vpack.c.b16 %v5268, %v5266
        %v5291 = vpack.c.b16 %v5269, %v5267
        %v5292 = vpack.c.b16 %v5272, %v5270
        %v5293 = vpack.c.b16 %v5273, %v5271
        %v5294 = vpack.c.b16 %v5276, %v5274
        %v5295 = vpack.c.b16 %v5277, %v5275
        %v5296 = vpack.c.b16 %v5280, %v5278
        %v5297 = vpack.c.b16 %v5281, %v5279
        %5314 = vmatprep.subr.bf16.mxu0 %v5297
        %5315 = vmatpush1.bf16.msra.mxu0 %v5296
        %5316 = vmatprep.subr.bf16.mxu0 %v5295
        %5317 = vmatpush1.bf16.msra.mxu0 %v5294
        %5318 = vmatprep.subr.bf16.mxu0 %v5293
        %5319 = vmatpush1.bf16.msra.mxu0 %v5292
        %5320 = vmatprep.subr.bf16.mxu0 %v5291
        %5321 = vmatpush1.bf16.msra.mxu0 %v5290
        %5322 = vmatprep.subr.bf16.mxu0 %v5289
        %5323 = vmatpush1.bf16.msra.mxu0 %v5288
        %5324 = vmatprep.subr.bf16.mxu0 %v5287
        %5325 = vmatpush1.bf16.msra.mxu0 %v5286
        %5326 = vmatprep.subr.bf16.mxu0 %v5285
        %5327 = vmatpush1.bf16.msra.mxu0 %v5284
        %5328 = vmatprep.subr.bf16.mxu0 %v5283
        %5329 = vmatpush1.bf16.msra.mxu0 %v5282
        %5330 = vmatprep.subr.bf16.mxu0 0
        %5331 = vmatpush2.bf16.msra.mxu0 0
        %5332 = vmatprep.subr.bf16.mxu0 0
        %5333 = vmatpush2.bf16.msra.mxu0 0
        %5334 = vmatprep.subr.bf16.mxu0 0
        %5335 = vmatpush2.bf16.msra.mxu0 0
        %5336 = vmatprep.subr.bf16.mxu0 0
        %5337 = vmatpush2.bf16.msra.mxu0 0
        %5338 = vmatprep.subr.bf16.mxu0 0
        %5339 = vmatpush2.bf16.msra.mxu0 0
        %5340 = vmatprep.subr.bf16.mxu0 0
        %5341 = vmatpush2.bf16.msra.mxu0 0
        %5342 = vmatprep.subr.bf16.mxu0 0
        %5343 = vmatpush2.bf16.msra.mxu0 0
        %5344 = vmatprep.subr.bf16.mxu0 0
        %5345 = vmatpush2.bf16.msra.mxu0 0
        %5346 = vmatprep.mubr.bf16.mxu0 0
        %5347 = vmatmul.mubr.bf16.gmra.mxu0 %v5203
        %v5348 = vpop.f32.mrf.mxu0
        %v5349 = vadd.f32 %v5227, %v5348
        %v5350 = vpop.f32.mrf.mxu0
        %v5351 = vadd.f32 %v5231, %v5350
        %v5352 = vpop.f32.mrf.mxu0
        %v5353 = vpop.f32.mrf.mxu0
        %5354 = vdwg.mxu0
        %v5355 = vmul.f32 %v5349, 0.5
        %v5356 = vmul.f32 %v5351, 0.5
        %v5357 = vmul.f32 %v5349, 0.70710677
        %v5358 = vmul.f32 %v5351, 0.70710677
        %v5359 = verf.f32.pop %v5357
        %v5360 = verf.f32.pop %v5358
        %v5361 = vadd.f32 %v5359, 1.0
        %v5362 = vadd.f32 %v5360, 1.0
        %v5363 = vmul.f32 %v5355, %v5361
        %v5364 = vmul.f32 %v5356, %v5362
        %v5365 = vpack.c.bf16 %v5363, %v5363
        %v5366 = vpack.c.bf16 %v5364, %v5364
        %s5367 = scalar_lea.vmem [#allocation18], 384
        %v5368 = vld [vmem:[%s5367] sm:$0xf]
        %v5369 = vld [vmem:[%s5367 + $0x4] sm:$0xf]
        %v5370 = vld [vmem:[%s5367 + $0x8] sm:$0xf]
        %v5371 = vld [vmem:[%s5367 + $0xc] sm:$0xf]
        %v5372 = vld [vmem:[%s5367 + $0x10] sm:$0xf]
        %v5373 = vld [vmem:[%s5367 + $0x14] sm:$0xf]
        %v5374 = vld [vmem:[%s5367 + $0x18] sm:$0xf]
        %v5375 = vld [vmem:[%s5367 + $0x1c] sm:$0xf]
        %v5376 = vld [vmem:[%s5367 + $0x20] sm:$0xf]
        %v5377 = vld [vmem:[%s5367 + $0x24] sm:$0xf]
        %v5378 = vld [vmem:[%s5367 + $0x28] sm:$0xf]
        %v5379 = vld [vmem:[%s5367 + $0x2c] sm:$0xf]
        %v5380 = vld [vmem:[%s5367 + $0x30] sm:$0xf]
        %v5381 = vld [vmem:[%s5367 + $0x34] sm:$0xf]
        %v5382 = vld [vmem:[%s5367 + $0x38] sm:$0xf]
        %v5383 = vld [vmem:[%s5367 + $0x3c] sm:$0xf]
        %v5384 = vld [vmem:[%s5367 + $0x40] sm:$0xf]
        %v5385 = vld [vmem:[%s5367 + $0x44] sm:$0xf]
        %v5386 = vld [vmem:[%s5367 + $0x48] sm:$0xf]
        %v5387 = vld [vmem:[%s5367 + $0x4c] sm:$0xf]
        %v5388 = vld [vmem:[%s5367 + $0x50] sm:$0xf]
        %v5389 = vld [vmem:[%s5367 + $0x54] sm:$0xf]
        %v5390 = vld [vmem:[%s5367 + $0x58] sm:$0xf]
        %v5391 = vld [vmem:[%s5367 + $0x5c] sm:$0xf]
        %v5392 = vld [vmem:[%s5367 + $0x60] sm:$0xf]
        %v5393 = vld [vmem:[%s5367 + $0x64] sm:$0xf]
        %v5394 = vld [vmem:[%s5367 + $0x68] sm:$0xf]
        %v5395 = vld [vmem:[%s5367 + $0x6c] sm:$0xf]
        %v5396 = vld [vmem:[%s5367 + $0x70] sm:$0xf]
        %v5397 = vld [vmem:[%s5367 + $0x74] sm:$0xf]
        %v5398 = vld [vmem:[%s5367 + $0x78] sm:$0xf]
        %v5399 = vld [vmem:[%s5367 + $0x7c] sm:$0xf]
        %s5400 = scalar_lea.vmem [#allocation20], 3
        %v5401 = vld [vmem:[%s5400] sm:$0x1]
        %v5403 = vlaneseq
        %v5404 = vshrl.u32 %v5403, 7
        %v5405 = vsub.s32 0, %v5404
        %v5406 = vrot.slane %v5401, %v5405
        %v5440 = vunpack.c.l.b16 %v5368
        %v5441 = vunpack.c.l.b16 %v5369
        %v5442 = vunpack.c.l.b16 %v5370
        %v5443 = vunpack.c.l.b16 %v5371
        %v5444 = vunpack.c.l.b16 %v5372
        %v5445 = vunpack.c.l.b16 %v5373
        %v5446 = vunpack.c.l.b16 %v5374
        %v5447 = vunpack.c.l.b16 %v5375
        %v5448 = vunpack.c.l.b16 %v5376
        %v5449 = vunpack.c.l.b16 %v5377
        %v5450 = vunpack.c.l.b16 %v5378
        %v5451 = vunpack.c.l.b16 %v5379
        %v5452 = vunpack.c.l.b16 %v5380
        %v5453 = vunpack.c.l.b16 %v5381
        %v5454 = vunpack.c.l.b16 %v5382
        %v5455 = vunpack.c.l.b16 %v5383
        %v5456 = vunpack.c.l.b16 %v5384
        %v5457 = vunpack.c.l.b16 %v5385
        %v5458 = vunpack.c.l.b16 %v5386
        %v5459 = vunpack.c.l.b16 %v5387
        %v5460 = vunpack.c.l.b16 %v5388
        %v5461 = vunpack.c.l.b16 %v5389
        %v5462 = vunpack.c.l.b16 %v5390
        %v5463 = vunpack.c.l.b16 %v5391
        %v5464 = vunpack.c.l.b16 %v5392
        %v5465 = vunpack.c.l.b16 %v5393
        %v5466 = vunpack.c.l.b16 %v5394
        %v5467 = vunpack.c.l.b16 %v5395
        %v5468 = vunpack.c.l.b16 %v5396
        %v5469 = vunpack.c.l.b16 %v5397
        %v5470 = vunpack.c.l.b16 %v5398
        %v5471 = vunpack.c.l.b16 %v5399
        %v5472 = vpack.c.b16 %v5441, %v5440
        %v5473 = vpack.c.b16 %v5443, %v5442
        %v5474 = vpack.c.b16 %v5445, %v5444
        %v5475 = vpack.c.b16 %v5447, %v5446
        %v5476 = vpack.c.b16 %v5449, %v5448
        %v5477 = vpack.c.b16 %v5451, %v5450
        %v5478 = vpack.c.b16 %v5453, %v5452
        %v5479 = vpack.c.b16 %v5455, %v5454
        %v5480 = vpack.c.b16 %v5457, %v5456
        %v5481 = vpack.c.b16 %v5459, %v5458
        %v5482 = vpack.c.b16 %v5461, %v5460
        %v5483 = vpack.c.b16 %v5463, %v5462
        %v5484 = vpack.c.b16 %v5465, %v5464
        %v5485 = vpack.c.b16 %v5467, %v5466
        %v5486 = vpack.c.b16 %v5469, %v5468
        %v5487 = vpack.c.b16 %v5471, %v5470
        %5504 = vmatprep.subr.bf16.mxu0 0
        %5505 = vmatpush1.bf16.msra.mxu0 %v5479
        %5506 = vmatprep.subr.bf16.mxu0 0
        %5507 = vmatpush1.bf16.msra.mxu0 %v5478
        %5508 = vmatprep.subr.bf16.mxu0 0
        %5509 = vmatpush1.bf16.msra.mxu0 %v5477
        %5510 = vmatprep.subr.bf16.mxu0 0
        %5511 = vmatpush1.bf16.msra.mxu0 %v5476
        %5512 = vmatprep.subr.bf16.mxu0 0
        %5513 = vmatpush1.bf16.msra.mxu0 %v5475
        %5514 = vmatprep.subr.bf16.mxu0 0
        %5515 = vmatpush1.bf16.msra.mxu0 %v5474
        %5516 = vmatprep.subr.bf16.mxu0 0
        %5517 = vmatpush1.bf16.msra.mxu0 %v5473
        %5518 = vmatprep.subr.bf16.mxu0 0
        %5519 = vmatpush1.bf16.msra.mxu0 %v5472
        %5520 = vmatprep.subr.bf16.mxu0 0
        %5521 = vmatpush2.bf16.msra.mxu0 %v5487
        %5522 = vmatprep.subr.bf16.mxu0 0
        %5523 = vmatpush2.bf16.msra.mxu0 %v5486
        %5524 = vmatprep.subr.bf16.mxu0 0
        %5525 = vmatpush2.bf16.msra.mxu0 %v5485
        %5526 = vmatprep.subr.bf16.mxu0 0
        %5527 = vmatpush2.bf16.msra.mxu0 %v5484
        %5528 = vmatprep.subr.bf16.mxu0 0
        %5529 = vmatpush2.bf16.msra.mxu0 %v5483
        %5530 = vmatprep.subr.bf16.mxu0 0
        %5531 = vmatpush2.bf16.msra.mxu0 %v5482
        %5532 = vmatprep.subr.bf16.mxu0 0
        %5533 = vmatpush2.bf16.msra.mxu0 %v5481
        %5534 = vmatprep.subr.bf16.mxu0 0
        %5535 = vmatpush2.bf16.msra.mxu0 %v5480
        %5536 = vmatprep.mubr.bf16.mxu0 %v5366
        %5537 = vmatmul.mubr.bf16.gmra.mxu0 %v5365
        %v5538 = vpop.f32.mrf.mxu0
        %v5539 = vadd.f32 %v5406, %v5538
        %v5540 = vpop.f32.mrf.mxu0
        %v5541 = vpop.f32.mrf.mxu0
        %v5542 = vpop.f32.mrf.mxu0
        %5543 = vdwg.mxu0
        %v5544 = vmul.f32 %v5539, 0.5
        %v5545 = vmul.f32 %v5539, 0.70710677
        %v5546 = verf.f32.pop %v5545
        %v5547 = vadd.f32 %v5546, 1.0
        %v5548 = vmul.f32 %v5544, %v5547
        %v5549 = vadd.f32 %v5173, %v5548
        %s5550 = scalar_lea.vmem [#allocation6], 4
        %v5551 = vld [vmem:[%s5550] sm:$0x1]
        %s5552 = scalar_lea.vmem [#allocation8], 4
        %v5553 = vld [vmem:[%s5552] sm:$0x1]
        %5554 = vadd.xlane.f32.xlu0 %v5549
        %v5555 = vpop.xlane.xlu0 %5554
        %v5556 = vmul.f32 %v5555, %v607
        %v5557 = vsub.f32 %v5549, %v5556
        %v5558 = vmul.f32 %v5557, %v5557
        %5559 = vadd.xlane.f32.xlu0 %v5558
        %v5560 = vpop.xlane.xlu0 %5559
        %v5561 = vmul.f32 %v5560, %v607
        %v5562 = vadd.f32 %v5561, 1e-06
        %v5563 = vrsqrt.pop %v5562
        %v5564 = vmul.f32 %v5557, %v5563
        %v5566 = vlaneseq
        %v5567 = vshrl.u32 %v5566, 7
        %v5568 = vsub.s32 0, %v5567
        %v5569 = vrot.slane %v5551, %v5568
        %v5571 = vmul.f32 %v5564, %v5569
        %v5573 = vlaneseq
        %v5574 = vshrl.u32 %v5573, 7
        %v5575 = vsub.s32 0, %v5574
        %v5576 = vrot.slane %v5553, %v5575
        %v5578 = vadd.f32 %v5571, %v5576
        %v5579 = vpack.c.bf16 %v5578, %v5578
        %s5580 = scalar_lea.vmem [#allocation9], 768
        %v5581 = vld [vmem:[%s5580] sm:$0xff]
        %v5582 = vld [vmem:[%s5580 + $0x8] sm:$0xf]
        %v5583 = vld [vmem:[%s5580 + $0xc] sm:$0xff]
        %v5584 = vld [vmem:[%s5580 + $0x14] sm:$0xf]
        %v5585 = vld [vmem:[%s5580 + $0x18] sm:$0xff]
        %v5586 = vld [vmem:[%s5580 + $0x20] sm:$0xf]
        %v5587 = vld [vmem:[%s5580 + $0x24] sm:$0xff]
        %v5588 = vld [vmem:[%s5580 + $0x2c] sm:$0xf]
        %v5589 = vld [vmem:[%s5580 + $0x30] sm:$0xff]
        %v5590 = vld [vmem:[%s5580 + $0x38] sm:$0xf]
        %v5591 = vld [vmem:[%s5580 + $0x3c] sm:$0xff]
        %v5592 = vld [vmem:[%s5580 + $0x44] sm:$0xf]
        %v5593 = vld [vmem:[%s5580 + $0x48] sm:$0xff]
        %v5594 = vld [vmem:[%s5580 + $0x50] sm:$0xf]
        %v5595 = vld [vmem:[%s5580 + $0x54] sm:$0xff]
        %v5596 = vld [vmem:[%s5580 + $0x5c] sm:$0xf]
        %v5597 = vld [vmem:[%s5580 + $0x60] sm:$0xff]
        %v5598 = vld [vmem:[%s5580 + $0x68] sm:$0xf]
        %v5599 = vld [vmem:[%s5580 + $0x6c] sm:$0xff]
        %v5600 = vld [vmem:[%s5580 + $0x74] sm:$0xf]
        %v5601 = vld [vmem:[%s5580 + $0x78] sm:$0xff]
        %v5602 = vld [vmem:[%s5580 + $0x80] sm:$0xf]
        %v5603 = vld [vmem:[%s5580 + $0x84] sm:$0xff]
        %v5604 = vld [vmem:[%s5580 + $0x8c] sm:$0xf]
        %v5605 = vld [vmem:[%s5580 + $0x90] sm:$0xff]
        %v5606 = vld [vmem:[%s5580 + $0x98] sm:$0xf]
        %v5607 = vld [vmem:[%s5580 + $0x9c] sm:$0xff]
        %v5608 = vld [vmem:[%s5580 + $0xa4] sm:$0xf]
        %v5609 = vld [vmem:[%s5580 + $0xa8] sm:$0xff]
        %v5610 = vld [vmem:[%s5580 + $0xb0] sm:$0xf]
        %v5611 = vld [vmem:[%s5580 + $0xb4] sm:$0xff]
        %v5612 = vld [vmem:[%s5580 + $0xbc] sm:$0xf]
        %s5613 = scalar_lea.vmem [#allocation11], 12
        %v5614 = vld [vmem:[%s5613] sm:$0x7]
        %v5616 = vlaneseq
        %v5617 = vshrl.u32 %v5616, 7
        %v5618 = vsub.s32 0, %v5617
        %v5619 = vrot.slane %v5614, %v5618
        %v5620 = vlaneseq
        %v5621 = vshrl.u32 %v5620, 7
        %v5622 = vsub.s32 1, %v5621
        %v5623 = vrot.slane %v5614, %v5622
        %v5624 = vlaneseq
        %v5625 = vshrl.u32 %v5624, 7
        %v5626 = vsub.s32 2, %v5625
        %v5627 = vrot.slane %v5614, %v5626
        %v5663 = vunpack.c.l.b16 %v5581
        %v5664 = vunpack.c.h.b16 %v5581
        %v5665 = vunpack.c.l.b16 %v5582
        %v5666 = vunpack.c.l.b16 %v5583
        %v5667 = vunpack.c.h.b16 %v5583
        %v5668 = vunpack.c.l.b16 %v5584
        %v5669 = vunpack.c.l.b16 %v5585
        %v5670 = vunpack.c.h.b16 %v5585
        %v5671 = vunpack.c.l.b16 %v5586
        %v5672 = vunpack.c.l.b16 %v5587
        %v5673 = vunpack.c.h.b16 %v5587
        %v5674 = vunpack.c.l.b16 %v5588
        %v5675 = vunpack.c.l.b16 %v5589
        %v5676 = vunpack.c.h.b16 %v5589
        %v5677 = vunpack.c.l.b16 %v5590
        %v5678 = vunpack.c.l.b16 %v5591
        %v5679 = vunpack.c.h.b16 %v5591
        %v5680 = vunpack.c.l.b16 %v5592
        %v5681 = vunpack.c.l.b16 %v5593
        %v5682 = vunpack.c.h.b16 %v5593
        %v5683 = vunpack.c.l.b16 %v5594
        %v5684 = vunpack.c.l.b16 %v5595
        %v5685 = vunpack.c.h.b16 %v5595
        %v5686 = vunpack.c.l.b16 %v5596
        %v5687 = vunpack.c.l.b16 %v5597
        %v5688 = vunpack.c.h.b16 %v5597
        %v5689 = vunpack.c.l.b16 %v5598
        %v5690 = vunpack.c.l.b16 %v5599
        %v5691 = vunpack.c.h.b16 %v5599
        %v5692 = vunpack.c.l.b16 %v5600
        %v5693 = vunpack.c.l.b16 %v5601
        %v5694 = vunpack.c.h.b16 %v5601
        %v5695 = vunpack.c.l.b16 %v5602
        %v5696 = vunpack.c.l.b16 %v5603
        %v5697 = vunpack.c.h.b16 %v5603
        %v5698 = vunpack.c.l.b16 %v5604
        %v5699 = vunpack.c.l.b16 %v5605
        %v5700 = vunpack.c.h.b16 %v5605
        %v5701 = vunpack.c.l.b16 %v5606
        %v5702 = vunpack.c.l.b16 %v5607
        %v5703 = vunpack.c.h.b16 %v5607
        %v5704 = vunpack.c.l.b16 %v5608
        %v5705 = vunpack.c.l.b16 %v5609
        %v5706 = vunpack.c.h.b16 %v5609
        %v5707 = vunpack.c.l.b16 %v5610
        %v5708 = vunpack.c.l.b16 %v5611
        %v5709 = vunpack.c.h.b16 %v5611
        %v5710 = vunpack.c.l.b16 %v5612
        %v5711 = vpack.c.b16 %v5666, %v5663
        %v5712 = vpack.c.b16 %v5667, %v5664
        %v5713 = vpack.c.b16 %v5668, %v5665
        %v5714 = vpack.c.b16 %v5672, %v5669
        %v5715 = vpack.c.b16 %v5673, %v5670
        %v5716 = vpack.c.b16 %v5674, %v5671
        %v5717 = vpack.c.b16 %v5678, %v5675
        %v5718 = vpack.c.b16 %v5679, %v5676
        %v5719 = vpack.c.b16 %v5680, %v5677
        %v5720 = vpack.c.b16 %v5684, %v5681
        %v5721 = vpack.c.b16 %v5685, %v5682
        %v5722 = vpack.c.b16 %v5686, %v5683
        %v5723 = vpack.c.b16 %v5690, %v5687
        %v5724 = vpack.c.b16 %v5691, %v5688
        %v5725 = vpack.c.b16 %v5692, %v5689
        %v5726 = vpack.c.b16 %v5696, %v5693
        %v5727 = vpack.c.b16 %v5697, %v5694
        %v5728 = vpack.c.b16 %v5698, %v5695
        %v5729 = vpack.c.b16 %v5702, %v5699
        %v5730 = vpack.c.b16 %v5703, %v5700
        %v5731 = vpack.c.b16 %v5704, %v5701
        %v5732 = vpack.c.b16 %v5708, %v5705
        %v5733 = vpack.c.b16 %v5709, %v5706
        %v5734 = vpack.c.b16 %v5710, %v5707
        %5759 = vmatprep.subr.bf16.mxu0 %v5733
        %5760 = vmatpush1.bf16.msra.mxu0 %v5732
        %5761 = vmatprep.subr.bf16.mxu0 %v5730
        %5762 = vmatpush1.bf16.msra.mxu0 %v5729
        %5763 = vmatprep.subr.bf16.mxu0 %v5727
        %5764 = vmatpush1.bf16.msra.mxu0 %v5726
        %5765 = vmatprep.subr.bf16.mxu0 %v5724
        %5766 = vmatpush1.bf16.msra.mxu0 %v5723
        %5767 = vmatprep.subr.bf16.mxu0 %v5721
        %5768 = vmatpush1.bf16.msra.mxu0 %v5720
        %5769 = vmatprep.subr.bf16.mxu0 %v5718
        %5770 = vmatpush1.bf16.msra.mxu0 %v5717
        %5771 = vmatprep.subr.bf16.mxu0 %v5715
        %5772 = vmatpush1.bf16.msra.mxu0 %v5714
        %5773 = vmatprep.subr.bf16.mxu0 %v5712
        %5774 = vmatpush1.bf16.msra.mxu0 %v5711
        %5775 = vmatprep.subr.bf16.mxu0 0
        %5776 = vmatpush2.bf16.msra.mxu0 0
        %5777 = vmatprep.subr.bf16.mxu0 0
        %5778 = vmatpush2.bf16.msra.mxu0 0
        %5779 = vmatprep.subr.bf16.mxu0 0
        %5780 = vmatpush2.bf16.msra.mxu0 0
        %5781 = vmatprep.subr.bf16.mxu0 0
        %5782 = vmatpush2.bf16.msra.mxu0 0
        %5783 = vmatprep.subr.bf16.mxu0 0
        %5784 = vmatpush2.bf16.msra.mxu0 0
        %5785 = vmatprep.subr.bf16.mxu0 0
        %5786 = vmatpush2.bf16.msra.mxu0 0
        %5787 = vmatprep.subr.bf16.mxu0 0
        %5788 = vmatpush2.bf16.msra.mxu0 0
        %5789 = vmatprep.subr.bf16.mxu0 0
        %5790 = vmatpush2.bf16.msra.mxu0 0
        %5791 = vmatprep.mubr.bf16.mxu0 0
        %5792 = vmatmul.mubr.bf16.gmra.mxu0 %v5579
        %v5793 = vpop.f32.mrf.mxu0
        %v5794 = vadd.f32 %v5619, %v5793
        %v5795 = vpop.f32.mrf.mxu0
        %v5796 = vadd.f32 %v5623, %v5795
        %v5797 = vpop.f32.mrf.mxu0
        %v5798 = vpop.f32.mrf.mxu0
        %5799 = vdwg.mxu0
        %5800 = vmatprep.subr.bf16.mxu0 0
        %5801 = vmatpush1.bf16.msra.mxu0 %v5734
        %5802 = vmatprep.subr.bf16.mxu0 0
        %5803 = vmatpush1.bf16.msra.mxu0 %v5731
        %5804 = vmatprep.subr.bf16.mxu0 0
        %5805 = vmatpush1.bf16.msra.mxu0 %v5728
        %5806 = vmatprep.subr.bf16.mxu0 0
        %5807 = vmatpush1.bf16.msra.mxu0 %v5725
        %5808 = vmatprep.subr.bf16.mxu0 0
        %5809 = vmatpush1.bf16.msra.mxu0 %v5722
        %5810 = vmatprep.subr.bf16.mxu0 0
        %5811 = vmatpush1.bf16.msra.mxu0 %v5719
        %5812 = vmatprep.subr.bf16.mxu0 0
        %5813 = vmatpush1.bf16.msra.mxu0 %v5716
        %5814 = vmatprep.subr.bf16.mxu0 0
        %5815 = vmatpush1.bf16.msra.mxu0 %v5713
        %5816 = vmatprep.subr.bf16.mxu0 0
        %5817 = vmatpush2.bf16.msra.mxu0 0
        %5818 = vmatprep.subr.bf16.mxu0 0
        %5819 = vmatpush2.bf16.msra.mxu0 0
        %5820 = vmatprep.subr.bf16.mxu0 0
        %5821 = vmatpush2.bf16.msra.mxu0 0
        %5822 = vmatprep.subr.bf16.mxu0 0
        %5823 = vmatpush2.bf16.msra.mxu0 0
        %5824 = vmatprep.subr.bf16.mxu0 0
        %5825 = vmatpush2.bf16.msra.mxu0 0
        %5826 = vmatprep.subr.bf16.mxu0 0
        %5827 = vmatpush2.bf16.msra.mxu0 0
        %5828 = vmatprep.subr.bf16.mxu0 0
        %5829 = vmatpush2.bf16.msra.mxu0 0
        %5830 = vmatprep.subr.bf16.mxu0 0
        %5831 = vmatpush2.bf16.msra.mxu0 0
        %5832 = vmatprep.mubr.bf16.mxu0 0
        %5833 = vmatmul.mubr.bf16.gmra.mxu0 %v5579
        %v5834 = vpop.f32.mrf.mxu0
        %v5835 = vadd.f32 %v5627, %v5834
        %v5836 = vpop.f32.mrf.mxu0
        %v5837 = vpop.f32.mrf.mxu0
        %v5838 = vpop.f32.mrf.mxu0
        %5839 = vdwg.mxu0
        %v5840 = vpack.c.bf16 %v5794, %v5794
        %v5841 = vpack.c.bf16 %v5796, %v5796
        %v5842 = vpack.c.bf16 %v5835, %v5835
        %v5844 = vsel %vm893, %v5840, 0
        %v5847 = vsel %vm893, %v5841, 0
        %5849 = vmatprep.subr.bf16.mxu0 0
        %5850 = vmatpush1.bf16.xpose.msra.mxu0 0
        %5851 = vmatprep.subr.bf16.mxu0 0
        %5852 = vmatpush1.bf16.xpose.msra.mxu0 0
        %5853 = vmatprep.subr.bf16.mxu0 0
        %5854 = vmatpush1.bf16.xpose.msra.mxu0 0
        %5855 = vmatprep.subr.bf16.mxu0 0
        %5856 = vmatpush1.bf16.xpose.msra.mxu0 0
        %5857 = vmatprep.subr.bf16.mxu0 0
        %5858 = vmatpush1.bf16.xpose.msra.mxu0 0
        %5859 = vmatprep.subr.bf16.mxu0 0
        %5860 = vmatpush1.bf16.xpose.msra.mxu0 0
        %5861 = vmatprep.subr.bf16.mxu0 0
        %5862 = vmatpush1.bf16.xpose.msra.mxu0 0
        %5863 = vmatprep.subr.bf16.mxu0 0
        %5864 = vmatpush1.bf16.xpose.msra.mxu0 %v5847
        %5865 = vmatprep.subr.bf16.mxu0 0
        %5866 = vmatpush2.bf16.xpose.msra.mxu0 0
        %5867 = vmatprep.subr.bf16.mxu0 0
        %5868 = vmatpush2.bf16.xpose.msra.mxu0 0
        %5869 = vmatprep.subr.bf16.mxu0 0
        %5870 = vmatpush2.bf16.xpose.msra.mxu0 0
        %5871 = vmatprep.subr.bf16.mxu0 0
        %5872 = vmatpush2.bf16.xpose.msra.mxu0 0
        %5873 = vmatprep.subr.bf16.mxu0 0
        %5874 = vmatpush2.bf16.xpose.msra.mxu0 0
        %5875 = vmatprep.subr.bf16.mxu0 0
        %5876 = vmatpush2.bf16.xpose.msra.mxu0 0
        %5877 = vmatprep.subr.bf16.mxu0 0
        %5878 = vmatpush2.bf16.xpose.msra.mxu0 0
        %5879 = vmatprep.subr.bf16.mxu0 0
        %5880 = vmatpush2.bf16.xpose.msra.mxu0 0
        %5881 = vmatprep.mubr.bf16.mxu0 0
        %5882 = vmatmul.mubr.bf16.gmra.mxu0 %v5844
        %v5883 = vpop.f32.mrf.mxu0
        %v5884 = vadd.f32 0.0, %v5883
        %v5885 = vpop.f32.mrf.mxu0
        %v5886 = vpop.f32.mrf.mxu0
        %v5887 = vpop.f32.mrf.mxu0
        %5888 = vdwg.mxu0
        %v5889 = vsel %vm940, %v5884, -inf
        %5890 = vmax.xlane.f32.xlu0 %v5889
        %v5891 = vpop.xlane.xlu0 %5890
        %v5892 = vsub.f32 %v5884, %v5891
        %v5893 = vmul.f32 %v5892, 1.442695
        %v5894 = vpow.pop %v5893
        %v5895 = vsel %vm940, %v5894, 0.0
        %5896 = vadd.xlane.f32.xlu0 %v5895
        %v5897 = vpop.xlane.xlu0 %5896
        %v5898 = vrcp.pop %v5897
        %v5899 = vmul.f32 %v5894, %v5898
        %v5900 = vpack.c.bf16 %v5899, %v5899
        %v5902 = vsel %vm940, %v5900, 0
        %v5905 = vsel %vm956, %v5842, 0
        %5907 = vmatprep.subr.bf16.mxu0 0
        %5908 = vmatpush1.bf16.msra.mxu0 0
        %5909 = vmatprep.subr.bf16.mxu0 0
        %5910 = vmatpush1.bf16.msra.mxu0 0
        %5911 = vmatprep.subr.bf16.mxu0 0
        %5912 = vmatpush1.bf16.msra.mxu0 0
        %5913 = vmatprep.subr.bf16.mxu0 0
        %5914 = vmatpush1.bf16.msra.mxu0 0
        %5915 = vmatprep.subr.bf16.mxu0 0
        %5916 = vmatpush1.bf16.msra.mxu0 0
        %5917 = vmatprep.subr.bf16.mxu0 0
        %5918 = vmatpush1.bf16.msra.mxu0 0
        %5919 = vmatprep.subr.bf16.mxu0 0
        %5920 = vmatpush1.bf16.msra.mxu0 0
        %5921 = vmatprep.subr.bf16.mxu0 0
        %5922 = vmatpush1.bf16.msra.mxu0 %v5905
        %5923 = vmatprep.subr.bf16.mxu0 0
        %5924 = vmatpush2.bf16.msra.mxu0 0
        %5925 = vmatprep.subr.bf16.mxu0 0
        %5926 = vmatpush2.bf16.msra.mxu0 0
        %5927 = vmatprep.subr.bf16.mxu0 0
        %5928 = vmatpush2.bf16.msra.mxu0 0
        %5929 = vmatprep.subr.bf16.mxu0 0
        %5930 = vmatpush2.bf16.msra.mxu0 0
        %5931 = vmatprep.subr.bf16.mxu0 0
        %5932 = vmatpush2.bf16.msra.mxu0 0
        %5933 = vmatprep.subr.bf16.mxu0 0
        %5934 = vmatpush2.bf16.msra.mxu0 0
        %5935 = vmatprep.subr.bf16.mxu0 0
        %5936 = vmatpush2.bf16.msra.mxu0 0
        %5937 = vmatprep.subr.bf16.mxu0 0
        %5938 = vmatpush2.bf16.msra.mxu0 0
        %5939 = vmatprep.mubr.bf16.mxu0 0
        %5940 = vmatmul.mubr.bf16.gmra.mxu0 %v5902
        %v5941 = vpop.f32.mrf.mxu0
        %v5942 = vadd.f32 0.0, %v5941
        %v5943 = vpop.f32.mrf.mxu0
        %v5944 = vpop.f32.mrf.mxu0
        %v5945 = vpop.f32.mrf.mxu0
        %5946 = vdwg.mxu0
        %5947 = vst.msk [vmem:[#allocation2] sm:$0xff] %vm893, %v5942
        %5949 = vrot.lane.b32.xlu0 %v5840, 96
        %v5950 = vpop.permute.xlu0 %5949
        %5952 = vrot.lane.b32.xlu0 %v5841, 96
        %v5953 = vpop.permute.xlu0 %5952
        %v5955 = vsel %vm893, %v5950, 0
        %v5958 = vsel %vm893, %v5953, 0
        %5960 = vmatprep.subr.bf16.mxu0 0
        %5961 = vmatpush1.bf16.xpose.msra.mxu0 0
        %5962 = vmatprep.subr.bf16.mxu0 0
        %5963 = vmatpush1.bf16.xpose.msra.mxu0 0
        %5964 = vmatprep.subr.bf16.mxu0 0
        %5965 = vmatpush1.bf16.xpose.msra.mxu0 0
        %5966 = vmatprep.subr.bf16.mxu0 0
        %5967 = vmatpush1.bf16.xpose.msra.mxu0 0
        %5968 = vmatprep.subr.bf16.mxu0 0
        %5969 = vmatpush1.bf16.xpose.msra.mxu0 0
        %5970 = vmatprep.subr.bf16.mxu0 0
        %5971 = vmatpush1.bf16.xpose.msra.mxu0 0
        %5972 = vmatprep.subr.bf16.mxu0 0
        %5973 = vmatpush1.bf16.xpose.msra.mxu0 0
        %5974 = vmatprep.subr.bf16.mxu0 0
        %5975 = vmatpush1.bf16.xpose.msra.mxu0 %v5958
        %5976 = vmatprep.subr.bf16.mxu0 0
        %5977 = vmatpush2.bf16.xpose.msra.mxu0 0
        %5978 = vmatprep.subr.bf16.mxu0 0
        %5979 = vmatpush2.bf16.xpose.msra.mxu0 0
        %5980 = vmatprep.subr.bf16.mxu0 0
        %5981 = vmatpush2.bf16.xpose.msra.mxu0 0
        %5982 = vmatprep.subr.bf16.mxu0 0
        %5983 = vmatpush2.bf16.xpose.msra.mxu0 0
        %5984 = vmatprep.subr.bf16.mxu0 0
        %5985 = vmatpush2.bf16.xpose.msra.mxu0 0
        %5986 = vmatprep.subr.bf16.mxu0 0
        %5987 = vmatpush2.bf16.xpose.msra.mxu0 0
        %5988 = vmatprep.subr.bf16.mxu0 0
        %5989 = vmatpush2.bf16.xpose.msra.mxu0 0
        %5990 = vmatprep.subr.bf16.mxu0 0
        %5991 = vmatpush2.bf16.xpose.msra.mxu0 0
        %5992 = vmatprep.mubr.bf16.mxu0 0
        %5993 = vmatmul.mubr.bf16.gmra.mxu0 %v5955
        %v5994 = vpop.f32.mrf.mxu0
        %v5995 = vadd.f32 0.0, %v5994
        %v5996 = vpop.f32.mrf.mxu0
        %v5997 = vpop.f32.mrf.mxu0
        %v5998 = vpop.f32.mrf.mxu0
        %5999 = vdwg.mxu0
        %v6000 = vsel %vm940, %v5995, -inf
        %6001 = vmax.xlane.f32.xlu0 %v6000
        %v6002 = vpop.xlane.xlu0 %6001
        %v6003 = vsub.f32 %v5995, %v6002
        %v6004 = vmul.f32 %v6003, 1.442695
        %v6005 = vpow.pop %v6004
        %v6006 = vsel %vm940, %v6005, 0.0
        %6007 = vadd.xlane.f32.xlu0 %v6006
        %v6008 = vpop.xlane.xlu0 %6007
        %v6009 = vrcp.pop %v6008
        %v6010 = vmul.f32 %v6005, %v6009
        %v6011 = vpack.c.bf16 %v6010, %v6010
        %6013 = vrot.lane.b32.xlu0 %v5842, 96
        %v6014 = vpop.permute.xlu0 %6013
        %v6016 = vsel %vm940, %v6011, 0
        %v6019 = vsel %vm956, %v6014, 0
        %6021 = vmatprep.subr.bf16.mxu0 0
        %6022 = vmatpush1.bf16.msra.mxu0 0
        %6023 = vmatprep.subr.bf16.mxu0 0
        %6024 = vmatpush1.bf16.msra.mxu0 0
        %6025 = vmatprep.subr.bf16.mxu0 0
        %6026 = vmatpush1.bf16.msra.mxu0 0
        %6027 = vmatprep.subr.bf16.mxu0 0
        %6028 = vmatpush1.bf16.msra.mxu0 0
        %6029 = vmatprep.subr.bf16.mxu0 0
        %6030 = vmatpush1.bf16.msra.mxu0 0
        %6031 = vmatprep.subr.bf16.mxu0 0
        %6032 = vmatpush1.bf16.msra.mxu0 0
        %6033 = vmatprep.subr.bf16.mxu0 0
        %6034 = vmatpush1.bf16.msra.mxu0 0
        %6035 = vmatprep.subr.bf16.mxu0 0
        %6036 = vmatpush1.bf16.msra.mxu0 %v6019
        %6037 = vmatprep.subr.bf16.mxu0 0
        %6038 = vmatpush2.bf16.msra.mxu0 0
        %6039 = vmatprep.subr.bf16.mxu0 0
        %6040 = vmatpush2.bf16.msra.mxu0 0
        %6041 = vmatprep.subr.bf16.mxu0 0
        %6042 = vmatpush2.bf16.msra.mxu0 0
        %6043 = vmatprep.subr.bf16.mxu0 0
        %6044 = vmatpush2.bf16.msra.mxu0 0
        %6045 = vmatprep.subr.bf16.mxu0 0
        %6046 = vmatpush2.bf16.msra.mxu0 0
        %6047 = vmatprep.subr.bf16.mxu0 0
        %6048 = vmatpush2.bf16.msra.mxu0 0
        %6049 = vmatprep.subr.bf16.mxu0 0
        %6050 = vmatpush2.bf16.msra.mxu0 0
        %6051 = vmatprep.subr.bf16.mxu0 0
        %6052 = vmatpush2.bf16.msra.mxu0 0
        %6053 = vmatprep.mubr.bf16.mxu0 0
        %6054 = vmatmul.mubr.bf16.gmra.mxu0 %v6016
        %v6055 = vpop.f32.mrf.mxu0
        %v6056 = vadd.f32 0.0, %v6055
        %v6057 = vpop.f32.mrf.mxu0
        %v6058 = vpop.f32.mrf.mxu0
        %v6059 = vpop.f32.mrf.mxu0
        %6060 = vdwg.mxu0
        %6062 = vrot.lane.b32.xlu0 %v6056, 32
        %v6063 = vpop.permute.xlu0 %6062
        %6065 = vst.msk [vmem:[#allocation2] sm:$0xff] %vm1118, %v6063
        %6066 = vrot.lane.b32.xlu0 %v5840, 64
        %v6067 = vpop.permute.xlu0 %6066
        %6068 = vrot.lane.b32.xlu0 %v5841, 64
        %v6069 = vpop.permute.xlu0 %6068
        %v6071 = vsel %vm893, %v6067, 0
        %v6074 = vsel %vm893, %v6069, 0
        %6076 = vmatprep.subr.bf16.mxu0 0
        %6077 = vmatpush1.bf16.xpose.msra.mxu0 0
        %6078 = vmatprep.subr.bf16.mxu0 0
        %6079 = vmatpush1.bf16.xpose.msra.mxu0 0
        %6080 = vmatprep.subr.bf16.mxu0 0
        %6081 = vmatpush1.bf16.xpose.msra.mxu0 0
        %6082 = vmatprep.subr.bf16.mxu0 0
        %6083 = vmatpush1.bf16.xpose.msra.mxu0 0
        %6084 = vmatprep.subr.bf16.mxu0 0
        %6085 = vmatpush1.bf16.xpose.msra.mxu0 0
        %6086 = vmatprep.subr.bf16.mxu0 0
        %6087 = vmatpush1.bf16.xpose.msra.mxu0 0
        %6088 = vmatprep.subr.bf16.mxu0 0
        %6089 = vmatpush1.bf16.xpose.msra.mxu0 0
        %6090 = vmatprep.subr.bf16.mxu0 0
        %6091 = vmatpush1.bf16.xpose.msra.mxu0 %v6074
        %6092 = vmatprep.subr.bf16.mxu0 0
        %6093 = vmatpush2.bf16.xpose.msra.mxu0 0
        %6094 = vmatprep.subr.bf16.mxu0 0
        %6095 = vmatpush2.bf16.xpose.msra.mxu0 0
        %6096 = vmatprep.subr.bf16.mxu0 0
        %6097 = vmatpush2.bf16.xpose.msra.mxu0 0
        %6098 = vmatprep.subr.bf16.mxu0 0
        %6099 = vmatpush2.bf16.xpose.msra.mxu0 0
        %6100 = vmatprep.subr.bf16.mxu0 0
        %6101 = vmatpush2.bf16.xpose.msra.mxu0 0
        %6102 = vmatprep.subr.bf16.mxu0 0
        %6103 = vmatpush2.bf16.xpose.msra.mxu0 0
        %6104 = vmatprep.subr.bf16.mxu0 0
        %6105 = vmatpush2.bf16.xpose.msra.mxu0 0
        %6106 = vmatprep.subr.bf16.mxu0 0
        %6107 = vmatpush2.bf16.xpose.msra.mxu0 0
        %6108 = vmatprep.mubr.bf16.mxu0 0
        %6109 = vmatmul.mubr.bf16.gmra.mxu0 %v6071
        %v6110 = vpop.f32.mrf.mxu0
        %v6111 = vadd.f32 0.0, %v6110
        %v6112 = vpop.f32.mrf.mxu0
        %v6113 = vpop.f32.mrf.mxu0
        %v6114 = vpop.f32.mrf.mxu0
        %6115 = vdwg.mxu0
        %v6116 = vsel %vm940, %v6111, -inf
        %6117 = vmax.xlane.f32.xlu0 %v6116
        %v6118 = vpop.xlane.xlu0 %6117
        %v6119 = vsub.f32 %v6111, %v6118
        %v6120 = vmul.f32 %v6119, 1.442695
        %v6121 = vpow.pop %v6120
        %v6122 = vsel %vm940, %v6121, 0.0
        %6123 = vadd.xlane.f32.xlu0 %v6122
        %v6124 = vpop.xlane.xlu0 %6123
        %v6125 = vrcp.pop %v6124
        %v6126 = vmul.f32 %v6121, %v6125
        %v6127 = vpack.c.bf16 %v6126, %v6126
        %6128 = vrot.lane.b32.xlu0 %v5842, 64
        %v6129 = vpop.permute.xlu0 %6128
        %v6131 = vsel %vm940, %v6127, 0
        %v6134 = vsel %vm956, %v6129, 0
        %6136 = vmatprep.subr.bf16.mxu0 0
        %6137 = vmatpush1.bf16.msra.mxu0 0
        %6138 = vmatprep.subr.bf16.mxu0 0
        %6139 = vmatpush1.bf16.msra.mxu0 0
        %6140 = vmatprep.subr.bf16.mxu0 0
        %6141 = vmatpush1.bf16.msra.mxu0 0
        %6142 = vmatprep.subr.bf16.mxu0 0
        %6143 = vmatpush1.bf16.msra.mxu0 0
        %6144 = vmatprep.subr.bf16.mxu0 0
        %6145 = vmatpush1.bf16.msra.mxu0 0
        %6146 = vmatprep.subr.bf16.mxu0 0
        %6147 = vmatpush1.bf16.msra.mxu0 0
        %6148 = vmatprep.subr.bf16.mxu0 0
        %6149 = vmatpush1.bf16.msra.mxu0 0
        %6150 = vmatprep.subr.bf16.mxu0 0
        %6151 = vmatpush1.bf16.msra.mxu0 %v6134
        %6152 = vmatprep.subr.bf16.mxu0 0
        %6153 = vmatpush2.bf16.msra.mxu0 0
        %6154 = vmatprep.subr.bf16.mxu0 0
        %6155 = vmatpush2.bf16.msra.mxu0 0
        %6156 = vmatprep.subr.bf16.mxu0 0
        %6157 = vmatpush2.bf16.msra.mxu0 0
        %6158 = vmatprep.subr.bf16.mxu0 0
        %6159 = vmatpush2.bf16.msra.mxu0 0
        %6160 = vmatprep.subr.bf16.mxu0 0
        %6161 = vmatpush2.bf16.msra.mxu0 0
        %6162 = vmatprep.subr.bf16.mxu0 0
        %6163 = vmatpush2.bf16.msra.mxu0 0
        %6164 = vmatprep.subr.bf16.mxu0 0
        %6165 = vmatpush2.bf16.msra.mxu0 0
        %6166 = vmatprep.subr.bf16.mxu0 0
        %6167 = vmatpush2.bf16.msra.mxu0 0
        %6168 = vmatprep.mubr.bf16.mxu0 0
        %6169 = vmatmul.mubr.bf16.gmra.mxu0 %v6131
        %v6170 = vpop.f32.mrf.mxu0
        %v6171 = vadd.f32 0.0, %v6170
        %v6172 = vpop.f32.mrf.mxu0
        %v6173 = vpop.f32.mrf.mxu0
        %v6174 = vpop.f32.mrf.mxu0
        %6175 = vdwg.mxu0
        %6177 = vrot.lane.b32.xlu0 %v6171, 64
        %v6178 = vpop.permute.xlu0 %6177
        %6180 = vst.msk [vmem:[#allocation2] sm:$0xff] %vm1234, %v6178
        %6181 = vrot.lane.b32.xlu0 %v5840, 32
        %v6182 = vpop.permute.xlu0 %6181
        %6183 = vrot.lane.b32.xlu0 %v5841, 32
        %v6184 = vpop.permute.xlu0 %6183
        %v6186 = vsel %vm893, %v6182, 0
        %v6189 = vsel %vm893, %v6184, 0
        %6191 = vmatprep.subr.bf16.mxu0 0
        %6192 = vmatpush1.bf16.xpose.msra.mxu0 0
        %6193 = vmatprep.subr.bf16.mxu0 0
        %6194 = vmatpush1.bf16.xpose.msra.mxu0 0
        %6195 = vmatprep.subr.bf16.mxu0 0
        %6196 = vmatpush1.bf16.xpose.msra.mxu0 0
        %6197 = vmatprep.subr.bf16.mxu0 0
        %6198 = vmatpush1.bf16.xpose.msra.mxu0 0
        %6199 = vmatprep.subr.bf16.mxu0 0
        %6200 = vmatpush1.bf16.xpose.msra.mxu0 0
        %6201 = vmatprep.subr.bf16.mxu0 0
        %6202 = vmatpush1.bf16.xpose.msra.mxu0 0
        %6203 = vmatprep.subr.bf16.mxu0 0
        %6204 = vmatpush1.bf16.xpose.msra.mxu0 0
        %6205 = vmatprep.subr.bf16.mxu0 0
        %6206 = vmatpush1.bf16.xpose.msra.mxu0 %v6189
        %6207 = vmatprep.subr.bf16.mxu0 0
        %6208 = vmatpush2.bf16.xpose.msra.mxu0 0
        %6209 = vmatprep.subr.bf16.mxu0 0
        %6210 = vmatpush2.bf16.xpose.msra.mxu0 0
        %6211 = vmatprep.subr.bf16.mxu0 0
        %6212 = vmatpush2.bf16.xpose.msra.mxu0 0
        %6213 = vmatprep.subr.bf16.mxu0 0
        %6214 = vmatpush2.bf16.xpose.msra.mxu0 0
        %6215 = vmatprep.subr.bf16.mxu0 0
        %6216 = vmatpush2.bf16.xpose.msra.mxu0 0
        %6217 = vmatprep.subr.bf16.mxu0 0
        %6218 = vmatpush2.bf16.xpose.msra.mxu0 0
        %6219 = vmatprep.subr.bf16.mxu0 0
        %6220 = vmatpush2.bf16.xpose.msra.mxu0 0
        %6221 = vmatprep.subr.bf16.mxu0 0
        %6222 = vmatpush2.bf16.xpose.msra.mxu0 0
        %6223 = vmatprep.mubr.bf16.mxu0 0
        %6224 = vmatmul.mubr.bf16.gmra.mxu0 %v6186
        %v6225 = vpop.f32.mrf.mxu0
        %v6226 = vadd.f32 0.0, %v6225
        %v6227 = vpop.f32.mrf.mxu0
        %v6228 = vpop.f32.mrf.mxu0
        %v6229 = vpop.f32.mrf.mxu0
        %6230 = vdwg.mxu0
        %v6231 = vsel %vm940, %v6226, -inf
        %6232 = vmax.xlane.f32.xlu0 %v6231
        %v6233 = vpop.xlane.xlu0 %6232
        %v6234 = vsub.f32 %v6226, %v6233
        %v6235 = vmul.f32 %v6234, 1.442695
        %v6236 = vpow.pop %v6235
        %v6237 = vsel %vm940, %v6236, 0.0
        %6238 = vadd.xlane.f32.xlu0 %v6237
        %v6239 = vpop.xlane.xlu0 %6238
        %v6240 = vrcp.pop %v6239
        %v6241 = vmul.f32 %v6236, %v6240
        %v6242 = vpack.c.bf16 %v6241, %v6241
        %6243 = vrot.lane.b32.xlu0 %v5842, 32
        %v6244 = vpop.permute.xlu0 %6243
        %v6246 = vsel %vm940, %v6242, 0
        %v6249 = vsel %vm956, %v6244, 0
        %6251 = vmatprep.subr.bf16.mxu0 0
        %6252 = vmatpush1.bf16.msra.mxu0 0
        %6253 = vmatprep.subr.bf16.mxu0 0
        %6254 = vmatpush1.bf16.msra.mxu0 0
        %6255 = vmatprep.subr.bf16.mxu0 0
        %6256 = vmatpush1.bf16.msra.mxu0 0
        %6257 = vmatprep.subr.bf16.mxu0 0
        %6258 = vmatpush1.bf16.msra.mxu0 0
        %6259 = vmatprep.subr.bf16.mxu0 0
        %6260 = vmatpush1.bf16.msra.mxu0 0
        %6261 = vmatprep.subr.bf16.mxu0 0
        %6262 = vmatpush1.bf16.msra.mxu0 0
        %6263 = vmatprep.subr.bf16.mxu0 0
        %6264 = vmatpush1.bf16.msra.mxu0 0
        %6265 = vmatprep.subr.bf16.mxu0 0
        %6266 = vmatpush1.bf16.msra.mxu0 %v6249
        %6267 = vmatprep.subr.bf16.mxu0 0
        %6268 = vmatpush2.bf16.msra.mxu0 0
        %6269 = vmatprep.subr.bf16.mxu0 0
        %6270 = vmatpush2.bf16.msra.mxu0 0
        %6271 = vmatprep.subr.bf16.mxu0 0
        %6272 = vmatpush2.bf16.msra.mxu0 0
        %6273 = vmatprep.subr.bf16.mxu0 0
        %6274 = vmatpush2.bf16.msra.mxu0 0
        %6275 = vmatprep.subr.bf16.mxu0 0
        %6276 = vmatpush2.bf16.msra.mxu0 0
        %6277 = vmatprep.subr.bf16.mxu0 0
        %6278 = vmatpush2.bf16.msra.mxu0 0
        %6279 = vmatprep.subr.bf16.mxu0 0
        %6280 = vmatpush2.bf16.msra.mxu0 0
        %6281 = vmatprep.subr.bf16.mxu0 0
        %6282 = vmatpush2.bf16.msra.mxu0 0
        %6283 = vmatprep.mubr.bf16.mxu0 0
        %6284 = vmatmul.mubr.bf16.gmra.mxu0 %v6246
        %v6285 = vpop.f32.mrf.mxu0
        %v6286 = vadd.f32 0.0, %v6285
        %v6287 = vpop.f32.mrf.mxu0
        %v6288 = vpop.f32.mrf.mxu0
        %v6289 = vpop.f32.mrf.mxu0
        %6290 = vdwg.mxu0
        %6292 = vrot.lane.b32.xlu0 %v6286, 96
        %v6293 = vpop.permute.xlu0 %6292
        %6295 = vst.msk [vmem:[#allocation2] sm:$0xff] %vm1350, %v6293
        %v6296 = vld [vmem:[#allocation2] sm:$0xff]
        %v6297 = vpack.c.bf16 %v6296, %v6296
        %s6298 = scalar_lea.vmem [#allocation12], 256
        %v6299 = vld [vmem:[%s6298] sm:$0xf]
        %v6300 = vld [vmem:[%s6298 + $0x4] sm:$0xf]
        %v6301 = vld [vmem:[%s6298 + $0x8] sm:$0xf]
        %v6302 = vld [vmem:[%s6298 + $0xc] sm:$0xf]
        %v6303 = vld [vmem:[%s6298 + $0x10] sm:$0xf]
        %v6304 = vld [vmem:[%s6298 + $0x14] sm:$0xf]
        %v6305 = vld [vmem:[%s6298 + $0x18] sm:$0xf]
        %v6306 = vld [vmem:[%s6298 + $0x1c] sm:$0xf]
        %v6307 = vld [vmem:[%s6298 + $0x20] sm:$0xf]
        %v6308 = vld [vmem:[%s6298 + $0x24] sm:$0xf]
        %v6309 = vld [vmem:[%s6298 + $0x28] sm:$0xf]
        %v6310 = vld [vmem:[%s6298 + $0x2c] sm:$0xf]
        %v6311 = vld [vmem:[%s6298 + $0x30] sm:$0xf]
        %v6312 = vld [vmem:[%s6298 + $0x34] sm:$0xf]
        %v6313 = vld [vmem:[%s6298 + $0x38] sm:$0xf]
        %v6314 = vld [vmem:[%s6298 + $0x3c] sm:$0xf]
        %s6315 = scalar_lea.vmem %s6, 4
        %v6316 = vld [vmem:[%s6315] sm:$0x1]
        %v6318 = vlaneseq
        %v6319 = vshrl.u32 %v6318, 7
        %v6320 = vsub.s32 0, %v6319
        %v6321 = vrot.slane %v6316, %v6320
        %v6339 = vunpack.c.l.b16 %v6299
        %v6340 = vunpack.c.l.b16 %v6300
        %v6341 = vunpack.c.l.b16 %v6301
        %v6342 = vunpack.c.l.b16 %v6302
        %v6343 = vunpack.c.l.b16 %v6303
        %v6344 = vunpack.c.l.b16 %v6304
        %v6345 = vunpack.c.l.b16 %v6305
        %v6346 = vunpack.c.l.b16 %v6306
        %v6347 = vunpack.c.l.b16 %v6307
        %v6348 = vunpack.c.l.b16 %v6308
        %v6349 = vunpack.c.l.b16 %v6309
        %v6350 = vunpack.c.l.b16 %v6310
        %v6351 = vunpack.c.l.b16 %v6311
        %v6352 = vunpack.c.l.b16 %v6312
        %v6353 = vunpack.c.l.b16 %v6313
        %v6354 = vunpack.c.l.b16 %v6314
        %v6355 = vpack.c.b16 %v6340, %v6339
        %v6356 = vpack.c.b16 %v6342, %v6341
        %v6357 = vpack.c.b16 %v6344, %v6343
        %v6358 = vpack.c.b16 %v6346, %v6345
        %v6359 = vpack.c.b16 %v6348, %v6347
        %v6360 = vpack.c.b16 %v6350, %v6349
        %v6361 = vpack.c.b16 %v6352, %v6351
        %v6362 = vpack.c.b16 %v6354, %v6353
        %6371 = vmatprep.subr.bf16.mxu0 0
        %6372 = vmatpush1.bf16.msra.mxu0 %v6362
        %6373 = vmatprep.subr.bf16.mxu0 0
        %6374 = vmatpush1.bf16.msra.mxu0 %v6361
        %6375 = vmatprep.subr.bf16.mxu0 0
        %6376 = vmatpush1.bf16.msra.mxu0 %v6360
        %6377 = vmatprep.subr.bf16.mxu0 0
        %6378 = vmatpush1.bf16.msra.mxu0 %v6359
        %6379 = vmatprep.subr.bf16.mxu0 0
        %6380 = vmatpush1.bf16.msra.mxu0 %v6358
        %6381 = vmatprep.subr.bf16.mxu0 0
        %6382 = vmatpush1.bf16.msra.mxu0 %v6357
        %6383 = vmatprep.subr.bf16.mxu0 0
        %6384 = vmatpush1.bf16.msra.mxu0 %v6356
        %6385 = vmatprep.subr.bf16.mxu0 0
        %6386 = vmatpush1.bf16.msra.mxu0 %v6355
        %6387 = vmatprep.subr.bf16.mxu0 0
        %6388 = vmatpush2.bf16.msra.mxu0 0
        %6389 = vmatprep.subr.bf16.mxu0 0
        %6390 = vmatpush2.bf16.msra.mxu0 0
        %6391 = vmatprep.subr.bf16.mxu0 0
        %6392 = vmatpush2.bf16.msra.mxu0 0
        %6393 = vmatprep.subr.bf16.mxu0 0
        %6394 = vmatpush2.bf16.msra.mxu0 0
        %6395 = vmatprep.subr.bf16.mxu0 0
        %6396 = vmatpush2.bf16.msra.mxu0 0
        %6397 = vmatprep.subr.bf16.mxu0 0
        %6398 = vmatpush2.bf16.msra.mxu0 0
        %6399 = vmatprep.subr.bf16.mxu0 0
        %6400 = vmatpush2.bf16.msra.mxu0 0
        %6401 = vmatprep.subr.bf16.mxu0 0
        %6402 = vmatpush2.bf16.msra.mxu0 0
        %6403 = vmatprep.mubr.bf16.mxu0 0
        %6404 = vmatmul.mubr.bf16.gmra.mxu0 %v6297
        %v6405 = vpop.f32.mrf.mxu0
        %v6406 = vadd.f32 %v6321, %v6405
        %v6407 = vpop.f32.mrf.mxu0
        %v6408 = vpop.f32.mrf.mxu0
        %v6409 = vpop.f32.mrf.mxu0
        %6410 = vdwg.mxu0
        %v6411 = vadd.f32 %v5549, %v6406
        %s6412 = scalar_lea.vmem [#allocation14], 4
        %v6413 = vld [vmem:[%s6412] sm:$0x1]
        %s6414 = scalar_lea.vmem [#allocation15], 4
        %v6415 = vld [vmem:[%s6414] sm:$0x1]
        %6416 = vadd.xlane.f32.xlu0 %v6411
        %v6417 = vpop.xlane.xlu0 %6416
        %v6418 = vmul.f32 %v6417, %v607
        %v6419 = vsub.f32 %v6411, %v6418
        %v6420 = vmul.f32 %v6419, %v6419
        %6421 = vadd.xlane.f32.xlu0 %v6420
        %v6422 = vpop.xlane.xlu0 %6421
        %v6423 = vmul.f32 %v6422, %v607
        %v6424 = vadd.f32 %v6423, 1e-06
        %v6425 = vrsqrt.pop %v6424
        %v6426 = vmul.f32 %v6419, %v6425
        %v6428 = vlaneseq
        %v6429 = vshrl.u32 %v6428, 7
        %v6430 = vsub.s32 0, %v6429
        %v6431 = vrot.slane %v6413, %v6430
        %v6433 = vmul.f32 %v6426, %v6431
        %v6435 = vlaneseq
        %v6436 = vshrl.u32 %v6435, 7
        %v6437 = vsub.s32 0, %v6436
        %v6438 = vrot.slane %v6415, %v6437
        %v6440 = vadd.f32 %v6433, %v6438
        %v6441 = vpack.c.bf16 %v6440, %v6440
        %s6442 = scalar_lea.vmem [#allocation17], 512
        %v6443 = vld [vmem:[%s6442] sm:$0xff]
        %v6444 = vld [vmem:[%s6442 + $0x8] sm:$0xff]
        %v6445 = vld [vmem:[%s6442 + $0x10] sm:$0xff]
        %v6446 = vld [vmem:[%s6442 + $0x18] sm:$0xff]
        %v6447 = vld [vmem:[%s6442 + $0x20] sm:$0xff]
        %v6448 = vld [vmem:[%s6442 + $0x28] sm:$0xff]
        %v6449 = vld [vmem:[%s6442 + $0x30] sm:$0xff]
        %v6450 = vld [vmem:[%s6442 + $0x38] sm:$0xff]
        %v6451 = vld [vmem:[%s6442 + $0x40] sm:$0xff]
        %v6452 = vld [vmem:[%s6442 + $0x48] sm:$0xff]
        %v6453 = vld [vmem:[%s6442 + $0x50] sm:$0xff]
        %v6454 = vld [vmem:[%s6442 + $0x58] sm:$0xff]
        %v6455 = vld [vmem:[%s6442 + $0x60] sm:$0xff]
        %v6456 = vld [vmem:[%s6442 + $0x68] sm:$0xff]
        %v6457 = vld [vmem:[%s6442 + $0x70] sm:$0xff]
        %v6458 = vld [vmem:[%s6442 + $0x78] sm:$0xff]
        %s6459 = scalar_lea.vmem %s10, 8
        %v6460 = vld [vmem:[%s6459] sm:$0x3]
        %v6462 = vlaneseq
        %v6463 = vshrl.u32 %v6462, 7
        %v6464 = vsub.s32 0, %v6463
        %v6465 = vrot.slane %v6460, %v6464
        %v6466 = vlaneseq
        %v6467 = vshrl.u32 %v6466, 7
        %v6468 = vsub.s32 1, %v6467
        %v6469 = vrot.slane %v6460, %v6468
        %v6488 = vunpack.c.l.b16 %v6443
        %v6489 = vunpack.c.h.b16 %v6443
        %v6490 = vunpack.c.l.b16 %v6444
        %v6491 = vunpack.c.h.b16 %v6444
        %v6492 = vunpack.c.l.b16 %v6445
        %v6493 = vunpack.c.h.b16 %v6445
        %v6494 = vunpack.c.l.b16 %v6446
        %v6495 = vunpack.c.h.b16 %v6446
        %v6496 = vunpack.c.l.b16 %v6447
        %v6497 = vunpack.c.h.b16 %v6447
        %v6498 = vunpack.c.l.b16 %v6448
        %v6499 = vunpack.c.h.b16 %v6448
        %v6500 = vunpack.c.l.b16 %v6449
        %v6501 = vunpack.c.h.b16 %v6449
        %v6502 = vunpack.c.l.b16 %v6450
        %v6503 = vunpack.c.h.b16 %v6450
        %v6504 = vunpack.c.l.b16 %v6451
        %v6505 = vunpack.c.h.b16 %v6451
        %v6506 = vunpack.c.l.b16 %v6452
        %v6507 = vunpack.c.h.b16 %v6452
        %v6508 = vunpack.c.l.b16 %v6453
        %v6509 = vunpack.c.h.b16 %v6453
        %v6510 = vunpack.c.l.b16 %v6454
        %v6511 = vunpack.c.h.b16 %v6454
        %v6512 = vunpack.c.l.b16 %v6455
        %v6513 = vunpack.c.h.b16 %v6455
        %v6514 = vunpack.c.l.b16 %v6456
        %v6515 = vunpack.c.h.b16 %v6456
        %v6516 = vunpack.c.l.b16 %v6457
        %v6517 = vunpack.c.h.b16 %v6457
        %v6518 = vunpack.c.l.b16 %v6458
        %v6519 = vunpack.c.h.b16 %v6458
        %v6520 = vpack.c.b16 %v6490, %v6488
        %v6521 = vpack.c.b16 %v6491, %v6489
        %v6522 = vpack.c.b16 %v6494, %v6492
        %v6523 = vpack.c.b16 %v6495, %v6493
        %v6524 = vpack.c.b16 %v6498, %v6496
        %v6525 = vpack.c.b16 %v6499, %v6497
        %v6526 = vpack.c.b16 %v6502, %v6500
        %v6527 = vpack.c.b16 %v6503, %v6501
        %v6528 = vpack.c.b16 %v6506, %v6504
        %v6529 = vpack.c.b16 %v6507, %v6505
        %v6530 = vpack.c.b16 %v6510, %v6508
        %v6531 = vpack.c.b16 %v6511, %v6509
        %v6532 = vpack.c.b16 %v6514, %v6512
        %v6533 = vpack.c.b16 %v6515, %v6513
        %v6534 = vpack.c.b16 %v6518, %v6516
        %v6535 = vpack.c.b16 %v6519, %v6517
        %6552 = vmatprep.subr.bf16.mxu0 %v6535
        %6553 = vmatpush1.bf16.msra.mxu0 %v6534
        %6554 = vmatprep.subr.bf16.mxu0 %v6533
        %6555 = vmatpush1.bf16.msra.mxu0 %v6532
        %6556 = vmatprep.subr.bf16.mxu0 %v6531
        %6557 = vmatpush1.bf16.msra.mxu0 %v6530
        %6558 = vmatprep.subr.bf16.mxu0 %v6529
        %6559 = vmatpush1.bf16.msra.mxu0 %v6528
        %6560 = vmatprep.subr.bf16.mxu0 %v6527
        %6561 = vmatpush1.bf16.msra.mxu0 %v6526
        %6562 = vmatprep.subr.bf16.mxu0 %v6525
        %6563 = vmatpush1.bf16.msra.mxu0 %v6524
        %6564 = vmatprep.subr.bf16.mxu0 %v6523
        %6565 = vmatpush1.bf16.msra.mxu0 %v6522
        %6566 = vmatprep.subr.bf16.mxu0 %v6521
        %6567 = vmatpush1.bf16.msra.mxu0 %v6520
        %6568 = vmatprep.subr.bf16.mxu0 0
        %6569 = vmatpush2.bf16.msra.mxu0 0
        %6570 = vmatprep.subr.bf16.mxu0 0
        %6571 = vmatpush2.bf16.msra.mxu0 0
        %6572 = vmatprep.subr.bf16.mxu0 0
        %6573 = vmatpush2.bf16.msra.mxu0 0
        %6574 = vmatprep.subr.bf16.mxu0 0
        %6575 = vmatpush2.bf16.msra.mxu0 0
        %6576 = vmatprep.subr.bf16.mxu0 0
        %6577 = vmatpush2.bf16.msra.mxu0 0
        %6578 = vmatprep.subr.bf16.mxu0 0
        %6579 = vmatpush2.bf16.msra.mxu0 0
        %6580 = vmatprep.subr.bf16.mxu0 0
        %6581 = vmatpush2.bf16.msra.mxu0 0
        %6582 = vmatprep.subr.bf16.mxu0 0
        %6583 = vmatpush2.bf16.msra.mxu0 0
        %6584 = vmatprep.mubr.bf16.mxu0 0
        %6585 = vmatmul.mubr.bf16.gmra.mxu0 %v6441
        %v6586 = vpop.f32.mrf.mxu0
        %v6587 = vadd.f32 %v6465, %v6586
        %v6588 = vpop.f32.mrf.mxu0
        %v6589 = vadd.f32 %v6469, %v6588
        %v6590 = vpop.f32.mrf.mxu0
        %v6591 = vpop.f32.mrf.mxu0
        %6592 = vdwg.mxu0
        %v6593 = vmul.f32 %v6587, 0.5
        %v6594 = vmul.f32 %v6589, 0.5
        %v6595 = vmul.f32 %v6587, 0.70710677
        %v6596 = vmul.f32 %v6589, 0.70710677
        %v6597 = verf.f32.pop %v6595
        %v6598 = verf.f32.pop %v6596
        %v6599 = vadd.f32 %v6597, 1.0
        %v6600 = vadd.f32 %v6598, 1.0
        %v6601 = vmul.f32 %v6593, %v6599
        %v6602 = vmul.f32 %v6594, %v6600
        %v6603 = vpack.c.bf16 %v6601, %v6601
        %v6604 = vpack.c.bf16 %v6602, %v6602
        %s6605 = scalar_lea.vmem [#allocation18], 512
        %v6606 = vld [vmem:[%s6605] sm:$0xf]
        %v6607 = vld [vmem:[%s6605 + $0x4] sm:$0xf]
        %v6608 = vld [vmem:[%s6605 + $0x8] sm:$0xf]
        %v6609 = vld [vmem:[%s6605 + $0xc] sm:$0xf]
        %v6610 = vld [vmem:[%s6605 + $0x10] sm:$0xf]
        %v6611 = vld [vmem:[%s6605 + $0x14] sm:$0xf]
        %v6612 = vld [vmem:[%s6605 + $0x18] sm:$0xf]
        %v6613 = vld [vmem:[%s6605 + $0x1c] sm:$0xf]
        %v6614 = vld [vmem:[%s6605 + $0x20] sm:$0xf]
        %v6615 = vld [vmem:[%s6605 + $0x24] sm:$0xf]
        %v6616 = vld [vmem:[%s6605 + $0x28] sm:$0xf]
        %v6617 = vld [vmem:[%s6605 + $0x2c] sm:$0xf]
        %v6618 = vld [vmem:[%s6605 + $0x30] sm:$0xf]
        %v6619 = vld [vmem:[%s6605 + $0x34] sm:$0xf]
        %v6620 = vld [vmem:[%s6605 + $0x38] sm:$0xf]
        %v6621 = vld [vmem:[%s6605 + $0x3c] sm:$0xf]
        %v6622 = vld [vmem:[%s6605 + $0x40] sm:$0xf]
        %v6623 = vld [vmem:[%s6605 + $0x44] sm:$0xf]
        %v6624 = vld [vmem:[%s6605 + $0x48] sm:$0xf]
        %v6625 = vld [vmem:[%s6605 + $0x4c] sm:$0xf]
        %v6626 = vld [vmem:[%s6605 + $0x50] sm:$0xf]
        %v6627 = vld [vmem:[%s6605 + $0x54] sm:$0xf]
        %v6628 = vld [vmem:[%s6605 + $0x58] sm:$0xf]
        %v6629 = vld [vmem:[%s6605 + $0x5c] sm:$0xf]
        %v6630 = vld [vmem:[%s6605 + $0x60] sm:$0xf]
        %v6631 = vld [vmem:[%s6605 + $0x64] sm:$0xf]
        %v6632 = vld [vmem:[%s6605 + $0x68] sm:$0xf]
        %v6633 = vld [vmem:[%s6605 + $0x6c] sm:$0xf]
        %v6634 = vld [vmem:[%s6605 + $0x70] sm:$0xf]
        %v6635 = vld [vmem:[%s6605 + $0x74] sm:$0xf]
        %v6636 = vld [vmem:[%s6605 + $0x78] sm:$0xf]
        %v6637 = vld [vmem:[%s6605 + $0x7c] sm:$0xf]
        %s6638 = scalar_lea.vmem [#allocation20], 4
        %v6639 = vld [vmem:[%s6638] sm:$0x1]
        %v6641 = vlaneseq
        %v6642 = vshrl.u32 %v6641, 7
        %v6643 = vsub.s32 0, %v6642
        %v6644 = vrot.slane %v6639, %v6643
        %v6678 = vunpack.c.l.b16 %v6606
        %v6679 = vunpack.c.l.b16 %v6607
        %v6680 = vunpack.c.l.b16 %v6608
        %v6681 = vunpack.c.l.b16 %v6609
        %v6682 = vunpack.c.l.b16 %v6610
        %v6683 = vunpack.c.l.b16 %v6611
        %v6684 = vunpack.c.l.b16 %v6612
        %v6685 = vunpack.c.l.b16 %v6613
        %v6686 = vunpack.c.l.b16 %v6614
        %v6687 = vunpack.c.l.b16 %v6615
        %v6688 = vunpack.c.l.b16 %v6616
        %v6689 = vunpack.c.l.b16 %v6617
        %v6690 = vunpack.c.l.b16 %v6618
        %v6691 = vunpack.c.l.b16 %v6619
        %v6692 = vunpack.c.l.b16 %v6620
        %v6693 = vunpack.c.l.b16 %v6621
        %v6694 = vunpack.c.l.b16 %v6622
        %v6695 = vunpack.c.l.b16 %v6623
        %v6696 = vunpack.c.l.b16 %v6624
        %v6697 = vunpack.c.l.b16 %v6625
        %v6698 = vunpack.c.l.b16 %v6626
        %v6699 = vunpack.c.l.b16 %v6627
        %v6700 = vunpack.c.l.b16 %v6628
        %v6701 = vunpack.c.l.b16 %v6629
        %v6702 = vunpack.c.l.b16 %v6630
        %v6703 = vunpack.c.l.b16 %v6631
        %v6704 = vunpack.c.l.b16 %v6632
        %v6705 = vunpack.c.l.b16 %v6633
        %v6706 = vunpack.c.l.b16 %v6634
        %v6707 = vunpack.c.l.b16 %v6635
        %v6708 = vunpack.c.l.b16 %v6636
        %v6709 = vunpack.c.l.b16 %v6637
        %v6710 = vpack.c.b16 %v6679, %v6678
        %v6711 = vpack.c.b16 %v6681, %v6680
        %v6712 = vpack.c.b16 %v6683, %v6682
        %v6713 = vpack.c.b16 %v6685, %v6684
        %v6714 = vpack.c.b16 %v6687, %v6686
        %v6715 = vpack.c.b16 %v6689, %v6688
        %v6716 = vpack.c.b16 %v6691, %v6690
        %v6717 = vpack.c.b16 %v6693, %v6692
        %v6718 = vpack.c.b16 %v6695, %v6694
        %v6719 = vpack.c.b16 %v6697, %v6696
        %v6720 = vpack.c.b16 %v6699, %v6698
        %v6721 = vpack.c.b16 %v6701, %v6700
        %v6722 = vpack.c.b16 %v6703, %v6702
        %v6723 = vpack.c.b16 %v6705, %v6704
        %v6724 = vpack.c.b16 %v6707, %v6706
        %v6725 = vpack.c.b16 %v6709, %v6708
        %6742 = vmatprep.subr.bf16.mxu0 0
        %6743 = vmatpush1.bf16.msra.mxu0 %v6717
        %6744 = vmatprep.subr.bf16.mxu0 0
        %6745 = vmatpush1.bf16.msra.mxu0 %v6716
        %6746 = vmatprep.subr.bf16.mxu0 0
        %6747 = vmatpush1.bf16.msra.mxu0 %v6715
        %6748 = vmatprep.subr.bf16.mxu0 0
        %6749 = vmatpush1.bf16.msra.mxu0 %v6714
        %6750 = vmatprep.subr.bf16.mxu0 0
        %6751 = vmatpush1.bf16.msra.mxu0 %v6713
        %6752 = vmatprep.subr.bf16.mxu0 0
        %6753 = vmatpush1.bf16.msra.mxu0 %v6712
        %6754 = vmatprep.subr.bf16.mxu0 0
        %6755 = vmatpush1.bf16.msra.mxu0 %v6711
        %6756 = vmatprep.subr.bf16.mxu0 0
        %6757 = vmatpush1.bf16.msra.mxu0 %v6710
        %6758 = vmatprep.subr.bf16.mxu0 0
        %6759 = vmatpush2.bf16.msra.mxu0 %v6725
        %6760 = vmatprep.subr.bf16.mxu0 0
        %6761 = vmatpush2.bf16.msra.mxu0 %v6724
        %6762 = vmatprep.subr.bf16.mxu0 0
        %6763 = vmatpush2.bf16.msra.mxu0 %v6723
        %6764 = vmatprep.subr.bf16.mxu0 0
        %6765 = vmatpush2.bf16.msra.mxu0 %v6722
        %6766 = vmatprep.subr.bf16.mxu0 0
        %6767 = vmatpush2.bf16.msra.mxu0 %v6721
        %6768 = vmatprep.subr.bf16.mxu0 0
        %6769 = vmatpush2.bf16.msra.mxu0 %v6720
        %6770 = vmatprep.subr.bf16.mxu0 0
        %6771 = vmatpush2.bf16.msra.mxu0 %v6719
        %6772 = vmatprep.subr.bf16.mxu0 0
        %6773 = vmatpush2.bf16.msra.mxu0 %v6718
        %6774 = vmatprep.mubr.bf16.mxu0 %v6604
        %6775 = vmatmul.mubr.bf16.gmra.mxu0 %v6603
        %v6776 = vpop.f32.mrf.mxu0
        %v6777 = vadd.f32 %v6644, %v6776
        %v6778 = vpop.f32.mrf.mxu0
        %v6779 = vpop.f32.mrf.mxu0
        %v6780 = vpop.f32.mrf.mxu0
        %6781 = vdwg.mxu0
        %v6782 = vmul.f32 %v6777, 0.5
        %v6783 = vmul.f32 %v6777, 0.70710677
        %v6784 = verf.f32.pop %v6783
        %v6785 = vadd.f32 %v6784, 1.0
        %v6786 = vmul.f32 %v6782, %v6785
        %v6787 = vadd.f32 %v6411, %v6786
        %s6788 = scalar_lea.vmem [#allocation6], 5
        %v6789 = vld [vmem:[%s6788] sm:$0x1]
        %s6790 = scalar_lea.vmem [#allocation8], 5
        %v6791 = vld [vmem:[%s6790] sm:$0x1]
        %6792 = vadd.xlane.f32.xlu0 %v6787
        %v6793 = vpop.xlane.xlu0 %6792
        %v6794 = vmul.f32 %v6793, %v607
        %v6795 = vsub.f32 %v6787, %v6794
        %v6796 = vmul.f32 %v6795, %v6795
        %6797 = vadd.xlane.f32.xlu0 %v6796
        %v6798 = vpop.xlane.xlu0 %6797
        %v6799 = vmul.f32 %v6798, %v607
        %v6800 = vadd.f32 %v6799, 1e-06
        %v6801 = vrsqrt.pop %v6800
        %v6802 = vmul.f32 %v6795, %v6801
        %v6804 = vlaneseq
        %v6805 = vshrl.u32 %v6804, 7
        %v6806 = vsub.s32 0, %v6805
        %v6807 = vrot.slane %v6789, %v6806
        %v6809 = vmul.f32 %v6802, %v6807
        %v6811 = vlaneseq
        %v6812 = vshrl.u32 %v6811, 7
        %v6813 = vsub.s32 0, %v6812
        %v6814 = vrot.slane %v6791, %v6813
        %v6816 = vadd.f32 %v6809, %v6814
        %v6817 = vpack.c.bf16 %v6816, %v6816
        %s6818 = scalar_lea.vmem [#allocation9], 960
        %v6819 = vld [vmem:[%s6818] sm:$0xff]
        %v6820 = vld [vmem:[%s6818 + $0x8] sm:$0xf]
        %v6821 = vld [vmem:[%s6818 + $0xc] sm:$0xff]
        %v6822 = vld [vmem:[%s6818 + $0x14] sm:$0xf]
        %v6823 = vld [vmem:[%s6818 + $0x18] sm:$0xff]
        %v6824 = vld [vmem:[%s6818 + $0x20] sm:$0xf]
        %v6825 = vld [vmem:[%s6818 + $0x24] sm:$0xff]
        %v6826 = vld [vmem:[%s6818 + $0x2c] sm:$0xf]
        %v6827 = vld [vmem:[%s6818 + $0x30] sm:$0xff]
        %v6828 = vld [vmem:[%s6818 + $0x38] sm:$0xf]
        %v6829 = vld [vmem:[%s6818 + $0x3c] sm:$0xff]
        %v6830 = vld [vmem:[%s6818 + $0x44] sm:$0xf]
        %v6831 = vld [vmem:[%s6818 + $0x48] sm:$0xff]
        %v6832 = vld [vmem:[%s6818 + $0x50] sm:$0xf]
        %v6833 = vld [vmem:[%s6818 + $0x54] sm:$0xff]
        %v6834 = vld [vmem:[%s6818 + $0x5c] sm:$0xf]
        %v6835 = vld [vmem:[%s6818 + $0x60] sm:$0xff]
        %v6836 = vld [vmem:[%s6818 + $0x68] sm:$0xf]
        %v6837 = vld [vmem:[%s6818 + $0x6c] sm:$0xff]
        %v6838 = vld [vmem:[%s6818 + $0x74] sm:$0xf]
        %v6839 = vld [vmem:[%s6818 + $0x78] sm:$0xff]
        %v6840 = vld [vmem:[%s6818 + $0x80] sm:$0xf]
        %v6841 = vld [vmem:[%s6818 + $0x84] sm:$0xff]
        %v6842 = vld [vmem:[%s6818 + $0x8c] sm:$0xf]
        %v6843 = vld [vmem:[%s6818 + $0x90] sm:$0xff]
        %v6844 = vld [vmem:[%s6818 + $0x98] sm:$0xf]
        %v6845 = vld [vmem:[%s6818 + $0x9c] sm:$0xff]
        %v6846 = vld [vmem:[%s6818 + $0xa4] sm:$0xf]
        %v6847 = vld [vmem:[%s6818 + $0xa8] sm:$0xff]
        %v6848 = vld [vmem:[%s6818 + $0xb0] sm:$0xf]
        %v6849 = vld [vmem:[%s6818 + $0xb4] sm:$0xff]
        %v6850 = vld [vmem:[%s6818 + $0xbc] sm:$0xf]
        %s6851 = scalar_lea.vmem [#allocation11], 15
        %v6852 = vld [vmem:[%s6851] sm:$0x7]
        %v6854 = vlaneseq
        %v6855 = vshrl.u32 %v6854, 7
        %v6856 = vsub.s32 0, %v6855
        %v6857 = vrot.slane %v6852, %v6856
        %v6858 = vlaneseq
        %v6859 = vshrl.u32 %v6858, 7
        %v6860 = vsub.s32 1, %v6859
        %v6861 = vrot.slane %v6852, %v6860
        %v6862 = vlaneseq
        %v6863 = vshrl.u32 %v6862, 7
        %v6864 = vsub.s32 2, %v6863
        %v6865 = vrot.slane %v6852, %v6864
        %v6901 = vunpack.c.l.b16 %v6819
        %v6902 = vunpack.c.h.b16 %v6819
        %v6903 = vunpack.c.l.b16 %v6820
        %v6904 = vunpack.c.l.b16 %v6821
        %v6905 = vunpack.c.h.b16 %v6821
        %v6906 = vunpack.c.l.b16 %v6822
        %v6907 = vunpack.c.l.b16 %v6823
        %v6908 = vunpack.c.h.b16 %v6823
        %v6909 = vunpack.c.l.b16 %v6824
        %v6910 = vunpack.c.l.b16 %v6825
        %v6911 = vunpack.c.h.b16 %v6825
        %v6912 = vunpack.c.l.b16 %v6826
        %v6913 = vunpack.c.l.b16 %v6827
        %v6914 = vunpack.c.h.b16 %v6827
        %v6915 = vunpack.c.l.b16 %v6828
        %v6916 = vunpack.c.l.b16 %v6829
        %v6917 = vunpack.c.h.b16 %v6829
        %v6918 = vunpack.c.l.b16 %v6830
        %v6919 = vunpack.c.l.b16 %v6831
        %v6920 = vunpack.c.h.b16 %v6831
        %v6921 = vunpack.c.l.b16 %v6832
        %v6922 = vunpack.c.l.b16 %v6833
        %v6923 = vunpack.c.h.b16 %v6833
        %v6924 = vunpack.c.l.b16 %v6834
        %v6925 = vunpack.c.l.b16 %v6835
        %v6926 = vunpack.c.h.b16 %v6835
        %v6927 = vunpack.c.l.b16 %v6836
        %v6928 = vunpack.c.l.b16 %v6837
        %v6929 = vunpack.c.h.b16 %v6837
        %v6930 = vunpack.c.l.b16 %v6838
        %v6931 = vunpack.c.l.b16 %v6839
        %v6932 = vunpack.c.h.b16 %v6839
        %v6933 = vunpack.c.l.b16 %v6840
        %v6934 = vunpack.c.l.b16 %v6841
        %v6935 = vunpack.c.h.b16 %v6841
        %v6936 = vunpack.c.l.b16 %v6842
        %v6937 = vunpack.c.l.b16 %v6843
        %v6938 = vunpack.c.h.b16 %v6843
        %v6939 = vunpack.c.l.b16 %v6844
        %v6940 = vunpack.c.l.b16 %v6845
        %v6941 = vunpack.c.h.b16 %v6845
        %v6942 = vunpack.c.l.b16 %v6846
        %v6943 = vunpack.c.l.b16 %v6847
        %v6944 = vunpack.c.h.b16 %v6847
        %v6945 = vunpack.c.l.b16 %v6848
        %v6946 = vunpack.c.l.b16 %v6849
        %v6947 = vunpack.c.h.b16 %v6849
        %v6948 = vunpack.c.l.b16 %v6850
        %v6949 = vpack.c.b16 %v6904, %v6901
        %v6950 = vpack.c.b16 %v6905, %v6902
        %v6951 = vpack.c.b16 %v6906, %v6903
        %v6952 = vpack.c.b16 %v6910, %v6907
        %v6953 = vpack.c.b16 %v6911, %v6908
        %v6954 = vpack.c.b16 %v6912, %v6909
        %v6955 = vpack.c.b16 %v6916, %v6913
        %v6956 = vpack.c.b16 %v6917, %v6914
        %v6957 = vpack.c.b16 %v6918, %v6915
        %v6958 = vpack.c.b16 %v6922, %v6919
        %v6959 = vpack.c.b16 %v6923, %v6920
        %v6960 = vpack.c.b16 %v6924, %v6921
        %v6961 = vpack.c.b16 %v6928, %v6925
        %v6962 = vpack.c.b16 %v6929, %v6926
        %v6963 = vpack.c.b16 %v6930, %v6927
        %v6964 = vpack.c.b16 %v6934, %v6931
        %v6965 = vpack.c.b16 %v6935, %v6932
        %v6966 = vpack.c.b16 %v6936, %v6933
        %v6967 = vpack.c.b16 %v6940, %v6937
        %v6968 = vpack.c.b16 %v6941, %v6938
        %v6969 = vpack.c.b16 %v6942, %v6939
        %v6970 = vpack.c.b16 %v6946, %v6943
        %v6971 = vpack.c.b16 %v6947, %v6944
        %v6972 = vpack.c.b16 %v6948, %v6945
        %6997 = vmatprep.subr.bf16.mxu0 %v6971
        %6998 = vmatpush1.bf16.msra.mxu0 %v6970
        %6999 = vmatprep.subr.bf16.mxu0 %v6968
        %7000 = vmatpush1.bf16.msra.mxu0 %v6967
        %7001 = vmatprep.subr.bf16.mxu0 %v6965
        %7002 = vmatpush1.bf16.msra.mxu0 %v6964
        %7003 = vmatprep.subr.bf16.mxu0 %v6962
        %7004 = vmatpush1.bf16.msra.mxu0 %v6961
        %7005 = vmatprep.subr.bf16.mxu0 %v6959
        %7006 = vmatpush1.bf16.msra.mxu0 %v6958
        %7007 = vmatprep.subr.bf16.mxu0 %v6956
        %7008 = vmatpush1.bf16.msra.mxu0 %v6955
        %7009 = vmatprep.subr.bf16.mxu0 %v6953
        %7010 = vmatpush1.bf16.msra.mxu0 %v6952
        %7011 = vmatprep.subr.bf16.mxu0 %v6950
        %7012 = vmatpush1.bf16.msra.mxu0 %v6949
        %7013 = vmatprep.subr.bf16.mxu0 0
        %7014 = vmatpush2.bf16.msra.mxu0 0
        %7015 = vmatprep.subr.bf16.mxu0 0
        %7016 = vmatpush2.bf16.msra.mxu0 0
        %7017 = vmatprep.subr.bf16.mxu0 0
        %7018 = vmatpush2.bf16.msra.mxu0 0
        %7019 = vmatprep.subr.bf16.mxu0 0
        %7020 = vmatpush2.bf16.msra.mxu0 0
        %7021 = vmatprep.subr.bf16.mxu0 0
        %7022 = vmatpush2.bf16.msra.mxu0 0
        %7023 = vmatprep.subr.bf16.mxu0 0
        %7024 = vmatpush2.bf16.msra.mxu0 0
        %7025 = vmatprep.subr.bf16.mxu0 0
        %7026 = vmatpush2.bf16.msra.mxu0 0
        %7027 = vmatprep.subr.bf16.mxu0 0
        %7028 = vmatpush2.bf16.msra.mxu0 0
        %7029 = vmatprep.mubr.bf16.mxu0 0
        %7030 = vmatmul.mubr.bf16.gmra.mxu0 %v6817
        %v7031 = vpop.f32.mrf.mxu0
        %v7032 = vadd.f32 %v6857, %v7031
        %v7033 = vpop.f32.mrf.mxu0
        %v7034 = vadd.f32 %v6861, %v7033
        %v7035 = vpop.f32.mrf.mxu0
        %v7036 = vpop.f32.mrf.mxu0
        %7037 = vdwg.mxu0
        %7038 = vmatprep.subr.bf16.mxu0 0
        %7039 = vmatpush1.bf16.msra.mxu0 %v6972
        %7040 = vmatprep.subr.bf16.mxu0 0
        %7041 = vmatpush1.bf16.msra.mxu0 %v6969
        %7042 = vmatprep.subr.bf16.mxu0 0
        %7043 = vmatpush1.bf16.msra.mxu0 %v6966
        %7044 = vmatprep.subr.bf16.mxu0 0
        %7045 = vmatpush1.bf16.msra.mxu0 %v6963
        %7046 = vmatprep.subr.bf16.mxu0 0
        %7047 = vmatpush1.bf16.msra.mxu0 %v6960
        %7048 = vmatprep.subr.bf16.mxu0 0
        %7049 = vmatpush1.bf16.msra.mxu0 %v6957
        %7050 = vmatprep.subr.bf16.mxu0 0
        %7051 = vmatpush1.bf16.msra.mxu0 %v6954
        %7052 = vmatprep.subr.bf16.mxu0 0
        %7053 = vmatpush1.bf16.msra.mxu0 %v6951
        %7054 = vmatprep.subr.bf16.mxu0 0
        %7055 = vmatpush2.bf16.msra.mxu0 0
        %7056 = vmatprep.subr.bf16.mxu0 0
        %7057 = vmatpush2.bf16.msra.mxu0 0
        %7058 = vmatprep.subr.bf16.mxu0 0
        %7059 = vmatpush2.bf16.msra.mxu0 0
        %7060 = vmatprep.subr.bf16.mxu0 0
        %7061 = vmatpush2.bf16.msra.mxu0 0
        %7062 = vmatprep.subr.bf16.mxu0 0
        %7063 = vmatpush2.bf16.msra.mxu0 0
        %7064 = vmatprep.subr.bf16.mxu0 0
        %7065 = vmatpush2.bf16.msra.mxu0 0
        %7066 = vmatprep.subr.bf16.mxu0 0
        %7067 = vmatpush2.bf16.msra.mxu0 0
        %7068 = vmatprep.subr.bf16.mxu0 0
        %7069 = vmatpush2.bf16.msra.mxu0 0
        %7070 = vmatprep.mubr.bf16.mxu0 0
        %7071 = vmatmul.mubr.bf16.gmra.mxu0 %v6817
        %v7072 = vpop.f32.mrf.mxu0
        %v7073 = vadd.f32 %v6865, %v7072
        %v7074 = vpop.f32.mrf.mxu0
        %v7075 = vpop.f32.mrf.mxu0
        %v7076 = vpop.f32.mrf.mxu0
        %7077 = vdwg.mxu0
        %v7078 = vpack.c.bf16 %v7032, %v7032
        %v7079 = vpack.c.bf16 %v7034, %v7034
        %v7080 = vpack.c.bf16 %v7073, %v7073
        %v7082 = vsel %vm893, %v7078, 0
        %v7085 = vsel %vm893, %v7079, 0
        %7087 = vmatprep.subr.bf16.mxu0 0
        %7088 = vmatpush1.bf16.xpose.msra.mxu0 0
        %7089 = vmatprep.subr.bf16.mxu0 0
        %7090 = vmatpush1.bf16.xpose.msra.mxu0 0
        %7091 = vmatprep.subr.bf16.mxu0 0
        %7092 = vmatpush1.bf16.xpose.msra.mxu0 0
        %7093 = vmatprep.subr.bf16.mxu0 0
        %7094 = vmatpush1.bf16.xpose.msra.mxu0 0
        %7095 = vmatprep.subr.bf16.mxu0 0
        %7096 = vmatpush1.bf16.xpose.msra.mxu0 0
        %7097 = vmatprep.subr.bf16.mxu0 0
        %7098 = vmatpush1.bf16.xpose.msra.mxu0 0
        %7099 = vmatprep.subr.bf16.mxu0 0
        %7100 = vmatpush1.bf16.xpose.msra.mxu0 0
        %7101 = vmatprep.subr.bf16.mxu0 0
        %7102 = vmatpush1.bf16.xpose.msra.mxu0 %v7085
        %7103 = vmatprep.subr.bf16.mxu0 0
        %7104 = vmatpush2.bf16.xpose.msra.mxu0 0
        %7105 = vmatprep.subr.bf16.mxu0 0
        %7106 = vmatpush2.bf16.xpose.msra.mxu0 0
        %7107 = vmatprep.subr.bf16.mxu0 0
        %7108 = vmatpush2.bf16.xpose.msra.mxu0 0
        %7109 = vmatprep.subr.bf16.mxu0 0
        %7110 = vmatpush2.bf16.xpose.msra.mxu0 0
        %7111 = vmatprep.subr.bf16.mxu0 0
        %7112 = vmatpush2.bf16.xpose.msra.mxu0 0
        %7113 = vmatprep.subr.bf16.mxu0 0
        %7114 = vmatpush2.bf16.xpose.msra.mxu0 0
        %7115 = vmatprep.subr.bf16.mxu0 0
        %7116 = vmatpush2.bf16.xpose.msra.mxu0 0
        %7117 = vmatprep.subr.bf16.mxu0 0
        %7118 = vmatpush2.bf16.xpose.msra.mxu0 0
        %7119 = vmatprep.mubr.bf16.mxu0 0
        %7120 = vmatmul.mubr.bf16.gmra.mxu0 %v7082
        %v7121 = vpop.f32.mrf.mxu0
        %v7122 = vadd.f32 0.0, %v7121
        %v7123 = vpop.f32.mrf.mxu0
        %v7124 = vpop.f32.mrf.mxu0
        %v7125 = vpop.f32.mrf.mxu0
        %7126 = vdwg.mxu0
        %v7127 = vsel %vm940, %v7122, -inf
        %7128 = vmax.xlane.f32.xlu0 %v7127
        %v7129 = vpop.xlane.xlu0 %7128
        %v7130 = vsub.f32 %v7122, %v7129
        %v7131 = vmul.f32 %v7130, 1.442695
        %v7132 = vpow.pop %v7131
        %v7133 = vsel %vm940, %v7132, 0.0
        %7134 = vadd.xlane.f32.xlu0 %v7133
        %v7135 = vpop.xlane.xlu0 %7134
        %v7136 = vrcp.pop %v7135
        %v7137 = vmul.f32 %v7132, %v7136
        %v7138 = vpack.c.bf16 %v7137, %v7137
        %v7140 = vsel %vm940, %v7138, 0
        %v7143 = vsel %vm956, %v7080, 0
        %7145 = vmatprep.subr.bf16.mxu0 0
        %7146 = vmatpush1.bf16.msra.mxu0 0
        %7147 = vmatprep.subr.bf16.mxu0 0
        %7148 = vmatpush1.bf16.msra.mxu0 0
        %7149 = vmatprep.subr.bf16.mxu0 0
        %7150 = vmatpush1.bf16.msra.mxu0 0
        %7151 = vmatprep.subr.bf16.mxu0 0
        %7152 = vmatpush1.bf16.msra.mxu0 0
        %7153 = vmatprep.subr.bf16.mxu0 0
        %7154 = vmatpush1.bf16.msra.mxu0 0
        %7155 = vmatprep.subr.bf16.mxu0 0
        %7156 = vmatpush1.bf16.msra.mxu0 0
        %7157 = vmatprep.subr.bf16.mxu0 0
        %7158 = vmatpush1.bf16.msra.mxu0 0
        %7159 = vmatprep.subr.bf16.mxu0 0
        %7160 = vmatpush1.bf16.msra.mxu0 %v7143
        %7161 = vmatprep.subr.bf16.mxu0 0
        %7162 = vmatpush2.bf16.msra.mxu0 0
        %7163 = vmatprep.subr.bf16.mxu0 0
        %7164 = vmatpush2.bf16.msra.mxu0 0
        %7165 = vmatprep.subr.bf16.mxu0 0
        %7166 = vmatpush2.bf16.msra.mxu0 0
        %7167 = vmatprep.subr.bf16.mxu0 0
        %7168 = vmatpush2.bf16.msra.mxu0 0
        %7169 = vmatprep.subr.bf16.mxu0 0
        %7170 = vmatpush2.bf16.msra.mxu0 0
        %7171 = vmatprep.subr.bf16.mxu0 0
        %7172 = vmatpush2.bf16.msra.mxu0 0
        %7173 = vmatprep.subr.bf16.mxu0 0
        %7174 = vmatpush2.bf16.msra.mxu0 0
        %7175 = vmatprep.subr.bf16.mxu0 0
        %7176 = vmatpush2.bf16.msra.mxu0 0
        %7177 = vmatprep.mubr.bf16.mxu0 0
        %7178 = vmatmul.mubr.bf16.gmra.mxu0 %v7140
        %v7179 = vpop.f32.mrf.mxu0
        %v7180 = vadd.f32 0.0, %v7179
        %v7181 = vpop.f32.mrf.mxu0
        %v7182 = vpop.f32.mrf.mxu0
        %v7183 = vpop.f32.mrf.mxu0
        %7184 = vdwg.mxu0
        %7185 = vst.msk [vmem:[#allocation2] sm:$0xff] %vm893, %v7180
        %7187 = vrot.lane.b32.xlu0 %v7078, 96
        %v7188 = vpop.permute.xlu0 %7187
        %7190 = vrot.lane.b32.xlu0 %v7079, 96
        %v7191 = vpop.permute.xlu0 %7190
        %v7193 = vsel %vm893, %v7188, 0
        %v7196 = vsel %vm893, %v7191, 0
        %7198 = vmatprep.subr.bf16.mxu0 0
        %7199 = vmatpush1.bf16.xpose.msra.mxu0 0
        %7200 = vmatprep.subr.bf16.mxu0 0
        %7201 = vmatpush1.bf16.xpose.msra.mxu0 0
        %7202 = vmatprep.subr.bf16.mxu0 0
        %7203 = vmatpush1.bf16.xpose.msra.mxu0 0
        %7204 = vmatprep.subr.bf16.mxu0 0
        %7205 = vmatpush1.bf16.xpose.msra.mxu0 0
        %7206 = vmatprep.subr.bf16.mxu0 0
        %7207 = vmatpush1.bf16.xpose.msra.mxu0 0
        %7208 = vmatprep.subr.bf16.mxu0 0
        %7209 = vmatpush1.bf16.xpose.msra.mxu0 0
        %7210 = vmatprep.subr.bf16.mxu0 0
        %7211 = vmatpush1.bf16.xpose.msra.mxu0 0
        %7212 = vmatprep.subr.bf16.mxu0 0
        %7213 = vmatpush1.bf16.xpose.msra.mxu0 %v7196
        %7214 = vmatprep.subr.bf16.mxu0 0
        %7215 = vmatpush2.bf16.xpose.msra.mxu0 0
        %7216 = vmatprep.subr.bf16.mxu0 0
        %7217 = vmatpush2.bf16.xpose.msra.mxu0 0
        %7218 = vmatprep.subr.bf16.mxu0 0
        %7219 = vmatpush2.bf16.xpose.msra.mxu0 0
        %7220 = vmatprep.subr.bf16.mxu0 0
        %7221 = vmatpush2.bf16.xpose.msra.mxu0 0
        %7222 = vmatprep.subr.bf16.mxu0 0
        %7223 = vmatpush2.bf16.xpose.msra.mxu0 0
        %7224 = vmatprep.subr.bf16.mxu0 0
        %7225 = vmatpush2.bf16.xpose.msra.mxu0 0
        %7226 = vmatprep.subr.bf16.mxu0 0
        %7227 = vmatpush2.bf16.xpose.msra.mxu0 0
        %7228 = vmatprep.subr.bf16.mxu0 0
        %7229 = vmatpush2.bf16.xpose.msra.mxu0 0
        %7230 = vmatprep.mubr.bf16.mxu0 0
        %7231 = vmatmul.mubr.bf16.gmra.mxu0 %v7193
        %v7232 = vpop.f32.mrf.mxu0
        %v7233 = vadd.f32 0.0, %v7232
        %v7234 = vpop.f32.mrf.mxu0
        %v7235 = vpop.f32.mrf.mxu0
        %v7236 = vpop.f32.mrf.mxu0
        %7237 = vdwg.mxu0
        %v7238 = vsel %vm940, %v7233, -inf
        %7239 = vmax.xlane.f32.xlu0 %v7238
        %v7240 = vpop.xlane.xlu0 %7239
        %v7241 = vsub.f32 %v7233, %v7240
        %v7242 = vmul.f32 %v7241, 1.442695
        %v7243 = vpow.pop %v7242
        %v7244 = vsel %vm940, %v7243, 0.0
        %7245 = vadd.xlane.f32.xlu0 %v7244
        %v7246 = vpop.xlane.xlu0 %7245
        %v7247 = vrcp.pop %v7246
        %v7248 = vmul.f32 %v7243, %v7247
        %v7249 = vpack.c.bf16 %v7248, %v7248
        %7251 = vrot.lane.b32.xlu0 %v7080, 96
        %v7252 = vpop.permute.xlu0 %7251
        %v7254 = vsel %vm940, %v7249, 0
        %v7257 = vsel %vm956, %v7252, 0
        %7259 = vmatprep.subr.bf16.mxu0 0
        %7260 = vmatpush1.bf16.msra.mxu0 0
        %7261 = vmatprep.subr.bf16.mxu0 0
        %7262 = vmatpush1.bf16.msra.mxu0 0
        %7263 = vmatprep.subr.bf16.mxu0 0
        %7264 = vmatpush1.bf16.msra.mxu0 0
        %7265 = vmatprep.subr.bf16.mxu0 0
        %7266 = vmatpush1.bf16.msra.mxu0 0
        %7267 = vmatprep.subr.bf16.mxu0 0
        %7268 = vmatpush1.bf16.msra.mxu0 0
        %7269 = vmatprep.subr.bf16.mxu0 0
        %7270 = vmatpush1.bf16.msra.mxu0 0
        %7271 = vmatprep.subr.bf16.mxu0 0
        %7272 = vmatpush1.bf16.msra.mxu0 0
        %7273 = vmatprep.subr.bf16.mxu0 0
        %7274 = vmatpush1.bf16.msra.mxu0 %v7257
        %7275 = vmatprep.subr.bf16.mxu0 0
        %7276 = vmatpush2.bf16.msra.mxu0 0
        %7277 = vmatprep.subr.bf16.mxu0 0
        %7278 = vmatpush2.bf16.msra.mxu0 0
        %7279 = vmatprep.subr.bf16.mxu0 0
        %7280 = vmatpush2.bf16.msra.mxu0 0
        %7281 = vmatprep.subr.bf16.mxu0 0
        %7282 = vmatpush2.bf16.msra.mxu0 0
        %7283 = vmatprep.subr.bf16.mxu0 0
        %7284 = vmatpush2.bf16.msra.mxu0 0
        %7285 = vmatprep.subr.bf16.mxu0 0
        %7286 = vmatpush2.bf16.msra.mxu0 0
        %7287 = vmatprep.subr.bf16.mxu0 0
        %7288 = vmatpush2.bf16.msra.mxu0 0
        %7289 = vmatprep.subr.bf16.mxu0 0
        %7290 = vmatpush2.bf16.msra.mxu0 0
        %7291 = vmatprep.mubr.bf16.mxu0 0
        %7292 = vmatmul.mubr.bf16.gmra.mxu0 %v7254
        %v7293 = vpop.f32.mrf.mxu0
        %v7294 = vadd.f32 0.0, %v7293
        %v7295 = vpop.f32.mrf.mxu0
        %v7296 = vpop.f32.mrf.mxu0
        %v7297 = vpop.f32.mrf.mxu0
        %7298 = vdwg.mxu0
        %7300 = vrot.lane.b32.xlu0 %v7294, 32
        %v7301 = vpop.permute.xlu0 %7300
        %7303 = vst.msk [vmem:[#allocation2] sm:$0xff] %vm1118, %v7301
        %7304 = vrot.lane.b32.xlu0 %v7078, 64
        %v7305 = vpop.permute.xlu0 %7304
        %7306 = vrot.lane.b32.xlu0 %v7079, 64
        %v7307 = vpop.permute.xlu0 %7306
        %v7309 = vsel %vm893, %v7305, 0
        %v7312 = vsel %vm893, %v7307, 0
        %7314 = vmatprep.subr.bf16.mxu0 0
        %7315 = vmatpush1.bf16.xpose.msra.mxu0 0
        %7316 = vmatprep.subr.bf16.mxu0 0
        %7317 = vmatpush1.bf16.xpose.msra.mxu0 0
        %7318 = vmatprep.subr.bf16.mxu0 0
        %7319 = vmatpush1.bf16.xpose.msra.mxu0 0
        %7320 = vmatprep.subr.bf16.mxu0 0
        %7321 = vmatpush1.bf16.xpose.msra.mxu0 0
        %7322 = vmatprep.subr.bf16.mxu0 0
        %7323 = vmatpush1.bf16.xpose.msra.mxu0 0
        %7324 = vmatprep.subr.bf16.mxu0 0
        %7325 = vmatpush1.bf16.xpose.msra.mxu0 0
        %7326 = vmatprep.subr.bf16.mxu0 0
        %7327 = vmatpush1.bf16.xpose.msra.mxu0 0
        %7328 = vmatprep.subr.bf16.mxu0 0
        %7329 = vmatpush1.bf16.xpose.msra.mxu0 %v7312
        %7330 = vmatprep.subr.bf16.mxu0 0
        %7331 = vmatpush2.bf16.xpose.msra.mxu0 0
        %7332 = vmatprep.subr.bf16.mxu0 0
        %7333 = vmatpush2.bf16.xpose.msra.mxu0 0
        %7334 = vmatprep.subr.bf16.mxu0 0
        %7335 = vmatpush2.bf16.xpose.msra.mxu0 0
        %7336 = vmatprep.subr.bf16.mxu0 0
        %7337 = vmatpush2.bf16.xpose.msra.mxu0 0
        %7338 = vmatprep.subr.bf16.mxu0 0
        %7339 = vmatpush2.bf16.xpose.msra.mxu0 0
        %7340 = vmatprep.subr.bf16.mxu0 0
        %7341 = vmatpush2.bf16.xpose.msra.mxu0 0
        %7342 = vmatprep.subr.bf16.mxu0 0
        %7343 = vmatpush2.bf16.xpose.msra.mxu0 0
        %7344 = vmatprep.subr.bf16.mxu0 0
        %7345 = vmatpush2.bf16.xpose.msra.mxu0 0
        %7346 = vmatprep.mubr.bf16.mxu0 0
        %7347 = vmatmul.mubr.bf16.gmra.mxu0 %v7309
        %v7348 = vpop.f32.mrf.mxu0
        %v7349 = vadd.f32 0.0, %v7348
        %v7350 = vpop.f32.mrf.mxu0
        %v7351 = vpop.f32.mrf.mxu0
        %v7352 = vpop.f32.mrf.mxu0
        %7353 = vdwg.mxu0
        %v7354 = vsel %vm940, %v7349, -inf
        %7355 = vmax.xlane.f32.xlu0 %v7354
        %v7356 = vpop.xlane.xlu0 %7355
        %v7357 = vsub.f32 %v7349, %v7356
        %v7358 = vmul.f32 %v7357, 1.442695
        %v7359 = vpow.pop %v7358
        %v7360 = vsel %vm940, %v7359, 0.0
        %7361 = vadd.xlane.f32.xlu0 %v7360
        %v7362 = vpop.xlane.xlu0 %7361
        %v7363 = vrcp.pop %v7362
        %v7364 = vmul.f32 %v7359, %v7363
        %v7365 = vpack.c.bf16 %v7364, %v7364
        %7366 = vrot.lane.b32.xlu0 %v7080, 64
        %v7367 = vpop.permute.xlu0 %7366
        %v7369 = vsel %vm940, %v7365, 0
        %v7372 = vsel %vm956, %v7367, 0
        %7374 = vmatprep.subr.bf16.mxu0 0
        %7375 = vmatpush1.bf16.msra.mxu0 0
        %7376 = vmatprep.subr.bf16.mxu0 0
        %7377 = vmatpush1.bf16.msra.mxu0 0
        %7378 = vmatprep.subr.bf16.mxu0 0
        %7379 = vmatpush1.bf16.msra.mxu0 0
        %7380 = vmatprep.subr.bf16.mxu0 0
        %7381 = vmatpush1.bf16.msra.mxu0 0
        %7382 = vmatprep.subr.bf16.mxu0 0
        %7383 = vmatpush1.bf16.msra.mxu0 0
        %7384 = vmatprep.subr.bf16.mxu0 0
        %7385 = vmatpush1.bf16.msra.mxu0 0
        %7386 = vmatprep.subr.bf16.mxu0 0
        %7387 = vmatpush1.bf16.msra.mxu0 0
        %7388 = vmatprep.subr.bf16.mxu0 0
        %7389 = vmatpush1.bf16.msra.mxu0 %v7372
        %7390 = vmatprep.subr.bf16.mxu0 0
        %7391 = vmatpush2.bf16.msra.mxu0 0
        %7392 = vmatprep.subr.bf16.mxu0 0
        %7393 = vmatpush2.bf16.msra.mxu0 0
        %7394 = vmatprep.subr.bf16.mxu0 0
        %7395 = vmatpush2.bf16.msra.mxu0 0
        %7396 = vmatprep.subr.bf16.mxu0 0
        %7397 = vmatpush2.bf16.msra.mxu0 0
        %7398 = vmatprep.subr.bf16.mxu0 0
        %7399 = vmatpush2.bf16.msra.mxu0 0
        %7400 = vmatprep.subr.bf16.mxu0 0
        %7401 = vmatpush2.bf16.msra.mxu0 0
        %7402 = vmatprep.subr.bf16.mxu0 0
        %7403 = vmatpush2.bf16.msra.mxu0 0
        %7404 = vmatprep.subr.bf16.mxu0 0
        %7405 = vmatpush2.bf16.msra.mxu0 0
        %7406 = vmatprep.mubr.bf16.mxu0 0
        %7407 = vmatmul.mubr.bf16.gmra.mxu0 %v7369
        %v7408 = vpop.f32.mrf.mxu0
        %v7409 = vadd.f32 0.0, %v7408
        %v7410 = vpop.f32.mrf.mxu0
        %v7411 = vpop.f32.mrf.mxu0
        %v7412 = vpop.f32.mrf.mxu0
        %7413 = vdwg.mxu0
        %7415 = vrot.lane.b32.xlu0 %v7409, 64
        %v7416 = vpop.permute.xlu0 %7415
        %7418 = vst.msk [vmem:[#allocation2] sm:$0xff] %vm1234, %v7416
        %7419 = vrot.lane.b32.xlu0 %v7078, 32
        %v7420 = vpop.permute.xlu0 %7419
        %7421 = vrot.lane.b32.xlu0 %v7079, 32
        %v7422 = vpop.permute.xlu0 %7421
        %v7424 = vsel %vm893, %v7420, 0
        %v7427 = vsel %vm893, %v7422, 0
        %7429 = vmatprep.subr.bf16.mxu0 0
        %7430 = vmatpush1.bf16.xpose.msra.mxu0 0
        %7431 = vmatprep.subr.bf16.mxu0 0
        %7432 = vmatpush1.bf16.xpose.msra.mxu0 0
        %7433 = vmatprep.subr.bf16.mxu0 0
        %7434 = vmatpush1.bf16.xpose.msra.mxu0 0
        %7435 = vmatprep.subr.bf16.mxu0 0
        %7436 = vmatpush1.bf16.xpose.msra.mxu0 0
        %7437 = vmatprep.subr.bf16.mxu0 0
        %7438 = vmatpush1.bf16.xpose.msra.mxu0 0
        %7439 = vmatprep.subr.bf16.mxu0 0
        %7440 = vmatpush1.bf16.xpose.msra.mxu0 0
        %7441 = vmatprep.subr.bf16.mxu0 0
        %7442 = vmatpush1.bf16.xpose.msra.mxu0 0
        %7443 = vmatprep.subr.bf16.mxu0 0
        %7444 = vmatpush1.bf16.xpose.msra.mxu0 %v7427
        %7445 = vmatprep.subr.bf16.mxu0 0
        %7446 = vmatpush2.bf16.xpose.msra.mxu0 0
        %7447 = vmatprep.subr.bf16.mxu0 0
        %7448 = vmatpush2.bf16.xpose.msra.mxu0 0
        %7449 = vmatprep.subr.bf16.mxu0 0
        %7450 = vmatpush2.bf16.xpose.msra.mxu0 0
        %7451 = vmatprep.subr.bf16.mxu0 0
        %7452 = vmatpush2.bf16.xpose.msra.mxu0 0
        %7453 = vmatprep.subr.bf16.mxu0 0
        %7454 = vmatpush2.bf16.xpose.msra.mxu0 0
        %7455 = vmatprep.subr.bf16.mxu0 0
        %7456 = vmatpush2.bf16.xpose.msra.mxu0 0
        %7457 = vmatprep.subr.bf16.mxu0 0
        %7458 = vmatpush2.bf16.xpose.msra.mxu0 0
        %7459 = vmatprep.subr.bf16.mxu0 0
        %7460 = vmatpush2.bf16.xpose.msra.mxu0 0
        %7461 = vmatprep.mubr.bf16.mxu0 0
        %7462 = vmatmul.mubr.bf16.gmra.mxu0 %v7424
        %v7463 = vpop.f32.mrf.mxu0
        %v7464 = vadd.f32 0.0, %v7463
        %v7465 = vpop.f32.mrf.mxu0
        %v7466 = vpop.f32.mrf.mxu0
        %v7467 = vpop.f32.mrf.mxu0
        %7468 = vdwg.mxu0
        %v7469 = vsel %vm940, %v7464, -inf
        %7470 = vmax.xlane.f32.xlu0 %v7469
        %v7471 = vpop.xlane.xlu0 %7470
        %v7472 = vsub.f32 %v7464, %v7471
        %v7473 = vmul.f32 %v7472, 1.442695
        %v7474 = vpow.pop %v7473
        %v7475 = vsel %vm940, %v7474, 0.0
        %7476 = vadd.xlane.f32.xlu0 %v7475
        %v7477 = vpop.xlane.xlu0 %7476
        %v7478 = vrcp.pop %v7477
        %v7479 = vmul.f32 %v7474, %v7478
        %v7480 = vpack.c.bf16 %v7479, %v7479
        %7481 = vrot.lane.b32.xlu0 %v7080, 32
        %v7482 = vpop.permute.xlu0 %7481
        %v7484 = vsel %vm940, %v7480, 0
        %v7487 = vsel %vm956, %v7482, 0
        %7489 = vmatprep.subr.bf16.mxu0 0
        %7490 = vmatpush1.bf16.msra.mxu0 0
        %7491 = vmatprep.subr.bf16.mxu0 0
        %7492 = vmatpush1.bf16.msra.mxu0 0
        %7493 = vmatprep.subr.bf16.mxu0 0
        %7494 = vmatpush1.bf16.msra.mxu0 0
        %7495 = vmatprep.subr.bf16.mxu0 0
        %7496 = vmatpush1.bf16.msra.mxu0 0
        %7497 = vmatprep.subr.bf16.mxu0 0
        %7498 = vmatpush1.bf16.msra.mxu0 0
        %7499 = vmatprep.subr.bf16.mxu0 0
        %7500 = vmatpush1.bf16.msra.mxu0 0
        %7501 = vmatprep.subr.bf16.mxu0 0
        %7502 = vmatpush1.bf16.msra.mxu0 0
        %7503 = vmatprep.subr.bf16.mxu0 0
        %7504 = vmatpush1.bf16.msra.mxu0 %v7487
        %7505 = vmatprep.subr.bf16.mxu0 0
        %7506 = vmatpush2.bf16.msra.mxu0 0
        %7507 = vmatprep.subr.bf16.mxu0 0
        %7508 = vmatpush2.bf16.msra.mxu0 0
        %7509 = vmatprep.subr.bf16.mxu0 0
        %7510 = vmatpush2.bf16.msra.mxu0 0
        %7511 = vmatprep.subr.bf16.mxu0 0
        %7512 = vmatpush2.bf16.msra.mxu0 0
        %7513 = vmatprep.subr.bf16.mxu0 0
        %7514 = vmatpush2.bf16.msra.mxu0 0
        %7515 = vmatprep.subr.bf16.mxu0 0
        %7516 = vmatpush2.bf16.msra.mxu0 0
        %7517 = vmatprep.subr.bf16.mxu0 0
        %7518 = vmatpush2.bf16.msra.mxu0 0
        %7519 = vmatprep.subr.bf16.mxu0 0
        %7520 = vmatpush2.bf16.msra.mxu0 0
        %7521 = vmatprep.mubr.bf16.mxu0 0
        %7522 = vmatmul.mubr.bf16.gmra.mxu0 %v7484
        %v7523 = vpop.f32.mrf.mxu0
        %v7524 = vadd.f32 0.0, %v7523
        %v7525 = vpop.f32.mrf.mxu0
        %v7526 = vpop.f32.mrf.mxu0
        %v7527 = vpop.f32.mrf.mxu0
        %7528 = vdwg.mxu0
        %7530 = vrot.lane.b32.xlu0 %v7524, 96
        %v7531 = vpop.permute.xlu0 %7530
        %7533 = vst.msk [vmem:[#allocation2] sm:$0xff] %vm1350, %v7531
        %v7534 = vld [vmem:[#allocation2] sm:$0xff]
        %v7535 = vpack.c.bf16 %v7534, %v7534
        %s7536 = scalar_lea.vmem [#allocation12], 320
        %v7537 = vld [vmem:[%s7536] sm:$0xf]
        %v7538 = vld [vmem:[%s7536 + $0x4] sm:$0xf]
        %v7539 = vld [vmem:[%s7536 + $0x8] sm:$0xf]
        %v7540 = vld [vmem:[%s7536 + $0xc] sm:$0xf]
        %v7541 = vld [vmem:[%s7536 + $0x10] sm:$0xf]
        %v7542 = vld [vmem:[%s7536 + $0x14] sm:$0xf]
        %v7543 = vld [vmem:[%s7536 + $0x18] sm:$0xf]
        %v7544 = vld [vmem:[%s7536 + $0x1c] sm:$0xf]
        %v7545 = vld [vmem:[%s7536 + $0x20] sm:$0xf]
        %v7546 = vld [vmem:[%s7536 + $0x24] sm:$0xf]
        %v7547 = vld [vmem:[%s7536 + $0x28] sm:$0xf]
        %v7548 = vld [vmem:[%s7536 + $0x2c] sm:$0xf]
        %v7549 = vld [vmem:[%s7536 + $0x30] sm:$0xf]
        %v7550 = vld [vmem:[%s7536 + $0x34] sm:$0xf]
        %v7551 = vld [vmem:[%s7536 + $0x38] sm:$0xf]
        %v7552 = vld [vmem:[%s7536 + $0x3c] sm:$0xf]
        %s7553 = scalar_lea.vmem %s6, 5
        %v7554 = vld [vmem:[%s7553] sm:$0x1]
        %v7556 = vlaneseq
        %v7557 = vshrl.u32 %v7556, 7
        %v7558 = vsub.s32 0, %v7557
        %v7559 = vrot.slane %v7554, %v7558
        %v7577 = vunpack.c.l.b16 %v7537
        %v7578 = vunpack.c.l.b16 %v7538
        %v7579 = vunpack.c.l.b16 %v7539
        %v7580 = vunpack.c.l.b16 %v7540
        %v7581 = vunpack.c.l.b16 %v7541
        %v7582 = vunpack.c.l.b16 %v7542
        %v7583 = vunpack.c.l.b16 %v7543
        %v7584 = vunpack.c.l.b16 %v7544
        %v7585 = vunpack.c.l.b16 %v7545
        %v7586 = vunpack.c.l.b16 %v7546
        %v7587 = vunpack.c.l.b16 %v7547
        %v7588 = vunpack.c.l.b16 %v7548
        %v7589 = vunpack.c.l.b16 %v7549
        %v7590 = vunpack.c.l.b16 %v7550
        %v7591 = vunpack.c.l.b16 %v7551
        %v7592 = vunpack.c.l.b16 %v7552
        %v7593 = vpack.c.b16 %v7578, %v7577
        %v7594 = vpack.c.b16 %v7580, %v7579
        %v7595 = vpack.c.b16 %v7582, %v7581
        %v7596 = vpack.c.b16 %v7584, %v7583
        %v7597 = vpack.c.b16 %v7586, %v7585
        %v7598 = vpack.c.b16 %v7588, %v7587
        %v7599 = vpack.c.b16 %v7590, %v7589
        %v7600 = vpack.c.b16 %v7592, %v7591
        %7609 = vmatprep.subr.bf16.mxu0 0
        %7610 = vmatpush1.bf16.msra.mxu0 %v7600
        %7611 = vmatprep.subr.bf16.mxu0 0
        %7612 = vmatpush1.bf16.msra.mxu0 %v7599
        %7613 = vmatprep.subr.bf16.mxu0 0
        %7614 = vmatpush1.bf16.msra.mxu0 %v7598
        %7615 = vmatprep.subr.bf16.mxu0 0
        %7616 = vmatpush1.bf16.msra.mxu0 %v7597
        %7617 = vmatprep.subr.bf16.mxu0 0
        %7618 = vmatpush1.bf16.msra.mxu0 %v7596
        %7619 = vmatprep.subr.bf16.mxu0 0
        %7620 = vmatpush1.bf16.msra.mxu0 %v7595
        %7621 = vmatprep.subr.bf16.mxu0 0
        %7622 = vmatpush1.bf16.msra.mxu0 %v7594
        %7623 = vmatprep.subr.bf16.mxu0 0
        %7624 = vmatpush1.bf16.msra.mxu0 %v7593
        %7625 = vmatprep.subr.bf16.mxu0 0
        %7626 = vmatpush2.bf16.msra.mxu0 0
        %7627 = vmatprep.subr.bf16.mxu0 0
        %7628 = vmatpush2.bf16.msra.mxu0 0
        %7629 = vmatprep.subr.bf16.mxu0 0
        %7630 = vmatpush2.bf16.msra.mxu0 0
        %7631 = vmatprep.subr.bf16.mxu0 0
        %7632 = vmatpush2.bf16.msra.mxu0 0
        %7633 = vmatprep.subr.bf16.mxu0 0
        %7634 = vmatpush2.bf16.msra.mxu0 0
        %7635 = vmatprep.subr.bf16.mxu0 0
        %7636 = vmatpush2.bf16.msra.mxu0 0
        %7637 = vmatprep.subr.bf16.mxu0 0
        %7638 = vmatpush2.bf16.msra.mxu0 0
        %7639 = vmatprep.subr.bf16.mxu0 0
        %7640 = vmatpush2.bf16.msra.mxu0 0
        %7641 = vmatprep.mubr.bf16.mxu0 0
        %7642 = vmatmul.mubr.bf16.gmra.mxu0 %v7535
        %v7643 = vpop.f32.mrf.mxu0
        %v7644 = vadd.f32 %v7559, %v7643
        %v7645 = vpop.f32.mrf.mxu0
        %v7646 = vpop.f32.mrf.mxu0
        %v7647 = vpop.f32.mrf.mxu0
        %7648 = vdwg.mxu0
        %v7649 = vadd.f32 %v6787, %v7644
        %s7650 = scalar_lea.vmem [#allocation14], 5
        %v7651 = vld [vmem:[%s7650] sm:$0x1]
        %s7652 = scalar_lea.vmem [#allocation15], 5
        %v7653 = vld [vmem:[%s7652] sm:$0x1]
        %7654 = vadd.xlane.f32.xlu0 %v7649
        %v7655 = vpop.xlane.xlu0 %7654
        %v7656 = vmul.f32 %v7655, %v607
        %v7657 = vsub.f32 %v7649, %v7656
        %v7658 = vmul.f32 %v7657, %v7657
        %7659 = vadd.xlane.f32.xlu0 %v7658
        %v7660 = vpop.xlane.xlu0 %7659
        %v7661 = vmul.f32 %v7660, %v607
        %v7662 = vadd.f32 %v7661, 1e-06
        %v7663 = vrsqrt.pop %v7662
        %v7664 = vmul.f32 %v7657, %v7663
        %v7666 = vlaneseq
        %v7667 = vshrl.u32 %v7666, 7
        %v7668 = vsub.s32 0, %v7667
        %v7669 = vrot.slane %v7651, %v7668
        %v7671 = vmul.f32 %v7664, %v7669
        %v7673 = vlaneseq
        %v7674 = vshrl.u32 %v7673, 7
        %v7675 = vsub.s32 0, %v7674
        %v7676 = vrot.slane %v7653, %v7675
        %v7678 = vadd.f32 %v7671, %v7676
        %v7679 = vpack.c.bf16 %v7678, %v7678
        %s7680 = scalar_lea.vmem [#allocation17], 640
        %v7681 = vld [vmem:[%s7680] sm:$0xff]
        %v7682 = vld [vmem:[%s7680 + $0x8] sm:$0xff]
        %v7683 = vld [vmem:[%s7680 + $0x10] sm:$0xff]
        %v7684 = vld [vmem:[%s7680 + $0x18] sm:$0xff]
        %v7685 = vld [vmem:[%s7680 + $0x20] sm:$0xff]
        %v7686 = vld [vmem:[%s7680 + $0x28] sm:$0xff]
        %v7687 = vld [vmem:[%s7680 + $0x30] sm:$0xff]
        %v7688 = vld [vmem:[%s7680 + $0x38] sm:$0xff]
        %v7689 = vld [vmem:[%s7680 + $0x40] sm:$0xff]
        %v7690 = vld [vmem:[%s7680 + $0x48] sm:$0xff]
        %v7691 = vld [vmem:[%s7680 + $0x50] sm:$0xff]
        %v7692 = vld [vmem:[%s7680 + $0x58] sm:$0xff]
        %v7693 = vld [vmem:[%s7680 + $0x60] sm:$0xff]
        %v7694 = vld [vmem:[%s7680 + $0x68] sm:$0xff]
        %v7695 = vld [vmem:[%s7680 + $0x70] sm:$0xff]
        %v7696 = vld [vmem:[%s7680 + $0x78] sm:$0xff]
        %s7697 = scalar_lea.vmem %s10, 10
        %v7698 = vld [vmem:[%s7697] sm:$0x3]
        %v7700 = vlaneseq
        %v7701 = vshrl.u32 %v7700, 7
        %v7702 = vsub.s32 0, %v7701
        %v7703 = vrot.slane %v7698, %v7702
        %v7704 = vlaneseq
        %v7705 = vshrl.u32 %v7704, 7
        %v7706 = vsub.s32 1, %v7705
        %v7707 = vrot.slane %v7698, %v7706
        %v7726 = vunpack.c.l.b16 %v7681
        %v7727 = vunpack.c.h.b16 %v7681
        %v7728 = vunpack.c.l.b16 %v7682
        %v7729 = vunpack.c.h.b16 %v7682
        %v7730 = vunpack.c.l.b16 %v7683
        %v7731 = vunpack.c.h.b16 %v7683
        %v7732 = vunpack.c.l.b16 %v7684
        %v7733 = vunpack.c.h.b16 %v7684
        %v7734 = vunpack.c.l.b16 %v7685
        %v7735 = vunpack.c.h.b16 %v7685
        %v7736 = vunpack.c.l.b16 %v7686
        %v7737 = vunpack.c.h.b16 %v7686
        %v7738 = vunpack.c.l.b16 %v7687
        %v7739 = vunpack.c.h.b16 %v7687
        %v7740 = vunpack.c.l.b16 %v7688
        %v7741 = vunpack.c.h.b16 %v7688
        %v7742 = vunpack.c.l.b16 %v7689
        %v7743 = vunpack.c.h.b16 %v7689
        %v7744 = vunpack.c.l.b16 %v7690
        %v7745 = vunpack.c.h.b16 %v7690
        %v7746 = vunpack.c.l.b16 %v7691
        %v7747 = vunpack.c.h.b16 %v7691
        %v7748 = vunpack.c.l.b16 %v7692
        %v7749 = vunpack.c.h.b16 %v7692
        %v7750 = vunpack.c.l.b16 %v7693
        %v7751 = vunpack.c.h.b16 %v7693
        %v7752 = vunpack.c.l.b16 %v7694
        %v7753 = vunpack.c.h.b16 %v7694
        %v7754 = vunpack.c.l.b16 %v7695
        %v7755 = vunpack.c.h.b16 %v7695
        %v7756 = vunpack.c.l.b16 %v7696
        %v7757 = vunpack.c.h.b16 %v7696
        %v7758 = vpack.c.b16 %v7728, %v7726
        %v7759 = vpack.c.b16 %v7729, %v7727
        %v7760 = vpack.c.b16 %v7732, %v7730
        %v7761 = vpack.c.b16 %v7733, %v7731
        %v7762 = vpack.c.b16 %v7736, %v7734
        %v7763 = vpack.c.b16 %v7737, %v7735
        %v7764 = vpack.c.b16 %v7740, %v7738
        %v7765 = vpack.c.b16 %v7741, %v7739
        %v7766 = vpack.c.b16 %v7744, %v7742
        %v7767 = vpack.c.b16 %v7745, %v7743
        %v7768 = vpack.c.b16 %v7748, %v7746
        %v7769 = vpack.c.b16 %v7749, %v7747
        %v7770 = vpack.c.b16 %v7752, %v7750
        %v7771 = vpack.c.b16 %v7753, %v7751
        %v7772 = vpack.c.b16 %v7756, %v7754
        %v7773 = vpack.c.b16 %v7757, %v7755
        %7790 = vmatprep.subr.bf16.mxu0 %v7773
        %7791 = vmatpush1.bf16.msra.mxu0 %v7772
        %7792 = vmatprep.subr.bf16.mxu0 %v7771
        %7793 = vmatpush1.bf16.msra.mxu0 %v7770
        %7794 = vmatprep.subr.bf16.mxu0 %v7769
        %7795 = vmatpush1.bf16.msra.mxu0 %v7768
        %7796 = vmatprep.subr.bf16.mxu0 %v7767
        %7797 = vmatpush1.bf16.msra.mxu0 %v7766
        %7798 = vmatprep.subr.bf16.mxu0 %v7765
        %7799 = vmatpush1.bf16.msra.mxu0 %v7764
        %7800 = vmatprep.subr.bf16.mxu0 %v7763
        %7801 = vmatpush1.bf16.msra.mxu0 %v7762
        %7802 = vmatprep.subr.bf16.mxu0 %v7761
        %7803 = vmatpush1.bf16.msra.mxu0 %v7760
        %7804 = vmatprep.subr.bf16.mxu0 %v7759
        %7805 = vmatpush1.bf16.msra.mxu0 %v7758
        %7806 = vmatprep.subr.bf16.mxu0 0
        %7807 = vmatpush2.bf16.msra.mxu0 0
        %7808 = vmatprep.subr.bf16.mxu0 0
        %7809 = vmatpush2.bf16.msra.mxu0 0
        %7810 = vmatprep.subr.bf16.mxu0 0
        %7811 = vmatpush2.bf16.msra.mxu0 0
        %7812 = vmatprep.subr.bf16.mxu0 0
        %7813 = vmatpush2.bf16.msra.mxu0 0
        %7814 = vmatprep.subr.bf16.mxu0 0
        %7815 = vmatpush2.bf16.msra.mxu0 0
        %7816 = vmatprep.subr.bf16.mxu0 0
        %7817 = vmatpush2.bf16.msra.mxu0 0
        %7818 = vmatprep.subr.bf16.mxu0 0
        %7819 = vmatpush2.bf16.msra.mxu0 0
        %7820 = vmatprep.subr.bf16.mxu0 0
        %7821 = vmatpush2.bf16.msra.mxu0 0
        %7822 = vmatprep.mubr.bf16.mxu0 0
        %7823 = vmatmul.mubr.bf16.gmra.mxu0 %v7679
        %v7824 = vpop.f32.mrf.mxu0
        %v7825 = vadd.f32 %v7703, %v7824
        %v7826 = vpop.f32.mrf.mxu0
        %v7827 = vadd.f32 %v7707, %v7826
        %v7828 = vpop.f32.mrf.mxu0
        %v7829 = vpop.f32.mrf.mxu0
        %7830 = vdwg.mxu0
        %v7831 = vmul.f32 %v7825, 0.5
        %v7832 = vmul.f32 %v7827, 0.5
        %v7833 = vmul.f32 %v7825, 0.70710677
        %v7834 = vmul.f32 %v7827, 0.70710677
        %v7835 = verf.f32.pop %v7833
        %v7836 = verf.f32.pop %v7834
        %v7837 = vadd.f32 %v7835, 1.0
        %v7838 = vadd.f32 %v7836, 1.0
        %v7839 = vmul.f32 %v7831, %v7837
        %v7840 = vmul.f32 %v7832, %v7838
        %v7841 = vpack.c.bf16 %v7839, %v7839
        %v7842 = vpack.c.bf16 %v7840, %v7840
        %s7843 = scalar_lea.vmem [#allocation18], 640
        %v7844 = vld [vmem:[%s7843] sm:$0xf]
        %v7845 = vld [vmem:[%s7843 + $0x4] sm:$0xf]
        %v7846 = vld [vmem:[%s7843 + $0x8] sm:$0xf]
        %v7847 = vld [vmem:[%s7843 + $0xc] sm:$0xf]
        %v7848 = vld [vmem:[%s7843 + $0x10] sm:$0xf]
        %v7849 = vld [vmem:[%s7843 + $0x14] sm:$0xf]
        %v7850 = vld [vmem:[%s7843 + $0x18] sm:$0xf]
        %v7851 = vld [vmem:[%s7843 + $0x1c] sm:$0xf]
        %v7852 = vld [vmem:[%s7843 + $0x20] sm:$0xf]
        %v7853 = vld [vmem:[%s7843 + $0x24] sm:$0xf]
        %v7854 = vld [vmem:[%s7843 + $0x28] sm:$0xf]
        %v7855 = vld [vmem:[%s7843 + $0x2c] sm:$0xf]
        %v7856 = vld [vmem:[%s7843 + $0x30] sm:$0xf]
        %v7857 = vld [vmem:[%s7843 + $0x34] sm:$0xf]
        %v7858 = vld [vmem:[%s7843 + $0x38] sm:$0xf]
        %v7859 = vld [vmem:[%s7843 + $0x3c] sm:$0xf]
        %v7860 = vld [vmem:[%s7843 + $0x40] sm:$0xf]
        %v7861 = vld [vmem:[%s7843 + $0x44] sm:$0xf]
        %v7862 = vld [vmem:[%s7843 + $0x48] sm:$0xf]
        %v7863 = vld [vmem:[%s7843 + $0x4c] sm:$0xf]
        %v7864 = vld [vmem:[%s7843 + $0x50] sm:$0xf]
        %v7865 = vld [vmem:[%s7843 + $0x54] sm:$0xf]
        %v7866 = vld [vmem:[%s7843 + $0x58] sm:$0xf]
        %v7867 = vld [vmem:[%s7843 + $0x5c] sm:$0xf]
        %v7868 = vld [vmem:[%s7843 + $0x60] sm:$0xf]
        %v7869 = vld [vmem:[%s7843 + $0x64] sm:$0xf]
        %v7870 = vld [vmem:[%s7843 + $0x68] sm:$0xf]
        %v7871 = vld [vmem:[%s7843 + $0x6c] sm:$0xf]
        %v7872 = vld [vmem:[%s7843 + $0x70] sm:$0xf]
        %v7873 = vld [vmem:[%s7843 + $0x74] sm:$0xf]
        %v7874 = vld [vmem:[%s7843 + $0x78] sm:$0xf]
        %v7875 = vld [vmem:[%s7843 + $0x7c] sm:$0xf]
        %s7876 = scalar_lea.vmem [#allocation20], 5
        %v7877 = vld [vmem:[%s7876] sm:$0x1]
        %v7879 = vlaneseq
        %v7880 = vshrl.u32 %v7879, 7
        %v7881 = vsub.s32 0, %v7880
        %v7882 = vrot.slane %v7877, %v7881
        %v7916 = vunpack.c.l.b16 %v7844
        %v7917 = vunpack.c.l.b16 %v7845
        %v7918 = vunpack.c.l.b16 %v7846
        %v7919 = vunpack.c.l.b16 %v7847
        %v7920 = vunpack.c.l.b16 %v7848
        %v7921 = vunpack.c.l.b16 %v7849
        %v7922 = vunpack.c.l.b16 %v7850
        %v7923 = vunpack.c.l.b16 %v7851
        %v7924 = vunpack.c.l.b16 %v7852
        %v7925 = vunpack.c.l.b16 %v7853
        %v7926 = vunpack.c.l.b16 %v7854
        %v7927 = vunpack.c.l.b16 %v7855
        %v7928 = vunpack.c.l.b16 %v7856
        %v7929 = vunpack.c.l.b16 %v7857
        %v7930 = vunpack.c.l.b16 %v7858
        %v7931 = vunpack.c.l.b16 %v7859
        %v7932 = vunpack.c.l.b16 %v7860
        %v7933 = vunpack.c.l.b16 %v7861
        %v7934 = vunpack.c.l.b16 %v7862
        %v7935 = vunpack.c.l.b16 %v7863
        %v7936 = vunpack.c.l.b16 %v7864
        %v7937 = vunpack.c.l.b16 %v7865
        %v7938 = vunpack.c.l.b16 %v7866
        %v7939 = vunpack.c.l.b16 %v7867
        %v7940 = vunpack.c.l.b16 %v7868
        %v7941 = vunpack.c.l.b16 %v7869
        %v7942 = vunpack.c.l.b16 %v7870
        %v7943 = vunpack.c.l.b16 %v7871
        %v7944 = vunpack.c.l.b16 %v7872
        %v7945 = vunpack.c.l.b16 %v7873
        %v7946 = vunpack.c.l.b16 %v7874
        %v7947 = vunpack.c.l.b16 %v7875
        %v7948 = vpack.c.b16 %v7917, %v7916
        %v7949 = vpack.c.b16 %v7919, %v7918
        %v7950 = vpack.c.b16 %v7921, %v7920
        %v7951 = vpack.c.b16 %v7923, %v7922
        %v7952 = vpack.c.b16 %v7925, %v7924
        %v7953 = vpack.c.b16 %v7927, %v7926
        %v7954 = vpack.c.b16 %v7929, %v7928
        %v7955 = vpack.c.b16 %v7931, %v7930
        %v7956 = vpack.c.b16 %v7933, %v7932
        %v7957 = vpack.c.b16 %v7935, %v7934
        %v7958 = vpack.c.b16 %v7937, %v7936
        %v7959 = vpack.c.b16 %v7939, %v7938
        %v7960 = vpack.c.b16 %v7941, %v7940
        %v7961 = vpack.c.b16 %v7943, %v7942
        %v7962 = vpack.c.b16 %v7945, %v7944
        %v7963 = vpack.c.b16 %v7947, %v7946
        %7980 = vmatprep.subr.bf16.mxu0 0
        %7981 = vmatpush1.bf16.msra.mxu0 %v7955
        %7982 = vmatprep.subr.bf16.mxu0 0
        %7983 = vmatpush1.bf16.msra.mxu0 %v7954
        %7984 = vmatprep.subr.bf16.mxu0 0
        %7985 = vmatpush1.bf16.msra.mxu0 %v7953
        %7986 = vmatprep.subr.bf16.mxu0 0
        %7987 = vmatpush1.bf16.msra.mxu0 %v7952
        %7988 = vmatprep.subr.bf16.mxu0 0
        %7989 = vmatpush1.bf16.msra.mxu0 %v7951
        %7990 = vmatprep.subr.bf16.mxu0 0
        %7991 = vmatpush1.bf16.msra.mxu0 %v7950
        %7992 = vmatprep.subr.bf16.mxu0 0
        %7993 = vmatpush1.bf16.msra.mxu0 %v7949
        %7994 = vmatprep.subr.bf16.mxu0 0
        %7995 = vmatpush1.bf16.msra.mxu0 %v7948
        %7996 = vmatprep.subr.bf16.mxu0 0
        %7997 = vmatpush2.bf16.msra.mxu0 %v7963
        %7998 = vmatprep.subr.bf16.mxu0 0
        %7999 = vmatpush2.bf16.msra.mxu0 %v7962
        %8000 = vmatprep.subr.bf16.mxu0 0
        %8001 = vmatpush2.bf16.msra.mxu0 %v7961
        %8002 = vmatprep.subr.bf16.mxu0 0
        %8003 = vmatpush2.bf16.msra.mxu0 %v7960
        %8004 = vmatprep.subr.bf16.mxu0 0
        %8005 = vmatpush2.bf16.msra.mxu0 %v7959
        %8006 = vmatprep.subr.bf16.mxu0 0
        %8007 = vmatpush2.bf16.msra.mxu0 %v7958
        %8008 = vmatprep.subr.bf16.mxu0 0
        %8009 = vmatpush2.bf16.msra.mxu0 %v7957
        %8010 = vmatprep.subr.bf16.mxu0 0
        %8011 = vmatpush2.bf16.msra.mxu0 %v7956
        %8012 = vmatprep.mubr.bf16.mxu0 %v7842
        %8013 = vmatmul.mubr.bf16.gmra.mxu0 %v7841
        %v8014 = vpop.f32.mrf.mxu0
        %v8015 = vadd.f32 %v7882, %v8014
        %v8016 = vpop.f32.mrf.mxu0
        %v8017 = vpop.f32.mrf.mxu0
        %v8018 = vpop.f32.mrf.mxu0
        %8019 = vdwg.mxu0
        %v8020 = vmul.f32 %v8015, 0.5
        %v8021 = vmul.f32 %v8015, 0.70710677
        %v8022 = verf.f32.pop %v8021
        %v8023 = vadd.f32 %v8022, 1.0
        %v8024 = vmul.f32 %v8020, %v8023
        %v8025 = vadd.f32 %v7649, %v8024
        %8026 = vst [vmem:[%s600] sm:$0xff] %v8025
        %s8027 = sand.u32 %s321, 1
        %s8028 = scalar_lea.sflag [#allocation5], %s8027
        %s8029 = sand.u32 %s321, 1
        %s8030 = smul.addr %s8029, 8
        %s8031 = scalar_lea.vmem [#allocation21], %s8030
        // Predicated region
        $region117: #{tpu_custom_call.1} parent=71 // pred_check
          %p8032 = pneg %p331
        $region118: #{tpu_custom_call.1} parent=71 // pred_check_branch
          %8034 = sbr.rel (%p8032) target = $region120
        $region119: #{tpu_custom_call.1} parent=71 // pred_region
          %s8036 = ssub.s32 128, 128
          %8037 = vsyncadd %s8028, %s8036
          %s8038 = smul.addr %s35, 128
          %s8039 = scalar_lea.hbm %s13, %s8038
          %s8041 = sshll.u32 %s8031, 4
          %s8042 = int_to_ptr.vmem [resolvable:$true] %s8041
          %8044 = dma.vmem_to_hbm [thread:$0]  %s8042, 128, %s8039, %s8028
        $region120: #{tpu_custom_call.1} parent=71 // pred_fallthru
          _
      $region72: #{tpu_custom_call.1} parent=5 // pred_fallthru
        _
      %p8045 = scmp.le.s32.totalorder 2, %s30
      // Predicated region
      $region121: #{tpu_custom_call.1} parent=5 // pred_check
        %p8046 = pneg %p8045
      $region122: #{tpu_custom_call.1} parent=5 // pred_check_branch
        %8048 = sbr.rel (%p8046) target = $region124
      $region123: #{tpu_custom_call.1} parent=5 // pred_region
        %s8049 = ssub.s32 %s30, 2
        // Predicated region
        $region125: #{tpu_custom_call.1} parent=123 // pred_check
          %p8050 = pneg %p337
        $region126: #{tpu_custom_call.1} parent=123 // pred_check_branch
          %8052 = sbr.rel (%p8050) target = $region128
        $region127: #{tpu_custom_call.1} parent=123 // pred_region
          %s8053 = sand.u32 %s322, 1
          %s8054 = scalar_lea.sflag [#allocation5], %s8053
          %s8055 = sand.u32 %s322, 1
          %s8056 = smul.addr %s8055, 8
          %s8057 = scalar_lea.vmem [#allocation21], %s8056
          %8058 = dma.done %s8054, 128
        $region128: #{tpu_custom_call.1} parent=123 // pred_fallthru
          _
      $region124: #{tpu_custom_call.1} parent=5 // pred_fallthru
        _
    $region6: #{tpu_custom_call.1} parent=1 // loop_footer
      %s34 = sadd.s32 1, %s30
    $region7: #{tpu_custom_call.1} parent=1 // loop_footer_branch
      %29 = sbr.rel target = $region3
    $region8: #{tpu_custom_call.1} parent=1 // loop_exit
      _
    %8059 = vsyncpa [#allocation4], 1
    %s8060 = scalar_lea.sflag [#allocation4], 1
    %8061 = vsyncpa %s8060, 1
    %8062 = vsyncpa [#allocation7], 1
    %8063 = vsyncpa [#allocation10], 1
    %8064 = vsyncpa [#allocation13], 1
    %8065 = vsyncpa [#allocation16], 1
    %8066 = vsyncpa [#allocation19], 1
    %8067 = vsyncpa [#allocation5], 1
    %s8068 = scalar_lea.sflag [#allocation5], 1
    %8069 = vsyncpa %s8068, 1

</llo_original>
